<compile_context>
chip_gen: v7x
topology: tpu7x:2x2x1
jax: 0.10.0
libtpu: 0.0.40
codegen_flags: <defaults>
</compile_context>

<pallas_src>
import functools

import jax
import jax.numpy as jnp
from jax import lax
from jax.experimental import pallas as pl
from jax.experimental.pallas import tpu as pltpu


# ----------------------------------------------------------------------------
# Pallas kernels (whole-array blocks; every operand lives in VMEM).
# ----------------------------------------------------------------------------
def _fc_kernel(z_ref, w_ref, b_ref, o_ref):
    # (B, Zd) @ (Zd, 4*4*8*ngf) + bias ; bf16 MXU operands, f32 accumulation.
    o_ref[...] = (jnp.dot(z_ref[...].astype(jnp.bfloat16), w_ref[...],
                          preferred_element_type=jnp.float32) + b_ref[...])


def _gemm_kernel(w_ref, x_ref, o_ref):
    # Y^T(KH*KW*OC, M) = W^T(KH*KW*OC, IC) @ X^T(IC, M); lanes carry M (dense).
    o_ref[...] = jnp.dot(w_ref[...], x_ref[...].astype(jnp.bfloat16),
                         preferred_element_type=jnp.float32)


def _bn_relu_gemm_kernel(x_ref, g_ref, b_ref, w_ref, o_ref, *, count, eps):
    # Training-mode BatchNorm (two-pass centered variance) + ReLU on the
    # (C, M) activation of the previous block, fused with the NEXT block's
    # (de)convolution GEMM so the normalized activation never leaves VMEM.
    x = x_ref[...]                                         # (C, M) f32
    inv_n = 1.0 / count
    mean = jnp.sum(x, axis=1, keepdims=True) * inv_n       # (C, 1)
    xc = x - mean
    var = jnp.sum(xc * xc, axis=1, keepdims=True) * inv_n  # biased (train mode)
    scale = g_ref[...] * lax.rsqrt(var + eps)
    y = jnp.maximum(xc * scale + b_ref[...], 0.0)          # BN + ReLU, f32
    o_ref[...] = jnp.dot(w_ref[...], y.astype(jnp.bfloat16),
                         preferred_element_type=jnp.float32)


def _bias_tanh_kernel(x_ref, b_ref, o_ref):
    # (NC, M) + (NC, 1) bias, tanh; lanes carry M (dense).
    o_ref[...] = jnp.tanh(x_ref[...] + b_ref[...])


def _call(kernel, out_shape, out_dtype, *args):
    return pl.pallas_call(
        kernel, out_shape=jax.ShapeDtypeStruct(out_shape, out_dtype))(*args)


# ----------------------------------------------------------------------------
# col2im glue (pure data movement, no scatters): shifted adds + pixel shuffle.
# ----------------------------------------------------------------------------
def _shift(a, axis, direction):
    """Zero-filled shift. direction=+1: a'[u]=a[u-1]; direction=-1: a'[u]=a[u+1]."""
    n = a.shape[axis]
    pad = [(0, 0)] * a.ndim
    if direction > 0:
        pad[axis] = (1, 0)
        return lax.slice_in_dim(jnp.pad(a, pad), 0, n, axis=axis)
    pad[axis] = (0, 1)
    return lax.slice_in_dim(jnp.pad(a, pad), 1, n + 1, axis=axis)


def _col2im_stride2_k4(y, oc, b, h, w):
    """ConvTranspose2d(k=4, s=2, p=1) overlap-add via parity decomposition.

    y: (16*oc, b*h*w) with rows ordered (di, dj, oc) and cols (b, i, j).
    Each output pixel (2u+r, 2v+s) receives exactly two taps per axis:
      even rows: (di=1, i=u) + (di=3, i=u-1);  odd rows: (di=2, i=u) + (di=0, i=u+1)
    Returns (oc, b, 2h, 2w) f32.
    """
    y = y.reshape(4, 4, oc, b, h, w)                 # (di, dj, oc, b, i, j)
    # combine di along H (axis 3 of the 5-D y[di] views)
    ye = y[1] + _shift(y[3], 3, +1)                  # (dj, oc, b, h, w), even rows
    yo = y[2] + _shift(y[0], 3, -1)                  # odd rows
    # combine dj along W (axis 3 of the 4-D t[dj] views)
    ee = ye[1] + _shift(ye[3], 3, +1)
    eo = ye[2] + _shift(ye[0], 3, -1)
    oe = yo[1] + _shift(yo[3], 3, +1)
    oo = yo[2] + _shift(yo[0], 3, -1)
    even = jnp.stack([ee, eo], axis=-1)              # (oc, b, h, w, 2) -> [.., v, s]
    odd = jnp.stack([oe, oo], axis=-1)
    out = jnp.stack([even, odd], axis=3)             # (oc, b, h, 2, w, 2) -> [.., u, r, v, s]
    return out.reshape(oc, b, 2 * h, 2 * w)


def _col2im_stride1_k3(y, oc, b, h, w):
    """Conv2d(k=3, s=1, p=1) overlap-add: out[u,v] = sum_{di,dj} y[u+di-1, v+dj-1, di, dj]."""
    y = y.reshape(3, 3, oc, b, h, w)                 # (di, dj, oc, b, i, j)
    th = _shift(y[0], 3, +1) + y[1] + _shift(y[2], 3, -1)    # combine di along H
    return _shift(th[0], 3, +1) + th[1] + _shift(th[2], 3, -1)  # combine dj along W


# ----------------------------------------------------------------------------
# Parameters (PyTorch layouts) + one-time GEMM-layout preparation + forward.
# ----------------------------------------------------------------------------
def init_generator_params(key, z_dim, nc, ngf):
    """Parameters in the PyTorch module's native layouts."""
    ks = list(jax.random.split(key, 20))

    def rnd(shape, scale=0.05):
        return scale * jax.random.normal(ks.pop(), shape, jnp.float32)

    p = {"fc_w": rnd((4 * 4 * ngf * 8, z_dim)),      # nn.Linear: (out, in)
         "fc_b": rnd((4 * 4 * ngf * 8,))}
    chans = [(ngf * 8, ngf * 4), (ngf * 4, ngf * 2), (ngf * 2, ngf)]
    for idx, (ci, co) in enumerate(chans, start=1):
        p[f"w{idx}"] = rnd((ci, co, 4, 4))           # ConvTranspose2d: (IC,OC,KH,KW)
        p[f"b{idx}"] = rnd((co,))                    # cancelled by train-mode BN
        p[f"g{idx}"] = 1.0 + rnd((co,))              # BN gamma
        p[f"be{idx}"] = rnd((co,))                   # BN beta
    p["wo"] = rnd((nc, ngf, 3, 3))                   # Conv2d: (OC,IC,KH,KW)
    p["bo"] = rnd((nc,))
    return p


def prepare_params(p):
    """One-time transform of PyTorch-layout params into GEMM-ready layouts."""
    q = {"fc_w": jnp.transpose(p["fc_w"]).astype(jnp.bfloat16),       # (in, out)
         "fc_b": p["fc_b"].reshape(1, -1).astype(jnp.float32)}
    for idx in (1, 2, 3):
        w = p[f"w{idx}"]                                              # (IC, OC, KH, KW)
        # W^T rows ordered (di, dj, oc), cols ic  ->  Y^T = W^T @ X^T
        q[f"w{idx}"] = (jnp.transpose(w, (2, 3, 1, 0))
                        .reshape(-1, w.shape[0]).astype(jnp.bfloat16))
        # ConvTranspose2d bias dropped: exactly cancelled by train-mode BN mean.
        q[f"g{idx}"] = p[f"g{idx}"].reshape(-1, 1).astype(jnp.float32)
        q[f"be{idx}"] = p[f"be{idx}"].reshape(-1, 1).astype(jnp.float32)
    wo = p["wo"]                                                      # (OC, IC, KH, KW)
    q["wo"] = (jnp.transpose(wo, (2, 3, 0, 1))
               .reshape(-1, wo.shape[1]).astype(jnp.bfloat16))        # (9*OC, IC)
    q["bo"] = p["bo"].reshape(-1, 1).astype(jnp.float32)
    return q


def generator_forward(params, z, *, ngf, nc):
    b = z.shape[0]
    c1 = ngf * 8

    # fc: (B, z_dim) @ (z_dim, 4*4*ngf*8) + bias   -> lane-dense (B, 512) output
    n_fc = params["fc_w"].shape[1]
    h = _call(_fc_kernel, (b, n_fc), jnp.float32, z, params["fc_w"], params["fc_b"])

    # out.view(B, ngf*8, 4, 4) -> channel-major transposed layout X^T = (C, B*H*W)
    x = h.reshape(b, c1, 16).transpose(1, 0, 2).reshape(c1, b * 16)
    hw = 4

    # Block 1 GEMM (no preceding BN): (16*OC1, IC1) @ (IC1, B*16)
    w1 = params["w1"]
    y = _call(_gemm_kernel, (w1.shape[0], x.shape[1]), jnp.float32, w1, x)
    oc = w1.shape[0] // 16
    a = _col2im_stride2_k4(y, oc, b, hw, hw)          # (OC1, B, 8, 8)
    hw *= 2

    # BN_k + ReLU + GEMM_{k+1}, fused into one kernel per block.
    for bn_idx, wkey in ((1, "w2"), (2, "w3"), (3, "wo")):
        m = b * hw * hw
        xk = a.reshape(oc, m)
        wk = params[wkey]
        kern = functools.partial(_bn_relu_gemm_kernel, count=float(m), eps=1e-5)
        y = _call(kern, (wk.shape[0], m), jnp.float32,
                  xk, params[f"g{bn_idx}"], params[f"be{bn_idx}"], wk)
        if wkey == "wo":
            a = _col2im_stride1_k3(y, nc, b, hw, hw)  # (NC, B, 32, 32)
        else:
            oc = wk.shape[0] // 16
            a = _col2im_stride2_k4(y, oc, b, hw, hw)
            hw *= 2

    # Conv2d bias + Tanh (lane-dense (NC, B*32*32)), then back to PyTorch NCHW.
    m = b * hw * hw
    out = _call(_bias_tanh_kernel, (nc, m), jnp.float32, a.reshape(nc, m), params["bo"])
    return out.reshape(nc, b, hw, hw).transpose(1, 0, 2, 3)


# ----------------------------------------------------------------------------
if __name__ == "__main__":
    # small-but-consistent shapes: z_dim=32, ngf=8, nc=3, batch=2
    Z_DIM, NGF, NC, BATCH = 32, 8, 3, 2

    key = jax.random.PRNGKey(0)
    kp, kz = jax.random.split(key)
    torch_layout_params = init_generator_params(kp, Z_DIM, NC, NGF)
    params = prepare_params(torch_layout_params)      # one-time weight prep
    z = jax.random.normal(kz, (BATCH, Z_DIM), jnp.float32)

    fwd = jax.jit(functools.partial(generator_forward, ngf=NGF, nc=NC))
    out = jax.block_until_ready(fwd(params, z))

    assert out.shape == (BATCH, NC, 32, 32), out.shape
    assert out.dtype == jnp.float32
    assert bool(jnp.all(jnp.isfinite(out)))
    assert bool(jnp.all(jnp.abs(out) <= 1.0 + 1e-6))  # tanh range
    print("KERNEL_OK")
</pallas_src>

<mosaic_0001>
module attributes {stable_mosaic.version = 11 : i64} {
  func.func @_fc_kernel(%arg0: memref<2x32xf32, #tpu.memory_space<vmem>>, %arg1: memref<32x1024xbf16, #tpu.memory_space<vmem>>, %arg2: memref<1x1024xf32, #tpu.memory_space<vmem>>, %arg3: memref<2x1024xf32, #tpu.memory_space<vmem>>) attributes {dimension_semantics = [], scalar_prefetch = 0 : i64, scratch_operands = 0 : i64, tpu.core_type = #tpu.core_type<tc>} {
    %c0 = arith.constant 0 : index
    %c0_0 = arith.constant 0 : index
    %0 = vector.load %arg0[%c0, %c0_0] : memref<2x32xf32, #tpu.memory_space<vmem>>, vector<2x32xf32>
    %1 = arith.truncf %0 : vector<2x32xf32> to vector<2x32xbf16>
    %c0_1 = arith.constant 0 : index
    %c0_2 = arith.constant 0 : index
    %2 = vector.load %arg1[%c0_1, %c0_2] : memref<32x1024xbf16, #tpu.memory_space<vmem>>, vector<32x1024xbf16>
    %cst = arith.constant dense<0.000000e+00> : vector<2x1024xf32>
    %3 = tpu.matmul %1, %2, %cst {dimension_numbers = #tpu.dot_dimension_numbers<[1], [0], [0], [1], [0, 0, 1, 1], [], []>} : vector<2x32xbf16>, vector<32x1024xbf16>, vector<2x1024xf32> -> vector<2x1024xf32>
    %c0_3 = arith.constant 0 : index
    %c0_4 = arith.constant 0 : index
    %4 = vector.load %arg2[%c0_3, %c0_4] : memref<1x1024xf32, #tpu.memory_space<vmem>>, vector<1x1024xf32>
    %5 = vector.broadcast %4 : vector<1x1024xf32> to vector<2x1024xf32>
    %6 = arith.addf %3, %5 : vector<2x1024xf32>
    %c0_5 = arith.constant 0 : index
    %c0_6 = arith.constant 0 : index
    %7 = vector.load %arg3[%c0_5, %c0_6] : memref<2x1024xf32, #tpu.memory_space<vmem>>, vector<2x1024xf32>
    tpu.vector_store %arg3[%c0_5, %c0_6], %6 {strides = array<i32>} : memref<2x1024xf32, #tpu.memory_space<vmem>>, vector<2x1024xf32>,
    return
  }
}

module attributes {stable_mosaic.version = 11 : i64} {
  func.func @_gemm_kernel(%arg0: memref<512x64xbf16, #tpu.memory_space<vmem>>, %arg1: memref<64x32xf32, #tpu.memory_space<vmem>>, %arg2: memref<512x32xf32, #tpu.memory_space<vmem>>) attributes {dimension_semantics = [], scalar_prefetch = 0 : i64, scratch_operands = 0 : i64, tpu.core_type = #tpu.core_type<tc>} {
    %c0 = arith.constant 0 : index
    %c0_0 = arith.constant 0 : index
    %0 = vector.load %arg0[%c0, %c0_0] : memref<512x64xbf16, #tpu.memory_space<vmem>>, vector<512x64xbf16>
    %c0_1 = arith.constant 0 : index
    %c0_2 = arith.constant 0 : index
    %1 = vector.load %arg1[%c0_1, %c0_2] : memref<64x32xf32, #tpu.memory_space<vmem>>, vector<64x32xf32>
    %2 = arith.truncf %1 : vector<64x32xf32> to vector<64x32xbf16>
    %cst = arith.constant dense<0.000000e+00> : vector<512x32xf32>
    %3 = tpu.matmul %0, %2, %cst {dimension_numbers = #tpu.dot_dimension_numbers<[1], [0], [0], [1], [0, 0, 1, 1], [], []>} : vector<512x64xbf16>, vector<64x32xbf16>, vector<512x32xf32> -> vector<512x32xf32>
    %c0_3 = arith.constant 0 : index
    %c0_4 = arith.constant 0 : index
    %4 = vector.load %arg2[%c0_3, %c0_4] : memref<512x32xf32, #tpu.memory_space<vmem>>, vector<512x32xf32>
    tpu.vector_store %arg2[%c0_3, %c0_4], %3 {strides = array<i32>} : memref<512x32xf32, #tpu.memory_space<vmem>>, vector<512x32xf32>,
    return
  }
}

module attributes {stable_mosaic.version = 11 : i64} {
  func.func @_bn_relu_gemm_kernel(%arg0: memref<32x128xf32, #tpu.memory_space<vmem>>, %arg1: memref<32x1xf32, #tpu.memory_space<vmem>>, %arg2: memref<32x1xf32, #tpu.memory_space<vmem>>, %arg3: memref<256x32xbf16, #tpu.memory_space<vmem>>, %arg4: memref<256x128xf32, #tpu.memory_space<vmem>>) attributes {dimension_semantics = [], scalar_prefetch = 0 : i64, scratch_operands = 0 : i64, tpu.core_type = #tpu.core_type<tc>} {
    %c0 = arith.constant 0 : index
    %c0_0 = arith.constant 0 : index
    %0 = vector.load %arg0[%c0, %c0_0] : memref<32x128xf32, #tpu.memory_space<vmem>>, vector<32x128xf32>
    %cst = arith.constant dense<0.000000e+00> : vector<32xf32>
    %1 = vector.multi_reduction <add>, %0, %cst [1] : vector<32x128xf32> to vector<32xf32>
    %2 = vector.shape_cast %1 : vector<32xf32> to vector<32x1xf32>
    %cst_1 = arith.constant 7.812500e-03 : f32
    %3 = vector.broadcast %cst_1 : f32 to vector<32x1xf32>
    %4 = arith.mulf %2, %3 : vector<32x1xf32>
    %5 = vector.broadcast %4 : vector<32x1xf32> to vector<32x128xf32>
    %6 = arith.subf %0, %5 : vector<32x128xf32>
    %7 = arith.mulf %6, %6 : vector<32x128xf32>
    %cst_2 = arith.constant dense<0.000000e+00> : vector<32xf32>
    %8 = vector.multi_reduction <add>, %7, %cst_2 [1] : vector<32x128xf32> to vector<32xf32>
    %9 = vector.shape_cast %8 : vector<32xf32> to vector<32x1xf32>
    %cst_3 = arith.constant 7.812500e-03 : f32
    %10 = vector.broadcast %cst_3 : f32 to vector<32x1xf32>
    %11 = arith.mulf %9, %10 : vector<32x1xf32>
    %c0_4 = arith.constant 0 : index
    %c0_5 = arith.constant 0 : index
    %12 = vector.load %arg1[%c0_4, %c0_5] : memref<32x1xf32, #tpu.memory_space<vmem>>, vector<32x1xf32>
    %cst_6 = arith.constant 9.99999974E-6 : f32
    %13 = vector.broadcast %cst_6 : f32 to vector<32x1xf32>
    %14 = arith.addf %11, %13 : vector<32x1xf32>
    %15 = math.rsqrt %14 : vector<32x1xf32>
    %16 = arith.mulf %12, %15 : vector<32x1xf32>
    %17 = vector.broadcast %16 : vector<32x1xf32> to vector<32x128xf32>
    %18 = arith.mulf %6, %17 : vector<32x128xf32>
    %c0_7 = arith.constant 0 : index
    %c0_8 = arith.constant 0 : index
    %19 = vector.load %arg2[%c0_7, %c0_8] : memref<32x1xf32, #tpu.memory_space<vmem>>, vector<32x1xf32>
    %20 = vector.broadcast %19 : vector<32x1xf32> to vector<32x128xf32>
    %21 = arith.addf %18, %20 : vector<32x128xf32>
    %cst_9 = arith.constant 0.000000e+00 : f32
    %22 = vector.broadcast %cst_9 : f32 to vector<32x128xf32>
    %23 = arith.maximumf %21, %22 : vector<32x128xf32>
    %c0_10 = arith.constant 0 : index
    %c0_11 = arith.constant 0 : index
    %24 = vector.load %arg3[%c0_10, %c0_11] : memref<256x32xbf16, #tpu.memory_space<vmem>>, vector<256x32xbf16>
    %25 = arith.truncf %23 : vector<32x128xf32> to vector<32x128xbf16>
    %cst_12 = arith.constant dense<0.000000e+00> : vector<256x128xf32>
    %26 = tpu.matmul %24, %25, %cst_12 {dimension_numbers = #tpu.dot_dimension_numbers<[1], [0], [0], [1], [0, 0, 1, 1], [], []>} : vector<256x32xbf16>, vector<32x128xbf16>, vector<256x128xf32> -> vector<256x128xf32>
    %c0_13 = arith.constant 0 : index
    %c0_14 = arith.constant 0 : index
    %27 = vector.load %arg4[%c0_13, %c0_14] : memref<256x128xf32, #tpu.memory_space<vmem>>, vector<256x128xf32>
    tpu.vector_store %arg4[%c0_13, %c0_14], %26 {strides = array<i32>} : memref<256x128xf32, #tpu.memory_space<vmem>>, vector<256x128xf32>,
    return
  }
}

module attributes {stable_mosaic.version = 11 : i64} {
  func.func @_bn_relu_gemm_kernel(%arg0: memref<16x512xf32, #tpu.memory_space<vmem>>, %arg1: memref<16x1xf32, #tpu.memory_space<vmem>>, %arg2: memref<16x1xf32, #tpu.memory_space<vmem>>, %arg3: memref<128x16xbf16, #tpu.memory_space<vmem>>, %arg4: memref<128x512xf32, #tpu.memory_space<vmem>>) attributes {dimension_semantics = [], scalar_prefetch = 0 : i64, scratch_operands = 0 : i64, tpu.core_type = #tpu.core_type<tc>} {
    %c0 = arith.constant 0 : index
    %c0_0 = arith.constant 0 : index
    %0 = vector.load %arg0[%c0, %c0_0] : memref<16x512xf32, #tpu.memory_space<vmem>>, vector<16x512xf32>
    %cst = arith.constant dense<0.000000e+00> : vector<16xf32>
    %1 = vector.multi_reduction <add>, %0, %cst [1] : vector<16x512xf32> to vector<16xf32>
    %2 = vector.shape_cast %1 : vector<16xf32> to vector<16x1xf32>
    %cst_1 = arith.constant 0.001953125 : f32
    %3 = vector.broadcast %cst_1 : f32 to vector<16x1xf32>
    %4 = arith.mulf %2, %3 : vector<16x1xf32>
    %5 = vector.broadcast %4 : vector<16x1xf32> to vector<16x512xf32>
    %6 = arith.subf %0, %5 : vector<16x512xf32>
    %7 = arith.mulf %6, %6 : vector<16x512xf32>
    %cst_2 = arith.constant dense<0.000000e+00> : vector<16xf32>
    %8 = vector.multi_reduction <add>, %7, %cst_2 [1] : vector<16x512xf32> to vector<16xf32>
    %9 = vector.shape_cast %8 : vector<16xf32> to vector<16x1xf32>
    %cst_3 = arith.constant 0.001953125 : f32
    %10 = vector.broadcast %cst_3 : f32 to vector<16x1xf32>
    %11 = arith.mulf %9, %10 : vector<16x1xf32>
    %c0_4 = arith.constant 0 : index
    %c0_5 = arith.constant 0 : index
    %12 = vector.load %arg1[%c0_4, %c0_5] : memref<16x1xf32, #tpu.memory_space<vmem>>, vector<16x1xf32>
    %cst_6 = arith.constant 9.99999974E-6 : f32
    %13 = vector.broadcast %cst_6 : f32 to vector<16x1xf32>
    %14 = arith.addf %11, %13 : vector<16x1xf32>
    %15 = math.rsqrt %14 : vector<16x1xf32>
    %16 = arith.mulf %12, %15 : vector<16x1xf32>
    %17 = vector.broadcast %16 : vector<16x1xf32> to vector<16x512xf32>
    %18 = arith.mulf %6, %17 : vector<16x512xf32>
    %c0_7 = arith.constant 0 : index
    %c0_8 = arith.constant 0 : index
    %19 = vector.load %arg2[%c0_7, %c0_8] : memref<16x1xf32, #tpu.memory_space<vmem>>, vector<16x1xf32>
    %20 = vector.broadcast %19 : vector<16x1xf32> to vector<16x512xf32>
    %21 = arith.addf %18, %20 : vector<16x512xf32>
    %cst_9 = arith.constant 0.000000e+00 : f32
    %22 = vector.broadcast %cst_9 : f32 to vector<16x512xf32>
    %23 = arith.maximumf %21, %22 : vector<16x512xf32>
    %c0_10 = arith.constant 0 : index
    %c0_11 = arith.constant 0 : index
    %24 = vector.load %arg3[%c0_10, %c0_11] : memref<128x16xbf16, #tpu.memory_space<vmem>>, vector<128x16xbf16>
    %25 = arith.truncf %23 : vector<16x512xf32> to vector<16x512xbf16>
    %cst_12 = arith.constant dense<0.000000e+00> : vector<128x512xf32>
    %26 = tpu.matmul %24, %25, %cst_12 {dimension_numbers = #tpu.dot_dimension_numbers<[1], [0], [0], [1], [0, 0, 1, 1], [], []>} : vector<128x16xbf16>, vector<16x512xbf16>, vector<128x512xf32> -> vector<128x512xf32>
    %c0_13 = arith.constant 0 : index
    %c0_14 = arith.constant 0 : index
    %27 = vector.load %arg4[%c0_13, %c0_14] : memref<128x512xf32, #tpu.memory_space<vmem>>, vector<128x512xf32>
    tpu.vector_store %arg4[%c0_13, %c0_14], %26 {strides = array<i32>} : memref<128x512xf32, #tpu.memory_space<vmem>>, vector<128x512xf32>,
    return
  }
}

module attributes {stable_mosaic.version = 11 : i64} {
  func.func @_bn_relu_gemm_kernel(%arg0: memref<8x2048xf32, #tpu.memory_space<vmem>>, %arg1: memref<8x1xf32, #tpu.memory_space<vmem>>, %arg2: memref<8x1xf32, #tpu.memory_space<vmem>>, %arg3: memref<27x8xbf16, #tpu.memory_space<vmem>>, %arg4: memref<27x2048xf32, #tpu.memory_space<vmem>>) attributes {dimension_semantics = [], scalar_prefetch = 0 : i64, scratch_operands = 0 : i64, tpu.core_type = #tpu.core_type<tc>} {
    %c0 = arith.constant 0 : index
    %c0_0 = arith.constant 0 : index
    %0 = vector.load %arg0[%c0, %c0_0] : memref<8x2048xf32, #tpu.memory_space<vmem>>, vector<8x2048xf32>
    %cst = arith.constant dense<0.000000e+00> : vector<8xf32>
    %1 = vector.multi_reduction <add>, %0, %cst [1] : vector<8x2048xf32> to vector<8xf32>
    %2 = vector.shape_cast %1 : vector<8xf32> to vector<8x1xf32>
    %cst_1 = arith.constant 4.8828125E-4 : f32
    %3 = vector.broadcast %cst_1 : f32 to vector<8x1xf32>
    %4 = arith.mulf %2, %3 : vector<8x1xf32>
    %5 = vector.broadcast %4 : vector<8x1xf32> to vector<8x2048xf32>
    %6 = arith.subf %0, %5 : vector<8x2048xf32>
    %7 = arith.mulf %6, %6 : vector<8x2048xf32>
    %cst_2 = arith.constant dense<0.000000e+00> : vector<8xf32>
    %8 = vector.multi_reduction <add>, %7, %cst_2 [1] : vector<8x2048xf32> to vector<8xf32>
    %9 = vector.shape_cast %8 : vector<8xf32> to vector<8x1xf32>
    %cst_3 = arith.constant 4.8828125E-4 : f32
    %10 = vector.broadcast %cst_3 : f32 to vector<8x1xf32>
    %11 = arith.mulf %9, %10 : vector<8x1xf32>
    %c0_4 = arith.constant 0 : index
    %c0_5 = arith.constant 0 : index
    %12 = vector.load %arg1[%c0_4, %c0_5] : memref<8x1xf32, #tpu.memory_space<vmem>>, vector<8x1xf32>
    %cst_6 = arith.constant 9.99999974E-6 : f32
    %13 = vector.broadcast %cst_6 : f32 to vector<8x1xf32>
    %14 = arith.addf %11, %13 : vector<8x1xf32>
    %15 = math.rsqrt %14 : vector<8x1xf32>
    %16 = arith.mulf %12, %15 : vector<8x1xf32>
    %17 = vector.broadcast %16 : vector<8x1xf32> to vector<8x2048xf32>
    %18 = arith.mulf %6, %17 : vector<8x2048xf32>
    %c0_7 = arith.constant 0 : index
    %c0_8 = arith.constant 0 : index
    %19 = vector.load %arg2[%c0_7, %c0_8] : memref<8x1xf32, #tpu.memory_space<vmem>>, vector<8x1xf32>
    %20 = vector.broadcast %19 : vector<8x1xf32> to vector<8x2048xf32>
    %21 = arith.addf %18, %20 : vector<8x2048xf32>
    %cst_9 = arith.constant 0.000000e+00 : f32
    %22 = vector.broadcast %cst_9 : f32 to vector<8x2048xf32>
    %23 = arith.maximumf %21, %22 : vector<8x2048xf32>
    %c0_10 = arith.constant 0 : index
    %c0_11 = arith.constant 0 : index
    %24 = vector.load %arg3[%c0_10, %c0_11] : memref<27x8xbf16, #tpu.memory_space<vmem>>, vector<27x8xbf16>
    %25 = arith.truncf %23 : vector<8x2048xf32> to vector<8x2048xbf16>
    %cst_12 = arith.constant dense<0.000000e+00> : vector<27x2048xf32>
    %26 = tpu.matmul %24, %25, %cst_12 {dimension_numbers = #tpu.dot_dimension_numbers<[1], [0], [0], [1], [0, 0, 1, 1], [], []>} : vector<27x8xbf16>, vector<8x2048xbf16>, vector<27x2048xf32> -> vector<27x2048xf32>
    %c0_13 = arith.constant 0 : index
    %c0_14 = arith.constant 0 : index
    %27 = vector.load %arg4[%c0_13, %c0_14] : memref<27x2048xf32, #tpu.memory_space<vmem>>, vector<27x2048xf32>
    tpu.vector_store %arg4[%c0_13, %c0_14], %26 {strides = array<i32>} : memref<27x2048xf32, #tpu.memory_space<vmem>>, vector<27x2048xf32>,
    return
  }
}

module attributes {stable_mosaic.version = 11 : i64} {
  func.func @_bias_tanh_kernel(%arg0: memref<3x2048xf32, #tpu.memory_space<vmem>>, %arg1: memref<3x1xf32, #tpu.memory_space<vmem>>, %arg2: memref<3x2048xf32, #tpu.memory_space<vmem>>) attributes {dimension_semantics = [], scalar_prefetch = 0 : i64, scratch_operands = 0 : i64, tpu.core_type = #tpu.core_type<tc>} {
    %c0 = arith.constant 0 : index
    %c0_0 = arith.constant 0 : index
    %0 = vector.load %arg0[%c0, %c0_0] : memref<3x2048xf32, #tpu.memory_space<vmem>>, vector<3x2048xf32>
    %c0_1 = arith.constant 0 : index
    %c0_2 = arith.constant 0 : index
    %1 = vector.load %arg1[%c0_1, %c0_2] : memref<3x1xf32, #tpu.memory_space<vmem>>, vector<3x1xf32>
    %2 = vector.broadcast %1 : vector<3x1xf32> to vector<3x2048xf32>
    %3 = arith.addf %0, %2 : vector<3x2048xf32>
    %4 = math.tanh %3 : vector<3x2048xf32>
    %c0_3 = arith.constant 0 : index
    %c0_4 = arith.constant 0 : index
    %5 = vector.load %arg2[%c0_3, %c0_4] : memref<3x2048xf32, #tpu.memory_space<vmem>>, vector<3x2048xf32>
    tpu.vector_store %arg2[%c0_3, %c0_4], %4 {strides = array<i32>} : memref<3x2048xf32, #tpu.memory_space<vmem>>, vector<3x2048xf32>,
    return
  }
}

</mosaic_0001>

<llo_original>
// kernel: squeeze.45
$region0: #{squeeze.45}
  %s0 = inlined_call_operand.vmem [shape: f32[128,32], index: 0, kind: input, shape index: {}]
  %s1 = inlined_call_operand.vmem [shape: f32[4,32,2,4,4], index: 1, kind: output, shape index: {}]
  $region1: #{squeeze.45} parent=0
    #allocation0 [shape = 'u8[131072]{0}', space=vmem, size = 0x20000, scoped, tag = 'scoped mem for output reshape']
    %v2 = vld [vmem:[%s0] sm:$0xff]
    %vm3 = vcmask 261120
    %4 = vst.msk [vmem:[#allocation0] ss:$8 sm:$0xf] %vm3, %v2
    %5 = vst.msk [vmem:[#allocation0] ss:$8 sm:$0xf0] %vm3, %v2
    %s6 = scalar_lea.vmem %s0, 8
    %v7 = vld [vmem:[%s6] sm:$0xff]
    %vm8 = vcmask 261120
    %s9 = scalar_lea.vmem [#allocation0], 64
    %10 = vst.msk [vmem:[%s9] ss:$8 sm:$0xf] %vm8, %v7
    %s11 = scalar_lea.vmem [#allocation0], 64
    %12 = vst.msk [vmem:[%s11] ss:$8 sm:$0xf0] %vm8, %v7
    %s13 = scalar_lea.vmem %s0, 16
    %v14 = vld [vmem:[%s13] sm:$0xff]
    %vm15 = vcmask 261120
    %s16 = scalar_lea.vmem [#allocation0], 128
    %17 = vst.msk [vmem:[%s16] ss:$8 sm:$0xf] %vm15, %v14
    %s18 = scalar_lea.vmem [#allocation0], 128
    %19 = vst.msk [vmem:[%s18] ss:$8 sm:$0xf0] %vm15, %v14
    %s20 = scalar_lea.vmem %s0, 24
    %v21 = vld [vmem:[%s20] sm:$0xff]
    %vm22 = vcmask 261120
    %s23 = scalar_lea.vmem [#allocation0], 192
    %24 = vst.msk [vmem:[%s23] ss:$8 sm:$0xf] %vm22, %v21
    %s25 = scalar_lea.vmem [#allocation0], 192
    %26 = vst.msk [vmem:[%s25] ss:$8 sm:$0xf0] %vm22, %v21
    %v27 = vld [vmem:[%s0] sm:$0xff]
    %28 = vrot.lane.b32.xlu0 %v27, 96
    %v29 = vpop.permute.xlu0 %28
    %vm30 = vcmask 261120
    %s31 = scalar_lea.vmem [#allocation0], 1
    %32 = vst.msk [vmem:[%s31] ss:$8 sm:$0xf] %vm30, %v29
    %s33 = scalar_lea.vmem [#allocation0], 1
    %34 = vst.msk [vmem:[%s33] ss:$8 sm:$0xf0] %vm30, %v29
    %s35 = scalar_lea.vmem %s0, 8
    %v36 = vld [vmem:[%s35] sm:$0xff]
    %37 = vrot.lane.b32.xlu0 %v36, 96
    %v38 = vpop.permute.xlu0 %37
    %vm39 = vcmask 261120
    %s40 = scalar_lea.vmem [#allocation0], 65
    %41 = vst.msk [vmem:[%s40] ss:$8 sm:$0xf] %vm39, %v38
    %s42 = scalar_lea.vmem [#allocation0], 65
    %43 = vst.msk [vmem:[%s42] ss:$8 sm:$0xf0] %vm39, %v38
    %s44 = scalar_lea.vmem %s0, 16
    %v45 = vld [vmem:[%s44] sm:$0xff]
    %46 = vrot.lane.b32.xlu0 %v45, 96
    %v47 = vpop.permute.xlu0 %46
    %vm48 = vcmask 261120
    %s49 = scalar_lea.vmem [#allocation0], 129
    %50 = vst.msk [vmem:[%s49] ss:$8 sm:$0xf] %vm48, %v47
    %s51 = scalar_lea.vmem [#allocation0], 129
    %52 = vst.msk [vmem:[%s51] ss:$8 sm:$0xf0] %vm48, %v47
    %s53 = scalar_lea.vmem %s0, 24
    %v54 = vld [vmem:[%s53] sm:$0xff]
    %55 = vrot.lane.b32.xlu0 %v54, 96
    %v56 = vpop.permute.xlu0 %55
    %vm57 = vcmask 261120
    %s58 = scalar_lea.vmem [#allocation0], 193
    %59 = vst.msk [vmem:[%s58] ss:$8 sm:$0xf] %vm57, %v56
    %s60 = scalar_lea.vmem [#allocation0], 193
    %61 = vst.msk [vmem:[%s60] ss:$8 sm:$0xf0] %vm57, %v56
    %v62 = vld [vmem:[%s0] sm:$0xff]
    %63 = vrot.lane.b32.xlu0 %v62, 64
    %v64 = vpop.permute.xlu0 %63
    %vm65 = vcmask 261120
    %s66 = scalar_lea.vmem [#allocation0], 2
    %67 = vst.msk [vmem:[%s66] ss:$8 sm:$0xf] %vm65, %v64
    %s68 = scalar_lea.vmem [#allocation0], 2
    %69 = vst.msk [vmem:[%s68] ss:$8 sm:$0xf0] %vm65, %v64
    %s70 = scalar_lea.vmem %s0, 8
    %v71 = vld [vmem:[%s70] sm:$0xff]
    %72 = vrot.lane.b32.xlu0 %v71, 64
    %v73 = vpop.permute.xlu0 %72
    %vm74 = vcmask 261120
    %s75 = scalar_lea.vmem [#allocation0], 66
    %76 = vst.msk [vmem:[%s75] ss:$8 sm:$0xf] %vm74, %v73
    %s77 = scalar_lea.vmem [#allocation0], 66
    %78 = vst.msk [vmem:[%s77] ss:$8 sm:$0xf0] %vm74, %v73
    %s79 = scalar_lea.vmem %s0, 16
    %v80 = vld [vmem:[%s79] sm:$0xff]
    %81 = vrot.lane.b32.xlu0 %v80, 64
    %v82 = vpop.permute.xlu0 %81
    %vm83 = vcmask 261120
    %s84 = scalar_lea.vmem [#allocation0], 130
    %85 = vst.msk [vmem:[%s84] ss:$8 sm:$0xf] %vm83, %v82
    %s86 = scalar_lea.vmem [#allocation0], 130
    %87 = vst.msk [vmem:[%s86] ss:$8 sm:$0xf0] %vm83, %v82
    %s88 = scalar_lea.vmem %s0, 24
    %v89 = vld [vmem:[%s88] sm:$0xff]
    %90 = vrot.lane.b32.xlu0 %v89, 64
    %v91 = vpop.permute.xlu0 %90
    %vm92 = vcmask 261120
    %s93 = scalar_lea.vmem [#allocation0], 194
    %94 = vst.msk [vmem:[%s93] ss:$8 sm:$0xf] %vm92, %v91
    %s95 = scalar_lea.vmem [#allocation0], 194
    %96 = vst.msk [vmem:[%s95] ss:$8 sm:$0xf0] %vm92, %v91
    %v97 = vld [vmem:[%s0] sm:$0xff]
    %98 = vrot.lane.b32.xlu0 %v97, 32
    %v99 = vpop.permute.xlu0 %98
    %vm100 = vcmask 261120
    %s101 = scalar_lea.vmem [#allocation0], 3
    %102 = vst.msk [vmem:[%s101] ss:$8 sm:$0xf] %vm100, %v99
    %s103 = scalar_lea.vmem [#allocation0], 3
    %104 = vst.msk [vmem:[%s103] ss:$8 sm:$0xf0] %vm100, %v99
    %s105 = scalar_lea.vmem %s0, 8
    %v106 = vld [vmem:[%s105] sm:$0xff]
    %107 = vrot.lane.b32.xlu0 %v106, 32
    %v108 = vpop.permute.xlu0 %107
    %vm109 = vcmask 261120
    %s110 = scalar_lea.vmem [#allocation0], 67
    %111 = vst.msk [vmem:[%s110] ss:$8 sm:$0xf] %vm109, %v108
    %s112 = scalar_lea.vmem [#allocation0], 67
    %113 = vst.msk [vmem:[%s112] ss:$8 sm:$0xf0] %vm109, %v108
    %s114 = scalar_lea.vmem %s0, 16
    %v115 = vld [vmem:[%s114] sm:$0xff]
    %116 = vrot.lane.b32.xlu0 %v115, 32
    %v117 = vpop.permute.xlu0 %116
    %vm118 = vcmask 261120
    %s119 = scalar_lea.vmem [#allocation0], 131
    %120 = vst.msk [vmem:[%s119] ss:$8 sm:$0xf] %vm118, %v117
    %s121 = scalar_lea.vmem [#allocation0], 131
    %122 = vst.msk [vmem:[%s121] ss:$8 sm:$0xf0] %vm118, %v117
    %s123 = scalar_lea.vmem %s0, 24
    %v124 = vld [vmem:[%s123] sm:$0xff]
    %125 = vrot.lane.b32.xlu0 %v124, 32
    %v126 = vpop.permute.xlu0 %125
    %vm127 = vcmask 261120
    %s128 = scalar_lea.vmem [#allocation0], 195
    %129 = vst.msk [vmem:[%s128] ss:$8 sm:$0xf] %vm127, %v126
    %s130 = scalar_lea.vmem [#allocation0], 195
    %131 = vst.msk [vmem:[%s130] ss:$8 sm:$0xf0] %vm127, %v126
    %s133 = sshllo.u32 0, 4
    %v135 = vld [vmem:[#allocation0] sm:%s133]
    %s136 = sshllo.u32 0, 4
    %137 = vst [vmem:[%s1] sm:%s136] %v135
    %s138 = scalar_lea.vmem [#allocation0], 8
    %v139 = vld [vmem:[%s138] sm:%s133]
    %s140 = sshllo.u32 0, 4
    %s141 = scalar_lea.vmem %s1, 4
    %142 = vst [vmem:[%s141] sm:%s140] %v139
    %s143 = scalar_lea.vmem [#allocation0], 16
    %v144 = vld [vmem:[%s143] sm:%s133]
    %s145 = sshllo.u32 0, 4
    %s146 = smul.addr 4, 2
    %s147 = scalar_lea.vmem %s1, %s146
    %148 = vst [vmem:[%s147] sm:%s145] %v144
    %s149 = scalar_lea.vmem [#allocation0], 24
    %v150 = vld [vmem:[%s149] sm:%s133]
    %s151 = sshllo.u32 0, 4
    %s152 = smul.addr 4, 3
    %s153 = scalar_lea.vmem %s1, %s152
    %154 = vst [vmem:[%s153] sm:%s151] %v150
    %s155 = scalar_lea.vmem [#allocation0], 32
    %v156 = vld [vmem:[%s155] sm:%s133]
    %s157 = sshllo.u32 0, 4
    %s158 = smul.addr 4, 4
    %s159 = scalar_lea.vmem %s1, %s158
    %160 = vst [vmem:[%s159] sm:%s157] %v156
    %s161 = scalar_lea.vmem [#allocation0], 40
    %v162 = vld [vmem:[%s161] sm:%s133]
    %s163 = sshllo.u32 0, 4
    %s164 = smul.addr 4, 5
    %s165 = scalar_lea.vmem %s1, %s164
    %166 = vst [vmem:[%s165] sm:%s163] %v162
    %s167 = scalar_lea.vmem [#allocation0], 48
    %v168 = vld [vmem:[%s167] sm:%s133]
    %s169 = sshllo.u32 0, 4
    %s170 = smul.addr 4, 6
    %s171 = scalar_lea.vmem %s1, %s170
    %172 = vst [vmem:[%s171] sm:%s169] %v168
    %s173 = scalar_lea.vmem [#allocation0], 56
    %v174 = vld [vmem:[%s173] sm:%s133]
    %s175 = sshllo.u32 0, 4
    %s176 = smul.addr 4, 7
    %s177 = scalar_lea.vmem %s1, %s176
    %178 = vst [vmem:[%s177] sm:%s175] %v174
    %s179 = scalar_lea.vmem [#allocation0], 64
    %v180 = vld [vmem:[%s179] sm:%s133]
    %s181 = sshllo.u32 0, 4
    %s182 = smul.addr 4, 8
    %s183 = scalar_lea.vmem %s1, %s182
    %184 = vst [vmem:[%s183] sm:%s181] %v180
    %s185 = scalar_lea.vmem [#allocation0], 72
    %v186 = vld [vmem:[%s185] sm:%s133]
    %s187 = sshllo.u32 0, 4
    %s188 = smul.addr 4, 9
    %s189 = scalar_lea.vmem %s1, %s188
    %190 = vst [vmem:[%s189] sm:%s187] %v186
    %s191 = scalar_lea.vmem [#allocation0], 80
    %v192 = vld [vmem:[%s191] sm:%s133]
    %s193 = sshllo.u32 0, 4
    %s194 = smul.addr 4, 10
    %s195 = scalar_lea.vmem %s1, %s194
    %196 = vst [vmem:[%s195] sm:%s193] %v192
    %s197 = scalar_lea.vmem [#allocation0], 88
    %v198 = vld [vmem:[%s197] sm:%s133]
    %s199 = sshllo.u32 0, 4
    %s200 = smul.addr 4, 11
    %s201 = scalar_lea.vmem %s1, %s200
    %202 = vst [vmem:[%s201] sm:%s199] %v198
    %s203 = scalar_lea.vmem [#allocation0], 96
    %v204 = vld [vmem:[%s203] sm:%s133]
    %s205 = sshllo.u32 0, 4
    %s206 = smul.addr 4, 12
    %s207 = scalar_lea.vmem %s1, %s206
    %208 = vst [vmem:[%s207] sm:%s205] %v204
    %s209 = scalar_lea.vmem [#allocation0], 104
    %v210 = vld [vmem:[%s209] sm:%s133]
    %s211 = sshllo.u32 0, 4
    %s212 = smul.addr 4, 13
    %s213 = scalar_lea.vmem %s1, %s212
    %214 = vst [vmem:[%s213] sm:%s211] %v210
    %s215 = scalar_lea.vmem [#allocation0], 112
    %v216 = vld [vmem:[%s215] sm:%s133]
    %s217 = sshllo.u32 0, 4
    %s218 = smul.addr 4, 14
    %s219 = scalar_lea.vmem %s1, %s218
    %220 = vst [vmem:[%s219] sm:%s217] %v216
    %s221 = scalar_lea.vmem [#allocation0], 120
    %v222 = vld [vmem:[%s221] sm:%s133]
    %s223 = sshllo.u32 0, 4
    %s224 = smul.addr 4, 15
    %s225 = scalar_lea.vmem %s1, %s224
    %226 = vst [vmem:[%s225] sm:%s223] %v222
    %s227 = scalar_lea.vmem [#allocation0], 128
    %v228 = vld [vmem:[%s227] sm:%s133]
    %s229 = sshllo.u32 0, 4
    %s230 = smul.addr 4, 16
    %s231 = scalar_lea.vmem %s1, %s230
    %232 = vst [vmem:[%s231] sm:%s229] %v228
    %s233 = scalar_lea.vmem [#allocation0], 136
    %v234 = vld [vmem:[%s233] sm:%s133]
    %s235 = sshllo.u32 0, 4
    %s236 = smul.addr 4, 17
    %s237 = scalar_lea.vmem %s1, %s236
    %238 = vst [vmem:[%s237] sm:%s235] %v234
    %s239 = scalar_lea.vmem [#allocation0], 144
    %v240 = vld [vmem:[%s239] sm:%s133]
    %s241 = sshllo.u32 0, 4
    %s242 = smul.addr 4, 18
    %s243 = scalar_lea.vmem %s1, %s242
    %244 = vst [vmem:[%s243] sm:%s241] %v240
    %s245 = scalar_lea.vmem [#allocation0], 152
    %v246 = vld [vmem:[%s245] sm:%s133]
    %s247 = sshllo.u32 0, 4
    %s248 = smul.addr 4, 19
    %s249 = scalar_lea.vmem %s1, %s248
    %250 = vst [vmem:[%s249] sm:%s247] %v246
    %s251 = scalar_lea.vmem [#allocation0], 160
    %v252 = vld [vmem:[%s251] sm:%s133]
    %s253 = sshllo.u32 0, 4
    %s254 = smul.addr 4, 20
    %s255 = scalar_lea.vmem %s1, %s254
    %256 = vst [vmem:[%s255] sm:%s253] %v252
    %s257 = scalar_lea.vmem [#allocation0], 168
    %v258 = vld [vmem:[%s257] sm:%s133]
    %s259 = sshllo.u32 0, 4
    %s260 = smul.addr 4, 21
    %s261 = scalar_lea.vmem %s1, %s260
    %262 = vst [vmem:[%s261] sm:%s259] %v258
    %s263 = scalar_lea.vmem [#allocation0], 176
    %v264 = vld [vmem:[%s263] sm:%s133]
    %s265 = sshllo.u32 0, 4
    %s266 = smul.addr 4, 22
    %s267 = scalar_lea.vmem %s1, %s266
    %268 = vst [vmem:[%s267] sm:%s265] %v264
    %s269 = scalar_lea.vmem [#allocation0], 184
    %v270 = vld [vmem:[%s269] sm:%s133]
    %s271 = sshllo.u32 0, 4
    %s272 = smul.addr 4, 23
    %s273 = scalar_lea.vmem %s1, %s272
    %274 = vst [vmem:[%s273] sm:%s271] %v270
    %s275 = scalar_lea.vmem [#allocation0], 192
    %v276 = vld [vmem:[%s275] sm:%s133]
    %s277 = sshllo.u32 0, 4
    %s278 = smul.addr 4, 24
    %s279 = scalar_lea.vmem %s1, %s278
    %280 = vst [vmem:[%s279] sm:%s277] %v276
    %s281 = scalar_lea.vmem [#allocation0], 200
    %v282 = vld [vmem:[%s281] sm:%s133]
    %s283 = sshllo.u32 0, 4
    %s284 = smul.addr 4, 25
    %s285 = scalar_lea.vmem %s1, %s284
    %286 = vst [vmem:[%s285] sm:%s283] %v282
    %s287 = scalar_lea.vmem [#allocation0], 208
    %v288 = vld [vmem:[%s287] sm:%s133]
    %s289 = sshllo.u32 0, 4
    %s290 = smul.addr 4, 26
    %s291 = scalar_lea.vmem %s1, %s290
    %292 = vst [vmem:[%s291] sm:%s289] %v288
    %s293 = scalar_lea.vmem [#allocation0], 216
    %v294 = vld [vmem:[%s293] sm:%s133]
    %s295 = sshllo.u32 0, 4
    %s296 = smul.addr 4, 27
    %s297 = scalar_lea.vmem %s1, %s296
    %298 = vst [vmem:[%s297] sm:%s295] %v294
    %s299 = scalar_lea.vmem [#allocation0], 224
    %v300 = vld [vmem:[%s299] sm:%s133]
    %s301 = sshllo.u32 0, 4
    %s302 = smul.addr 4, 28
    %s303 = scalar_lea.vmem %s1, %s302
    %304 = vst [vmem:[%s303] sm:%s301] %v300
    %s305 = scalar_lea.vmem [#allocation0], 232
    %v306 = vld [vmem:[%s305] sm:%s133]
    %s307 = sshllo.u32 0, 4
    %s308 = smul.addr 4, 29
    %s309 = scalar_lea.vmem %s1, %s308
    %310 = vst [vmem:[%s309] sm:%s307] %v306
    %s311 = scalar_lea.vmem [#allocation0], 240
    %v312 = vld [vmem:[%s311] sm:%s133]
    %s313 = sshllo.u32 0, 4
    %s314 = smul.addr 4, 30
    %s315 = scalar_lea.vmem %s1, %s314
    %316 = vst [vmem:[%s315] sm:%s313] %v312
    %s317 = scalar_lea.vmem [#allocation0], 248
    %v318 = vld [vmem:[%s317] sm:%s133]
    %s319 = sshllo.u32 0, 4
    %s320 = smul.addr 4, 31
    %s321 = scalar_lea.vmem %s1, %s320
    %322 = vst [vmem:[%s321] sm:%s319] %v318

// kernel: generator_forward.6
$region0: #{generator_forward.6}
  #allocation0 [shape = 'u32[]', space=smem, size = 0x4, offset = 0x4, fixed_abs, tag = 'smem constant byte address 0x4 - core index']
  #allocation1 [shape = 'u32[144,128]{1,0:T(1,128)}', space=vmem, size = 0x12000, scoped, tag = 'internal scratch']
  %s0 = inlined_call_operand.hbm [shape: f32[2,32], index: 0, kind: input, shape index: {}]
  %s1 = inlined_call_operand.hbm [shape: bf16[32,1024], index: 1, kind: input, shape index: {}]
  %s2 = inlined_call_operand.hbm [shape: f32[1,1024], index: 2, kind: input, shape index: {}]
  %s3 = inlined_call_operand.vmem [shape: f32[2,1024], index: 3, kind: output, shape index: {}]
  %s4 = sld [smem:[#allocation0]]
  $region34: #{generator_forward.6} parent=0
    _
  %s6 = ssub.s32 1, %s4
  %s7 = scalar_select 0, %s6, %s4
  $region1: #{generator_forward.6} parent=0
    #allocation2 [shape = 'u8[1024]{0}', space=vmem, size = 0x400, scoped, tag = 'input window, operand 0, single buffered']
    #allocation3 [shape = 's32[1]{0}', space=sflag, size = 0x4, scoped, tag = 'scoped memory for generator_forward.6']
    #allocation4 [shape = 'u8[65536]{0}', space=vmem, size = 0x10000, scoped, tag = 'input window, operand 1, single buffered']
    #allocation5 [shape = 's32[1]{0}', space=sflag, size = 0x4, scoped, tag = 'scoped memory for generator_forward.6']
    #allocation6 [shape = 'u8[4096]{0}', space=vmem, size = 0x1000, scoped, tag = 'input window, operand 2, single buffered']
    %8 = vsyncpa [#allocation3], 0
    %9 = vsyncpa [#allocation5], 0
    // Predicated region
    $region2: #{generator_forward.6} parent=1 // pred_check
      _
    $region3: #{generator_forward.6} parent=1 // pred_check_branch
      %11 = sbr.rel (0) target = $region5
    $region4: #{generator_forward.6} parent=1 // pred_region
      %s13 = ssub.s32 32, 32
      %14 = vsyncadd [#allocation3], %s13
      %s16 = sshll.u32 [#allocation2], 4
      %s17 = int_to_ptr.vmem [resolvable:$true] %s16
      %19 = dma.hbm_to_vmem [thread:$0]  %s0, 32, %s17, [#allocation3]
    $region5: #{generator_forward.6} parent=1 // pred_fallthru
      _
    // Predicated region
    $region6: #{generator_forward.6} parent=1 // pred_check
      _
    $region7: #{generator_forward.6} parent=1 // pred_check_branch
      %21 = sbr.rel (0) target = $region9
    $region8: #{generator_forward.6} parent=1 // pred_region
      %s23 = ssub.s32 2048, 2048
      %24 = vsyncadd [#allocation5], %s23
      %s25 = sshll.u32 [#allocation4], 4
      %s26 = int_to_ptr.vmem [resolvable:$true] %s25
      %31 = dma.hbm_to_vmem [thread:$0]  %s1, 2048, %s26, [#allocation5], 512, 512, 32
    $region9: #{generator_forward.6} parent=1 // pred_fallthru
      _
    // Predicated region
    $region10: #{generator_forward.6} parent=1 // pred_check
      _
    $region11: #{generator_forward.6} parent=1 // pred_check_branch
      %33 = sbr.rel (0) target = $region13
    $region12: #{generator_forward.6} parent=1 // pred_region
      %s35 = ssub.s32 128, 128
      %36 = vsyncadd [#allocation5], %s35
      %s38 = sshll.u32 [#allocation6], 4
      %s39 = int_to_ptr.vmem [resolvable:$true] %s38
      %41 = dma.hbm_to_vmem [thread:$0]  %s2, 128, %s39, [#allocation5]
    $region13: #{generator_forward.6} parent=1 // pred_fallthru
      _
    // Predicated region
    $region14: #{generator_forward.6} parent=1 // pred_check
      _
    $region15: #{generator_forward.6} parent=1 // pred_check_branch
      %43 = sbr.rel (0) target = $region17
    $region16: #{generator_forward.6} parent=1 // pred_region
      %44 = dma.done [#allocation3], 32
    $region17: #{generator_forward.6} parent=1 // pred_fallthru
      _
    // Predicated region
    $region18: #{generator_forward.6} parent=1 // pred_check
      _
    $region19: #{generator_forward.6} parent=1 // pred_check_branch
      %46 = sbr.rel (0) target = $region21
    $region20: #{generator_forward.6} parent=1 // pred_region
      %47 = dma.done [#allocation5], 2048
    $region21: #{generator_forward.6} parent=1 // pred_fallthru
      _
    // Predicated region
    $region22: #{generator_forward.6} parent=1 // pred_check
      _
    $region23: #{generator_forward.6} parent=1 // pred_check_branch
      %49 = sbr.rel (0) target = $region25
    $region24: #{generator_forward.6} parent=1 // pred_region
      %50 = dma.done [#allocation5], 128
    $region25: #{generator_forward.6} parent=1 // pred_fallthru
      _
    %v52 = vld [vmem:[#allocation2] sm:$0x3]
    %v53 = vpack.c.bf16 %v52, %v52
    %v54 = vld [vmem:[#allocation4] sm:$0xff]
    %v55 = vld [vmem:[#allocation4 + $0x8] sm:$0xff]
    %v56 = vld [vmem:[#allocation4 + $0x10] sm:$0xff]
    %v57 = vld [vmem:[#allocation4 + $0x18] sm:$0xff]
    %v58 = vld [vmem:[#allocation4 + $0x20] sm:$0xff]
    %v59 = vld [vmem:[#allocation4 + $0x28] sm:$0xff]
    %v60 = vld [vmem:[#allocation4 + $0x30] sm:$0xff]
    %v61 = vld [vmem:[#allocation4 + $0x38] sm:$0xff]
    %v62 = vld [vmem:[#allocation4 + $0x40] sm:$0xff]
    %v63 = vld [vmem:[#allocation4 + $0x48] sm:$0xff]
    %v64 = vld [vmem:[#allocation4 + $0x50] sm:$0xff]
    %v65 = vld [vmem:[#allocation4 + $0x58] sm:$0xff]
    %v66 = vld [vmem:[#allocation4 + $0x60] sm:$0xff]
    %v67 = vld [vmem:[#allocation4 + $0x68] sm:$0xff]
    %v68 = vld [vmem:[#allocation4 + $0x70] sm:$0xff]
    %v69 = vld [vmem:[#allocation4 + $0x78] sm:$0xff]
    %v70 = vld [vmem:[#allocation6] sm:$0xff]
    %v72 = vlaneseq
    %v73 = vshrl.u32 %v72, 7
    %v74 = vsub.s32 0, %v73
    %v75 = vrot.slane %v70, %v74
    %v76 = vlaneseq
    %v77 = vshrl.u32 %v76, 7
    %v78 = vsub.s32 1, %v77
    %v79 = vrot.slane %v70, %v78
    %v80 = vlaneseq
    %v81 = vshrl.u32 %v80, 7
    %v82 = vsub.s32 2, %v81
    %v83 = vrot.slane %v70, %v82
    %v84 = vlaneseq
    %v85 = vshrl.u32 %v84, 7
    %v86 = vsub.s32 3, %v85
    %v87 = vrot.slane %v70, %v86
    %v88 = vlaneseq
    %v89 = vshrl.u32 %v88, 7
    %v90 = vsub.s32 4, %v89
    %v91 = vrot.slane %v70, %v90
    %v92 = vlaneseq
    %v93 = vshrl.u32 %v92, 7
    %v94 = vsub.s32 5, %v93
    %v95 = vrot.slane %v70, %v94
    %v96 = vlaneseq
    %v97 = vshrl.u32 %v96, 7
    %v98 = vsub.s32 6, %v97
    %v99 = vrot.slane %v70, %v98
    %v100 = vlaneseq
    %v101 = vshrl.u32 %v100, 7
    %v102 = vsub.s32 7, %v101
    %v103 = vrot.slane %v70, %v102
    %v128 = vunpack.c.l.b16 %v54
    %v129 = vunpack.c.h.b16 %v54
    %v130 = vunpack.c.l.b16 %v55
    %v131 = vunpack.c.h.b16 %v55
    %v132 = vunpack.c.l.b16 %v56
    %v133 = vunpack.c.h.b16 %v56
    %v134 = vunpack.c.l.b16 %v57
    %v135 = vunpack.c.h.b16 %v57
    %v136 = vunpack.c.l.b16 %v58
    %v137 = vunpack.c.h.b16 %v58
    %v138 = vunpack.c.l.b16 %v59
    %v139 = vunpack.c.h.b16 %v59
    %v140 = vunpack.c.l.b16 %v60
    %v141 = vunpack.c.h.b16 %v60
    %v142 = vunpack.c.l.b16 %v61
    %v143 = vunpack.c.h.b16 %v61
    %v144 = vunpack.c.l.b16 %v62
    %v145 = vunpack.c.h.b16 %v62
    %v146 = vunpack.c.l.b16 %v63
    %v147 = vunpack.c.h.b16 %v63
    %v148 = vunpack.c.l.b16 %v64
    %v149 = vunpack.c.h.b16 %v64
    %v150 = vunpack.c.l.b16 %v65
    %v151 = vunpack.c.h.b16 %v65
    %v152 = vunpack.c.l.b16 %v66
    %v153 = vunpack.c.h.b16 %v66
    %v154 = vunpack.c.l.b16 %v67
    %v155 = vunpack.c.h.b16 %v67
    %v156 = vunpack.c.l.b16 %v68
    %v157 = vunpack.c.h.b16 %v68
    %v158 = vunpack.c.l.b16 %v69
    %v159 = vunpack.c.h.b16 %v69
    %v160 = vpack.c.b16 %v136, %v128
    %v161 = vpack.c.b16 %v137, %v129
    %v162 = vpack.c.b16 %v138, %v130
    %v163 = vpack.c.b16 %v139, %v131
    %v164 = vpack.c.b16 %v140, %v132
    %v165 = vpack.c.b16 %v141, %v133
    %v166 = vpack.c.b16 %v142, %v134
    %v167 = vpack.c.b16 %v143, %v135
    %v168 = vpack.c.b16 %v152, %v144
    %v169 = vpack.c.b16 %v153, %v145
    %v170 = vpack.c.b16 %v154, %v146
    %v171 = vpack.c.b16 %v155, %v147
    %v172 = vpack.c.b16 %v156, %v148
    %v173 = vpack.c.b16 %v157, %v149
    %v174 = vpack.c.b16 %v158, %v150
    %v175 = vpack.c.b16 %v159, %v151
    %vm192 = vcmask 261120
    %v194 = vsel %vm192, %v53, 0
    %196 = vmatprep.subr.bf16.mxu0 %v161
    %197 = vmatpush1.bf16.msra.mxu0 %v160
    %198 = vmatprep.subr.bf16.mxu0 %v169
    %199 = vmatpush1.bf16.msra.mxu0 %v168
    %200 = vmatprep.subr.bf16.mxu0 0
    %201 = vmatpush1.bf16.msra.mxu0 0
    %202 = vmatprep.subr.bf16.mxu0 0
    %203 = vmatpush1.bf16.msra.mxu0 0
    %204 = vmatprep.subr.bf16.mxu0 0
    %205 = vmatpush1.bf16.msra.mxu0 0
    %206 = vmatprep.subr.bf16.mxu0 0
    %207 = vmatpush1.bf16.msra.mxu0 0
    %208 = vmatprep.subr.bf16.mxu0 0
    %209 = vmatpush1.bf16.msra.mxu0 0
    %210 = vmatprep.subr.bf16.mxu0 0
    %211 = vmatpush1.bf16.msra.mxu0 0
    %212 = vmatprep.subr.bf16.mxu0 0
    %213 = vmatpush1.bf16.msra.mxu0 0
    %214 = vmatprep.subr.bf16.mxu0 0
    %215 = vmatpush1.bf16.msra.mxu0 0
    %216 = vmatprep.subr.bf16.mxu0 0
    %217 = vmatpush1.bf16.msra.mxu0 0
    %218 = vmatprep.subr.bf16.mxu0 0
    %219 = vmatpush1.bf16.msra.mxu0 0
    %220 = vmatprep.subr.bf16.mxu0 0
    %221 = vmatpush1.bf16.msra.mxu0 0
    %222 = vmatprep.subr.bf16.mxu0 0
    %223 = vmatpush1.bf16.msra.mxu0 0
    %224 = vmatprep.subr.bf16.mxu0 0
    %225 = vmatpush1.bf16.msra.mxu0 0
    %226 = vmatprep.subr.bf16.mxu0 0
    %227 = vmatpush1.bf16.msra.mxu0 0
    %228 = vmatprep.mubr.bf16.mxu0 0
    %229 = vmatmul.mubr.bf16.gmra.mrb[0].mxu0 %v194
    %v230 = vpop.f32.mrb[0].mxu0
    %v231 = vadd.f32 %v75, %v230
    %v232 = vpop.f32.mrb[0].mxu0
    %v233 = vadd.f32 %v79, %v232
    %v234 = vpop.f32.mrb[0].mxu0
    %v235 = vpop.f32.mrb[0].mxu0
    %236 = vdwg.mxu0
    %237 = vmatprep.subr.bf16.mxu0 %v163
    %238 = vmatpush1.bf16.msra.mxu0 %v162
    %239 = vmatprep.subr.bf16.mxu0 %v171
    %240 = vmatpush1.bf16.msra.mxu0 %v170
    %241 = vmatprep.subr.bf16.mxu0 0
    %242 = vmatpush1.bf16.msra.mxu0 0
    %243 = vmatprep.subr.bf16.mxu0 0
    %244 = vmatpush1.bf16.msra.mxu0 0
    %245 = vmatprep.subr.bf16.mxu0 0
    %246 = vmatpush1.bf16.msra.mxu0 0
    %247 = vmatprep.subr.bf16.mxu0 0
    %248 = vmatpush1.bf16.msra.mxu0 0
    %249 = vmatprep.subr.bf16.mxu0 0
    %250 = vmatpush1.bf16.msra.mxu0 0
    %251 = vmatprep.subr.bf16.mxu0 0
    %252 = vmatpush1.bf16.msra.mxu0 0
    %253 = vmatprep.subr.bf16.mxu0 0
    %254 = vmatpush1.bf16.msra.mxu0 0
    %255 = vmatprep.subr.bf16.mxu0 0
    %256 = vmatpush1.bf16.msra.mxu0 0
    %257 = vmatprep.subr.bf16.mxu0 0
    %258 = vmatpush1.bf16.msra.mxu0 0
    %259 = vmatprep.subr.bf16.mxu0 0
    %260 = vmatpush1.bf16.msra.mxu0 0
    %261 = vmatprep.subr.bf16.mxu0 0
    %262 = vmatpush1.bf16.msra.mxu0 0
    %263 = vmatprep.subr.bf16.mxu0 0
    %264 = vmatpush1.bf16.msra.mxu0 0
    %265 = vmatprep.subr.bf16.mxu0 0
    %266 = vmatpush1.bf16.msra.mxu0 0
    %267 = vmatprep.subr.bf16.mxu0 0
    %268 = vmatpush1.bf16.msra.mxu0 0
    %269 = vmatprep.mubr.bf16.mxu0 0
    %270 = vmatmul.mubr.bf16.gmra.mrb[0].mxu0 %v194
    %v271 = vpop.f32.mrb[0].mxu0
    %v272 = vadd.f32 %v83, %v271
    %v273 = vpop.f32.mrb[0].mxu0
    %v274 = vadd.f32 %v87, %v273
    %v275 = vpop.f32.mrb[0].mxu0
    %v276 = vpop.f32.mrb[0].mxu0
    %277 = vdwg.mxu0
    %278 = vmatprep.subr.bf16.mxu0 %v165
    %279 = vmatpush1.bf16.msra.mxu0 %v164
    %280 = vmatprep.subr.bf16.mxu0 %v173
    %281 = vmatpush1.bf16.msra.mxu0 %v172
    %282 = vmatprep.subr.bf16.mxu0 0
    %283 = vmatpush1.bf16.msra.mxu0 0
    %284 = vmatprep.subr.bf16.mxu0 0
    %285 = vmatpush1.bf16.msra.mxu0 0
    %286 = vmatprep.subr.bf16.mxu0 0
    %287 = vmatpush1.bf16.msra.mxu0 0
    %288 = vmatprep.subr.bf16.mxu0 0
    %289 = vmatpush1.bf16.msra.mxu0 0
    %290 = vmatprep.subr.bf16.mxu0 0
    %291 = vmatpush1.bf16.msra.mxu0 0
    %292 = vmatprep.subr.bf16.mxu0 0
    %293 = vmatpush1.bf16.msra.mxu0 0
    %294 = vmatprep.subr.bf16.mxu0 0
    %295 = vmatpush1.bf16.msra.mxu0 0
    %296 = vmatprep.subr.bf16.mxu0 0
    %297 = vmatpush1.bf16.msra.mxu0 0
    %298 = vmatprep.subr.bf16.mxu0 0
    %299 = vmatpush1.bf16.msra.mxu0 0
    %300 = vmatprep.subr.bf16.mxu0 0
    %301 = vmatpush1.bf16.msra.mxu0 0
    %302 = vmatprep.subr.bf16.mxu0 0
    %303 = vmatpush1.bf16.msra.mxu0 0
    %304 = vmatprep.subr.bf16.mxu0 0
    %305 = vmatpush1.bf16.msra.mxu0 0
    %306 = vmatprep.subr.bf16.mxu0 0
    %307 = vmatpush1.bf16.msra.mxu0 0
    %308 = vmatprep.subr.bf16.mxu0 0
    %309 = vmatpush1.bf16.msra.mxu0 0
    %310 = vmatprep.mubr.bf16.mxu0 0
    %311 = vmatmul.mubr.bf16.gmra.mrb[0].mxu0 %v194
    %v312 = vpop.f32.mrb[0].mxu0
    %v313 = vadd.f32 %v91, %v312
    %v314 = vpop.f32.mrb[0].mxu0
    %v315 = vadd.f32 %v95, %v314
    %v316 = vpop.f32.mrb[0].mxu0
    %v317 = vpop.f32.mrb[0].mxu0
    %318 = vdwg.mxu0
    %319 = vmatprep.subr.bf16.mxu0 %v167
    %320 = vmatpush1.bf16.msra.mxu0 %v166
    %321 = vmatprep.subr.bf16.mxu0 %v175
    %322 = vmatpush1.bf16.msra.mxu0 %v174
    %323 = vmatprep.subr.bf16.mxu0 0
    %324 = vmatpush1.bf16.msra.mxu0 0
    %325 = vmatprep.subr.bf16.mxu0 0
    %326 = vmatpush1.bf16.msra.mxu0 0
    %327 = vmatprep.subr.bf16.mxu0 0
    %328 = vmatpush1.bf16.msra.mxu0 0
    %329 = vmatprep.subr.bf16.mxu0 0
    %330 = vmatpush1.bf16.msra.mxu0 0
    %331 = vmatprep.subr.bf16.mxu0 0
    %332 = vmatpush1.bf16.msra.mxu0 0
    %333 = vmatprep.subr.bf16.mxu0 0
    %334 = vmatpush1.bf16.msra.mxu0 0
    %335 = vmatprep.subr.bf16.mxu0 0
    %336 = vmatpush1.bf16.msra.mxu0 0
    %337 = vmatprep.subr.bf16.mxu0 0
    %338 = vmatpush1.bf16.msra.mxu0 0
    %339 = vmatprep.subr.bf16.mxu0 0
    %340 = vmatpush1.bf16.msra.mxu0 0
    %341 = vmatprep.subr.bf16.mxu0 0
    %342 = vmatpush1.bf16.msra.mxu0 0
    %343 = vmatprep.subr.bf16.mxu0 0
    %344 = vmatpush1.bf16.msra.mxu0 0
    %345 = vmatprep.subr.bf16.mxu0 0
    %346 = vmatpush1.bf16.msra.mxu0 0
    %347 = vmatprep.subr.bf16.mxu0 0
    %348 = vmatpush1.bf16.msra.mxu0 0
    %349 = vmatprep.subr.bf16.mxu0 0
    %350 = vmatpush1.bf16.msra.mxu0 0
    %351 = vmatprep.mubr.bf16.mxu0 0
    %352 = vmatmul.mubr.bf16.gmra.mrb[0].mxu0 %v194
    %v353 = vpop.f32.mrb[0].mxu0
    %v354 = vadd.f32 %v99, %v353
    %v355 = vpop.f32.mrb[0].mxu0
    %v356 = vadd.f32 %v103, %v355
    %v357 = vpop.f32.mrb[0].mxu0
    %v358 = vpop.f32.mrb[0].mxu0
    %359 = vdwg.mxu0
    %v368 = vcombine.low %v231, %v233
    %v369 = vcombine.low %v272, %v274
    %v371 = vunpack.c.l.s4 1983009808
    %v372 = vunpack.c.0.s8 %v371
    %v373 = vlaneseq
    %v374 = vshrl.u32 %v373, 7
    %v375 = vsub.s32 %v372, %v374
    %v376 = vrot.slane %v368, %v375
    %v378 = vunpack.c.l.s4 1983009808
    %v379 = vunpack.c.0.s8 %v378
    %v380 = vlaneseq
    %v381 = vshrl.u32 %v380, 7
    %v382 = vsub.s32 %v379, %v381
    %v383 = vrot.slane %v369, %v382
    %v384 = vcombine.low %v376, %v383
    %v385 = vcombine.low %v313, %v315
    %v386 = vcombine.low %v354, %v356
    %v388 = vunpack.c.l.s4 1983009808
    %v389 = vunpack.c.0.s8 %v388
    %v390 = vlaneseq
    %v391 = vshrl.u32 %v390, 7
    %v392 = vsub.s32 %v389, %v391
    %v393 = vrot.slane %v385, %v392
    %v395 = vunpack.c.l.s4 1983009808
    %v396 = vunpack.c.0.s8 %v395
    %v397 = vlaneseq
    %v398 = vshrl.u32 %v397, 7
    %v399 = vsub.s32 %v396, %v398
    %v400 = vrot.slane %v386, %v399
    %v401 = vcombine.low %v393, %v400
    %404 = vst [vmem:[%s3] sm:$0xff] %v384
    %405 = vst [vmem:[%s3 + $0x8] sm:$0xff] %v401
    // Predicated region
    $region26: #{generator_forward.6} parent=1 // pred_check
      _
    $region27: #{generator_forward.6} parent=1 // pred_check_branch
      %407 = sbr.rel (0) target = $region29
    $region28: #{generator_forward.6} parent=1 // pred_region
      _
    $region29: #{generator_forward.6} parent=1 // pred_fallthru
      _
    // Predicated region
    $region30: #{generator_forward.6} parent=1 // pred_check
      _
    $region31: #{generator_forward.6} parent=1 // pred_check_branch
      %409 = sbr.rel (0) target = $region33
    $region32: #{generator_forward.6} parent=1 // pred_region
      _
    $region33: #{generator_forward.6} parent=1 // pred_fallthru
      _
    %410 = vsyncpa [#allocation3], 1
    %411 = vsyncpa [#allocation5], 1

// kernel: generator_forward.7
$region0: #{generator_forward.7}
  #allocation0 [shape = 'u32[]', space=smem, size = 0x4, offset = 0x4, fixed_abs, tag = 'smem constant byte address 0x4 - core index']
  #allocation1 [shape = 'u32[144,128]{1,0:T(1,128)}', space=vmem, size = 0x12000, scoped, tag = 'internal scratch']
  %s0 = inlined_call_operand.vmem [shape: bf16[512,64], index: 0, kind: input, shape index: {}]
  %s1 = inlined_call_operand.vmem [shape: f32[64,32], index: 1, kind: input, shape index: {}]
  %s2 = inlined_call_operand.vmem [shape: f32[512,32], index: 2, kind: output, shape index: {}]
  %s3 = sld [smem:[#allocation0]]
  $region18: #{generator_forward.7} parent=0
    _
  %s5 = ssub.s32 1, %s3
  %s6 = scalar_select 0, %s5, %s3
  // Predicated region
  $region2: #{generator_forward.7} parent=0 // pred_check
    _
  $region3: #{generator_forward.7} parent=0 // pred_check_branch
    %8 = sbr.rel (0) target = $region5
  $region4: #{generator_forward.7} parent=0 // pred_region
    _
  $region5: #{generator_forward.7} parent=0 // pred_fallthru
    _
  // Predicated region
  $region6: #{generator_forward.7} parent=0 // pred_check
    _
  $region7: #{generator_forward.7} parent=0 // pred_check_branch
    %10 = sbr.rel (0) target = $region9
  $region8: #{generator_forward.7} parent=0 // pred_region
    _
  $region9: #{generator_forward.7} parent=0 // pred_fallthru
    _
  %v12 = vld [vmem:[%s0] sm:$0xf]
  %v13 = vld [vmem:[%s0 + $0x4] sm:$0xf]
  %v14 = vld [vmem:[%s0 + $0x8] sm:$0xf]
  %v15 = vld [vmem:[%s0 + $0xc] sm:$0xf]
  %v16 = vld [vmem:[%s0 + $0x10] sm:$0xf]
  %v17 = vld [vmem:[%s0 + $0x14] sm:$0xf]
  %v18 = vld [vmem:[%s0 + $0x18] sm:$0xf]
  %v19 = vld [vmem:[%s0 + $0x1c] sm:$0xf]
  %v20 = vld [vmem:[%s0 + $0x20] sm:$0xf]
  %v21 = vld [vmem:[%s0 + $0x24] sm:$0xf]
  %v22 = vld [vmem:[%s0 + $0x28] sm:$0xf]
  %v23 = vld [vmem:[%s0 + $0x2c] sm:$0xf]
  %v24 = vld [vmem:[%s0 + $0x30] sm:$0xf]
  %v25 = vld [vmem:[%s0 + $0x34] sm:$0xf]
  %v26 = vld [vmem:[%s0 + $0x38] sm:$0xf]
  %v27 = vld [vmem:[%s0 + $0x3c] sm:$0xf]
  %v28 = vld [vmem:[%s0 + $0x40] sm:$0xf]
  %v29 = vld [vmem:[%s0 + $0x44] sm:$0xf]
  %v30 = vld [vmem:[%s0 + $0x48] sm:$0xf]
  %v31 = vld [vmem:[%s0 + $0x4c] sm:$0xf]
  %v32 = vld [vmem:[%s0 + $0x50] sm:$0xf]
  %v33 = vld [vmem:[%s0 + $0x54] sm:$0xf]
  %v34 = vld [vmem:[%s0 + $0x58] sm:$0xf]
  %v35 = vld [vmem:[%s0 + $0x5c] sm:$0xf]
  %v36 = vld [vmem:[%s0 + $0x60] sm:$0xf]
  %v37 = vld [vmem:[%s0 + $0x64] sm:$0xf]
  %v38 = vld [vmem:[%s0 + $0x68] sm:$0xf]
  %v39 = vld [vmem:[%s0 + $0x6c] sm:$0xf]
  %v40 = vld [vmem:[%s0 + $0x70] sm:$0xf]
  %v41 = vld [vmem:[%s0 + $0x74] sm:$0xf]
  %v42 = vld [vmem:[%s0 + $0x78] sm:$0xf]
  %v43 = vld [vmem:[%s0 + $0x7c] sm:$0xf]
  %v44 = vld [vmem:[%s0 + $0x80] sm:$0xf]
  %v45 = vld [vmem:[%s0 + $0x84] sm:$0xf]
  %v46 = vld [vmem:[%s0 + $0x88] sm:$0xf]
  %v47 = vld [vmem:[%s0 + $0x8c] sm:$0xf]
  %v48 = vld [vmem:[%s0 + $0x90] sm:$0xf]
  %v49 = vld [vmem:[%s0 + $0x94] sm:$0xf]
  %v50 = vld [vmem:[%s0 + $0x98] sm:$0xf]
  %v51 = vld [vmem:[%s0 + $0x9c] sm:$0xf]
  %v52 = vld [vmem:[%s0 + $0xa0] sm:$0xf]
  %v53 = vld [vmem:[%s0 + $0xa4] sm:$0xf]
  %v54 = vld [vmem:[%s0 + $0xa8] sm:$0xf]
  %v55 = vld [vmem:[%s0 + $0xac] sm:$0xf]
  %v56 = vld [vmem:[%s0 + $0xb0] sm:$0xf]
  %v57 = vld [vmem:[%s0 + $0xb4] sm:$0xf]
  %v58 = vld [vmem:[%s0 + $0xb8] sm:$0xf]
  %v59 = vld [vmem:[%s0 + $0xbc] sm:$0xf]
  %v60 = vld [vmem:[%s0 + $0xc0] sm:$0xf]
  %v61 = vld [vmem:[%s0 + $0xc4] sm:$0xf]
  %v62 = vld [vmem:[%s0 + $0xc8] sm:$0xf]
  %v63 = vld [vmem:[%s0 + $0xcc] sm:$0xf]
  %v64 = vld [vmem:[%s0 + $0xd0] sm:$0xf]
  %v65 = vld [vmem:[%s0 + $0xd4] sm:$0xf]
  %v66 = vld [vmem:[%s0 + $0xd8] sm:$0xf]
  %v67 = vld [vmem:[%s0 + $0xdc] sm:$0xf]
  %v68 = vld [vmem:[%s0 + $0xe0] sm:$0xf]
  %v69 = vld [vmem:[%s0 + $0xe4] sm:$0xf]
  %v70 = vld [vmem:[%s0 + $0xe8] sm:$0xf]
  %v71 = vld [vmem:[%s0 + $0xec] sm:$0xf]
  %v72 = vld [vmem:[%s0 + $0xf0] sm:$0xf]
  %v73 = vld [vmem:[%s0 + $0xf4] sm:$0xf]
  %v74 = vld [vmem:[%s0 + $0xf8] sm:$0xf]
  %v75 = vld [vmem:[%s0 + $0xfc] sm:$0xf]
  %v76 = vld [vmem:[%s1] sm:$0xff]
  %v77 = vld [vmem:[%s1 + $0x8] sm:$0xff]
  %v78 = vld [vmem:[%s1 + $0x10] sm:$0xff]
  %v79 = vld [vmem:[%s1 + $0x18] sm:$0xff]
  %v80 = vld [vmem:[%s1 + $0x20] sm:$0xff]
  %v81 = vld [vmem:[%s1 + $0x28] sm:$0xff]
  %v82 = vld [vmem:[%s1 + $0x30] sm:$0xff]
  %v83 = vld [vmem:[%s1 + $0x38] sm:$0xff]
  %v84 = vpack.c.bf16 %v77, %v76
  %v85 = vpack.c.bf16 %v79, %v78
  %v86 = vpack.c.bf16 %v81, %v80
  %v87 = vpack.c.bf16 %v83, %v82
  %v152 = vunpack.c.l.b16 %v12
  %v153 = vunpack.c.l.b16 %v13
  %v154 = vunpack.c.l.b16 %v14
  %v155 = vunpack.c.l.b16 %v15
  %v156 = vunpack.c.l.b16 %v16
  %v157 = vunpack.c.l.b16 %v17
  %v158 = vunpack.c.l.b16 %v18
  %v159 = vunpack.c.l.b16 %v19
  %v160 = vunpack.c.l.b16 %v20
  %v161 = vunpack.c.l.b16 %v21
  %v162 = vunpack.c.l.b16 %v22
  %v163 = vunpack.c.l.b16 %v23
  %v164 = vunpack.c.l.b16 %v24
  %v165 = vunpack.c.l.b16 %v25
  %v166 = vunpack.c.l.b16 %v26
  %v167 = vunpack.c.l.b16 %v27
  %v168 = vunpack.c.l.b16 %v28
  %v169 = vunpack.c.l.b16 %v29
  %v170 = vunpack.c.l.b16 %v30
  %v171 = vunpack.c.l.b16 %v31
  %v172 = vunpack.c.l.b16 %v32
  %v173 = vunpack.c.l.b16 %v33
  %v174 = vunpack.c.l.b16 %v34
  %v175 = vunpack.c.l.b16 %v35
  %v176 = vunpack.c.l.b16 %v36
  %v177 = vunpack.c.l.b16 %v37
  %v178 = vunpack.c.l.b16 %v38
  %v179 = vunpack.c.l.b16 %v39
  %v180 = vunpack.c.l.b16 %v40
  %v181 = vunpack.c.l.b16 %v41
  %v182 = vunpack.c.l.b16 %v42
  %v183 = vunpack.c.l.b16 %v43
  %v184 = vunpack.c.l.b16 %v44
  %v185 = vunpack.c.l.b16 %v45
  %v186 = vunpack.c.l.b16 %v46
  %v187 = vunpack.c.l.b16 %v47
  %v188 = vunpack.c.l.b16 %v48
  %v189 = vunpack.c.l.b16 %v49
  %v190 = vunpack.c.l.b16 %v50
  %v191 = vunpack.c.l.b16 %v51
  %v192 = vunpack.c.l.b16 %v52
  %v193 = vunpack.c.l.b16 %v53
  %v194 = vunpack.c.l.b16 %v54
  %v195 = vunpack.c.l.b16 %v55
  %v196 = vunpack.c.l.b16 %v56
  %v197 = vunpack.c.l.b16 %v57
  %v198 = vunpack.c.l.b16 %v58
  %v199 = vunpack.c.l.b16 %v59
  %v200 = vunpack.c.l.b16 %v60
  %v201 = vunpack.c.l.b16 %v61
  %v202 = vunpack.c.l.b16 %v62
  %v203 = vunpack.c.l.b16 %v63
  %v204 = vunpack.c.l.b16 %v64
  %v205 = vunpack.c.l.b16 %v65
  %v206 = vunpack.c.l.b16 %v66
  %v207 = vunpack.c.l.b16 %v67
  %v208 = vunpack.c.l.b16 %v68
  %v209 = vunpack.c.l.b16 %v69
  %v210 = vunpack.c.l.b16 %v70
  %v211 = vunpack.c.l.b16 %v71
  %v212 = vunpack.c.l.b16 %v72
  %v213 = vunpack.c.l.b16 %v73
  %v214 = vunpack.c.l.b16 %v74
  %v215 = vunpack.c.l.b16 %v75
  %v216 = vpack.c.b16 %v153, %v152
  %v217 = vpack.c.b16 %v155, %v154
  %v218 = vpack.c.b16 %v157, %v156
  %v219 = vpack.c.b16 %v159, %v158
  %v220 = vpack.c.b16 %v161, %v160
  %v221 = vpack.c.b16 %v163, %v162
  %v222 = vpack.c.b16 %v165, %v164
  %v223 = vpack.c.b16 %v167, %v166
  %v224 = vpack.c.b16 %v169, %v168
  %v225 = vpack.c.b16 %v171, %v170
  %v226 = vpack.c.b16 %v173, %v172
  %v227 = vpack.c.b16 %v175, %v174
  %v228 = vpack.c.b16 %v177, %v176
  %v229 = vpack.c.b16 %v179, %v178
  %v230 = vpack.c.b16 %v181, %v180
  %v231 = vpack.c.b16 %v183, %v182
  %v232 = vpack.c.b16 %v185, %v184
  %v233 = vpack.c.b16 %v187, %v186
  %v234 = vpack.c.b16 %v189, %v188
  %v235 = vpack.c.b16 %v191, %v190
  %v236 = vpack.c.b16 %v193, %v192
  %v237 = vpack.c.b16 %v195, %v194
  %v238 = vpack.c.b16 %v197, %v196
  %v239 = vpack.c.b16 %v199, %v198
  %v240 = vpack.c.b16 %v201, %v200
  %v241 = vpack.c.b16 %v203, %v202
  %v242 = vpack.c.b16 %v205, %v204
  %v243 = vpack.c.b16 %v207, %v206
  %v244 = vpack.c.b16 %v209, %v208
  %v245 = vpack.c.b16 %v211, %v210
  %v246 = vpack.c.b16 %v213, %v212
  %v247 = vpack.c.b16 %v215, %v214
  %vm248 = vcmask 523264
  %v250 = vsel %vm248, %v216, 0
  %v253 = vsel %vm248, %v217, 0
  %v256 = vsel %vm248, %v218, 0
  %v259 = vsel %vm248, %v219, 0
  %v262 = vsel %vm248, %v220, 0
  %v265 = vsel %vm248, %v221, 0
  %v268 = vsel %vm248, %v222, 0
  %v271 = vsel %vm248, %v223, 0
  %v274 = vsel %vm248, %v224, 0
  %v277 = vsel %vm248, %v225, 0
  %v280 = vsel %vm248, %v226, 0
  %v283 = vsel %vm248, %v227, 0
  %v286 = vsel %vm248, %v228, 0
  %v289 = vsel %vm248, %v229, 0
  %v292 = vsel %vm248, %v230, 0
  %v295 = vsel %vm248, %v231, 0
  %v298 = vsel %vm248, %v232, 0
  %v301 = vsel %vm248, %v233, 0
  %v304 = vsel %vm248, %v234, 0
  %v307 = vsel %vm248, %v235, 0
  %v310 = vsel %vm248, %v236, 0
  %v313 = vsel %vm248, %v237, 0
  %v316 = vsel %vm248, %v238, 0
  %v319 = vsel %vm248, %v239, 0
  %v322 = vsel %vm248, %v240, 0
  %v325 = vsel %vm248, %v241, 0
  %v328 = vsel %vm248, %v242, 0
  %v331 = vsel %vm248, %v243, 0
  %v334 = vsel %vm248, %v244, 0
  %v337 = vsel %vm248, %v245, 0
  %v340 = vsel %vm248, %v246, 0
  %v343 = vsel %vm248, %v247, 0
  %345 = vmatprep.subr.bf16.mxu0 0
  %346 = vmatpush1.bf16.msra.mxu0 %v84
  %347 = vmatprep.subr.bf16.mxu0 0
  %348 = vmatpush1.bf16.msra.mxu0 %v85
  %349 = vmatprep.subr.bf16.mxu0 0
  %350 = vmatpush1.bf16.msra.mxu0 %v86
  %351 = vmatprep.subr.bf16.mxu0 0
  %352 = vmatpush1.bf16.msra.mxu0 %v87
  %353 = vmatprep.subr.bf16.mxu0 0
  %354 = vmatpush1.bf16.msra.mxu0 0
  %355 = vmatprep.subr.bf16.mxu0 0
  %356 = vmatpush1.bf16.msra.mxu0 0
  %357 = vmatprep.subr.bf16.mxu0 0
  %358 = vmatpush1.bf16.msra.mxu0 0
  %359 = vmatprep.subr.bf16.mxu0 0
  %360 = vmatpush1.bf16.msra.mxu0 0
  %361 = vmatprep.subr.bf16.mxu0 0
  %362 = vmatpush1.bf16.msra.mxu0 0
  %363 = vmatprep.subr.bf16.mxu0 0
  %364 = vmatpush1.bf16.msra.mxu0 0
  %365 = vmatprep.subr.bf16.mxu0 0
  %366 = vmatpush1.bf16.msra.mxu0 0
  %367 = vmatprep.subr.bf16.mxu0 0
  %368 = vmatpush1.bf16.msra.mxu0 0
  %369 = vmatprep.subr.bf16.mxu0 0
  %370 = vmatpush1.bf16.msra.mxu0 0
  %371 = vmatprep.subr.bf16.mxu0 0
  %372 = vmatpush1.bf16.msra.mxu0 0
  %373 = vmatprep.subr.bf16.mxu0 0
  %374 = vmatpush1.bf16.msra.mxu0 0
  %375 = vmatprep.subr.bf16.mxu0 0
  %376 = vmatpush1.bf16.msra.mxu0 0
  %377 = vmatprep.mubr.bf16.mxu0 0
  %378 = vmatmul.mubr.bf16.gmra.mrb[0].mxu0 %v250
  %v379 = vpop.f32.mrb[0].mxu0
  %v380 = vadd.f32 0.0, %v379
  %v381 = vpop.f32.mrb[0].mxu0
  %v382 = vpop.f32.mrb[0].mxu0
  %v383 = vadd.f32 0.0, %v382
  %v384 = vpop.f32.mrb[0].mxu0
  %385 = vmatprep.mubr.bf16.mxu0 0
  %386 = vmatmul.mubr.bf16.gmra.mrb[0].mxu0 %v253
  %v387 = vpop.f32.mrb[0].mxu0
  %v388 = vadd.f32 0.0, %v387
  %v389 = vpop.f32.mrb[0].mxu0
  %v390 = vpop.f32.mrb[0].mxu0
  %v391 = vadd.f32 0.0, %v390
  %v392 = vpop.f32.mrb[0].mxu0
  %393 = vmatprep.mubr.bf16.mxu0 0
  %394 = vmatmul.mubr.bf16.gmra.mrb[0].mxu0 %v256
  %v395 = vpop.f32.mrb[0].mxu0
  %v396 = vadd.f32 0.0, %v395
  %v397 = vpop.f32.mrb[0].mxu0
  %v398 = vpop.f32.mrb[0].mxu0
  %v399 = vadd.f32 0.0, %v398
  %v400 = vpop.f32.mrb[0].mxu0
  %401 = vmatprep.mubr.bf16.mxu0 0
  %402 = vmatmul.mubr.bf16.gmra.mrb[0].mxu0 %v259
  %v403 = vpop.f32.mrb[0].mxu0
  %v404 = vadd.f32 0.0, %v403
  %v405 = vpop.f32.mrb[0].mxu0
  %v406 = vpop.f32.mrb[0].mxu0
  %v407 = vadd.f32 0.0, %v406
  %v408 = vpop.f32.mrb[0].mxu0
  %409 = vmatprep.mubr.bf16.mxu0 0
  %410 = vmatmul.mubr.bf16.gmra.mrb[0].mxu0 %v262
  %v411 = vpop.f32.mrb[0].mxu0
  %v412 = vadd.f32 0.0, %v411
  %v413 = vpop.f32.mrb[0].mxu0
  %v414 = vpop.f32.mrb[0].mxu0
  %v415 = vadd.f32 0.0, %v414
  %v416 = vpop.f32.mrb[0].mxu0
  %417 = vmatprep.mubr.bf16.mxu0 0
  %418 = vmatmul.mubr.bf16.gmra.mrb[0].mxu0 %v265
  %v419 = vpop.f32.mrb[0].mxu0
  %v420 = vadd.f32 0.0, %v419
  %v421 = vpop.f32.mrb[0].mxu0
  %v422 = vpop.f32.mrb[0].mxu0
  %v423 = vadd.f32 0.0, %v422
  %v424 = vpop.f32.mrb[0].mxu0
  %425 = vmatprep.mubr.bf16.mxu0 0
  %426 = vmatmul.mubr.bf16.gmra.mrb[0].mxu0 %v268
  %v427 = vpop.f32.mrb[0].mxu0
  %v428 = vadd.f32 0.0, %v427
  %v429 = vpop.f32.mrb[0].mxu0
  %v430 = vpop.f32.mrb[0].mxu0
  %v431 = vadd.f32 0.0, %v430
  %v432 = vpop.f32.mrb[0].mxu0
  %433 = vmatprep.mubr.bf16.mxu0 0
  %434 = vmatmul.mubr.bf16.gmra.mrb[0].mxu0 %v271
  %v435 = vpop.f32.mrb[0].mxu0
  %v436 = vadd.f32 0.0, %v435
  %v437 = vpop.f32.mrb[0].mxu0
  %v438 = vpop.f32.mrb[0].mxu0
  %v439 = vadd.f32 0.0, %v438
  %v440 = vpop.f32.mrb[0].mxu0
  %441 = vmatprep.mubr.bf16.mxu0 0
  %442 = vmatmul.mubr.bf16.gmra.mrb[0].mxu0 %v274
  %v443 = vpop.f32.mrb[0].mxu0
  %v444 = vadd.f32 0.0, %v443
  %v445 = vpop.f32.mrb[0].mxu0
  %v446 = vpop.f32.mrb[0].mxu0
  %v447 = vadd.f32 0.0, %v446
  %v448 = vpop.f32.mrb[0].mxu0
  %449 = vmatprep.mubr.bf16.mxu0 0
  %450 = vmatmul.mubr.bf16.gmra.mrb[0].mxu0 %v277
  %v451 = vpop.f32.mrb[0].mxu0
  %v452 = vadd.f32 0.0, %v451
  %v453 = vpop.f32.mrb[0].mxu0
  %v454 = vpop.f32.mrb[0].mxu0
  %v455 = vadd.f32 0.0, %v454
  %v456 = vpop.f32.mrb[0].mxu0
  %457 = vmatprep.mubr.bf16.mxu0 0
  %458 = vmatmul.mubr.bf16.gmra.mrb[0].mxu0 %v280
  %v459 = vpop.f32.mrb[0].mxu0
  %v460 = vadd.f32 0.0, %v459
  %v461 = vpop.f32.mrb[0].mxu0
  %v462 = vpop.f32.mrb[0].mxu0
  %v463 = vadd.f32 0.0, %v462
  %v464 = vpop.f32.mrb[0].mxu0
  %465 = vmatprep.mubr.bf16.mxu0 0
  %466 = vmatmul.mubr.bf16.gmra.mrb[0].mxu0 %v283
  %v467 = vpop.f32.mrb[0].mxu0
  %v468 = vadd.f32 0.0, %v467
  %v469 = vpop.f32.mrb[0].mxu0
  %v470 = vpop.f32.mrb[0].mxu0
  %v471 = vadd.f32 0.0, %v470
  %v472 = vpop.f32.mrb[0].mxu0
  %473 = vmatprep.mubr.bf16.mxu0 0
  %474 = vmatmul.mubr.bf16.gmra.mrb[0].mxu0 %v286
  %v475 = vpop.f32.mrb[0].mxu0
  %v476 = vadd.f32 0.0, %v475
  %v477 = vpop.f32.mrb[0].mxu0
  %v478 = vpop.f32.mrb[0].mxu0
  %v479 = vadd.f32 0.0, %v478
  %v480 = vpop.f32.mrb[0].mxu0
  %481 = vmatprep.mubr.bf16.mxu0 0
  %482 = vmatmul.mubr.bf16.gmra.mrb[0].mxu0 %v289
  %v483 = vpop.f32.mrb[0].mxu0
  %v484 = vadd.f32 0.0, %v483
  %v485 = vpop.f32.mrb[0].mxu0
  %v486 = vpop.f32.mrb[0].mxu0
  %v487 = vadd.f32 0.0, %v486
  %v488 = vpop.f32.mrb[0].mxu0
  %489 = vmatprep.mubr.bf16.mxu0 0
  %490 = vmatmul.mubr.bf16.gmra.mrb[0].mxu0 %v292
  %v491 = vpop.f32.mrb[0].mxu0
  %v492 = vadd.f32 0.0, %v491
  %v493 = vpop.f32.mrb[0].mxu0
  %v494 = vpop.f32.mrb[0].mxu0
  %v495 = vadd.f32 0.0, %v494
  %v496 = vpop.f32.mrb[0].mxu0
  %497 = vmatprep.mubr.bf16.mxu0 0
  %498 = vmatmul.mubr.bf16.gmra.mrb[0].mxu0 %v295
  %v499 = vpop.f32.mrb[0].mxu0
  %v500 = vadd.f32 0.0, %v499
  %v501 = vpop.f32.mrb[0].mxu0
  %v502 = vpop.f32.mrb[0].mxu0
  %v503 = vadd.f32 0.0, %v502
  %v504 = vpop.f32.mrb[0].mxu0
  %505 = vmatprep.mubr.bf16.mxu0 0
  %506 = vmatmul.mubr.bf16.gmra.mrb[0].mxu0 %v298
  %v507 = vpop.f32.mrb[0].mxu0
  %v508 = vadd.f32 0.0, %v507
  %v509 = vpop.f32.mrb[0].mxu0
  %v510 = vpop.f32.mrb[0].mxu0
  %v511 = vadd.f32 0.0, %v510
  %v512 = vpop.f32.mrb[0].mxu0
  %513 = vmatprep.mubr.bf16.mxu0 0
  %514 = vmatmul.mubr.bf16.gmra.mrb[0].mxu0 %v301
  %v515 = vpop.f32.mrb[0].mxu0
  %v516 = vadd.f32 0.0, %v515
  %v517 = vpop.f32.mrb[0].mxu0
  %v518 = vpop.f32.mrb[0].mxu0
  %v519 = vadd.f32 0.0, %v518
  %v520 = vpop.f32.mrb[0].mxu0
  %521 = vmatprep.mubr.bf16.mxu0 0
  %522 = vmatmul.mubr.bf16.gmra.mrb[0].mxu0 %v304
  %v523 = vpop.f32.mrb[0].mxu0
  %v524 = vadd.f32 0.0, %v523
  %v525 = vpop.f32.mrb[0].mxu0
  %v526 = vpop.f32.mrb[0].mxu0
  %v527 = vadd.f32 0.0, %v526
  %v528 = vpop.f32.mrb[0].mxu0
  %529 = vmatprep.mubr.bf16.mxu0 0
  %530 = vmatmul.mubr.bf16.gmra.mrb[0].mxu0 %v307
  %v531 = vpop.f32.mrb[0].mxu0
  %v532 = vadd.f32 0.0, %v531
  %v533 = vpop.f32.mrb[0].mxu0
  %v534 = vpop.f32.mrb[0].mxu0
  %v535 = vadd.f32 0.0, %v534
  %v536 = vpop.f32.mrb[0].mxu0
  %537 = vmatprep.mubr.bf16.mxu0 0
  %538 = vmatmul.mubr.bf16.gmra.mrb[0].mxu0 %v310
  %v539 = vpop.f32.mrb[0].mxu0
  %v540 = vadd.f32 0.0, %v539
  %v541 = vpop.f32.mrb[0].mxu0
  %v542 = vpop.f32.mrb[0].mxu0
  %v543 = vadd.f32 0.0, %v542
  %v544 = vpop.f32.mrb[0].mxu0
  %545 = vmatprep.mubr.bf16.mxu0 0
  %546 = vmatmul.mubr.bf16.gmra.mrb[0].mxu0 %v313
  %v547 = vpop.f32.mrb[0].mxu0
  %v548 = vadd.f32 0.0, %v547
  %v549 = vpop.f32.mrb[0].mxu0
  %v550 = vpop.f32.mrb[0].mxu0
  %v551 = vadd.f32 0.0, %v550
  %v552 = vpop.f32.mrb[0].mxu0
  %553 = vmatprep.mubr.bf16.mxu0 0
  %554 = vmatmul.mubr.bf16.gmra.mrb[0].mxu0 %v316
  %v555 = vpop.f32.mrb[0].mxu0
  %v556 = vadd.f32 0.0, %v555
  %v557 = vpop.f32.mrb[0].mxu0
  %v558 = vpop.f32.mrb[0].mxu0
  %v559 = vadd.f32 0.0, %v558
  %v560 = vpop.f32.mrb[0].mxu0
  %561 = vmatprep.mubr.bf16.mxu0 0
  %562 = vmatmul.mubr.bf16.gmra.mrb[0].mxu0 %v319
  %v563 = vpop.f32.mrb[0].mxu0
  %v564 = vadd.f32 0.0, %v563
  %v565 = vpop.f32.mrb[0].mxu0
  %v566 = vpop.f32.mrb[0].mxu0
  %v567 = vadd.f32 0.0, %v566
  %v568 = vpop.f32.mrb[0].mxu0
  %569 = vmatprep.mubr.bf16.mxu0 0
  %570 = vmatmul.mubr.bf16.gmra.mrb[0].mxu0 %v322
  %v571 = vpop.f32.mrb[0].mxu0
  %v572 = vadd.f32 0.0, %v571
  %v573 = vpop.f32.mrb[0].mxu0
  %v574 = vpop.f32.mrb[0].mxu0
  %v575 = vadd.f32 0.0, %v574
  %v576 = vpop.f32.mrb[0].mxu0
  %577 = vmatprep.mubr.bf16.mxu0 0
  %578 = vmatmul.mubr.bf16.gmra.mrb[0].mxu0 %v325
  %v579 = vpop.f32.mrb[0].mxu0
  %v580 = vadd.f32 0.0, %v579
  %v581 = vpop.f32.mrb[0].mxu0
  %v582 = vpop.f32.mrb[0].mxu0
  %v583 = vadd.f32 0.0, %v582
  %v584 = vpop.f32.mrb[0].mxu0
  %585 = vmatprep.mubr.bf16.mxu0 0
  %586 = vmatmul.mubr.bf16.gmra.mrb[0].mxu0 %v328
  %v587 = vpop.f32.mrb[0].mxu0
  %v588 = vadd.f32 0.0, %v587
  %v589 = vpop.f32.mrb[0].mxu0
  %v590 = vpop.f32.mrb[0].mxu0
  %v591 = vadd.f32 0.0, %v590
  %v592 = vpop.f32.mrb[0].mxu0
  %593 = vmatprep.mubr.bf16.mxu0 0
  %594 = vmatmul.mubr.bf16.gmra.mrb[0].mxu0 %v331
  %v595 = vpop.f32.mrb[0].mxu0
  %v596 = vadd.f32 0.0, %v595
  %v597 = vpop.f32.mrb[0].mxu0
  %v598 = vpop.f32.mrb[0].mxu0
  %v599 = vadd.f32 0.0, %v598
  %v600 = vpop.f32.mrb[0].mxu0
  %601 = vmatprep.mubr.bf16.mxu0 0
  %602 = vmatmul.mubr.bf16.gmra.mrb[0].mxu0 %v334
  %v603 = vpop.f32.mrb[0].mxu0
  %v604 = vadd.f32 0.0, %v603
  %v605 = vpop.f32.mrb[0].mxu0
  %v606 = vpop.f32.mrb[0].mxu0
  %v607 = vadd.f32 0.0, %v606
  %v608 = vpop.f32.mrb[0].mxu0
  %609 = vmatprep.mubr.bf16.mxu0 0
  %610 = vmatmul.mubr.bf16.gmra.mrb[0].mxu0 %v337
  %v611 = vpop.f32.mrb[0].mxu0
  %v612 = vadd.f32 0.0, %v611
  %v613 = vpop.f32.mrb[0].mxu0
  %v614 = vpop.f32.mrb[0].mxu0
  %v615 = vadd.f32 0.0, %v614
  %v616 = vpop.f32.mrb[0].mxu0
  %617 = vmatprep.mubr.bf16.mxu0 0
  %618 = vmatmul.mubr.bf16.gmra.mrb[0].mxu0 %v340
  %v619 = vpop.f32.mrb[0].mxu0
  %v620 = vadd.f32 0.0, %v619
  %v621 = vpop.f32.mrb[0].mxu0
  %v622 = vpop.f32.mrb[0].mxu0
  %v623 = vadd.f32 0.0, %v622
  %v624 = vpop.f32.mrb[0].mxu0
  %625 = vmatprep.mubr.bf16.mxu0 0
  %626 = vmatmul.mubr.bf16.gmra.mrb[0].mxu0 %v343
  %v627 = vpop.f32.mrb[0].mxu0
  %v628 = vadd.f32 0.0, %v627
  %v629 = vpop.f32.mrb[0].mxu0
  %v630 = vpop.f32.mrb[0].mxu0
  %v631 = vadd.f32 0.0, %v630
  %v632 = vpop.f32.mrb[0].mxu0
  %633 = vdwg.mxu0
  %vm634 = vcmask 261120
  %635 = vst.msk [vmem:[%s2] sm:$0xff] %vm634, %v380
  %636 = vst.msk [vmem:[%s2 + $0x8] sm:$0xff] %vm634, %v383
  %637 = vst.msk [vmem:[%s2 + $0x10] sm:$0xff] %vm634, %v388
  %638 = vst.msk [vmem:[%s2 + $0x18] sm:$0xff] %vm634, %v391
  %639 = vst.msk [vmem:[%s2 + $0x20] sm:$0xff] %vm634, %v396
  %640 = vst.msk [vmem:[%s2 + $0x28] sm:$0xff] %vm634, %v399
  %641 = vst.msk [vmem:[%s2 + $0x30] sm:$0xff] %vm634, %v404
  %642 = vst.msk [vmem:[%s2 + $0x38] sm:$0xff] %vm634, %v407
  %643 = vst.msk [vmem:[%s2 + $0x40] sm:$0xff] %vm634, %v412
  %644 = vst.msk [vmem:[%s2 + $0x48] sm:$0xff] %vm634, %v415
  %645 = vst.msk [vmem:[%s2 + $0x50] sm:$0xff] %vm634, %v420
  %646 = vst.msk [vmem:[%s2 + $0x58] sm:$0xff] %vm634, %v423
  %647 = vst.msk [vmem:[%s2 + $0x60] sm:$0xff] %vm634, %v428
  %648 = vst.msk [vmem:[%s2 + $0x68] sm:$0xff] %vm634, %v431
  %649 = vst.msk [vmem:[%s2 + $0x70] sm:$0xff] %vm634, %v436
  %650 = vst.msk [vmem:[%s2 + $0x78] sm:$0xff] %vm634, %v439
  %651 = vst.msk [vmem:[%s2 + $0x80] sm:$0xff] %vm634, %v444
  %652 = vst.msk [vmem:[%s2 + $0x88] sm:$0xff] %vm634, %v447
  %653 = vst.msk [vmem:[%s2 + $0x90] sm:$0xff] %vm634, %v452
  %654 = vst.msk [vmem:[%s2 + $0x98] sm:$0xff] %vm634, %v455
  %655 = vst.msk [vmem:[%s2 + $0xa0] sm:$0xff] %vm634, %v460
  %656 = vst.msk [vmem:[%s2 + $0xa8] sm:$0xff] %vm634, %v463
  %657 = vst.msk [vmem:[%s2 + $0xb0] sm:$0xff] %vm634, %v468
  %658 = vst.msk [vmem:[%s2 + $0xb8] sm:$0xff] %vm634, %v471
  %659 = vst.msk [vmem:[%s2 + $0xc0] sm:$0xff] %vm634, %v476
  %660 = vst.msk [vmem:[%s2 + $0xc8] sm:$0xff] %vm634, %v479
  %661 = vst.msk [vmem:[%s2 + $0xd0] sm:$0xff] %vm634, %v484
  %662 = vst.msk [vmem:[%s2 + $0xd8] sm:$0xff] %vm634, %v487
  %663 = vst.msk [vmem:[%s2 + $0xe0] sm:$0xff] %vm634, %v492
  %664 = vst.msk [vmem:[%s2 + $0xe8] sm:$0xff] %vm634, %v495
  %665 = vst.msk [vmem:[%s2 + $0xf0] sm:$0xff] %vm634, %v500
  %666 = vst.msk [vmem:[%s2 + $0xf8] sm:$0xff] %vm634, %v503
  %667 = vst.msk [vmem:[%s2 + $0x100] sm:$0xff] %vm634, %v508
  %668 = vst.msk [vmem:[%s2 + $0x108] sm:$0xff] %vm634, %v511
  %669 = vst.msk [vmem:[%s2 + $0x110] sm:$0xff] %vm634, %v516
  %670 = vst.msk [vmem:[%s2 + $0x118] sm:$0xff] %vm634, %v519
  %671 = vst.msk [vmem:[%s2 + $0x120] sm:$0xff] %vm634, %v524
  %672 = vst.msk [vmem:[%s2 + $0x128] sm:$0xff] %vm634, %v527
  %673 = vst.msk [vmem:[%s2 + $0x130] sm:$0xff] %vm634, %v532
  %674 = vst.msk [vmem:[%s2 + $0x138] sm:$0xff] %vm634, %v535
  %675 = vst.msk [vmem:[%s2 + $0x140] sm:$0xff] %vm634, %v540
  %676 = vst.msk [vmem:[%s2 + $0x148] sm:$0xff] %vm634, %v543
  %677 = vst.msk [vmem:[%s2 + $0x150] sm:$0xff] %vm634, %v548
  %678 = vst.msk [vmem:[%s2 + $0x158] sm:$0xff] %vm634, %v551
  %679 = vst.msk [vmem:[%s2 + $0x160] sm:$0xff] %vm634, %v556
  %680 = vst.msk [vmem:[%s2 + $0x168] sm:$0xff] %vm634, %v559
  %681 = vst.msk [vmem:[%s2 + $0x170] sm:$0xff] %vm634, %v564
  %682 = vst.msk [vmem:[%s2 + $0x178] sm:$0xff] %vm634, %v567
  %683 = vst.msk [vmem:[%s2 + $0x180] sm:$0xff] %vm634, %v572
  %684 = vst.msk [vmem:[%s2 + $0x188] sm:$0xff] %vm634, %v575
  %685 = vst.msk [vmem:[%s2 + $0x190] sm:$0xff] %vm634, %v580
  %686 = vst.msk [vmem:[%s2 + $0x198] sm:$0xff] %vm634, %v583
  %687 = vst.msk [vmem:[%s2 + $0x1a0] sm:$0xff] %vm634, %v588
  %688 = vst.msk [vmem:[%s2 + $0x1a8] sm:$0xff] %vm634, %v591
  %689 = vst.msk [vmem:[%s2 + $0x1b0] sm:$0xff] %vm634, %v596
  %690 = vst.msk [vmem:[%s2 + $0x1b8] sm:$0xff] %vm634, %v599
  %691 = vst.msk [vmem:[%s2 + $0x1c0] sm:$0xff] %vm634, %v604
  %692 = vst.msk [vmem:[%s2 + $0x1c8] sm:$0xff] %vm634, %v607
  %693 = vst.msk [vmem:[%s2 + $0x1d0] sm:$0xff] %vm634, %v612
  %694 = vst.msk [vmem:[%s2 + $0x1d8] sm:$0xff] %vm634, %v615
  %695 = vst.msk [vmem:[%s2 + $0x1e0] sm:$0xff] %vm634, %v620
  %696 = vst.msk [vmem:[%s2 + $0x1e8] sm:$0xff] %vm634, %v623
  %697 = vst.msk [vmem:[%s2 + $0x1f0] sm:$0xff] %vm634, %v628
  %698 = vst.msk [vmem:[%s2 + $0x1f8] sm:$0xff] %vm634, %v631
  // Predicated region
  $region10: #{generator_forward.7} parent=0 // pred_check
    _
  $region11: #{generator_forward.7} parent=0 // pred_check_branch
    %700 = sbr.rel (0) target = $region13
  $region12: #{generator_forward.7} parent=0 // pred_region
    _
  $region13: #{generator_forward.7} parent=0 // pred_fallthru
    _
  // Predicated region
  $region14: #{generator_forward.7} parent=0 // pred_check
    _
  $region15: #{generator_forward.7} parent=0 // pred_check_branch
    %702 = sbr.rel (0) target = $region17
  $region16: #{generator_forward.7} parent=0 // pred_region
    _
  $region17: #{generator_forward.7} parent=0 // pred_fallthru
    _

// kernel: generator_forward.8
$region0: #{generator_forward.8}
  #allocation0 [shape = 'u32[]', space=smem, size = 0x4, offset = 0x4, fixed_abs, tag = 'smem constant byte address 0x4 - core index']
  #allocation1 [shape = 'u32[144,128]{1,0:T(1,128)}', space=vmem, size = 0x12000, scoped, tag = 'internal scratch']
  %s0 = inlined_call_operand.vmem [shape: f32[32,128], index: 0, kind: input, shape index: {}]
  %s1 = inlined_call_operand.vmem [shape: f32[32,1], index: 1, kind: input, shape index: {}]
  %s2 = inlined_call_operand.vmem [shape: f32[32,1], index: 2, kind: input, shape index: {}]
  %s3 = inlined_call_operand.vmem [shape: bf16[256,32], index: 3, kind: input, shape index: {}]
  %s4 = inlined_call_operand.vmem [shape: f32[256,128], index: 4, kind: output, shape index: {}]
  %s5 = sld [smem:[#allocation0]]
  $region26: #{generator_forward.8} parent=0
    _
  %s7 = ssub.s32 1, %s5
  %s8 = scalar_select 0, %s7, %s5
  // Predicated region
  $region2: #{generator_forward.8} parent=0 // pred_check
    _
  $region3: #{generator_forward.8} parent=0 // pred_check_branch
    %10 = sbr.rel (0) target = $region5
  $region4: #{generator_forward.8} parent=0 // pred_region
    _
  $region5: #{generator_forward.8} parent=0 // pred_fallthru
    _
  // Predicated region
  $region6: #{generator_forward.8} parent=0 // pred_check
    _
  $region7: #{generator_forward.8} parent=0 // pred_check_branch
    %12 = sbr.rel (0) target = $region9
  $region8: #{generator_forward.8} parent=0 // pred_region
    _
  $region9: #{generator_forward.8} parent=0 // pred_fallthru
    _
  // Predicated region
  $region10: #{generator_forward.8} parent=0 // pred_check
    _
  $region11: #{generator_forward.8} parent=0 // pred_check_branch
    %14 = sbr.rel (0) target = $region13
  $region12: #{generator_forward.8} parent=0 // pred_region
    _
  $region13: #{generator_forward.8} parent=0 // pred_fallthru
    _
  // Predicated region
  $region14: #{generator_forward.8} parent=0 // pred_check
    _
  $region15: #{generator_forward.8} parent=0 // pred_check_branch
    %16 = sbr.rel (0) target = $region17
  $region16: #{generator_forward.8} parent=0 // pred_region
    _
  $region17: #{generator_forward.8} parent=0 // pred_fallthru
    _
  %v18 = vld [vmem:[%s0] sm:$0xff]
  %v19 = vld [vmem:[%s0 + $0x8] sm:$0xff]
  %v20 = vld [vmem:[%s0 + $0x10] sm:$0xff]
  %v21 = vld [vmem:[%s0 + $0x18] sm:$0xff]
  %22 = vadd.xlane.f32.xlu0 %v18
  %v23 = vpop.xlane.xlu0 %22
  %24 = vadd.xlane.f32.xlu0 %v19
  %v25 = vpop.xlane.xlu0 %24
  %26 = vadd.xlane.f32.xlu0 %v20
  %v27 = vpop.xlane.xlu0 %26
  %28 = vadd.xlane.f32.xlu0 %v21
  %v29 = vpop.xlane.xlu0 %28
  %v30 = vmul.f32 %v23, 0.0078125
  %v31 = vmul.f32 %v25, 0.0078125
  %v32 = vmul.f32 %v27, 0.0078125
  %v33 = vmul.f32 %v29, 0.0078125
  %v34 = vsub.f32 %v18, %v30
  %v35 = vsub.f32 %v19, %v31
  %v36 = vsub.f32 %v20, %v32
  %v37 = vsub.f32 %v21, %v33
  %v38 = vmul.f32 %v34, %v34
  %v39 = vmul.f32 %v35, %v35
  %v40 = vmul.f32 %v36, %v36
  %v41 = vmul.f32 %v37, %v37
  %42 = vadd.xlane.f32.xlu0 %v38
  %v43 = vpop.xlane.xlu0 %42
  %44 = vadd.xlane.f32.xlu0 %v39
  %v45 = vpop.xlane.xlu0 %44
  %46 = vadd.xlane.f32.xlu0 %v40
  %v47 = vpop.xlane.xlu0 %46
  %48 = vadd.xlane.f32.xlu0 %v41
  %v49 = vpop.xlane.xlu0 %48
  %v50 = vmul.f32 %v43, 0.0078125
  %v51 = vmul.f32 %v45, 0.0078125
  %v52 = vmul.f32 %v47, 0.0078125
  %v53 = vmul.f32 %v49, 0.0078125
  %v54 = vld [vmem:[%s1] sm:$0xff]
  %v55 = vld [vmem:[%s1 + $0x8] sm:$0xff]
  %v56 = vld [vmem:[%s1 + $0x10] sm:$0xff]
  %v57 = vld [vmem:[%s1 + $0x18] sm:$0xff]
  %v58 = vadd.f32 %v50, 1e-05
  %v59 = vadd.f32 %v51, 1e-05
  %v60 = vadd.f32 %v52, 1e-05
  %v61 = vadd.f32 %v53, 1e-05
  %v62 = vrsqrt.pop %v58
  %v63 = vrsqrt.pop %v59
  %v64 = vrsqrt.pop %v60
  %v65 = vrsqrt.pop %v61
  %v66 = vmul.f32 %v54, %v62
  %v67 = vmul.f32 %v55, %v63
  %v68 = vmul.f32 %v56, %v64
  %v69 = vmul.f32 %v57, %v65
  %71 = vset.pattern.permute.xlu0 0
  %72 = vperm.xlu0 %71, %v66
  %v73 = vpop.permute.xlu0 %72
  %76 = vset.pattern.permute.xlu0 0
  %77 = vperm.xlu0 %76, %v67
  %v78 = vpop.permute.xlu0 %77
  %81 = vset.pattern.permute.xlu0 0
  %82 = vperm.xlu0 %81, %v68
  %v83 = vpop.permute.xlu0 %82
  %86 = vset.pattern.permute.xlu0 0
  %87 = vperm.xlu0 %86, %v69
  %v88 = vpop.permute.xlu0 %87
  %v90 = vmul.f32 %v34, %v73
  %v91 = vmul.f32 %v35, %v78
  %v92 = vmul.f32 %v36, %v83
  %v93 = vmul.f32 %v37, %v88
  %v94 = vld [vmem:[%s2] sm:$0xff]
  %v95 = vld [vmem:[%s2 + $0x8] sm:$0xff]
  %v96 = vld [vmem:[%s2 + $0x10] sm:$0xff]
  %v97 = vld [vmem:[%s2 + $0x18] sm:$0xff]
  %99 = vset.pattern.permute.xlu0 0
  %100 = vperm.xlu0 %99, %v94
  %v101 = vpop.permute.xlu0 %100
  %104 = vset.pattern.permute.xlu0 0
  %105 = vperm.xlu0 %104, %v95
  %v106 = vpop.permute.xlu0 %105
  %109 = vset.pattern.permute.xlu0 0
  %110 = vperm.xlu0 %109, %v96
  %v111 = vpop.permute.xlu0 %110
  %114 = vset.pattern.permute.xlu0 0
  %115 = vperm.xlu0 %114, %v97
  %v116 = vpop.permute.xlu0 %115
  %v118 = vadd.f32 %v90, %v101
  %v119 = vadd.f32 %v91, %v106
  %v120 = vadd.f32 %v92, %v111
  %v121 = vadd.f32 %v93, %v116
  %v122 = vmax.f32 %v118, 0.0
  %v123 = vmax.f32 %v119, 0.0
  %v124 = vmax.f32 %v120, 0.0
  %v125 = vmax.f32 %v121, 0.0
  %v126 = vld [vmem:[%s3] sm:$0xf]
  %v127 = vld [vmem:[%s3 + $0x4] sm:$0xf]
  %v128 = vld [vmem:[%s3 + $0x8] sm:$0xf]
  %v129 = vld [vmem:[%s3 + $0xc] sm:$0xf]
  %v130 = vld [vmem:[%s3 + $0x10] sm:$0xf]
  %v131 = vld [vmem:[%s3 + $0x14] sm:$0xf]
  %v132 = vld [vmem:[%s3 + $0x18] sm:$0xf]
  %v133 = vld [vmem:[%s3 + $0x1c] sm:$0xf]
  %v134 = vld [vmem:[%s3 + $0x20] sm:$0xf]
  %v135 = vld [vmem:[%s3 + $0x24] sm:$0xf]
  %v136 = vld [vmem:[%s3 + $0x28] sm:$0xf]
  %v137 = vld [vmem:[%s3 + $0x2c] sm:$0xf]
  %v138 = vld [vmem:[%s3 + $0x30] sm:$0xf]
  %v139 = vld [vmem:[%s3 + $0x34] sm:$0xf]
  %v140 = vld [vmem:[%s3 + $0x38] sm:$0xf]
  %v141 = vld [vmem:[%s3 + $0x3c] sm:$0xf]
  %v142 = vld [vmem:[%s3 + $0x40] sm:$0xf]
  %v143 = vld [vmem:[%s3 + $0x44] sm:$0xf]
  %v144 = vld [vmem:[%s3 + $0x48] sm:$0xf]
  %v145 = vld [vmem:[%s3 + $0x4c] sm:$0xf]
  %v146 = vld [vmem:[%s3 + $0x50] sm:$0xf]
  %v147 = vld [vmem:[%s3 + $0x54] sm:$0xf]
  %v148 = vld [vmem:[%s3 + $0x58] sm:$0xf]
  %v149 = vld [vmem:[%s3 + $0x5c] sm:$0xf]
  %v150 = vld [vmem:[%s3 + $0x60] sm:$0xf]
  %v151 = vld [vmem:[%s3 + $0x64] sm:$0xf]
  %v152 = vld [vmem:[%s3 + $0x68] sm:$0xf]
  %v153 = vld [vmem:[%s3 + $0x6c] sm:$0xf]
  %v154 = vld [vmem:[%s3 + $0x70] sm:$0xf]
  %v155 = vld [vmem:[%s3 + $0x74] sm:$0xf]
  %v156 = vld [vmem:[%s3 + $0x78] sm:$0xf]
  %v157 = vld [vmem:[%s3 + $0x7c] sm:$0xf]
  %v158 = vpack.c.bf16 %v123, %v122
  %v159 = vpack.c.bf16 %v125, %v124
  %v192 = vunpack.c.l.b16 %v126
  %v193 = vunpack.c.l.b16 %v127
  %v194 = vunpack.c.l.b16 %v128
  %v195 = vunpack.c.l.b16 %v129
  %v196 = vunpack.c.l.b16 %v130
  %v197 = vunpack.c.l.b16 %v131
  %v198 = vunpack.c.l.b16 %v132
  %v199 = vunpack.c.l.b16 %v133
  %v200 = vunpack.c.l.b16 %v134
  %v201 = vunpack.c.l.b16 %v135
  %v202 = vunpack.c.l.b16 %v136
  %v203 = vunpack.c.l.b16 %v137
  %v204 = vunpack.c.l.b16 %v138
  %v205 = vunpack.c.l.b16 %v139
  %v206 = vunpack.c.l.b16 %v140
  %v207 = vunpack.c.l.b16 %v141
  %v208 = vunpack.c.l.b16 %v142
  %v209 = vunpack.c.l.b16 %v143
  %v210 = vunpack.c.l.b16 %v144
  %v211 = vunpack.c.l.b16 %v145
  %v212 = vunpack.c.l.b16 %v146
  %v213 = vunpack.c.l.b16 %v147
  %v214 = vunpack.c.l.b16 %v148
  %v215 = vunpack.c.l.b16 %v149
  %v216 = vunpack.c.l.b16 %v150
  %v217 = vunpack.c.l.b16 %v151
  %v218 = vunpack.c.l.b16 %v152
  %v219 = vunpack.c.l.b16 %v153
  %v220 = vunpack.c.l.b16 %v154
  %v221 = vunpack.c.l.b16 %v155
  %v222 = vunpack.c.l.b16 %v156
  %v223 = vunpack.c.l.b16 %v157
  %v224 = vpack.c.b16 %v193, %v192
  %v225 = vpack.c.b16 %v195, %v194
  %v226 = vpack.c.b16 %v197, %v196
  %v227 = vpack.c.b16 %v199, %v198
  %v228 = vpack.c.b16 %v201, %v200
  %v229 = vpack.c.b16 %v203, %v202
  %v230 = vpack.c.b16 %v205, %v204
  %v231 = vpack.c.b16 %v207, %v206
  %v232 = vpack.c.b16 %v209, %v208
  %v233 = vpack.c.b16 %v211, %v210
  %v234 = vpack.c.b16 %v213, %v212
  %v235 = vpack.c.b16 %v215, %v214
  %v236 = vpack.c.b16 %v217, %v216
  %v237 = vpack.c.b16 %v219, %v218
  %v238 = vpack.c.b16 %v221, %v220
  %v239 = vpack.c.b16 %v223, %v222
  %vm240 = vcmask 261120
  %v242 = vsel %vm240, %v224, 0
  %v245 = vsel %vm240, %v225, 0
  %v248 = vsel %vm240, %v226, 0
  %v251 = vsel %vm240, %v227, 0
  %v254 = vsel %vm240, %v228, 0
  %v257 = vsel %vm240, %v229, 0
  %v260 = vsel %vm240, %v230, 0
  %v263 = vsel %vm240, %v231, 0
  %v266 = vsel %vm240, %v232, 0
  %v269 = vsel %vm240, %v233, 0
  %v272 = vsel %vm240, %v234, 0
  %v275 = vsel %vm240, %v235, 0
  %v278 = vsel %vm240, %v236, 0
  %v281 = vsel %vm240, %v237, 0
  %v284 = vsel %vm240, %v238, 0
  %v287 = vsel %vm240, %v239, 0
  %289 = vmatprep.subr.bf16.mxu0 0
  %290 = vmatpush1.bf16.msra.mxu0 %v158
  %291 = vmatprep.subr.bf16.mxu0 0
  %292 = vmatpush1.bf16.msra.mxu0 %v159
  %293 = vmatprep.subr.bf16.mxu0 0
  %294 = vmatpush1.bf16.msra.mxu0 0
  %295 = vmatprep.subr.bf16.mxu0 0
  %296 = vmatpush1.bf16.msra.mxu0 0
  %297 = vmatprep.subr.bf16.mxu0 0
  %298 = vmatpush1.bf16.msra.mxu0 0
  %299 = vmatprep.subr.bf16.mxu0 0
  %300 = vmatpush1.bf16.msra.mxu0 0
  %301 = vmatprep.subr.bf16.mxu0 0
  %302 = vmatpush1.bf16.msra.mxu0 0
  %303 = vmatprep.subr.bf16.mxu0 0
  %304 = vmatpush1.bf16.msra.mxu0 0
  %305 = vmatprep.subr.bf16.mxu0 0
  %306 = vmatpush1.bf16.msra.mxu0 0
  %307 = vmatprep.subr.bf16.mxu0 0
  %308 = vmatpush1.bf16.msra.mxu0 0
  %309 = vmatprep.subr.bf16.mxu0 0
  %310 = vmatpush1.bf16.msra.mxu0 0
  %311 = vmatprep.subr.bf16.mxu0 0
  %312 = vmatpush1.bf16.msra.mxu0 0
  %313 = vmatprep.subr.bf16.mxu0 0
  %314 = vmatpush1.bf16.msra.mxu0 0
  %315 = vmatprep.subr.bf16.mxu0 0
  %316 = vmatpush1.bf16.msra.mxu0 0
  %317 = vmatprep.subr.bf16.mxu0 0
  %318 = vmatpush1.bf16.msra.mxu0 0
  %319 = vmatprep.subr.bf16.mxu0 0
  %320 = vmatpush1.bf16.msra.mxu0 0
  %321 = vmatprep.mubr.bf16.mxu0 0
  %322 = vmatmul.mubr.bf16.gmra.mrb[0].mxu0 %v242
  %v323 = vpop.f32.mrb[0].mxu0
  %v324 = vadd.f32 0.0, %v323
  %v325 = vpop.f32.mrb[0].mxu0
  %v326 = vpop.f32.mrb[0].mxu0
  %v327 = vadd.f32 0.0, %v326
  %v328 = vpop.f32.mrb[0].mxu0
  %329 = vmatprep.mubr.bf16.mxu0 0
  %330 = vmatmul.mubr.bf16.gmra.mrb[0].mxu0 %v245
  %v331 = vpop.f32.mrb[0].mxu0
  %v332 = vadd.f32 0.0, %v331
  %v333 = vpop.f32.mrb[0].mxu0
  %v334 = vpop.f32.mrb[0].mxu0
  %v335 = vadd.f32 0.0, %v334
  %v336 = vpop.f32.mrb[0].mxu0
  %337 = vmatprep.mubr.bf16.mxu0 0
  %338 = vmatmul.mubr.bf16.gmra.mrb[0].mxu0 %v248
  %v339 = vpop.f32.mrb[0].mxu0
  %v340 = vadd.f32 0.0, %v339
  %v341 = vpop.f32.mrb[0].mxu0
  %v342 = vpop.f32.mrb[0].mxu0
  %v343 = vadd.f32 0.0, %v342
  %v344 = vpop.f32.mrb[0].mxu0
  %345 = vmatprep.mubr.bf16.mxu0 0
  %346 = vmatmul.mubr.bf16.gmra.mrb[0].mxu0 %v251
  %v347 = vpop.f32.mrb[0].mxu0
  %v348 = vadd.f32 0.0, %v347
  %v349 = vpop.f32.mrb[0].mxu0
  %v350 = vpop.f32.mrb[0].mxu0
  %v351 = vadd.f32 0.0, %v350
  %v352 = vpop.f32.mrb[0].mxu0
  %353 = vmatprep.mubr.bf16.mxu0 0
  %354 = vmatmul.mubr.bf16.gmra.mrb[0].mxu0 %v254
  %v355 = vpop.f32.mrb[0].mxu0
  %v356 = vadd.f32 0.0, %v355
  %v357 = vpop.f32.mrb[0].mxu0
  %v358 = vpop.f32.mrb[0].mxu0
  %v359 = vadd.f32 0.0, %v358
  %v360 = vpop.f32.mrb[0].mxu0
  %361 = vmatprep.mubr.bf16.mxu0 0
  %362 = vmatmul.mubr.bf16.gmra.mrb[0].mxu0 %v257
  %v363 = vpop.f32.mrb[0].mxu0
  %v364 = vadd.f32 0.0, %v363
  %v365 = vpop.f32.mrb[0].mxu0
  %v366 = vpop.f32.mrb[0].mxu0
  %v367 = vadd.f32 0.0, %v366
  %v368 = vpop.f32.mrb[0].mxu0
  %369 = vmatprep.mubr.bf16.mxu0 0
  %370 = vmatmul.mubr.bf16.gmra.mrb[0].mxu0 %v260
  %v371 = vpop.f32.mrb[0].mxu0
  %v372 = vadd.f32 0.0, %v371
  %v373 = vpop.f32.mrb[0].mxu0
  %v374 = vpop.f32.mrb[0].mxu0
  %v375 = vadd.f32 0.0, %v374
  %v376 = vpop.f32.mrb[0].mxu0
  %377 = vmatprep.mubr.bf16.mxu0 0
  %378 = vmatmul.mubr.bf16.gmra.mrb[0].mxu0 %v263
  %v379 = vpop.f32.mrb[0].mxu0
  %v380 = vadd.f32 0.0, %v379
  %v381 = vpop.f32.mrb[0].mxu0
  %v382 = vpop.f32.mrb[0].mxu0
  %v383 = vadd.f32 0.0, %v382
  %v384 = vpop.f32.mrb[0].mxu0
  %385 = vmatprep.mubr.bf16.mxu0 0
  %386 = vmatmul.mubr.bf16.gmra.mrb[0].mxu0 %v266
  %v387 = vpop.f32.mrb[0].mxu0
  %v388 = vadd.f32 0.0, %v387
  %v389 = vpop.f32.mrb[0].mxu0
  %v390 = vpop.f32.mrb[0].mxu0
  %v391 = vadd.f32 0.0, %v390
  %v392 = vpop.f32.mrb[0].mxu0
  %393 = vmatprep.mubr.bf16.mxu0 0
  %394 = vmatmul.mubr.bf16.gmra.mrb[0].mxu0 %v269
  %v395 = vpop.f32.mrb[0].mxu0
  %v396 = vadd.f32 0.0, %v395
  %v397 = vpop.f32.mrb[0].mxu0
  %v398 = vpop.f32.mrb[0].mxu0
  %v399 = vadd.f32 0.0, %v398
  %v400 = vpop.f32.mrb[0].mxu0
  %401 = vmatprep.mubr.bf16.mxu0 0
  %402 = vmatmul.mubr.bf16.gmra.mrb[0].mxu0 %v272
  %v403 = vpop.f32.mrb[0].mxu0
  %v404 = vadd.f32 0.0, %v403
  %v405 = vpop.f32.mrb[0].mxu0
  %v406 = vpop.f32.mrb[0].mxu0
  %v407 = vadd.f32 0.0, %v406
  %v408 = vpop.f32.mrb[0].mxu0
  %409 = vmatprep.mubr.bf16.mxu0 0
  %410 = vmatmul.mubr.bf16.gmra.mrb[0].mxu0 %v275
  %v411 = vpop.f32.mrb[0].mxu0
  %v412 = vadd.f32 0.0, %v411
  %v413 = vpop.f32.mrb[0].mxu0
  %v414 = vpop.f32.mrb[0].mxu0
  %v415 = vadd.f32 0.0, %v414
  %v416 = vpop.f32.mrb[0].mxu0
  %417 = vmatprep.mubr.bf16.mxu0 0
  %418 = vmatmul.mubr.bf16.gmra.mrb[0].mxu0 %v278
  %v419 = vpop.f32.mrb[0].mxu0
  %v420 = vadd.f32 0.0, %v419
  %v421 = vpop.f32.mrb[0].mxu0
  %v422 = vpop.f32.mrb[0].mxu0
  %v423 = vadd.f32 0.0, %v422
  %v424 = vpop.f32.mrb[0].mxu0
  %425 = vmatprep.mubr.bf16.mxu0 0
  %426 = vmatmul.mubr.bf16.gmra.mrb[0].mxu0 %v281
  %v427 = vpop.f32.mrb[0].mxu0
  %v428 = vadd.f32 0.0, %v427
  %v429 = vpop.f32.mrb[0].mxu0
  %v430 = vpop.f32.mrb[0].mxu0
  %v431 = vadd.f32 0.0, %v430
  %v432 = vpop.f32.mrb[0].mxu0
  %433 = vmatprep.mubr.bf16.mxu0 0
  %434 = vmatmul.mubr.bf16.gmra.mrb[0].mxu0 %v284
  %v435 = vpop.f32.mrb[0].mxu0
  %v436 = vadd.f32 0.0, %v435
  %v437 = vpop.f32.mrb[0].mxu0
  %v438 = vpop.f32.mrb[0].mxu0
  %v439 = vadd.f32 0.0, %v438
  %v440 = vpop.f32.mrb[0].mxu0
  %441 = vmatprep.mubr.bf16.mxu0 0
  %442 = vmatmul.mubr.bf16.gmra.mrb[0].mxu0 %v287
  %v443 = vpop.f32.mrb[0].mxu0
  %v444 = vadd.f32 0.0, %v443
  %v445 = vpop.f32.mrb[0].mxu0
  %v446 = vpop.f32.mrb[0].mxu0
  %v447 = vadd.f32 0.0, %v446
  %v448 = vpop.f32.mrb[0].mxu0
  %449 = vdwg.mxu0
  %450 = vst [vmem:[%s4] sm:$0xff] %v324
  %451 = vst [vmem:[%s4 + $0x8] sm:$0xff] %v327
  %452 = vst [vmem:[%s4 + $0x10] sm:$0xff] %v332
  %453 = vst [vmem:[%s4 + $0x18] sm:$0xff] %v335
  %454 = vst [vmem:[%s4 + $0x20] sm:$0xff] %v340
  %455 = vst [vmem:[%s4 + $0x28] sm:$0xff] %v343
  %456 = vst [vmem:[%s4 + $0x30] sm:$0xff] %v348
  %457 = vst [vmem:[%s4 + $0x38] sm:$0xff] %v351
  %458 = vst [vmem:[%s4 + $0x40] sm:$0xff] %v356
  %459 = vst [vmem:[%s4 + $0x48] sm:$0xff] %v359
  %460 = vst [vmem:[%s4 + $0x50] sm:$0xff] %v364
  %461 = vst [vmem:[%s4 + $0x58] sm:$0xff] %v367
  %462 = vst [vmem:[%s4 + $0x60] sm:$0xff] %v372
  %463 = vst [vmem:[%s4 + $0x68] sm:$0xff] %v375
  %464 = vst [vmem:[%s4 + $0x70] sm:$0xff] %v380
  %465 = vst [vmem:[%s4 + $0x78] sm:$0xff] %v383
  %466 = vst [vmem:[%s4 + $0x80] sm:$0xff] %v388
  %467 = vst [vmem:[%s4 + $0x88] sm:$0xff] %v391
  %468 = vst [vmem:[%s4 + $0x90] sm:$0xff] %v396
  %469 = vst [vmem:[%s4 + $0x98] sm:$0xff] %v399
  %470 = vst [vmem:[%s4 + $0xa0] sm:$0xff] %v404
  %471 = vst [vmem:[%s4 + $0xa8] sm:$0xff] %v407
  %472 = vst [vmem:[%s4 + $0xb0] sm:$0xff] %v412
  %473 = vst [vmem:[%s4 + $0xb8] sm:$0xff] %v415
  %474 = vst [vmem:[%s4 + $0xc0] sm:$0xff] %v420
  %475 = vst [vmem:[%s4 + $0xc8] sm:$0xff] %v423
  %476 = vst [vmem:[%s4 + $0xd0] sm:$0xff] %v428
  %477 = vst [vmem:[%s4 + $0xd8] sm:$0xff] %v431
  %478 = vst [vmem:[%s4 + $0xe0] sm:$0xff] %v436
  %479 = vst [vmem:[%s4 + $0xe8] sm:$0xff] %v439
  %480 = vst [vmem:[%s4 + $0xf0] sm:$0xff] %v444
  %481 = vst [vmem:[%s4 + $0xf8] sm:$0xff] %v447
  // Predicated region
  $region18: #{generator_forward.8} parent=0 // pred_check
    _
  $region19: #{generator_forward.8} parent=0 // pred_check_branch
    %483 = sbr.rel (0) target = $region21
  $region20: #{generator_forward.8} parent=0 // pred_region
    _
  $region21: #{generator_forward.8} parent=0 // pred_fallthru
    _
  // Predicated region
  $region22: #{generator_forward.8} parent=0 // pred_check
    _
  $region23: #{generator_forward.8} parent=0 // pred_check_branch
    %485 = sbr.rel (0) target = $region25
  $region24: #{generator_forward.8} parent=0 // pred_region
    _
  $region25: #{generator_forward.8} parent=0 // pred_fallthru
    _

// kernel: squeeze.57
$region0: #{squeeze.57}
  %s0 = inlined_call_operand.vmem [shape: f32[64,128], index: 0, kind: input, shape index: {}]
  %s1 = inlined_call_operand.vmem [shape: f32[4,16,2,8,8], index: 1, kind: output, shape index: {}]
  $region1: #{squeeze.57} parent=0
    #allocation0 [shape = 'u8[524288]{0}', space=vmem, size = 0x80000, scoped, tag = 'scoped mem for output reshape']
    %v2 = vld [vmem:[%s0] sm:$0xff]
    %vm3 = vcmask 130048
    %4 = vst.msk [vmem:[#allocation0] ss:$8 sm:$0xf] %vm3, %v2
    %5 = vst.msk [vmem:[#allocation0] ss:$8 sm:$0xf0] %vm3, %v2
    %s6 = scalar_lea.vmem %s0, 8
    %v7 = vld [vmem:[%s6] sm:$0xff]
    %vm8 = vcmask 130048
    %s9 = scalar_lea.vmem [#allocation0], 64
    %10 = vst.msk [vmem:[%s9] ss:$8 sm:$0xf] %vm8, %v7
    %s11 = scalar_lea.vmem [#allocation0], 64
    %12 = vst.msk [vmem:[%s11] ss:$8 sm:$0xf0] %vm8, %v7
    %s13 = scalar_lea.vmem %s0, 16
    %v14 = vld [vmem:[%s13] sm:$0xff]
    %vm15 = vcmask 130048
    %s16 = scalar_lea.vmem [#allocation0], 128
    %17 = vst.msk [vmem:[%s16] ss:$8 sm:$0xf] %vm15, %v14
    %s18 = scalar_lea.vmem [#allocation0], 128
    %19 = vst.msk [vmem:[%s18] ss:$8 sm:$0xf0] %vm15, %v14
    %s20 = scalar_lea.vmem %s0, 24
    %v21 = vld [vmem:[%s20] sm:$0xff]
    %vm22 = vcmask 130048
    %s23 = scalar_lea.vmem [#allocation0], 192
    %24 = vst.msk [vmem:[%s23] ss:$8 sm:$0xf] %vm22, %v21
    %s25 = scalar_lea.vmem [#allocation0], 192
    %26 = vst.msk [vmem:[%s25] ss:$8 sm:$0xf0] %vm22, %v21
    %s27 = scalar_lea.vmem %s0, 32
    %v28 = vld [vmem:[%s27] sm:$0xff]
    %vm29 = vcmask 130048
    %s30 = scalar_lea.vmem [#allocation0], 256
    %31 = vst.msk [vmem:[%s30] ss:$8 sm:$0xf] %vm29, %v28
    %s32 = scalar_lea.vmem [#allocation0], 256
    %33 = vst.msk [vmem:[%s32] ss:$8 sm:$0xf0] %vm29, %v28
    %s34 = scalar_lea.vmem %s0, 40
    %v35 = vld [vmem:[%s34] sm:$0xff]
    %vm36 = vcmask 130048
    %s37 = scalar_lea.vmem [#allocation0], 320
    %38 = vst.msk [vmem:[%s37] ss:$8 sm:$0xf] %vm36, %v35
    %s39 = scalar_lea.vmem [#allocation0], 320
    %40 = vst.msk [vmem:[%s39] ss:$8 sm:$0xf0] %vm36, %v35
    %s41 = scalar_lea.vmem %s0, 48
    %v42 = vld [vmem:[%s41] sm:$0xff]
    %vm43 = vcmask 130048
    %s44 = scalar_lea.vmem [#allocation0], 384
    %45 = vst.msk [vmem:[%s44] ss:$8 sm:$0xf] %vm43, %v42
    %s46 = scalar_lea.vmem [#allocation0], 384
    %47 = vst.msk [vmem:[%s46] ss:$8 sm:$0xf0] %vm43, %v42
    %s48 = scalar_lea.vmem %s0, 56
    %v49 = vld [vmem:[%s48] sm:$0xff]
    %vm50 = vcmask 130048
    %s51 = scalar_lea.vmem [#allocation0], 448
    %52 = vst.msk [vmem:[%s51] ss:$8 sm:$0xf] %vm50, %v49
    %s53 = scalar_lea.vmem [#allocation0], 448
    %54 = vst.msk [vmem:[%s53] ss:$8 sm:$0xf0] %vm50, %v49
    %s55 = scalar_lea.vmem %s0, 64
    %v56 = vld [vmem:[%s55] sm:$0xff]
    %vm57 = vcmask 130048
    %s58 = scalar_lea.vmem [#allocation0], 512
    %59 = vst.msk [vmem:[%s58] ss:$8 sm:$0xf] %vm57, %v56
    %s60 = scalar_lea.vmem [#allocation0], 512
    %61 = vst.msk [vmem:[%s60] ss:$8 sm:$0xf0] %vm57, %v56
    %s62 = scalar_lea.vmem %s0, 72
    %v63 = vld [vmem:[%s62] sm:$0xff]
    %vm64 = vcmask 130048
    %s65 = scalar_lea.vmem [#allocation0], 576
    %66 = vst.msk [vmem:[%s65] ss:$8 sm:$0xf] %vm64, %v63
    %s67 = scalar_lea.vmem [#allocation0], 576
    %68 = vst.msk [vmem:[%s67] ss:$8 sm:$0xf0] %vm64, %v63
    %s69 = scalar_lea.vmem %s0, 80
    %v70 = vld [vmem:[%s69] sm:$0xff]
    %vm71 = vcmask 130048
    %s72 = scalar_lea.vmem [#allocation0], 640
    %73 = vst.msk [vmem:[%s72] ss:$8 sm:$0xf] %vm71, %v70
    %s74 = scalar_lea.vmem [#allocation0], 640
    %75 = vst.msk [vmem:[%s74] ss:$8 sm:$0xf0] %vm71, %v70
    %s76 = scalar_lea.vmem %s0, 88
    %v77 = vld [vmem:[%s76] sm:$0xff]
    %vm78 = vcmask 130048
    %s79 = scalar_lea.vmem [#allocation0], 704
    %80 = vst.msk [vmem:[%s79] ss:$8 sm:$0xf] %vm78, %v77
    %s81 = scalar_lea.vmem [#allocation0], 704
    %82 = vst.msk [vmem:[%s81] ss:$8 sm:$0xf0] %vm78, %v77
    %s83 = scalar_lea.vmem %s0, 96
    %v84 = vld [vmem:[%s83] sm:$0xff]
    %vm85 = vcmask 130048
    %s86 = scalar_lea.vmem [#allocation0], 768
    %87 = vst.msk [vmem:[%s86] ss:$8 sm:$0xf] %vm85, %v84
    %s88 = scalar_lea.vmem [#allocation0], 768
    %89 = vst.msk [vmem:[%s88] ss:$8 sm:$0xf0] %vm85, %v84
    %s90 = scalar_lea.vmem %s0, 104
    %v91 = vld [vmem:[%s90] sm:$0xff]
    %vm92 = vcmask 130048
    %s93 = scalar_lea.vmem [#allocation0], 832
    %94 = vst.msk [vmem:[%s93] ss:$8 sm:$0xf] %vm92, %v91
    %s95 = scalar_lea.vmem [#allocation0], 832
    %96 = vst.msk [vmem:[%s95] ss:$8 sm:$0xf0] %vm92, %v91
    %s97 = scalar_lea.vmem %s0, 112
    %v98 = vld [vmem:[%s97] sm:$0xff]
    %vm99 = vcmask 130048
    %s100 = scalar_lea.vmem [#allocation0], 896
    %101 = vst.msk [vmem:[%s100] ss:$8 sm:$0xf] %vm99, %v98
    %s102 = scalar_lea.vmem [#allocation0], 896
    %103 = vst.msk [vmem:[%s102] ss:$8 sm:$0xf0] %vm99, %v98
    %s104 = scalar_lea.vmem %s0, 120
    %v105 = vld [vmem:[%s104] sm:$0xff]
    %vm106 = vcmask 130048
    %s107 = scalar_lea.vmem [#allocation0], 960
    %108 = vst.msk [vmem:[%s107] ss:$8 sm:$0xf] %vm106, %v105
    %s109 = scalar_lea.vmem [#allocation0], 960
    %110 = vst.msk [vmem:[%s109] ss:$8 sm:$0xf0] %vm106, %v105
    %v111 = vld [vmem:[%s0] sm:$0xff]
    %112 = vrot.lane.b32.xlu0 %v111, 112
    %v113 = vpop.permute.xlu0 %112
    %vm114 = vcmask 130048
    %s115 = scalar_lea.vmem [#allocation0], 1
    %116 = vst.msk [vmem:[%s115] ss:$8 sm:$0xf] %vm114, %v113
    %s117 = scalar_lea.vmem [#allocation0], 1
    %118 = vst.msk [vmem:[%s117] ss:$8 sm:$0xf0] %vm114, %v113
    %s119 = scalar_lea.vmem %s0, 8
    %v120 = vld [vmem:[%s119] sm:$0xff]
    %121 = vrot.lane.b32.xlu0 %v120, 112
    %v122 = vpop.permute.xlu0 %121
    %vm123 = vcmask 130048
    %s124 = scalar_lea.vmem [#allocation0], 65
    %125 = vst.msk [vmem:[%s124] ss:$8 sm:$0xf] %vm123, %v122
    %s126 = scalar_lea.vmem [#allocation0], 65
    %127 = vst.msk [vmem:[%s126] ss:$8 sm:$0xf0] %vm123, %v122
    %s128 = scalar_lea.vmem %s0, 16
    %v129 = vld [vmem:[%s128] sm:$0xff]
    %130 = vrot.lane.b32.xlu0 %v129, 112
    %v131 = vpop.permute.xlu0 %130
    %vm132 = vcmask 130048
    %s133 = scalar_lea.vmem [#allocation0], 129
    %134 = vst.msk [vmem:[%s133] ss:$8 sm:$0xf] %vm132, %v131
    %s135 = scalar_lea.vmem [#allocation0], 129
    %136 = vst.msk [vmem:[%s135] ss:$8 sm:$0xf0] %vm132, %v131
    %s137 = scalar_lea.vmem %s0, 24
    %v138 = vld [vmem:[%s137] sm:$0xff]
    %139 = vrot.lane.b32.xlu0 %v138, 112
    %v140 = vpop.permute.xlu0 %139
    %vm141 = vcmask 130048
    %s142 = scalar_lea.vmem [#allocation0], 193
    %143 = vst.msk [vmem:[%s142] ss:$8 sm:$0xf] %vm141, %v140
    %s144 = scalar_lea.vmem [#allocation0], 193
    %145 = vst.msk [vmem:[%s144] ss:$8 sm:$0xf0] %vm141, %v140
    %s146 = scalar_lea.vmem %s0, 32
    %v147 = vld [vmem:[%s146] sm:$0xff]
    %148 = vrot.lane.b32.xlu0 %v147, 112
    %v149 = vpop.permute.xlu0 %148
    %vm150 = vcmask 130048
    %s151 = scalar_lea.vmem [#allocation0], 257
    %152 = vst.msk [vmem:[%s151] ss:$8 sm:$0xf] %vm150, %v149
    %s153 = scalar_lea.vmem [#allocation0], 257
    %154 = vst.msk [vmem:[%s153] ss:$8 sm:$0xf0] %vm150, %v149
    %s155 = scalar_lea.vmem %s0, 40
    %v156 = vld [vmem:[%s155] sm:$0xff]
    %157 = vrot.lane.b32.xlu0 %v156, 112
    %v158 = vpop.permute.xlu0 %157
    %vm159 = vcmask 130048
    %s160 = scalar_lea.vmem [#allocation0], 321
    %161 = vst.msk [vmem:[%s160] ss:$8 sm:$0xf] %vm159, %v158
    %s162 = scalar_lea.vmem [#allocation0], 321
    %163 = vst.msk [vmem:[%s162] ss:$8 sm:$0xf0] %vm159, %v158
    %s164 = scalar_lea.vmem %s0, 48
    %v165 = vld [vmem:[%s164] sm:$0xff]
    %166 = vrot.lane.b32.xlu0 %v165, 112
    %v167 = vpop.permute.xlu0 %166
    %vm168 = vcmask 130048
    %s169 = scalar_lea.vmem [#allocation0], 385
    %170 = vst.msk [vmem:[%s169] ss:$8 sm:$0xf] %vm168, %v167
    %s171 = scalar_lea.vmem [#allocation0], 385
    %172 = vst.msk [vmem:[%s171] ss:$8 sm:$0xf0] %vm168, %v167
    %s173 = scalar_lea.vmem %s0, 56
    %v174 = vld [vmem:[%s173] sm:$0xff]
    %175 = vrot.lane.b32.xlu0 %v174, 112
    %v176 = vpop.permute.xlu0 %175
    %vm177 = vcmask 130048
    %s178 = scalar_lea.vmem [#allocation0], 449
    %179 = vst.msk [vmem:[%s178] ss:$8 sm:$0xf] %vm177, %v176
    %s180 = scalar_lea.vmem [#allocation0], 449
    %181 = vst.msk [vmem:[%s180] ss:$8 sm:$0xf0] %vm177, %v176
    %s182 = scalar_lea.vmem %s0, 64
    %v183 = vld [vmem:[%s182] sm:$0xff]
    %184 = vrot.lane.b32.xlu0 %v183, 112
    %v185 = vpop.permute.xlu0 %184
    %vm186 = vcmask 130048
    %s187 = scalar_lea.vmem [#allocation0], 513
    %188 = vst.msk [vmem:[%s187] ss:$8 sm:$0xf] %vm186, %v185
    %s189 = scalar_lea.vmem [#allocation0], 513
    %190 = vst.msk [vmem:[%s189] ss:$8 sm:$0xf0] %vm186, %v185
    %s191 = scalar_lea.vmem %s0, 72
    %v192 = vld [vmem:[%s191] sm:$0xff]
    %193 = vrot.lane.b32.xlu0 %v192, 112
    %v194 = vpop.permute.xlu0 %193
    %vm195 = vcmask 130048
    %s196 = scalar_lea.vmem [#allocation0], 577
    %197 = vst.msk [vmem:[%s196] ss:$8 sm:$0xf] %vm195, %v194
    %s198 = scalar_lea.vmem [#allocation0], 577
    %199 = vst.msk [vmem:[%s198] ss:$8 sm:$0xf0] %vm195, %v194
    %s200 = scalar_lea.vmem %s0, 80
    %v201 = vld [vmem:[%s200] sm:$0xff]
    %202 = vrot.lane.b32.xlu0 %v201, 112
    %v203 = vpop.permute.xlu0 %202
    %vm204 = vcmask 130048
    %s205 = scalar_lea.vmem [#allocation0], 641
    %206 = vst.msk [vmem:[%s205] ss:$8 sm:$0xf] %vm204, %v203
    %s207 = scalar_lea.vmem [#allocation0], 641
    %208 = vst.msk [vmem:[%s207] ss:$8 sm:$0xf0] %vm204, %v203
    %s209 = scalar_lea.vmem %s0, 88
    %v210 = vld [vmem:[%s209] sm:$0xff]
    %211 = vrot.lane.b32.xlu0 %v210, 112
    %v212 = vpop.permute.xlu0 %211
    %vm213 = vcmask 130048
    %s214 = scalar_lea.vmem [#allocation0], 705
    %215 = vst.msk [vmem:[%s214] ss:$8 sm:$0xf] %vm213, %v212
    %s216 = scalar_lea.vmem [#allocation0], 705
    %217 = vst.msk [vmem:[%s216] ss:$8 sm:$0xf0] %vm213, %v212
    %s218 = scalar_lea.vmem %s0, 96
    %v219 = vld [vmem:[%s218] sm:$0xff]
    %220 = vrot.lane.b32.xlu0 %v219, 112
    %v221 = vpop.permute.xlu0 %220
    %vm222 = vcmask 130048
    %s223 = scalar_lea.vmem [#allocation0], 769
    %224 = vst.msk [vmem:[%s223] ss:$8 sm:$0xf] %vm222, %v221
    %s225 = scalar_lea.vmem [#allocation0], 769
    %226 = vst.msk [vmem:[%s225] ss:$8 sm:$0xf0] %vm222, %v221
    %s227 = scalar_lea.vmem %s0, 104
    %v228 = vld [vmem:[%s227] sm:$0xff]
    %229 = vrot.lane.b32.xlu0 %v228, 112
    %v230 = vpop.permute.xlu0 %229
    %vm231 = vcmask 130048
    %s232 = scalar_lea.vmem [#allocation0], 833
    %233 = vst.msk [vmem:[%s232] ss:$8 sm:$0xf] %vm231, %v230
    %s234 = scalar_lea.vmem [#allocation0], 833
    %235 = vst.msk [vmem:[%s234] ss:$8 sm:$0xf0] %vm231, %v230
    %s236 = scalar_lea.vmem %s0, 112
    %v237 = vld [vmem:[%s236] sm:$0xff]
    %238 = vrot.lane.b32.xlu0 %v237, 112
    %v239 = vpop.permute.xlu0 %238
    %vm240 = vcmask 130048
    %s241 = scalar_lea.vmem [#allocation0], 897
    %242 = vst.msk [vmem:[%s241] ss:$8 sm:$0xf] %vm240, %v239
    %s243 = scalar_lea.vmem [#allocation0], 897
    %244 = vst.msk [vmem:[%s243] ss:$8 sm:$0xf0] %vm240, %v239
    %s245 = scalar_lea.vmem %s0, 120
    %v246 = vld [vmem:[%s245] sm:$0xff]
    %247 = vrot.lane.b32.xlu0 %v246, 112
    %v248 = vpop.permute.xlu0 %247
    %vm249 = vcmask 130048
    %s250 = scalar_lea.vmem [#allocation0], 961
    %251 = vst.msk [vmem:[%s250] ss:$8 sm:$0xf] %vm249, %v248
    %s252 = scalar_lea.vmem [#allocation0], 961
    %253 = vst.msk [vmem:[%s252] ss:$8 sm:$0xf0] %vm249, %v248
    %v254 = vld [vmem:[%s0] sm:$0xff]
    %255 = vrot.lane.b32.xlu0 %v254, 96
    %v256 = vpop.permute.xlu0 %255
    %vm257 = vcmask 130048
    %s258 = scalar_lea.vmem [#allocation0], 2
    %259 = vst.msk [vmem:[%s258] ss:$8 sm:$0xf] %vm257, %v256
    %s260 = scalar_lea.vmem [#allocation0], 2
    %261 = vst.msk [vmem:[%s260] ss:$8 sm:$0xf0] %vm257, %v256
    %s262 = scalar_lea.vmem %s0, 8
    %v263 = vld [vmem:[%s262] sm:$0xff]
    %264 = vrot.lane.b32.xlu0 %v263, 96
    %v265 = vpop.permute.xlu0 %264
    %vm266 = vcmask 130048
    %s267 = scalar_lea.vmem [#allocation0], 66
    %268 = vst.msk [vmem:[%s267] ss:$8 sm:$0xf] %vm266, %v265
    %s269 = scalar_lea.vmem [#allocation0], 66
    %270 = vst.msk [vmem:[%s269] ss:$8 sm:$0xf0] %vm266, %v265
    %s271 = scalar_lea.vmem %s0, 16
    %v272 = vld [vmem:[%s271] sm:$0xff]
    %273 = vrot.lane.b32.xlu0 %v272, 96
    %v274 = vpop.permute.xlu0 %273
    %vm275 = vcmask 130048
    %s276 = scalar_lea.vmem [#allocation0], 130
    %277 = vst.msk [vmem:[%s276] ss:$8 sm:$0xf] %vm275, %v274
    %s278 = scalar_lea.vmem [#allocation0], 130
    %279 = vst.msk [vmem:[%s278] ss:$8 sm:$0xf0] %vm275, %v274
    %s280 = scalar_lea.vmem %s0, 24
    %v281 = vld [vmem:[%s280] sm:$0xff]
    %282 = vrot.lane.b32.xlu0 %v281, 96
    %v283 = vpop.permute.xlu0 %282
    %vm284 = vcmask 130048
    %s285 = scalar_lea.vmem [#allocation0], 194
    %286 = vst.msk [vmem:[%s285] ss:$8 sm:$0xf] %vm284, %v283
    %s287 = scalar_lea.vmem [#allocation0], 194
    %288 = vst.msk [vmem:[%s287] ss:$8 sm:$0xf0] %vm284, %v283
    %s289 = scalar_lea.vmem %s0, 32
    %v290 = vld [vmem:[%s289] sm:$0xff]
    %291 = vrot.lane.b32.xlu0 %v290, 96
    %v292 = vpop.permute.xlu0 %291
    %vm293 = vcmask 130048
    %s294 = scalar_lea.vmem [#allocation0], 258
    %295 = vst.msk [vmem:[%s294] ss:$8 sm:$0xf] %vm293, %v292
    %s296 = scalar_lea.vmem [#allocation0], 258
    %297 = vst.msk [vmem:[%s296] ss:$8 sm:$0xf0] %vm293, %v292
    %s298 = scalar_lea.vmem %s0, 40
    %v299 = vld [vmem:[%s298] sm:$0xff]
    %300 = vrot.lane.b32.xlu0 %v299, 96
    %v301 = vpop.permute.xlu0 %300
    %vm302 = vcmask 130048
    %s303 = scalar_lea.vmem [#allocation0], 322
    %304 = vst.msk [vmem:[%s303] ss:$8 sm:$0xf] %vm302, %v301
    %s305 = scalar_lea.vmem [#allocation0], 322
    %306 = vst.msk [vmem:[%s305] ss:$8 sm:$0xf0] %vm302, %v301
    %s307 = scalar_lea.vmem %s0, 48
    %v308 = vld [vmem:[%s307] sm:$0xff]
    %309 = vrot.lane.b32.xlu0 %v308, 96
    %v310 = vpop.permute.xlu0 %309
    %vm311 = vcmask 130048
    %s312 = scalar_lea.vmem [#allocation0], 386
    %313 = vst.msk [vmem:[%s312] ss:$8 sm:$0xf] %vm311, %v310
    %s314 = scalar_lea.vmem [#allocation0], 386
    %315 = vst.msk [vmem:[%s314] ss:$8 sm:$0xf0] %vm311, %v310
    %s316 = scalar_lea.vmem %s0, 56
    %v317 = vld [vmem:[%s316] sm:$0xff]
    %318 = vrot.lane.b32.xlu0 %v317, 96
    %v319 = vpop.permute.xlu0 %318
    %vm320 = vcmask 130048
    %s321 = scalar_lea.vmem [#allocation0], 450
    %322 = vst.msk [vmem:[%s321] ss:$8 sm:$0xf] %vm320, %v319
    %s323 = scalar_lea.vmem [#allocation0], 450
    %324 = vst.msk [vmem:[%s323] ss:$8 sm:$0xf0] %vm320, %v319
    %s325 = scalar_lea.vmem %s0, 64
    %v326 = vld [vmem:[%s325] sm:$0xff]
    %327 = vrot.lane.b32.xlu0 %v326, 96
    %v328 = vpop.permute.xlu0 %327
    %vm329 = vcmask 130048
    %s330 = scalar_lea.vmem [#allocation0], 514
    %331 = vst.msk [vmem:[%s330] ss:$8 sm:$0xf] %vm329, %v328
    %s332 = scalar_lea.vmem [#allocation0], 514
    %333 = vst.msk [vmem:[%s332] ss:$8 sm:$0xf0] %vm329, %v328
    %s334 = scalar_lea.vmem %s0, 72
    %v335 = vld [vmem:[%s334] sm:$0xff]
    %336 = vrot.lane.b32.xlu0 %v335, 96
    %v337 = vpop.permute.xlu0 %336
    %vm338 = vcmask 130048
    %s339 = scalar_lea.vmem [#allocation0], 578
    %340 = vst.msk [vmem:[%s339] ss:$8 sm:$0xf] %vm338, %v337
    %s341 = scalar_lea.vmem [#allocation0], 578
    %342 = vst.msk [vmem:[%s341] ss:$8 sm:$0xf0] %vm338, %v337
    %s343 = scalar_lea.vmem %s0, 80
    %v344 = vld [vmem:[%s343] sm:$0xff]
    %345 = vrot.lane.b32.xlu0 %v344, 96
    %v346 = vpop.permute.xlu0 %345
    %vm347 = vcmask 130048
    %s348 = scalar_lea.vmem [#allocation0], 642
    %349 = vst.msk [vmem:[%s348] ss:$8 sm:$0xf] %vm347, %v346
    %s350 = scalar_lea.vmem [#allocation0], 642
    %351 = vst.msk [vmem:[%s350] ss:$8 sm:$0xf0] %vm347, %v346
    %s352 = scalar_lea.vmem %s0, 88
    %v353 = vld [vmem:[%s352] sm:$0xff]
    %354 = vrot.lane.b32.xlu0 %v353, 96
    %v355 = vpop.permute.xlu0 %354
    %vm356 = vcmask 130048
    %s357 = scalar_lea.vmem [#allocation0], 706
    %358 = vst.msk [vmem:[%s357] ss:$8 sm:$0xf] %vm356, %v355
    %s359 = scalar_lea.vmem [#allocation0], 706
    %360 = vst.msk [vmem:[%s359] ss:$8 sm:$0xf0] %vm356, %v355
    %s361 = scalar_lea.vmem %s0, 96
    %v362 = vld [vmem:[%s361] sm:$0xff]
    %363 = vrot.lane.b32.xlu0 %v362, 96
    %v364 = vpop.permute.xlu0 %363
    %vm365 = vcmask 130048
    %s366 = scalar_lea.vmem [#allocation0], 770
    %367 = vst.msk [vmem:[%s366] ss:$8 sm:$0xf] %vm365, %v364
    %s368 = scalar_lea.vmem [#allocation0], 770
    %369 = vst.msk [vmem:[%s368] ss:$8 sm:$0xf0] %vm365, %v364
    %s370 = scalar_lea.vmem %s0, 104
    %v371 = vld [vmem:[%s370] sm:$0xff]
    %372 = vrot.lane.b32.xlu0 %v371, 96
    %v373 = vpop.permute.xlu0 %372
    %vm374 = vcmask 130048
    %s375 = scalar_lea.vmem [#allocation0], 834
    %376 = vst.msk [vmem:[%s375] ss:$8 sm:$0xf] %vm374, %v373
    %s377 = scalar_lea.vmem [#allocation0], 834
    %378 = vst.msk [vmem:[%s377] ss:$8 sm:$0xf0] %vm374, %v373
    %s379 = scalar_lea.vmem %s0, 112
    %v380 = vld [vmem:[%s379] sm:$0xff]
    %381 = vrot.lane.b32.xlu0 %v380, 96
    %v382 = vpop.permute.xlu0 %381
    %vm383 = vcmask 130048
    %s384 = scalar_lea.vmem [#allocation0], 898
    %385 = vst.msk [vmem:[%s384] ss:$8 sm:$0xf] %vm383, %v382
    %s386 = scalar_lea.vmem [#allocation0], 898
    %387 = vst.msk [vmem:[%s386] ss:$8 sm:$0xf0] %vm383, %v382
    %s388 = scalar_lea.vmem %s0, 120
    %v389 = vld [vmem:[%s388] sm:$0xff]
    %390 = vrot.lane.b32.xlu0 %v389, 96
    %v391 = vpop.permute.xlu0 %390
    %vm392 = vcmask 130048
    %s393 = scalar_lea.vmem [#allocation0], 962
    %394 = vst.msk [vmem:[%s393] ss:$8 sm:$0xf] %vm392, %v391
    %s395 = scalar_lea.vmem [#allocation0], 962
    %396 = vst.msk [vmem:[%s395] ss:$8 sm:$0xf0] %vm392, %v391
    %v397 = vld [vmem:[%s0] sm:$0xff]
    %398 = vrot.lane.b32.xlu0 %v397, 80
    %v399 = vpop.permute.xlu0 %398
    %vm400 = vcmask 130048
    %s401 = scalar_lea.vmem [#allocation0], 3
    %402 = vst.msk [vmem:[%s401] ss:$8 sm:$0xf] %vm400, %v399
    %s403 = scalar_lea.vmem [#allocation0], 3
    %404 = vst.msk [vmem:[%s403] ss:$8 sm:$0xf0] %vm400, %v399
    %s405 = scalar_lea.vmem %s0, 8
    %v406 = vld [vmem:[%s405] sm:$0xff]
    %407 = vrot.lane.b32.xlu0 %v406, 80
    %v408 = vpop.permute.xlu0 %407
    %vm409 = vcmask 130048
    %s410 = scalar_lea.vmem [#allocation0], 67
    %411 = vst.msk [vmem:[%s410] ss:$8 sm:$0xf] %vm409, %v408
    %s412 = scalar_lea.vmem [#allocation0], 67
    %413 = vst.msk [vmem:[%s412] ss:$8 sm:$0xf0] %vm409, %v408
    %s414 = scalar_lea.vmem %s0, 16
    %v415 = vld [vmem:[%s414] sm:$0xff]
    %416 = vrot.lane.b32.xlu0 %v415, 80
    %v417 = vpop.permute.xlu0 %416
    %vm418 = vcmask 130048
    %s419 = scalar_lea.vmem [#allocation0], 131
    %420 = vst.msk [vmem:[%s419] ss:$8 sm:$0xf] %vm418, %v417
    %s421 = scalar_lea.vmem [#allocation0], 131
    %422 = vst.msk [vmem:[%s421] ss:$8 sm:$0xf0] %vm418, %v417
    %s423 = scalar_lea.vmem %s0, 24
    %v424 = vld [vmem:[%s423] sm:$0xff]
    %425 = vrot.lane.b32.xlu0 %v424, 80
    %v426 = vpop.permute.xlu0 %425
    %vm427 = vcmask 130048
    %s428 = scalar_lea.vmem [#allocation0], 195
    %429 = vst.msk [vmem:[%s428] ss:$8 sm:$0xf] %vm427, %v426
    %s430 = scalar_lea.vmem [#allocation0], 195
    %431 = vst.msk [vmem:[%s430] ss:$8 sm:$0xf0] %vm427, %v426
    %s432 = scalar_lea.vmem %s0, 32
    %v433 = vld [vmem:[%s432] sm:$0xff]
    %434 = vrot.lane.b32.xlu0 %v433, 80
    %v435 = vpop.permute.xlu0 %434
    %vm436 = vcmask 130048
    %s437 = scalar_lea.vmem [#allocation0], 259
    %438 = vst.msk [vmem:[%s437] ss:$8 sm:$0xf] %vm436, %v435
    %s439 = scalar_lea.vmem [#allocation0], 259
    %440 = vst.msk [vmem:[%s439] ss:$8 sm:$0xf0] %vm436, %v435
    %s441 = scalar_lea.vmem %s0, 40
    %v442 = vld [vmem:[%s441] sm:$0xff]
    %443 = vrot.lane.b32.xlu0 %v442, 80
    %v444 = vpop.permute.xlu0 %443
    %vm445 = vcmask 130048
    %s446 = scalar_lea.vmem [#allocation0], 323
    %447 = vst.msk [vmem:[%s446] ss:$8 sm:$0xf] %vm445, %v444
    %s448 = scalar_lea.vmem [#allocation0], 323
    %449 = vst.msk [vmem:[%s448] ss:$8 sm:$0xf0] %vm445, %v444
    %s450 = scalar_lea.vmem %s0, 48
    %v451 = vld [vmem:[%s450] sm:$0xff]
    %452 = vrot.lane.b32.xlu0 %v451, 80
    %v453 = vpop.permute.xlu0 %452
    %vm454 = vcmask 130048
    %s455 = scalar_lea.vmem [#allocation0], 387
    %456 = vst.msk [vmem:[%s455] ss:$8 sm:$0xf] %vm454, %v453
    %s457 = scalar_lea.vmem [#allocation0], 387
    %458 = vst.msk [vmem:[%s457] ss:$8 sm:$0xf0] %vm454, %v453
    %s459 = scalar_lea.vmem %s0, 56
    %v460 = vld [vmem:[%s459] sm:$0xff]
    %461 = vrot.lane.b32.xlu0 %v460, 80
    %v462 = vpop.permute.xlu0 %461
    %vm463 = vcmask 130048
    %s464 = scalar_lea.vmem [#allocation0], 451
    %465 = vst.msk [vmem:[%s464] ss:$8 sm:$0xf] %vm463, %v462
    %s466 = scalar_lea.vmem [#allocation0], 451
    %467 = vst.msk [vmem:[%s466] ss:$8 sm:$0xf0] %vm463, %v462
    %s468 = scalar_lea.vmem %s0, 64
    %v469 = vld [vmem:[%s468] sm:$0xff]
    %470 = vrot.lane.b32.xlu0 %v469, 80
    %v471 = vpop.permute.xlu0 %470
    %vm472 = vcmask 130048
    %s473 = scalar_lea.vmem [#allocation0], 515
    %474 = vst.msk [vmem:[%s473] ss:$8 sm:$0xf] %vm472, %v471
    %s475 = scalar_lea.vmem [#allocation0], 515
    %476 = vst.msk [vmem:[%s475] ss:$8 sm:$0xf0] %vm472, %v471
    %s477 = scalar_lea.vmem %s0, 72
    %v478 = vld [vmem:[%s477] sm:$0xff]
    %479 = vrot.lane.b32.xlu0 %v478, 80
    %v480 = vpop.permute.xlu0 %479
    %vm481 = vcmask 130048
    %s482 = scalar_lea.vmem [#allocation0], 579
    %483 = vst.msk [vmem:[%s482] ss:$8 sm:$0xf] %vm481, %v480
    %s484 = scalar_lea.vmem [#allocation0], 579
    %485 = vst.msk [vmem:[%s484] ss:$8 sm:$0xf0] %vm481, %v480
    %s486 = scalar_lea.vmem %s0, 80
    %v487 = vld [vmem:[%s486] sm:$0xff]
    %488 = vrot.lane.b32.xlu0 %v487, 80
    %v489 = vpop.permute.xlu0 %488
    %vm490 = vcmask 130048
    %s491 = scalar_lea.vmem [#allocation0], 643
    %492 = vst.msk [vmem:[%s491] ss:$8 sm:$0xf] %vm490, %v489
    %s493 = scalar_lea.vmem [#allocation0], 643
    %494 = vst.msk [vmem:[%s493] ss:$8 sm:$0xf0] %vm490, %v489
    %s495 = scalar_lea.vmem %s0, 88
    %v496 = vld [vmem:[%s495] sm:$0xff]
    %497 = vrot.lane.b32.xlu0 %v496, 80
    %v498 = vpop.permute.xlu0 %497
    %vm499 = vcmask 130048
    %s500 = scalar_lea.vmem [#allocation0], 707
    %501 = vst.msk [vmem:[%s500] ss:$8 sm:$0xf] %vm499, %v498
    %s502 = scalar_lea.vmem [#allocation0], 707
    %503 = vst.msk [vmem:[%s502] ss:$8 sm:$0xf0] %vm499, %v498
    %s504 = scalar_lea.vmem %s0, 96
    %v505 = vld [vmem:[%s504] sm:$0xff]
    %506 = vrot.lane.b32.xlu0 %v505, 80
    %v507 = vpop.permute.xlu0 %506
    %vm508 = vcmask 130048
    %s509 = scalar_lea.vmem [#allocation0], 771
    %510 = vst.msk [vmem:[%s509] ss:$8 sm:$0xf] %vm508, %v507
    %s511 = scalar_lea.vmem [#allocation0], 771
    %512 = vst.msk [vmem:[%s511] ss:$8 sm:$0xf0] %vm508, %v507
    %s513 = scalar_lea.vmem %s0, 104
    %v514 = vld [vmem:[%s513] sm:$0xff]
    %515 = vrot.lane.b32.xlu0 %v514, 80
    %v516 = vpop.permute.xlu0 %515
    %vm517 = vcmask 130048
    %s518 = scalar_lea.vmem [#allocation0], 835
    %519 = vst.msk [vmem:[%s518] ss:$8 sm:$0xf] %vm517, %v516
    %s520 = scalar_lea.vmem [#allocation0], 835
    %521 = vst.msk [vmem:[%s520] ss:$8 sm:$0xf0] %vm517, %v516
    %s522 = scalar_lea.vmem %s0, 112
    %v523 = vld [vmem:[%s522] sm:$0xff]
    %524 = vrot.lane.b32.xlu0 %v523, 80
    %v525 = vpop.permute.xlu0 %524
    %vm526 = vcmask 130048
    %s527 = scalar_lea.vmem [#allocation0], 899
    %528 = vst.msk [vmem:[%s527] ss:$8 sm:$0xf] %vm526, %v525
    %s529 = scalar_lea.vmem [#allocation0], 899
    %530 = vst.msk [vmem:[%s529] ss:$8 sm:$0xf0] %vm526, %v525
    %s531 = scalar_lea.vmem %s0, 120
    %v532 = vld [vmem:[%s531] sm:$0xff]
    %533 = vrot.lane.b32.xlu0 %v532, 80
    %v534 = vpop.permute.xlu0 %533
    %vm535 = vcmask 130048
    %s536 = scalar_lea.vmem [#allocation0], 963
    %537 = vst.msk [vmem:[%s536] ss:$8 sm:$0xf] %vm535, %v534
    %s538 = scalar_lea.vmem [#allocation0], 963
    %539 = vst.msk [vmem:[%s538] ss:$8 sm:$0xf0] %vm535, %v534
    %s541 = sshllo.u32 0, 4
    %v543 = vld [vmem:[#allocation0] sm:%s541]
    %s544 = sshllo.u32 0, 4
    %545 = vst [vmem:[%s1] sm:%s544] %v543
    %s546 = scalar_lea.vmem [#allocation0], 8
    %v547 = vld [vmem:[%s546] sm:%s541]
    %s548 = sshllo.u32 0, 4
    %s549 = scalar_lea.vmem %s1, 4
    %550 = vst [vmem:[%s549] sm:%s548] %v547
    %s551 = scalar_lea.vmem [#allocation0], 16
    %v552 = vld [vmem:[%s551] sm:%s541]
    %s553 = sshllo.u32 0, 4
    %s554 = smul.addr 4, 2
    %s555 = scalar_lea.vmem %s1, %s554
    %556 = vst [vmem:[%s555] sm:%s553] %v552
    %s557 = scalar_lea.vmem [#allocation0], 24
    %v558 = vld [vmem:[%s557] sm:%s541]
    %s559 = sshllo.u32 0, 4
    %s560 = smul.addr 4, 3
    %s561 = scalar_lea.vmem %s1, %s560
    %562 = vst [vmem:[%s561] sm:%s559] %v558
    %s563 = scalar_lea.vmem [#allocation0], 32
    %v564 = vld [vmem:[%s563] sm:%s541]
    %s565 = sshllo.u32 0, 4
    %s566 = smul.addr 4, 4
    %s567 = scalar_lea.vmem %s1, %s566
    %568 = vst [vmem:[%s567] sm:%s565] %v564
    %s569 = scalar_lea.vmem [#allocation0], 40
    %v570 = vld [vmem:[%s569] sm:%s541]
    %s571 = sshllo.u32 0, 4
    %s572 = smul.addr 4, 5
    %s573 = scalar_lea.vmem %s1, %s572
    %574 = vst [vmem:[%s573] sm:%s571] %v570
    %s575 = scalar_lea.vmem [#allocation0], 48
    %v576 = vld [vmem:[%s575] sm:%s541]
    %s577 = sshllo.u32 0, 4
    %s578 = smul.addr 4, 6
    %s579 = scalar_lea.vmem %s1, %s578
    %580 = vst [vmem:[%s579] sm:%s577] %v576
    %s581 = scalar_lea.vmem [#allocation0], 56
    %v582 = vld [vmem:[%s581] sm:%s541]
    %s583 = sshllo.u32 0, 4
    %s584 = smul.addr 4, 7
    %s585 = scalar_lea.vmem %s1, %s584
    %586 = vst [vmem:[%s585] sm:%s583] %v582
    %s587 = scalar_lea.vmem [#allocation0], 64
    %v588 = vld [vmem:[%s587] sm:%s541]
    %s589 = sshllo.u32 0, 4
    %s590 = smul.addr 4, 8
    %s591 = scalar_lea.vmem %s1, %s590
    %592 = vst [vmem:[%s591] sm:%s589] %v588
    %s593 = scalar_lea.vmem [#allocation0], 72
    %v594 = vld [vmem:[%s593] sm:%s541]
    %s595 = sshllo.u32 0, 4
    %s596 = smul.addr 4, 9
    %s597 = scalar_lea.vmem %s1, %s596
    %598 = vst [vmem:[%s597] sm:%s595] %v594
    %s599 = scalar_lea.vmem [#allocation0], 80
    %v600 = vld [vmem:[%s599] sm:%s541]
    %s601 = sshllo.u32 0, 4
    %s602 = smul.addr 4, 10
    %s603 = scalar_lea.vmem %s1, %s602
    %604 = vst [vmem:[%s603] sm:%s601] %v600
    %s605 = scalar_lea.vmem [#allocation0], 88
    %v606 = vld [vmem:[%s605] sm:%s541]
    %s607 = sshllo.u32 0, 4
    %s608 = smul.addr 4, 11
    %s609 = scalar_lea.vmem %s1, %s608
    %610 = vst [vmem:[%s609] sm:%s607] %v606
    %s611 = scalar_lea.vmem [#allocation0], 96
    %v612 = vld [vmem:[%s611] sm:%s541]
    %s613 = sshllo.u32 0, 4
    %s614 = smul.addr 4, 12
    %s615 = scalar_lea.vmem %s1, %s614
    %616 = vst [vmem:[%s615] sm:%s613] %v612
    %s617 = scalar_lea.vmem [#allocation0], 104
    %v618 = vld [vmem:[%s617] sm:%s541]
    %s619 = sshllo.u32 0, 4
    %s620 = smul.addr 4, 13
    %s621 = scalar_lea.vmem %s1, %s620
    %622 = vst [vmem:[%s621] sm:%s619] %v618
    %s623 = scalar_lea.vmem [#allocation0], 112
    %v624 = vld [vmem:[%s623] sm:%s541]
    %s625 = sshllo.u32 0, 4
    %s626 = smul.addr 4, 14
    %s627 = scalar_lea.vmem %s1, %s626
    %628 = vst [vmem:[%s627] sm:%s625] %v624
    %s629 = scalar_lea.vmem [#allocation0], 120
    %v630 = vld [vmem:[%s629] sm:%s541]
    %s631 = sshllo.u32 0, 4
    %s632 = smul.addr 4, 15
    %s633 = scalar_lea.vmem %s1, %s632
    %634 = vst [vmem:[%s633] sm:%s631] %v630
    %s635 = scalar_lea.vmem [#allocation0], 128
    %v636 = vld [vmem:[%s635] sm:%s541]
    %s637 = sshllo.u32 0, 4
    %s638 = smul.addr 4, 16
    %s639 = scalar_lea.vmem %s1, %s638
    %640 = vst [vmem:[%s639] sm:%s637] %v636
    %s641 = scalar_lea.vmem [#allocation0], 136
    %v642 = vld [vmem:[%s641] sm:%s541]
    %s643 = sshllo.u32 0, 4
    %s644 = smul.addr 4, 17
    %s645 = scalar_lea.vmem %s1, %s644
    %646 = vst [vmem:[%s645] sm:%s643] %v642
    %s647 = scalar_lea.vmem [#allocation0], 144
    %v648 = vld [vmem:[%s647] sm:%s541]
    %s649 = sshllo.u32 0, 4
    %s650 = smul.addr 4, 18
    %s651 = scalar_lea.vmem %s1, %s650
    %652 = vst [vmem:[%s651] sm:%s649] %v648
    %s653 = scalar_lea.vmem [#allocation0], 152
    %v654 = vld [vmem:[%s653] sm:%s541]
    %s655 = sshllo.u32 0, 4
    %s656 = smul.addr 4, 19
    %s657 = scalar_lea.vmem %s1, %s656
    %658 = vst [vmem:[%s657] sm:%s655] %v654
    %s659 = scalar_lea.vmem [#allocation0], 160
    %v660 = vld [vmem:[%s659] sm:%s541]
    %s661 = sshllo.u32 0, 4
    %s662 = smul.addr 4, 20
    %s663 = scalar_lea.vmem %s1, %s662
    %664 = vst [vmem:[%s663] sm:%s661] %v660
    %s665 = scalar_lea.vmem [#allocation0], 168
    %v666 = vld [vmem:[%s665] sm:%s541]
    %s667 = sshllo.u32 0, 4
    %s668 = smul.addr 4, 21
    %s669 = scalar_lea.vmem %s1, %s668
    %670 = vst [vmem:[%s669] sm:%s667] %v666
    %s671 = scalar_lea.vmem [#allocation0], 176
    %v672 = vld [vmem:[%s671] sm:%s541]
    %s673 = sshllo.u32 0, 4
    %s674 = smul.addr 4, 22
    %s675 = scalar_lea.vmem %s1, %s674
    %676 = vst [vmem:[%s675] sm:%s673] %v672
    %s677 = scalar_lea.vmem [#allocation0], 184
    %v678 = vld [vmem:[%s677] sm:%s541]
    %s679 = sshllo.u32 0, 4
    %s680 = smul.addr 4, 23
    %s681 = scalar_lea.vmem %s1, %s680
    %682 = vst [vmem:[%s681] sm:%s679] %v678
    %s683 = scalar_lea.vmem [#allocation0], 192
    %v684 = vld [vmem:[%s683] sm:%s541]
    %s685 = sshllo.u32 0, 4
    %s686 = smul.addr 4, 24
    %s687 = scalar_lea.vmem %s1, %s686
    %688 = vst [vmem:[%s687] sm:%s685] %v684
    %s689 = scalar_lea.vmem [#allocation0], 200
    %v690 = vld [vmem:[%s689] sm:%s541]
    %s691 = sshllo.u32 0, 4
    %s692 = smul.addr 4, 25
    %s693 = scalar_lea.vmem %s1, %s692
    %694 = vst [vmem:[%s693] sm:%s691] %v690
    %s695 = scalar_lea.vmem [#allocation0], 208
    %v696 = vld [vmem:[%s695] sm:%s541]
    %s697 = sshllo.u32 0, 4
    %s698 = smul.addr 4, 26
    %s699 = scalar_lea.vmem %s1, %s698
    %700 = vst [vmem:[%s699] sm:%s697] %v696
    %s701 = scalar_lea.vmem [#allocation0], 216
    %v702 = vld [vmem:[%s701] sm:%s541]
    %s703 = sshllo.u32 0, 4
    %s704 = smul.addr 4, 27
    %s705 = scalar_lea.vmem %s1, %s704
    %706 = vst [vmem:[%s705] sm:%s703] %v702
    %s707 = scalar_lea.vmem [#allocation0], 224
    %v708 = vld [vmem:[%s707] sm:%s541]
    %s709 = sshllo.u32 0, 4
    %s710 = smul.addr 4, 28
    %s711 = scalar_lea.vmem %s1, %s710
    %712 = vst [vmem:[%s711] sm:%s709] %v708
    %s713 = scalar_lea.vmem [#allocation0], 232
    %v714 = vld [vmem:[%s713] sm:%s541]
    %s715 = sshllo.u32 0, 4
    %s716 = smul.addr 4, 29
    %s717 = scalar_lea.vmem %s1, %s716
    %718 = vst [vmem:[%s717] sm:%s715] %v714
    %s719 = scalar_lea.vmem [#allocation0], 240
    %v720 = vld [vmem:[%s719] sm:%s541]
    %s721 = sshllo.u32 0, 4
    %s722 = smul.addr 4, 30
    %s723 = scalar_lea.vmem %s1, %s722
    %724 = vst [vmem:[%s723] sm:%s721] %v720
    %s725 = scalar_lea.vmem [#allocation0], 248
    %v726 = vld [vmem:[%s725] sm:%s541]
    %s727 = sshllo.u32 0, 4
    %s728 = smul.addr 4, 31
    %s729 = scalar_lea.vmem %s1, %s728
    %730 = vst [vmem:[%s729] sm:%s727] %v726
    %s731 = scalar_lea.vmem [#allocation0], 256
    %v732 = vld [vmem:[%s731] sm:%s541]
    %s733 = sshllo.u32 0, 4
    %s734 = smul.addr 4, 32
    %s735 = scalar_lea.vmem %s1, %s734
    %736 = vst [vmem:[%s735] sm:%s733] %v732
    %s737 = scalar_lea.vmem [#allocation0], 264
    %v738 = vld [vmem:[%s737] sm:%s541]
    %s739 = sshllo.u32 0, 4
    %s740 = smul.addr 4, 33
    %s741 = scalar_lea.vmem %s1, %s740
    %742 = vst [vmem:[%s741] sm:%s739] %v738
    %s743 = scalar_lea.vmem [#allocation0], 272
    %v744 = vld [vmem:[%s743] sm:%s541]
    %s745 = sshllo.u32 0, 4
    %s746 = smul.addr 4, 34
    %s747 = scalar_lea.vmem %s1, %s746
    %748 = vst [vmem:[%s747] sm:%s745] %v744
    %s749 = scalar_lea.vmem [#allocation0], 280
    %v750 = vld [vmem:[%s749] sm:%s541]
    %s751 = sshllo.u32 0, 4
    %s752 = smul.addr 4, 35
    %s753 = scalar_lea.vmem %s1, %s752
    %754 = vst [vmem:[%s753] sm:%s751] %v750
    %s755 = scalar_lea.vmem [#allocation0], 288
    %v756 = vld [vmem:[%s755] sm:%s541]
    %s757 = sshllo.u32 0, 4
    %s758 = smul.addr 4, 36
    %s759 = scalar_lea.vmem %s1, %s758
    %760 = vst [vmem:[%s759] sm:%s757] %v756
    %s761 = scalar_lea.vmem [#allocation0], 296
    %v762 = vld [vmem:[%s761] sm:%s541]
    %s763 = sshllo.u32 0, 4
    %s764 = smul.addr 4, 37
    %s765 = scalar_lea.vmem %s1, %s764
    %766 = vst [vmem:[%s765] sm:%s763] %v762
    %s767 = scalar_lea.vmem [#allocation0], 304
    %v768 = vld [vmem:[%s767] sm:%s541]
    %s769 = sshllo.u32 0, 4
    %s770 = smul.addr 4, 38
    %s771 = scalar_lea.vmem %s1, %s770
    %772 = vst [vmem:[%s771] sm:%s769] %v768
    %s773 = scalar_lea.vmem [#allocation0], 312
    %v774 = vld [vmem:[%s773] sm:%s541]
    %s775 = sshllo.u32 0, 4
    %s776 = smul.addr 4, 39
    %s777 = scalar_lea.vmem %s1, %s776
    %778 = vst [vmem:[%s777] sm:%s775] %v774
    %s779 = scalar_lea.vmem [#allocation0], 320
    %v780 = vld [vmem:[%s779] sm:%s541]
    %s781 = sshllo.u32 0, 4
    %s782 = smul.addr 4, 40
    %s783 = scalar_lea.vmem %s1, %s782
    %784 = vst [vmem:[%s783] sm:%s781] %v780
    %s785 = scalar_lea.vmem [#allocation0], 328
    %v786 = vld [vmem:[%s785] sm:%s541]
    %s787 = sshllo.u32 0, 4
    %s788 = smul.addr 4, 41
    %s789 = scalar_lea.vmem %s1, %s788
    %790 = vst [vmem:[%s789] sm:%s787] %v786
    %s791 = scalar_lea.vmem [#allocation0], 336
    %v792 = vld [vmem:[%s791] sm:%s541]
    %s793 = sshllo.u32 0, 4
    %s794 = smul.addr 4, 42
    %s795 = scalar_lea.vmem %s1, %s794
    %796 = vst [vmem:[%s795] sm:%s793] %v792
    %s797 = scalar_lea.vmem [#allocation0], 344
    %v798 = vld [vmem:[%s797] sm:%s541]
    %s799 = sshllo.u32 0, 4
    %s800 = smul.addr 4, 43
    %s801 = scalar_lea.vmem %s1, %s800
    %802 = vst [vmem:[%s801] sm:%s799] %v798
    %s803 = scalar_lea.vmem [#allocation0], 352
    %v804 = vld [vmem:[%s803] sm:%s541]
    %s805 = sshllo.u32 0, 4
    %s806 = smul.addr 4, 44
    %s807 = scalar_lea.vmem %s1, %s806
    %808 = vst [vmem:[%s807] sm:%s805] %v804
    %s809 = scalar_lea.vmem [#allocation0], 360
    %v810 = vld [vmem:[%s809] sm:%s541]
    %s811 = sshllo.u32 0, 4
    %s812 = smul.addr 4, 45
    %s813 = scalar_lea.vmem %s1, %s812
    %814 = vst [vmem:[%s813] sm:%s811] %v810
    %s815 = scalar_lea.vmem [#allocation0], 368
    %v816 = vld [vmem:[%s815] sm:%s541]
    %s817 = sshllo.u32 0, 4
    %s818 = smul.addr 4, 46
    %s819 = scalar_lea.vmem %s1, %s818
    %820 = vst [vmem:[%s819] sm:%s817] %v816
    %s821 = scalar_lea.vmem [#allocation0], 376
    %v822 = vld [vmem:[%s821] sm:%s541]
    %s823 = sshllo.u32 0, 4
    %s824 = smul.addr 4, 47
    %s825 = scalar_lea.vmem %s1, %s824
    %826 = vst [vmem:[%s825] sm:%s823] %v822
    %s827 = scalar_lea.vmem [#allocation0], 384
    %v828 = vld [vmem:[%s827] sm:%s541]
    %s829 = sshllo.u32 0, 4
    %s830 = smul.addr 4, 48
    %s831 = scalar_lea.vmem %s1, %s830
    %832 = vst [vmem:[%s831] sm:%s829] %v828
    %s833 = scalar_lea.vmem [#allocation0], 392
    %v834 = vld [vmem:[%s833] sm:%s541]
    %s835 = sshllo.u32 0, 4
    %s836 = smul.addr 4, 49
    %s837 = scalar_lea.vmem %s1, %s836
    %838 = vst [vmem:[%s837] sm:%s835] %v834
    %s839 = scalar_lea.vmem [#allocation0], 400
    %v840 = vld [vmem:[%s839] sm:%s541]
    %s841 = sshllo.u32 0, 4
    %s842 = smul.addr 4, 50
    %s843 = scalar_lea.vmem %s1, %s842
    %844 = vst [vmem:[%s843] sm:%s841] %v840
    %s845 = scalar_lea.vmem [#allocation0], 408
    %v846 = vld [vmem:[%s845] sm:%s541]
    %s847 = sshllo.u32 0, 4
    %s848 = smul.addr 4, 51
    %s849 = scalar_lea.vmem %s1, %s848
    %850 = vst [vmem:[%s849] sm:%s847] %v846
    %s851 = scalar_lea.vmem [#allocation0], 416
    %v852 = vld [vmem:[%s851] sm:%s541]
    %s853 = sshllo.u32 0, 4
    %s854 = smul.addr 4, 52
    %s855 = scalar_lea.vmem %s1, %s854
    %856 = vst [vmem:[%s855] sm:%s853] %v852
    %s857 = scalar_lea.vmem [#allocation0], 424
    %v858 = vld [vmem:[%s857] sm:%s541]
    %s859 = sshllo.u32 0, 4
    %s860 = smul.addr 4, 53
    %s861 = scalar_lea.vmem %s1, %s860
    %862 = vst [vmem:[%s861] sm:%s859] %v858
    %s863 = scalar_lea.vmem [#allocation0], 432
    %v864 = vld [vmem:[%s863] sm:%s541]
    %s865 = sshllo.u32 0, 4
    %s866 = smul.addr 4, 54
    %s867 = scalar_lea.vmem %s1, %s866
    %868 = vst [vmem:[%s867] sm:%s865] %v864
    %s869 = scalar_lea.vmem [#allocation0], 440
    %v870 = vld [vmem:[%s869] sm:%s541]
    %s871 = sshllo.u32 0, 4
    %s872 = smul.addr 4, 55
    %s873 = scalar_lea.vmem %s1, %s872
    %874 = vst [vmem:[%s873] sm:%s871] %v870
    %s875 = scalar_lea.vmem [#allocation0], 448
    %v876 = vld [vmem:[%s875] sm:%s541]
    %s877 = sshllo.u32 0, 4
    %s878 = smul.addr 4, 56
    %s879 = scalar_lea.vmem %s1, %s878
    %880 = vst [vmem:[%s879] sm:%s877] %v876
    %s881 = scalar_lea.vmem [#allocation0], 456
    %v882 = vld [vmem:[%s881] sm:%s541]
    %s883 = sshllo.u32 0, 4
    %s884 = smul.addr 4, 57
    %s885 = scalar_lea.vmem %s1, %s884
    %886 = vst [vmem:[%s885] sm:%s883] %v882
    %s887 = scalar_lea.vmem [#allocation0], 464
    %v888 = vld [vmem:[%s887] sm:%s541]
    %s889 = sshllo.u32 0, 4
    %s890 = smul.addr 4, 58
    %s891 = scalar_lea.vmem %s1, %s890
    %892 = vst [vmem:[%s891] sm:%s889] %v888
    %s893 = scalar_lea.vmem [#allocation0], 472
    %v894 = vld [vmem:[%s893] sm:%s541]
    %s895 = sshllo.u32 0, 4
    %s896 = smul.addr 4, 59
    %s897 = scalar_lea.vmem %s1, %s896
    %898 = vst [vmem:[%s897] sm:%s895] %v894
    %s899 = scalar_lea.vmem [#allocation0], 480
    %v900 = vld [vmem:[%s899] sm:%s541]
    %s901 = sshllo.u32 0, 4
    %s902 = smul.addr 4, 60
    %s903 = scalar_lea.vmem %s1, %s902
    %904 = vst [vmem:[%s903] sm:%s901] %v900
    %s905 = scalar_lea.vmem [#allocation0], 488
    %v906 = vld [vmem:[%s905] sm:%s541]
    %s907 = sshllo.u32 0, 4
    %s908 = smul.addr 4, 61
    %s909 = scalar_lea.vmem %s1, %s908
    %910 = vst [vmem:[%s909] sm:%s907] %v906
    %s911 = scalar_lea.vmem [#allocation0], 496
    %v912 = vld [vmem:[%s911] sm:%s541]
    %s913 = sshllo.u32 0, 4
    %s914 = smul.addr 4, 62
    %s915 = scalar_lea.vmem %s1, %s914
    %916 = vst [vmem:[%s915] sm:%s913] %v912
    %s917 = scalar_lea.vmem [#allocation0], 504
    %v918 = vld [vmem:[%s917] sm:%s541]
    %s919 = sshllo.u32 0, 4
    %s920 = smul.addr 4, 63
    %s921 = scalar_lea.vmem %s1, %s920
    %922 = vst [vmem:[%s921] sm:%s919] %v918
    %s923 = scalar_lea.vmem [#allocation0], 512
    %v924 = vld [vmem:[%s923] sm:%s541]
    %s925 = sshllo.u32 0, 4
    %s926 = smul.addr 4, 64
    %s927 = scalar_lea.vmem %s1, %s926
    %928 = vst [vmem:[%s927] sm:%s925] %v924
    %s929 = scalar_lea.vmem [#allocation0], 520
    %v930 = vld [vmem:[%s929] sm:%s541]
    %s931 = sshllo.u32 0, 4
    %s932 = smul.addr 4, 65
    %s933 = scalar_lea.vmem %s1, %s932
    %934 = vst [vmem:[%s933] sm:%s931] %v930
    %s935 = scalar_lea.vmem [#allocation0], 528
    %v936 = vld [vmem:[%s935] sm:%s541]
    %s937 = sshllo.u32 0, 4
    %s938 = smul.addr 4, 66
    %s939 = scalar_lea.vmem %s1, %s938
    %940 = vst [vmem:[%s939] sm:%s937] %v936
    %s941 = scalar_lea.vmem [#allocation0], 536
    %v942 = vld [vmem:[%s941] sm:%s541]
    %s943 = sshllo.u32 0, 4
    %s944 = smul.addr 4, 67
    %s945 = scalar_lea.vmem %s1, %s944
    %946 = vst [vmem:[%s945] sm:%s943] %v942
    %s947 = scalar_lea.vmem [#allocation0], 544
    %v948 = vld [vmem:[%s947] sm:%s541]
    %s949 = sshllo.u32 0, 4
    %s950 = smul.addr 4, 68
    %s951 = scalar_lea.vmem %s1, %s950
    %952 = vst [vmem:[%s951] sm:%s949] %v948
    %s953 = scalar_lea.vmem [#allocation0], 552
    %v954 = vld [vmem:[%s953] sm:%s541]
    %s955 = sshllo.u32 0, 4
    %s956 = smul.addr 4, 69
    %s957 = scalar_lea.vmem %s1, %s956
    %958 = vst [vmem:[%s957] sm:%s955] %v954
    %s959 = scalar_lea.vmem [#allocation0], 560
    %v960 = vld [vmem:[%s959] sm:%s541]
    %s961 = sshllo.u32 0, 4
    %s962 = smul.addr 4, 70
    %s963 = scalar_lea.vmem %s1, %s962
    %964 = vst [vmem:[%s963] sm:%s961] %v960
    %s965 = scalar_lea.vmem [#allocation0], 568
    %v966 = vld [vmem:[%s965] sm:%s541]
    %s967 = sshllo.u32 0, 4
    %s968 = smul.addr 4, 71
    %s969 = scalar_lea.vmem %s1, %s968
    %970 = vst [vmem:[%s969] sm:%s967] %v966
    %s971 = scalar_lea.vmem [#allocation0], 576
    %v972 = vld [vmem:[%s971] sm:%s541]
    %s973 = sshllo.u32 0, 4
    %s974 = smul.addr 4, 72
    %s975 = scalar_lea.vmem %s1, %s974
    %976 = vst [vmem:[%s975] sm:%s973] %v972
    %s977 = scalar_lea.vmem [#allocation0], 584
    %v978 = vld [vmem:[%s977] sm:%s541]
    %s979 = sshllo.u32 0, 4
    %s980 = smul.addr 4, 73
    %s981 = scalar_lea.vmem %s1, %s980
    %982 = vst [vmem:[%s981] sm:%s979] %v978
    %s983 = scalar_lea.vmem [#allocation0], 592
    %v984 = vld [vmem:[%s983] sm:%s541]
    %s985 = sshllo.u32 0, 4
    %s986 = smul.addr 4, 74
    %s987 = scalar_lea.vmem %s1, %s986
    %988 = vst [vmem:[%s987] sm:%s985] %v984
    %s989 = scalar_lea.vmem [#allocation0], 600
    %v990 = vld [vmem:[%s989] sm:%s541]
    %s991 = sshllo.u32 0, 4
    %s992 = smul.addr 4, 75
    %s993 = scalar_lea.vmem %s1, %s992
    %994 = vst [vmem:[%s993] sm:%s991] %v990
    %s995 = scalar_lea.vmem [#allocation0], 608
    %v996 = vld [vmem:[%s995] sm:%s541]
    %s997 = sshllo.u32 0, 4
    %s998 = smul.addr 4, 76
    %s999 = scalar_lea.vmem %s1, %s998
    %1000 = vst [vmem:[%s999] sm:%s997] %v996
    %s1001 = scalar_lea.vmem [#allocation0], 616
    %v1002 = vld [vmem:[%s1001] sm:%s541]
    %s1003 = sshllo.u32 0, 4
    %s1004 = smul.addr 4, 77
    %s1005 = scalar_lea.vmem %s1, %s1004
    %1006 = vst [vmem:[%s1005] sm:%s1003] %v1002
    %s1007 = scalar_lea.vmem [#allocation0], 624
    %v1008 = vld [vmem:[%s1007] sm:%s541]
    %s1009 = sshllo.u32 0, 4
    %s1010 = smul.addr 4, 78
    %s1011 = scalar_lea.vmem %s1, %s1010
    %1012 = vst [vmem:[%s1011] sm:%s1009] %v1008
    %s1013 = scalar_lea.vmem [#allocation0], 632
    %v1014 = vld [vmem:[%s1013] sm:%s541]
    %s1015 = sshllo.u32 0, 4
    %s1016 = smul.addr 4, 79
    %s1017 = scalar_lea.vmem %s1, %s1016
    %1018 = vst [vmem:[%s1017] sm:%s1015] %v1014
    %s1019 = scalar_lea.vmem [#allocation0], 640
    %v1020 = vld [vmem:[%s1019] sm:%s541]
    %s1021 = sshllo.u32 0, 4
    %s1022 = smul.addr 4, 80
    %s1023 = scalar_lea.vmem %s1, %s1022
    %1024 = vst [vmem:[%s1023] sm:%s1021] %v1020
    %s1025 = scalar_lea.vmem [#allocation0], 648
    %v1026 = vld [vmem:[%s1025] sm:%s541]
    %s1027 = sshllo.u32 0, 4
    %s1028 = smul.addr 4, 81
    %s1029 = scalar_lea.vmem %s1, %s1028
    %1030 = vst [vmem:[%s1029] sm:%s1027] %v1026
    %s1031 = scalar_lea.vmem [#allocation0], 656
    %v1032 = vld [vmem:[%s1031] sm:%s541]
    %s1033 = sshllo.u32 0, 4
    %s1034 = smul.addr 4, 82
    %s1035 = scalar_lea.vmem %s1, %s1034
    %1036 = vst [vmem:[%s1035] sm:%s1033] %v1032
    %s1037 = scalar_lea.vmem [#allocation0], 664
    %v1038 = vld [vmem:[%s1037] sm:%s541]
    %s1039 = sshllo.u32 0, 4
    %s1040 = smul.addr 4, 83
    %s1041 = scalar_lea.vmem %s1, %s1040
    %1042 = vst [vmem:[%s1041] sm:%s1039] %v1038
    %s1043 = scalar_lea.vmem [#allocation0], 672
    %v1044 = vld [vmem:[%s1043] sm:%s541]
    %s1045 = sshllo.u32 0, 4
    %s1046 = smul.addr 4, 84
    %s1047 = scalar_lea.vmem %s1, %s1046
    %1048 = vst [vmem:[%s1047] sm:%s1045] %v1044
    %s1049 = scalar_lea.vmem [#allocation0], 680
    %v1050 = vld [vmem:[%s1049] sm:%s541]
    %s1051 = sshllo.u32 0, 4
    %s1052 = smul.addr 4, 85
    %s1053 = scalar_lea.vmem %s1, %s1052
    %1054 = vst [vmem:[%s1053] sm:%s1051] %v1050
    %s1055 = scalar_lea.vmem [#allocation0], 688
    %v1056 = vld [vmem:[%s1055] sm:%s541]
    %s1057 = sshllo.u32 0, 4
    %s1058 = smul.addr 4, 86
    %s1059 = scalar_lea.vmem %s1, %s1058
    %1060 = vst [vmem:[%s1059] sm:%s1057] %v1056
    %s1061 = scalar_lea.vmem [#allocation0], 696
    %v1062 = vld [vmem:[%s1061] sm:%s541]
    %s1063 = sshllo.u32 0, 4
    %s1064 = smul.addr 4, 87
    %s1065 = scalar_lea.vmem %s1, %s1064
    %1066 = vst [vmem:[%s1065] sm:%s1063] %v1062
    %s1067 = scalar_lea.vmem [#allocation0], 704
    %v1068 = vld [vmem:[%s1067] sm:%s541]
    %s1069 = sshllo.u32 0, 4
    %s1070 = smul.addr 4, 88
    %s1071 = scalar_lea.vmem %s1, %s1070
    %1072 = vst [vmem:[%s1071] sm:%s1069] %v1068
    %s1073 = scalar_lea.vmem [#allocation0], 712
    %v1074 = vld [vmem:[%s1073] sm:%s541]
    %s1075 = sshllo.u32 0, 4
    %s1076 = smul.addr 4, 89
    %s1077 = scalar_lea.vmem %s1, %s1076
    %1078 = vst [vmem:[%s1077] sm:%s1075] %v1074
    %s1079 = scalar_lea.vmem [#allocation0], 720
    %v1080 = vld [vmem:[%s1079] sm:%s541]
    %s1081 = sshllo.u32 0, 4
    %s1082 = smul.addr 4, 90
    %s1083 = scalar_lea.vmem %s1, %s1082
    %1084 = vst [vmem:[%s1083] sm:%s1081] %v1080
    %s1085 = scalar_lea.vmem [#allocation0], 728
    %v1086 = vld [vmem:[%s1085] sm:%s541]
    %s1087 = sshllo.u32 0, 4
    %s1088 = smul.addr 4, 91
    %s1089 = scalar_lea.vmem %s1, %s1088
    %1090 = vst [vmem:[%s1089] sm:%s1087] %v1086
    %s1091 = scalar_lea.vmem [#allocation0], 736
    %v1092 = vld [vmem:[%s1091] sm:%s541]
    %s1093 = sshllo.u32 0, 4
    %s1094 = smul.addr 4, 92
    %s1095 = scalar_lea.vmem %s1, %s1094
    %1096 = vst [vmem:[%s1095] sm:%s1093] %v1092
    %s1097 = scalar_lea.vmem [#allocation0], 744
    %v1098 = vld [vmem:[%s1097] sm:%s541]
    %s1099 = sshllo.u32 0, 4
    %s1100 = smul.addr 4, 93
    %s1101 = scalar_lea.vmem %s1, %s1100
    %1102 = vst [vmem:[%s1101] sm:%s1099] %v1098
    %s1103 = scalar_lea.vmem [#allocation0], 752
    %v1104 = vld [vmem:[%s1103] sm:%s541]
    %s1105 = sshllo.u32 0, 4
    %s1106 = smul.addr 4, 94
    %s1107 = scalar_lea.vmem %s1, %s1106
    %1108 = vst [vmem:[%s1107] sm:%s1105] %v1104
    %s1109 = scalar_lea.vmem [#allocation0], 760
    %v1110 = vld [vmem:[%s1109] sm:%s541]
    %s1111 = sshllo.u32 0, 4
    %s1112 = smul.addr 4, 95
    %s1113 = scalar_lea.vmem %s1, %s1112
    %1114 = vst [vmem:[%s1113] sm:%s1111] %v1110
    %s1115 = scalar_lea.vmem [#allocation0], 768
    %v1116 = vld [vmem:[%s1115] sm:%s541]
    %s1117 = sshllo.u32 0, 4
    %s1118 = smul.addr 4, 96
    %s1119 = scalar_lea.vmem %s1, %s1118
    %1120 = vst [vmem:[%s1119] sm:%s1117] %v1116
    %s1121 = scalar_lea.vmem [#allocation0], 776
    %v1122 = vld [vmem:[%s1121] sm:%s541]
    %s1123 = sshllo.u32 0, 4
    %s1124 = smul.addr 4, 97
    %s1125 = scalar_lea.vmem %s1, %s1124
    %1126 = vst [vmem:[%s1125] sm:%s1123] %v1122
    %s1127 = scalar_lea.vmem [#allocation0], 784
    %v1128 = vld [vmem:[%s1127] sm:%s541]
    %s1129 = sshllo.u32 0, 4
    %s1130 = smul.addr 4, 98
    %s1131 = scalar_lea.vmem %s1, %s1130
    %1132 = vst [vmem:[%s1131] sm:%s1129] %v1128
    %s1133 = scalar_lea.vmem [#allocation0], 792
    %v1134 = vld [vmem:[%s1133] sm:%s541]
    %s1135 = sshllo.u32 0, 4
    %s1136 = smul.addr 4, 99
    %s1137 = scalar_lea.vmem %s1, %s1136
    %1138 = vst [vmem:[%s1137] sm:%s1135] %v1134
    %s1139 = scalar_lea.vmem [#allocation0], 800
    %v1140 = vld [vmem:[%s1139] sm:%s541]
    %s1141 = sshllo.u32 0, 4
    %s1142 = smul.addr 4, 100
    %s1143 = scalar_lea.vmem %s1, %s1142
    %1144 = vst [vmem:[%s1143] sm:%s1141] %v1140
    %s1145 = scalar_lea.vmem [#allocation0], 808
    %v1146 = vld [vmem:[%s1145] sm:%s541]
    %s1147 = sshllo.u32 0, 4
    %s1148 = smul.addr 4, 101
    %s1149 = scalar_lea.vmem %s1, %s1148
    %1150 = vst [vmem:[%s1149] sm:%s1147] %v1146
    %s1151 = scalar_lea.vmem [#allocation0], 816
    %v1152 = vld [vmem:[%s1151] sm:%s541]
    %s1153 = sshllo.u32 0, 4
    %s1154 = smul.addr 4, 102
    %s1155 = scalar_lea.vmem %s1, %s1154
    %1156 = vst [vmem:[%s1155] sm:%s1153] %v1152
    %s1157 = scalar_lea.vmem [#allocation0], 824
    %v1158 = vld [vmem:[%s1157] sm:%s541]
    %s1159 = sshllo.u32 0, 4
    %s1160 = smul.addr 4, 103
    %s1161 = scalar_lea.vmem %s1, %s1160
    %1162 = vst [vmem:[%s1161] sm:%s1159] %v1158
    %s1163 = scalar_lea.vmem [#allocation0], 832
    %v1164 = vld [vmem:[%s1163] sm:%s541]
    %s1165 = sshllo.u32 0, 4
    %s1166 = smul.addr 4, 104
    %s1167 = scalar_lea.vmem %s1, %s1166
    %1168 = vst [vmem:[%s1167] sm:%s1165] %v1164
    %s1169 = scalar_lea.vmem [#allocation0], 840
    %v1170 = vld [vmem:[%s1169] sm:%s541]
    %s1171 = sshllo.u32 0, 4
    %s1172 = smul.addr 4, 105
    %s1173 = scalar_lea.vmem %s1, %s1172
    %1174 = vst [vmem:[%s1173] sm:%s1171] %v1170
    %s1175 = scalar_lea.vmem [#allocation0], 848
    %v1176 = vld [vmem:[%s1175] sm:%s541]
    %s1177 = sshllo.u32 0, 4
    %s1178 = smul.addr 4, 106
    %s1179 = scalar_lea.vmem %s1, %s1178
    %1180 = vst [vmem:[%s1179] sm:%s1177] %v1176
    %s1181 = scalar_lea.vmem [#allocation0], 856
    %v1182 = vld [vmem:[%s1181] sm:%s541]
    %s1183 = sshllo.u32 0, 4
    %s1184 = smul.addr 4, 107
    %s1185 = scalar_lea.vmem %s1, %s1184
    %1186 = vst [vmem:[%s1185] sm:%s1183] %v1182
    %s1187 = scalar_lea.vmem [#allocation0], 864
    %v1188 = vld [vmem:[%s1187] sm:%s541]
    %s1189 = sshllo.u32 0, 4
    %s1190 = smul.addr 4, 108
    %s1191 = scalar_lea.vmem %s1, %s1190
    %1192 = vst [vmem:[%s1191] sm:%s1189] %v1188
    %s1193 = scalar_lea.vmem [#allocation0], 872
    %v1194 = vld [vmem:[%s1193] sm:%s541]
    %s1195 = sshllo.u32 0, 4
    %s1196 = smul.addr 4, 109
    %s1197 = scalar_lea.vmem %s1, %s1196
    %1198 = vst [vmem:[%s1197] sm:%s1195] %v1194
    %s1199 = scalar_lea.vmem [#allocation0], 880
    %v1200 = vld [vmem:[%s1199] sm:%s541]
    %s1201 = sshllo.u32 0, 4
    %s1202 = smul.addr 4, 110
    %s1203 = scalar_lea.vmem %s1, %s1202
    %1204 = vst [vmem:[%s1203] sm:%s1201] %v1200
    %s1205 = scalar_lea.vmem [#allocation0], 888
    %v1206 = vld [vmem:[%s1205] sm:%s541]
    %s1207 = sshllo.u32 0, 4
    %s1208 = smul.addr 4, 111
    %s1209 = scalar_lea.vmem %s1, %s1208
    %1210 = vst [vmem:[%s1209] sm:%s1207] %v1206
    %s1211 = scalar_lea.vmem [#allocation0], 896
    %v1212 = vld [vmem:[%s1211] sm:%s541]
    %s1213 = sshllo.u32 0, 4
    %s1214 = smul.addr 4, 112
    %s1215 = scalar_lea.vmem %s1, %s1214
    %1216 = vst [vmem:[%s1215] sm:%s1213] %v1212
    %s1217 = scalar_lea.vmem [#allocation0], 904
    %v1218 = vld [vmem:[%s1217] sm:%s541]
    %s1219 = sshllo.u32 0, 4
    %s1220 = smul.addr 4, 113
    %s1221 = scalar_lea.vmem %s1, %s1220
    %1222 = vst [vmem:[%s1221] sm:%s1219] %v1218
    %s1223 = scalar_lea.vmem [#allocation0], 912
    %v1224 = vld [vmem:[%s1223] sm:%s541]
    %s1225 = sshllo.u32 0, 4
    %s1226 = smul.addr 4, 114
    %s1227 = scalar_lea.vmem %s1, %s1226
    %1228 = vst [vmem:[%s1227] sm:%s1225] %v1224
    %s1229 = scalar_lea.vmem [#allocation0], 920
    %v1230 = vld [vmem:[%s1229] sm:%s541]
    %s1231 = sshllo.u32 0, 4
    %s1232 = smul.addr 4, 115
    %s1233 = scalar_lea.vmem %s1, %s1232
    %1234 = vst [vmem:[%s1233] sm:%s1231] %v1230
    %s1235 = scalar_lea.vmem [#allocation0], 928
    %v1236 = vld [vmem:[%s1235] sm:%s541]
    %s1237 = sshllo.u32 0, 4
    %s1238 = smul.addr 4, 116
    %s1239 = scalar_lea.vmem %s1, %s1238
    %1240 = vst [vmem:[%s1239] sm:%s1237] %v1236
    %s1241 = scalar_lea.vmem [#allocation0], 936
    %v1242 = vld [vmem:[%s1241] sm:%s541]
    %s1243 = sshllo.u32 0, 4
    %s1244 = smul.addr 4, 117
    %s1245 = scalar_lea.vmem %s1, %s1244
    %1246 = vst [vmem:[%s1245] sm:%s1243] %v1242
    %s1247 = scalar_lea.vmem [#allocation0], 944
    %v1248 = vld [vmem:[%s1247] sm:%s541]
    %s1249 = sshllo.u32 0, 4
    %s1250 = smul.addr 4, 118
    %s1251 = scalar_lea.vmem %s1, %s1250
    %1252 = vst [vmem:[%s1251] sm:%s1249] %v1248
    %s1253 = scalar_lea.vmem [#allocation0], 952
    %v1254 = vld [vmem:[%s1253] sm:%s541]
    %s1255 = sshllo.u32 0, 4
    %s1256 = smul.addr 4, 119
    %s1257 = scalar_lea.vmem %s1, %s1256
    %1258 = vst [vmem:[%s1257] sm:%s1255] %v1254
    %s1259 = scalar_lea.vmem [#allocation0], 960
    %v1260 = vld [vmem:[%s1259] sm:%s541]
    %s1261 = sshllo.u32 0, 4
    %s1262 = smul.addr 4, 120
    %s1263 = scalar_lea.vmem %s1, %s1262
    %1264 = vst [vmem:[%s1263] sm:%s1261] %v1260
    %s1265 = scalar_lea.vmem [#allocation0], 968
    %v1266 = vld [vmem:[%s1265] sm:%s541]
    %s1267 = sshllo.u32 0, 4
    %s1268 = smul.addr 4, 121
    %s1269 = scalar_lea.vmem %s1, %s1268
    %1270 = vst [vmem:[%s1269] sm:%s1267] %v1266
    %s1271 = scalar_lea.vmem [#allocation0], 976
    %v1272 = vld [vmem:[%s1271] sm:%s541]
    %s1273 = sshllo.u32 0, 4
    %s1274 = smul.addr 4, 122
    %s1275 = scalar_lea.vmem %s1, %s1274
    %1276 = vst [vmem:[%s1275] sm:%s1273] %v1272
    %s1277 = scalar_lea.vmem [#allocation0], 984
    %v1278 = vld [vmem:[%s1277] sm:%s541]
    %s1279 = sshllo.u32 0, 4
    %s1280 = smul.addr 4, 123
    %s1281 = scalar_lea.vmem %s1, %s1280
    %1282 = vst [vmem:[%s1281] sm:%s1279] %v1278
    %s1283 = scalar_lea.vmem [#allocation0], 992
    %v1284 = vld [vmem:[%s1283] sm:%s541]
    %s1285 = sshllo.u32 0, 4
    %s1286 = smul.addr 4, 124
    %s1287 = scalar_lea.vmem %s1, %s1286
    %1288 = vst [vmem:[%s1287] sm:%s1285] %v1284
    %s1289 = scalar_lea.vmem [#allocation0], 1000
    %v1290 = vld [vmem:[%s1289] sm:%s541]
    %s1291 = sshllo.u32 0, 4
    %s1292 = smul.addr 4, 125
    %s1293 = scalar_lea.vmem %s1, %s1292
    %1294 = vst [vmem:[%s1293] sm:%s1291] %v1290
    %s1295 = scalar_lea.vmem [#allocation0], 1008
    %v1296 = vld [vmem:[%s1295] sm:%s541]
    %s1297 = sshllo.u32 0, 4
    %s1298 = smul.addr 4, 126
    %s1299 = scalar_lea.vmem %s1, %s1298
    %1300 = vst [vmem:[%s1299] sm:%s1297] %v1296
    %s1301 = scalar_lea.vmem [#allocation0], 1016
    %v1302 = vld [vmem:[%s1301] sm:%s541]
    %s1303 = sshllo.u32 0, 4
    %s1304 = smul.addr 4, 127
    %s1305 = scalar_lea.vmem %s1, %s1304
    %1306 = vst [vmem:[%s1305] sm:%s1303] %v1302

// kernel: generator_forward.9
$region0: #{generator_forward.9}
  #allocation0 [shape = 'u32[]', space=smem, size = 0x4, offset = 0x4, fixed_abs, tag = 'smem constant byte address 0x4 - core index']
  #allocation1 [shape = 'u32[144,128]{1,0:T(1,128)}', space=vmem, size = 0x12000, scoped, tag = 'internal scratch']
  %s0 = inlined_call_operand.vmem [shape: f32[16,512], index: 0, kind: input, shape index: {}]
  %s1 = inlined_call_operand.vmem [shape: f32[16,1], index: 1, kind: input, shape index: {}]
  %s2 = inlined_call_operand.vmem [shape: f32[16,1], index: 2, kind: input, shape index: {}]
  %s3 = inlined_call_operand.vmem [shape: bf16[128,16], index: 3, kind: input, shape index: {}]
  %s4 = inlined_call_operand.vmem [shape: f32[128,512], index: 4, kind: output, shape index: {}]
  %s5 = sld [smem:[#allocation0]]
  $region26: #{generator_forward.9} parent=0
    _
  %s7 = ssub.s32 1, %s5
  %s8 = scalar_select 0, %s7, %s5
  // Predicated region
  $region2: #{generator_forward.9} parent=0 // pred_check
    _
  $region3: #{generator_forward.9} parent=0 // pred_check_branch
    %10 = sbr.rel (0) target = $region5
  $region4: #{generator_forward.9} parent=0 // pred_region
    _
  $region5: #{generator_forward.9} parent=0 // pred_fallthru
    _
  // Predicated region
  $region6: #{generator_forward.9} parent=0 // pred_check
    _
  $region7: #{generator_forward.9} parent=0 // pred_check_branch
    %12 = sbr.rel (0) target = $region9
  $region8: #{generator_forward.9} parent=0 // pred_region
    _
  $region9: #{generator_forward.9} parent=0 // pred_fallthru
    _
  // Predicated region
  $region10: #{generator_forward.9} parent=0 // pred_check
    _
  $region11: #{generator_forward.9} parent=0 // pred_check_branch
    %14 = sbr.rel (0) target = $region13
  $region12: #{generator_forward.9} parent=0 // pred_region
    _
  $region13: #{generator_forward.9} parent=0 // pred_fallthru
    _
  // Predicated region
  $region14: #{generator_forward.9} parent=0 // pred_check
    _
  $region15: #{generator_forward.9} parent=0 // pred_check_branch
    %16 = sbr.rel (0) target = $region17
  $region16: #{generator_forward.9} parent=0 // pred_region
    _
  $region17: #{generator_forward.9} parent=0 // pred_fallthru
    _
  %v18 = vld [vmem:[%s0] sm:$0xff]
  %v19 = vld [vmem:[%s0 + $0x8] sm:$0xff]
  %v20 = vld [vmem:[%s0 + $0x10] sm:$0xff]
  %v21 = vld [vmem:[%s0 + $0x18] sm:$0xff]
  %v22 = vld [vmem:[%s0 + $0x20] sm:$0xff]
  %v23 = vld [vmem:[%s0 + $0x28] sm:$0xff]
  %v24 = vld [vmem:[%s0 + $0x30] sm:$0xff]
  %v25 = vld [vmem:[%s0 + $0x38] sm:$0xff]
  %v26 = vadd.f32 %v18, %v19
  %v27 = vadd.f32 %v26, %v20
  %v28 = vadd.f32 %v27, %v21
  %29 = vadd.xlane.f32.xlu0 %v28
  %v30 = vpop.xlane.xlu0 %29
  %v31 = vadd.f32 %v22, %v23
  %v32 = vadd.f32 %v31, %v24
  %v33 = vadd.f32 %v32, %v25
  %34 = vadd.xlane.f32.xlu0 %v33
  %v35 = vpop.xlane.xlu0 %34
  %v36 = vmul.f32 %v30, 0.001953125
  %v37 = vmul.f32 %v35, 0.001953125
  %v38 = vsub.f32 %v18, %v36
  %v39 = vsub.f32 %v19, %v36
  %v40 = vsub.f32 %v20, %v36
  %v41 = vsub.f32 %v21, %v36
  %v42 = vsub.f32 %v22, %v37
  %v43 = vsub.f32 %v23, %v37
  %v44 = vsub.f32 %v24, %v37
  %v45 = vsub.f32 %v25, %v37
  %v46 = vmul.f32 %v38, %v38
  %v47 = vmul.f32 %v39, %v39
  %v48 = vmul.f32 %v40, %v40
  %v49 = vmul.f32 %v41, %v41
  %v50 = vmul.f32 %v42, %v42
  %v51 = vmul.f32 %v43, %v43
  %v52 = vmul.f32 %v44, %v44
  %v53 = vmul.f32 %v45, %v45
  %v54 = vadd.f32 %v46, %v47
  %v55 = vadd.f32 %v54, %v48
  %v56 = vadd.f32 %v55, %v49
  %57 = vadd.xlane.f32.xlu0 %v56
  %v58 = vpop.xlane.xlu0 %57
  %v59 = vadd.f32 %v50, %v51
  %v60 = vadd.f32 %v59, %v52
  %v61 = vadd.f32 %v60, %v53
  %62 = vadd.xlane.f32.xlu0 %v61
  %v63 = vpop.xlane.xlu0 %62
  %v64 = vmul.f32 %v58, 0.001953125
  %v65 = vmul.f32 %v63, 0.001953125
  %v66 = vld [vmem:[%s1] sm:$0xff]
  %v67 = vld [vmem:[%s1 + $0x8] sm:$0xff]
  %v68 = vadd.f32 %v64, 1e-05
  %v69 = vadd.f32 %v65, 1e-05
  %v70 = vrsqrt.pop %v68
  %v71 = vrsqrt.pop %v69
  %v72 = vmul.f32 %v66, %v70
  %v73 = vmul.f32 %v67, %v71
  %75 = vset.pattern.permute.xlu0 0
  %76 = vperm.xlu0 %75, %v72
  %v77 = vpop.permute.xlu0 %76
  %80 = vset.pattern.permute.xlu0 0
  %81 = vperm.xlu0 %80, %v73
  %v82 = vpop.permute.xlu0 %81
  %v84 = vmul.f32 %v38, %v77
  %v85 = vmul.f32 %v39, %v77
  %v86 = vmul.f32 %v40, %v77
  %v87 = vmul.f32 %v41, %v77
  %v88 = vmul.f32 %v42, %v82
  %v89 = vmul.f32 %v43, %v82
  %v90 = vmul.f32 %v44, %v82
  %v91 = vmul.f32 %v45, %v82
  %v92 = vld [vmem:[%s2] sm:$0xff]
  %v93 = vld [vmem:[%s2 + $0x8] sm:$0xff]
  %95 = vset.pattern.permute.xlu0 0
  %96 = vperm.xlu0 %95, %v92
  %v97 = vpop.permute.xlu0 %96
  %100 = vset.pattern.permute.xlu0 0
  %101 = vperm.xlu0 %100, %v93
  %v102 = vpop.permute.xlu0 %101
  %v104 = vadd.f32 %v84, %v97
  %v105 = vadd.f32 %v85, %v97
  %v106 = vadd.f32 %v86, %v97
  %v107 = vadd.f32 %v87, %v97
  %v108 = vadd.f32 %v88, %v102
  %v109 = vadd.f32 %v89, %v102
  %v110 = vadd.f32 %v90, %v102
  %v111 = vadd.f32 %v91, %v102
  %v112 = vmax.f32 %v104, 0.0
  %v113 = vmax.f32 %v105, 0.0
  %v114 = vmax.f32 %v106, 0.0
  %v115 = vmax.f32 %v107, 0.0
  %v116 = vmax.f32 %v108, 0.0
  %v117 = vmax.f32 %v109, 0.0
  %v118 = vmax.f32 %v110, 0.0
  %v119 = vmax.f32 %v111, 0.0
  %v120 = vld [vmem:[%s3] sm:$0xf]
  %v121 = vld [vmem:[%s3 + $0x4] sm:$0xf]
  %v122 = vld [vmem:[%s3 + $0x8] sm:$0xf]
  %v123 = vld [vmem:[%s3 + $0xc] sm:$0xf]
  %v124 = vld [vmem:[%s3 + $0x10] sm:$0xf]
  %v125 = vld [vmem:[%s3 + $0x14] sm:$0xf]
  %v126 = vld [vmem:[%s3 + $0x18] sm:$0xf]
  %v127 = vld [vmem:[%s3 + $0x1c] sm:$0xf]
  %v128 = vld [vmem:[%s3 + $0x20] sm:$0xf]
  %v129 = vld [vmem:[%s3 + $0x24] sm:$0xf]
  %v130 = vld [vmem:[%s3 + $0x28] sm:$0xf]
  %v131 = vld [vmem:[%s3 + $0x2c] sm:$0xf]
  %v132 = vld [vmem:[%s3 + $0x30] sm:$0xf]
  %v133 = vld [vmem:[%s3 + $0x34] sm:$0xf]
  %v134 = vld [vmem:[%s3 + $0x38] sm:$0xf]
  %v135 = vld [vmem:[%s3 + $0x3c] sm:$0xf]
  %v136 = vpack.c.bf16 %v116, %v112
  %v137 = vpack.c.bf16 %v117, %v113
  %v138 = vpack.c.bf16 %v118, %v114
  %v139 = vpack.c.bf16 %v119, %v115
  %v156 = vunpack.c.l.b16 %v120
  %v157 = vunpack.c.l.b16 %v121
  %v158 = vunpack.c.l.b16 %v122
  %v159 = vunpack.c.l.b16 %v123
  %v160 = vunpack.c.l.b16 %v124
  %v161 = vunpack.c.l.b16 %v125
  %v162 = vunpack.c.l.b16 %v126
  %v163 = vunpack.c.l.b16 %v127
  %v164 = vunpack.c.l.b16 %v128
  %v165 = vunpack.c.l.b16 %v129
  %v166 = vunpack.c.l.b16 %v130
  %v167 = vunpack.c.l.b16 %v131
  %v168 = vunpack.c.l.b16 %v132
  %v169 = vunpack.c.l.b16 %v133
  %v170 = vunpack.c.l.b16 %v134
  %v171 = vunpack.c.l.b16 %v135
  %v172 = vpack.c.b16 %v157, %v156
  %v173 = vpack.c.b16 %v159, %v158
  %v174 = vpack.c.b16 %v161, %v160
  %v175 = vpack.c.b16 %v163, %v162
  %v176 = vpack.c.b16 %v165, %v164
  %v177 = vpack.c.b16 %v167, %v166
  %v178 = vpack.c.b16 %v169, %v168
  %v179 = vpack.c.b16 %v171, %v170
  %vm180 = vcmask 130048
  %v182 = vsel %vm180, %v172, 0
  %v185 = vsel %vm180, %v173, 0
  %v188 = vsel %vm180, %v174, 0
  %v191 = vsel %vm180, %v175, 0
  %v194 = vsel %vm180, %v176, 0
  %v197 = vsel %vm180, %v177, 0
  %v200 = vsel %vm180, %v178, 0
  %v203 = vsel %vm180, %v179, 0
  %205 = vmatprep.subr.bf16.mxu0 %v137
  %206 = vmatpush1.bf16.msra.mxu0 %v136
  %207 = vmatprep.subr.bf16.mxu0 0
  %208 = vmatpush1.bf16.msra.mxu0 0
  %209 = vmatprep.subr.bf16.mxu0 0
  %210 = vmatpush1.bf16.msra.mxu0 0
  %211 = vmatprep.subr.bf16.mxu0 0
  %212 = vmatpush1.bf16.msra.mxu0 0
  %213 = vmatprep.subr.bf16.mxu0 0
  %214 = vmatpush1.bf16.msra.mxu0 0
  %215 = vmatprep.subr.bf16.mxu0 0
  %216 = vmatpush1.bf16.msra.mxu0 0
  %217 = vmatprep.subr.bf16.mxu0 0
  %218 = vmatpush1.bf16.msra.mxu0 0
  %219 = vmatprep.subr.bf16.mxu0 0
  %220 = vmatpush1.bf16.msra.mxu0 0
  %221 = vmatprep.subr.bf16.mxu0 0
  %222 = vmatpush1.bf16.msra.mxu0 0
  %223 = vmatprep.subr.bf16.mxu0 0
  %224 = vmatpush1.bf16.msra.mxu0 0
  %225 = vmatprep.subr.bf16.mxu0 0
  %226 = vmatpush1.bf16.msra.mxu0 0
  %227 = vmatprep.subr.bf16.mxu0 0
  %228 = vmatpush1.bf16.msra.mxu0 0
  %229 = vmatprep.subr.bf16.mxu0 0
  %230 = vmatpush1.bf16.msra.mxu0 0
  %231 = vmatprep.subr.bf16.mxu0 0
  %232 = vmatpush1.bf16.msra.mxu0 0
  %233 = vmatprep.subr.bf16.mxu0 0
  %234 = vmatpush1.bf16.msra.mxu0 0
  %235 = vmatprep.subr.bf16.mxu0 0
  %236 = vmatpush1.bf16.msra.mxu0 0
  %237 = vmatprep.mubr.bf16.mxu0 0
  %238 = vmatmul.mubr.bf16.gmra.mrb[0].mxu0 %v182
  %v239 = vpop.f32.mrb[0].mxu0
  %v240 = vadd.f32 0.0, %v239
  %v241 = vpop.f32.mrb[0].mxu0
  %v242 = vadd.f32 0.0, %v241
  %v243 = vpop.f32.mrb[0].mxu0
  %v244 = vadd.f32 0.0, %v243
  %v245 = vpop.f32.mrb[0].mxu0
  %v246 = vadd.f32 0.0, %v245
  %247 = vmatprep.mubr.bf16.mxu0 0
  %248 = vmatmul.mubr.bf16.gmra.mrb[0].mxu0 %v185
  %v249 = vpop.f32.mrb[0].mxu0
  %v250 = vadd.f32 0.0, %v249
  %v251 = vpop.f32.mrb[0].mxu0
  %v252 = vadd.f32 0.0, %v251
  %v253 = vpop.f32.mrb[0].mxu0
  %v254 = vadd.f32 0.0, %v253
  %v255 = vpop.f32.mrb[0].mxu0
  %v256 = vadd.f32 0.0, %v255
  %257 = vmatprep.mubr.bf16.mxu0 0
  %258 = vmatmul.mubr.bf16.gmra.mrb[0].mxu0 %v188
  %v259 = vpop.f32.mrb[0].mxu0
  %v260 = vadd.f32 0.0, %v259
  %v261 = vpop.f32.mrb[0].mxu0
  %v262 = vadd.f32 0.0, %v261
  %v263 = vpop.f32.mrb[0].mxu0
  %v264 = vadd.f32 0.0, %v263
  %v265 = vpop.f32.mrb[0].mxu0
  %v266 = vadd.f32 0.0, %v265
  %267 = vmatprep.mubr.bf16.mxu0 0
  %268 = vmatmul.mubr.bf16.gmra.mrb[0].mxu0 %v191
  %v269 = vpop.f32.mrb[0].mxu0
  %v270 = vadd.f32 0.0, %v269
  %v271 = vpop.f32.mrb[0].mxu0
  %v272 = vadd.f32 0.0, %v271
  %v273 = vpop.f32.mrb[0].mxu0
  %v274 = vadd.f32 0.0, %v273
  %v275 = vpop.f32.mrb[0].mxu0
  %v276 = vadd.f32 0.0, %v275
  %277 = vmatprep.mubr.bf16.mxu0 0
  %278 = vmatmul.mubr.bf16.gmra.mrb[0].mxu0 %v194
  %v279 = vpop.f32.mrb[0].mxu0
  %v280 = vadd.f32 0.0, %v279
  %v281 = vpop.f32.mrb[0].mxu0
  %v282 = vadd.f32 0.0, %v281
  %v283 = vpop.f32.mrb[0].mxu0
  %v284 = vadd.f32 0.0, %v283
  %v285 = vpop.f32.mrb[0].mxu0
  %v286 = vadd.f32 0.0, %v285
  %287 = vmatprep.mubr.bf16.mxu0 0
  %288 = vmatmul.mubr.bf16.gmra.mrb[0].mxu0 %v197
  %v289 = vpop.f32.mrb[0].mxu0
  %v290 = vadd.f32 0.0, %v289
  %v291 = vpop.f32.mrb[0].mxu0
  %v292 = vadd.f32 0.0, %v291
  %v293 = vpop.f32.mrb[0].mxu0
  %v294 = vadd.f32 0.0, %v293
  %v295 = vpop.f32.mrb[0].mxu0
  %v296 = vadd.f32 0.0, %v295
  %297 = vmatprep.mubr.bf16.mxu0 0
  %298 = vmatmul.mubr.bf16.gmra.mrb[0].mxu0 %v200
  %v299 = vpop.f32.mrb[0].mxu0
  %v300 = vadd.f32 0.0, %v299
  %v301 = vpop.f32.mrb[0].mxu0
  %v302 = vadd.f32 0.0, %v301
  %v303 = vpop.f32.mrb[0].mxu0
  %v304 = vadd.f32 0.0, %v303
  %v305 = vpop.f32.mrb[0].mxu0
  %v306 = vadd.f32 0.0, %v305
  %307 = vmatprep.mubr.bf16.mxu0 0
  %308 = vmatmul.mubr.bf16.gmra.mrb[0].mxu0 %v203
  %v309 = vpop.f32.mrb[0].mxu0
  %v310 = vadd.f32 0.0, %v309
  %v311 = vpop.f32.mrb[0].mxu0
  %v312 = vadd.f32 0.0, %v311
  %v313 = vpop.f32.mrb[0].mxu0
  %v314 = vadd.f32 0.0, %v313
  %v315 = vpop.f32.mrb[0].mxu0
  %v316 = vadd.f32 0.0, %v315
  %317 = vdwg.mxu0
  %318 = vmatprep.subr.bf16.mxu0 %v139
  %319 = vmatpush1.bf16.msra.mxu0 %v138
  %320 = vmatprep.subr.bf16.mxu0 0
  %321 = vmatpush1.bf16.msra.mxu0 0
  %322 = vmatprep.subr.bf16.mxu0 0
  %323 = vmatpush1.bf16.msra.mxu0 0
  %324 = vmatprep.subr.bf16.mxu0 0
  %325 = vmatpush1.bf16.msra.mxu0 0
  %326 = vmatprep.subr.bf16.mxu0 0
  %327 = vmatpush1.bf16.msra.mxu0 0
  %328 = vmatprep.subr.bf16.mxu0 0
  %329 = vmatpush1.bf16.msra.mxu0 0
  %330 = vmatprep.subr.bf16.mxu0 0
  %331 = vmatpush1.bf16.msra.mxu0 0
  %332 = vmatprep.subr.bf16.mxu0 0
  %333 = vmatpush1.bf16.msra.mxu0 0
  %334 = vmatprep.subr.bf16.mxu0 0
  %335 = vmatpush1.bf16.msra.mxu0 0
  %336 = vmatprep.subr.bf16.mxu0 0
  %337 = vmatpush1.bf16.msra.mxu0 0
  %338 = vmatprep.subr.bf16.mxu0 0
  %339 = vmatpush1.bf16.msra.mxu0 0
  %340 = vmatprep.subr.bf16.mxu0 0
  %341 = vmatpush1.bf16.msra.mxu0 0
  %342 = vmatprep.subr.bf16.mxu0 0
  %343 = vmatpush1.bf16.msra.mxu0 0
  %344 = vmatprep.subr.bf16.mxu0 0
  %345 = vmatpush1.bf16.msra.mxu0 0
  %346 = vmatprep.subr.bf16.mxu0 0
  %347 = vmatpush1.bf16.msra.mxu0 0
  %348 = vmatprep.subr.bf16.mxu0 0
  %349 = vmatpush1.bf16.msra.mxu0 0
  %350 = vmatprep.mubr.bf16.mxu0 0
  %351 = vmatmul.mubr.bf16.gmra.mrb[0].mxu0 %v182
  %v352 = vpop.f32.mrb[0].mxu0
  %v353 = vadd.f32 0.0, %v352
  %v354 = vpop.f32.mrb[0].mxu0
  %v355 = vadd.f32 0.0, %v354
  %v356 = vpop.f32.mrb[0].mxu0
  %v357 = vadd.f32 0.0, %v356
  %v358 = vpop.f32.mrb[0].mxu0
  %v359 = vadd.f32 0.0, %v358
  %360 = vmatprep.mubr.bf16.mxu0 0
  %361 = vmatmul.mubr.bf16.gmra.mrb[0].mxu0 %v185
  %v362 = vpop.f32.mrb[0].mxu0
  %v363 = vadd.f32 0.0, %v362
  %v364 = vpop.f32.mrb[0].mxu0
  %v365 = vadd.f32 0.0, %v364
  %v366 = vpop.f32.mrb[0].mxu0
  %v367 = vadd.f32 0.0, %v366
  %v368 = vpop.f32.mrb[0].mxu0
  %v369 = vadd.f32 0.0, %v368
  %370 = vmatprep.mubr.bf16.mxu0 0
  %371 = vmatmul.mubr.bf16.gmra.mrb[0].mxu0 %v188
  %v372 = vpop.f32.mrb[0].mxu0
  %v373 = vadd.f32 0.0, %v372
  %v374 = vpop.f32.mrb[0].mxu0
  %v375 = vadd.f32 0.0, %v374
  %v376 = vpop.f32.mrb[0].mxu0
  %v377 = vadd.f32 0.0, %v376
  %v378 = vpop.f32.mrb[0].mxu0
  %v379 = vadd.f32 0.0, %v378
  %380 = vmatprep.mubr.bf16.mxu0 0
  %381 = vmatmul.mubr.bf16.gmra.mrb[0].mxu0 %v191
  %v382 = vpop.f32.mrb[0].mxu0
  %v383 = vadd.f32 0.0, %v382
  %v384 = vpop.f32.mrb[0].mxu0
  %v385 = vadd.f32 0.0, %v384
  %v386 = vpop.f32.mrb[0].mxu0
  %v387 = vadd.f32 0.0, %v386
  %v388 = vpop.f32.mrb[0].mxu0
  %v389 = vadd.f32 0.0, %v388
  %390 = vmatprep.mubr.bf16.mxu0 0
  %391 = vmatmul.mubr.bf16.gmra.mrb[0].mxu0 %v194
  %v392 = vpop.f32.mrb[0].mxu0
  %v393 = vadd.f32 0.0, %v392
  %v394 = vpop.f32.mrb[0].mxu0
  %v395 = vadd.f32 0.0, %v394
  %v396 = vpop.f32.mrb[0].mxu0
  %v397 = vadd.f32 0.0, %v396
  %v398 = vpop.f32.mrb[0].mxu0
  %v399 = vadd.f32 0.0, %v398
  %400 = vmatprep.mubr.bf16.mxu0 0
  %401 = vmatmul.mubr.bf16.gmra.mrb[0].mxu0 %v197
  %v402 = vpop.f32.mrb[0].mxu0
  %v403 = vadd.f32 0.0, %v402
  %v404 = vpop.f32.mrb[0].mxu0
  %v405 = vadd.f32 0.0, %v404
  %v406 = vpop.f32.mrb[0].mxu0
  %v407 = vadd.f32 0.0, %v406
  %v408 = vpop.f32.mrb[0].mxu0
  %v409 = vadd.f32 0.0, %v408
  %410 = vmatprep.mubr.bf16.mxu0 0
  %411 = vmatmul.mubr.bf16.gmra.mrb[0].mxu0 %v200
  %v412 = vpop.f32.mrb[0].mxu0
  %v413 = vadd.f32 0.0, %v412
  %v414 = vpop.f32.mrb[0].mxu0
  %v415 = vadd.f32 0.0, %v414
  %v416 = vpop.f32.mrb[0].mxu0
  %v417 = vadd.f32 0.0, %v416
  %v418 = vpop.f32.mrb[0].mxu0
  %v419 = vadd.f32 0.0, %v418
  %420 = vmatprep.mubr.bf16.mxu0 0
  %421 = vmatmul.mubr.bf16.gmra.mrb[0].mxu0 %v203
  %v422 = vpop.f32.mrb[0].mxu0
  %v423 = vadd.f32 0.0, %v422
  %v424 = vpop.f32.mrb[0].mxu0
  %v425 = vadd.f32 0.0, %v424
  %v426 = vpop.f32.mrb[0].mxu0
  %v427 = vadd.f32 0.0, %v426
  %v428 = vpop.f32.mrb[0].mxu0
  %v429 = vadd.f32 0.0, %v428
  %430 = vdwg.mxu0
  %431 = vst [vmem:[%s4] sm:$0xff] %v240
  %432 = vst [vmem:[%s4 + $0x8] sm:$0xff] %v242
  %433 = vst [vmem:[%s4 + $0x10] sm:$0xff] %v353
  %434 = vst [vmem:[%s4 + $0x18] sm:$0xff] %v355
  %435 = vst [vmem:[%s4 + $0x20] sm:$0xff] %v244
  %436 = vst [vmem:[%s4 + $0x28] sm:$0xff] %v246
  %437 = vst [vmem:[%s4 + $0x30] sm:$0xff] %v357
  %438 = vst [vmem:[%s4 + $0x38] sm:$0xff] %v359
  %439 = vst [vmem:[%s4 + $0x40] sm:$0xff] %v250
  %440 = vst [vmem:[%s4 + $0x48] sm:$0xff] %v252
  %441 = vst [vmem:[%s4 + $0x50] sm:$0xff] %v363
  %442 = vst [vmem:[%s4 + $0x58] sm:$0xff] %v365
  %443 = vst [vmem:[%s4 + $0x60] sm:$0xff] %v254
  %444 = vst [vmem:[%s4 + $0x68] sm:$0xff] %v256
  %445 = vst [vmem:[%s4 + $0x70] sm:$0xff] %v367
  %446 = vst [vmem:[%s4 + $0x78] sm:$0xff] %v369
  %447 = vst [vmem:[%s4 + $0x80] sm:$0xff] %v260
  %448 = vst [vmem:[%s4 + $0x88] sm:$0xff] %v262
  %449 = vst [vmem:[%s4 + $0x90] sm:$0xff] %v373
  %450 = vst [vmem:[%s4 + $0x98] sm:$0xff] %v375
  %451 = vst [vmem:[%s4 + $0xa0] sm:$0xff] %v264
  %452 = vst [vmem:[%s4 + $0xa8] sm:$0xff] %v266
  %453 = vst [vmem:[%s4 + $0xb0] sm:$0xff] %v377
  %454 = vst [vmem:[%s4 + $0xb8] sm:$0xff] %v379
  %455 = vst [vmem:[%s4 + $0xc0] sm:$0xff] %v270
  %456 = vst [vmem:[%s4 + $0xc8] sm:$0xff] %v272
  %457 = vst [vmem:[%s4 + $0xd0] sm:$0xff] %v383
  %458 = vst [vmem:[%s4 + $0xd8] sm:$0xff] %v385
  %459 = vst [vmem:[%s4 + $0xe0] sm:$0xff] %v274
  %460 = vst [vmem:[%s4 + $0xe8] sm:$0xff] %v276
  %461 = vst [vmem:[%s4 + $0xf0] sm:$0xff] %v387
  %462 = vst [vmem:[%s4 + $0xf8] sm:$0xff] %v389
  %463 = vst [vmem:[%s4 + $0x100] sm:$0xff] %v280
  %464 = vst [vmem:[%s4 + $0x108] sm:$0xff] %v282
  %465 = vst [vmem:[%s4 + $0x110] sm:$0xff] %v393
  %466 = vst [vmem:[%s4 + $0x118] sm:$0xff] %v395
  %467 = vst [vmem:[%s4 + $0x120] sm:$0xff] %v284
  %468 = vst [vmem:[%s4 + $0x128] sm:$0xff] %v286
  %469 = vst [vmem:[%s4 + $0x130] sm:$0xff] %v397
  %470 = vst [vmem:[%s4 + $0x138] sm:$0xff] %v399
  %471 = vst [vmem:[%s4 + $0x140] sm:$0xff] %v290
  %472 = vst [vmem:[%s4 + $0x148] sm:$0xff] %v292
  %473 = vst [vmem:[%s4 + $0x150] sm:$0xff] %v403
  %474 = vst [vmem:[%s4 + $0x158] sm:$0xff] %v405
  %475 = vst [vmem:[%s4 + $0x160] sm:$0xff] %v294
  %476 = vst [vmem:[%s4 + $0x168] sm:$0xff] %v296
  %477 = vst [vmem:[%s4 + $0x170] sm:$0xff] %v407
  %478 = vst [vmem:[%s4 + $0x178] sm:$0xff] %v409
  %479 = vst [vmem:[%s4 + $0x180] sm:$0xff] %v300
  %480 = vst [vmem:[%s4 + $0x188] sm:$0xff] %v302
  %481 = vst [vmem:[%s4 + $0x190] sm:$0xff] %v413
  %482 = vst [vmem:[%s4 + $0x198] sm:$0xff] %v415
  %483 = vst [vmem:[%s4 + $0x1a0] sm:$0xff] %v304
  %484 = vst [vmem:[%s4 + $0x1a8] sm:$0xff] %v306
  %485 = vst [vmem:[%s4 + $0x1b0] sm:$0xff] %v417
  %486 = vst [vmem:[%s4 + $0x1b8] sm:$0xff] %v419
  %487 = vst [vmem:[%s4 + $0x1c0] sm:$0xff] %v310
  %488 = vst [vmem:[%s4 + $0x1c8] sm:$0xff] %v312
  %489 = vst [vmem:[%s4 + $0x1d0] sm:$0xff] %v423
  %490 = vst [vmem:[%s4 + $0x1d8] sm:$0xff] %v425
  %491 = vst [vmem:[%s4 + $0x1e0] sm:$0xff] %v314
  %492 = vst [vmem:[%s4 + $0x1e8] sm:$0xff] %v316
  %493 = vst [vmem:[%s4 + $0x1f0] sm:$0xff] %v427
  %494 = vst [vmem:[%s4 + $0x1f8] sm:$0xff] %v429
  // Predicated region
  $region18: #{generator_forward.9} parent=0 // pred_check
    _
  $region19: #{generator_forward.9} parent=0 // pred_check_branch
    %496 = sbr.rel (0) target = $region21
  $region20: #{generator_forward.9} parent=0 // pred_region
    _
  $region21: #{generator_forward.9} parent=0 // pred_fallthru
    _
  // Predicated region
  $region22: #{generator_forward.9} parent=0 // pred_check
    _
  $region23: #{generator_forward.9} parent=0 // pred_check_branch
    %498 = sbr.rel (0) target = $region25
  $region24: #{generator_forward.9} parent=0 // pred_region
    _
  $region25: #{generator_forward.9} parent=0 // pred_fallthru
    _

// kernel: squeeze.69
$region0: #{squeeze.69}
  %s0 = inlined_call_operand.vmem [shape: f32[32,512], index: 0, kind: input, shape index: {}]
  %s1 = inlined_call_operand.vmem [shape: f32[4,8,2,16,16], index: 1, kind: output, shape index: {}]
  %v2 = vld [vmem:[%s0] sm:$0xff]
  %vm3 = vcmask 130048
  %4 = vst.msk [vmem:[%s1] sm:$0x1] %vm3, %v2
  %s5 = scalar_lea.vmem %s1, 31
  %6 = vst.msk [vmem:[%s5] sm:$0x2] %vm3, %v2
  %s7 = scalar_lea.vmem %s1, 62
  %8 = vst.msk [vmem:[%s7] sm:$0x4] %vm3, %v2
  %s9 = scalar_lea.vmem %s1, 93
  %10 = vst.msk [vmem:[%s9] sm:$0x8] %vm3, %v2
  %s11 = scalar_lea.vmem %s1, 124
  %12 = vst.msk [vmem:[%s11] sm:$0x10] %vm3, %v2
  %s13 = scalar_lea.vmem %s1, 155
  %14 = vst.msk [vmem:[%s13] sm:$0x20] %vm3, %v2
  %s15 = scalar_lea.vmem %s1, 186
  %16 = vst.msk [vmem:[%s15] sm:$0x40] %vm3, %v2
  %s17 = scalar_lea.vmem %s1, 217
  %18 = vst.msk [vmem:[%s17] sm:$0x80] %vm3, %v2
  %s19 = scalar_lea.vmem %s0, 8
  %v20 = vld [vmem:[%s19] sm:$0xff]
  %vm21 = vcmask 130048
  %s22 = scalar_lea.vmem %s1, 8
  %23 = vst.msk [vmem:[%s22] sm:$0x1] %vm21, %v20
  %s24 = scalar_lea.vmem %s1, 39
  %25 = vst.msk [vmem:[%s24] sm:$0x2] %vm21, %v20
  %s26 = scalar_lea.vmem %s1, 70
  %27 = vst.msk [vmem:[%s26] sm:$0x4] %vm21, %v20
  %s28 = scalar_lea.vmem %s1, 101
  %29 = vst.msk [vmem:[%s28] sm:$0x8] %vm21, %v20
  %s30 = scalar_lea.vmem %s1, 132
  %31 = vst.msk [vmem:[%s30] sm:$0x10] %vm21, %v20
  %s32 = scalar_lea.vmem %s1, 163
  %33 = vst.msk [vmem:[%s32] sm:$0x20] %vm21, %v20
  %s34 = scalar_lea.vmem %s1, 194
  %35 = vst.msk [vmem:[%s34] sm:$0x40] %vm21, %v20
  %s36 = scalar_lea.vmem %s1, 225
  %37 = vst.msk [vmem:[%s36] sm:$0x80] %vm21, %v20
  %s38 = scalar_lea.vmem %s0, 16
  %v39 = vld [vmem:[%s38] sm:$0xff]
  %vm40 = vcmask 130048
  %s41 = scalar_lea.vmem %s1, 16
  %42 = vst.msk [vmem:[%s41] sm:$0x1] %vm40, %v39
  %s43 = scalar_lea.vmem %s1, 47
  %44 = vst.msk [vmem:[%s43] sm:$0x2] %vm40, %v39
  %s45 = scalar_lea.vmem %s1, 78
  %46 = vst.msk [vmem:[%s45] sm:$0x4] %vm40, %v39
  %s47 = scalar_lea.vmem %s1, 109
  %48 = vst.msk [vmem:[%s47] sm:$0x8] %vm40, %v39
  %s49 = scalar_lea.vmem %s1, 140
  %50 = vst.msk [vmem:[%s49] sm:$0x10] %vm40, %v39
  %s51 = scalar_lea.vmem %s1, 171
  %52 = vst.msk [vmem:[%s51] sm:$0x20] %vm40, %v39
  %s53 = scalar_lea.vmem %s1, 202
  %54 = vst.msk [vmem:[%s53] sm:$0x40] %vm40, %v39
  %s55 = scalar_lea.vmem %s1, 233
  %56 = vst.msk [vmem:[%s55] sm:$0x80] %vm40, %v39
  %s57 = scalar_lea.vmem %s0, 24
  %v58 = vld [vmem:[%s57] sm:$0xff]
  %vm59 = vcmask 130048
  %s60 = scalar_lea.vmem %s1, 24
  %61 = vst.msk [vmem:[%s60] sm:$0x1] %vm59, %v58
  %s62 = scalar_lea.vmem %s1, 55
  %63 = vst.msk [vmem:[%s62] sm:$0x2] %vm59, %v58
  %s64 = scalar_lea.vmem %s1, 86
  %65 = vst.msk [vmem:[%s64] sm:$0x4] %vm59, %v58
  %s66 = scalar_lea.vmem %s1, 117
  %67 = vst.msk [vmem:[%s66] sm:$0x8] %vm59, %v58
  %s68 = scalar_lea.vmem %s1, 148
  %69 = vst.msk [vmem:[%s68] sm:$0x10] %vm59, %v58
  %s70 = scalar_lea.vmem %s1, 179
  %71 = vst.msk [vmem:[%s70] sm:$0x20] %vm59, %v58
  %s72 = scalar_lea.vmem %s1, 210
  %73 = vst.msk [vmem:[%s72] sm:$0x40] %vm59, %v58
  %s74 = scalar_lea.vmem %s1, 241
  %75 = vst.msk [vmem:[%s74] sm:$0x80] %vm59, %v58
  %s76 = scalar_lea.vmem %s0, 32
  %v77 = vld [vmem:[%s76] sm:$0xff]
  %vm78 = vcmask 130048
  %s79 = scalar_lea.vmem %s1, 256
  %80 = vst.msk [vmem:[%s79] sm:$0x1] %vm78, %v77
  %s81 = scalar_lea.vmem %s1, 287
  %82 = vst.msk [vmem:[%s81] sm:$0x2] %vm78, %v77
  %s83 = scalar_lea.vmem %s1, 318
  %84 = vst.msk [vmem:[%s83] sm:$0x4] %vm78, %v77
  %s85 = scalar_lea.vmem %s1, 349
  %86 = vst.msk [vmem:[%s85] sm:$0x8] %vm78, %v77
  %s87 = scalar_lea.vmem %s1, 380
  %88 = vst.msk [vmem:[%s87] sm:$0x10] %vm78, %v77
  %s89 = scalar_lea.vmem %s1, 411
  %90 = vst.msk [vmem:[%s89] sm:$0x20] %vm78, %v77
  %s91 = scalar_lea.vmem %s1, 442
  %92 = vst.msk [vmem:[%s91] sm:$0x40] %vm78, %v77
  %s93 = scalar_lea.vmem %s1, 473
  %94 = vst.msk [vmem:[%s93] sm:$0x80] %vm78, %v77
  %s95 = scalar_lea.vmem %s0, 40
  %v96 = vld [vmem:[%s95] sm:$0xff]
  %vm97 = vcmask 130048
  %s98 = scalar_lea.vmem %s1, 264
  %99 = vst.msk [vmem:[%s98] sm:$0x1] %vm97, %v96
  %s100 = scalar_lea.vmem %s1, 295
  %101 = vst.msk [vmem:[%s100] sm:$0x2] %vm97, %v96
  %s102 = scalar_lea.vmem %s1, 326
  %103 = vst.msk [vmem:[%s102] sm:$0x4] %vm97, %v96
  %s104 = scalar_lea.vmem %s1, 357
  %105 = vst.msk [vmem:[%s104] sm:$0x8] %vm97, %v96
  %s106 = scalar_lea.vmem %s1, 388
  %107 = vst.msk [vmem:[%s106] sm:$0x10] %vm97, %v96
  %s108 = scalar_lea.vmem %s1, 419
  %109 = vst.msk [vmem:[%s108] sm:$0x20] %vm97, %v96
  %s110 = scalar_lea.vmem %s1, 450
  %111 = vst.msk [vmem:[%s110] sm:$0x40] %vm97, %v96
  %s112 = scalar_lea.vmem %s1, 481
  %113 = vst.msk [vmem:[%s112] sm:$0x80] %vm97, %v96
  %s114 = scalar_lea.vmem %s0, 48
  %v115 = vld [vmem:[%s114] sm:$0xff]
  %vm116 = vcmask 130048
  %s117 = scalar_lea.vmem %s1, 272
  %118 = vst.msk [vmem:[%s117] sm:$0x1] %vm116, %v115
  %s119 = scalar_lea.vmem %s1, 303
  %120 = vst.msk [vmem:[%s119] sm:$0x2] %vm116, %v115
  %s121 = scalar_lea.vmem %s1, 334
  %122 = vst.msk [vmem:[%s121] sm:$0x4] %vm116, %v115
  %s123 = scalar_lea.vmem %s1, 365
  %124 = vst.msk [vmem:[%s123] sm:$0x8] %vm116, %v115
  %s125 = scalar_lea.vmem %s1, 396
  %126 = vst.msk [vmem:[%s125] sm:$0x10] %vm116, %v115
  %s127 = scalar_lea.vmem %s1, 427
  %128 = vst.msk [vmem:[%s127] sm:$0x20] %vm116, %v115
  %s129 = scalar_lea.vmem %s1, 458
  %130 = vst.msk [vmem:[%s129] sm:$0x40] %vm116, %v115
  %s131 = scalar_lea.vmem %s1, 489
  %132 = vst.msk [vmem:[%s131] sm:$0x80] %vm116, %v115
  %s133 = scalar_lea.vmem %s0, 56
  %v134 = vld [vmem:[%s133] sm:$0xff]
  %vm135 = vcmask 130048
  %s136 = scalar_lea.vmem %s1, 280
  %137 = vst.msk [vmem:[%s136] sm:$0x1] %vm135, %v134
  %s138 = scalar_lea.vmem %s1, 311
  %139 = vst.msk [vmem:[%s138] sm:$0x2] %vm135, %v134
  %s140 = scalar_lea.vmem %s1, 342
  %141 = vst.msk [vmem:[%s140] sm:$0x4] %vm135, %v134
  %s142 = scalar_lea.vmem %s1, 373
  %143 = vst.msk [vmem:[%s142] sm:$0x8] %vm135, %v134
  %s144 = scalar_lea.vmem %s1, 404
  %145 = vst.msk [vmem:[%s144] sm:$0x10] %vm135, %v134
  %s146 = scalar_lea.vmem %s1, 435
  %147 = vst.msk [vmem:[%s146] sm:$0x20] %vm135, %v134
  %s148 = scalar_lea.vmem %s1, 466
  %149 = vst.msk [vmem:[%s148] sm:$0x40] %vm135, %v134
  %s150 = scalar_lea.vmem %s1, 497
  %151 = vst.msk [vmem:[%s150] sm:$0x80] %vm135, %v134
  %s152 = scalar_lea.vmem %s0, 64
  %v153 = vld [vmem:[%s152] sm:$0xff]
  %vm154 = vcmask 130048
  %s155 = scalar_lea.vmem %s1, 512
  %156 = vst.msk [vmem:[%s155] sm:$0x1] %vm154, %v153
  %s157 = scalar_lea.vmem %s1, 543
  %158 = vst.msk [vmem:[%s157] sm:$0x2] %vm154, %v153
  %s159 = scalar_lea.vmem %s1, 574
  %160 = vst.msk [vmem:[%s159] sm:$0x4] %vm154, %v153
  %s161 = scalar_lea.vmem %s1, 605
  %162 = vst.msk [vmem:[%s161] sm:$0x8] %vm154, %v153
  %s163 = scalar_lea.vmem %s1, 636
  %164 = vst.msk [vmem:[%s163] sm:$0x10] %vm154, %v153
  %s165 = scalar_lea.vmem %s1, 667
  %166 = vst.msk [vmem:[%s165] sm:$0x20] %vm154, %v153
  %s167 = scalar_lea.vmem %s1, 698
  %168 = vst.msk [vmem:[%s167] sm:$0x40] %vm154, %v153
  %s169 = scalar_lea.vmem %s1, 729
  %170 = vst.msk [vmem:[%s169] sm:$0x80] %vm154, %v153
  %s171 = scalar_lea.vmem %s0, 72
  %v172 = vld [vmem:[%s171] sm:$0xff]
  %vm173 = vcmask 130048
  %s174 = scalar_lea.vmem %s1, 520
  %175 = vst.msk [vmem:[%s174] sm:$0x1] %vm173, %v172
  %s176 = scalar_lea.vmem %s1, 551
  %177 = vst.msk [vmem:[%s176] sm:$0x2] %vm173, %v172
  %s178 = scalar_lea.vmem %s1, 582
  %179 = vst.msk [vmem:[%s178] sm:$0x4] %vm173, %v172
  %s180 = scalar_lea.vmem %s1, 613
  %181 = vst.msk [vmem:[%s180] sm:$0x8] %vm173, %v172
  %s182 = scalar_lea.vmem %s1, 644
  %183 = vst.msk [vmem:[%s182] sm:$0x10] %vm173, %v172
  %s184 = scalar_lea.vmem %s1, 675
  %185 = vst.msk [vmem:[%s184] sm:$0x20] %vm173, %v172
  %s186 = scalar_lea.vmem %s1, 706
  %187 = vst.msk [vmem:[%s186] sm:$0x40] %vm173, %v172
  %s188 = scalar_lea.vmem %s1, 737
  %189 = vst.msk [vmem:[%s188] sm:$0x80] %vm173, %v172
  %s190 = scalar_lea.vmem %s0, 80
  %v191 = vld [vmem:[%s190] sm:$0xff]
  %vm192 = vcmask 130048
  %s193 = scalar_lea.vmem %s1, 528
  %194 = vst.msk [vmem:[%s193] sm:$0x1] %vm192, %v191
  %s195 = scalar_lea.vmem %s1, 559
  %196 = vst.msk [vmem:[%s195] sm:$0x2] %vm192, %v191
  %s197 = scalar_lea.vmem %s1, 590
  %198 = vst.msk [vmem:[%s197] sm:$0x4] %vm192, %v191
  %s199 = scalar_lea.vmem %s1, 621
  %200 = vst.msk [vmem:[%s199] sm:$0x8] %vm192, %v191
  %s201 = scalar_lea.vmem %s1, 652
  %202 = vst.msk [vmem:[%s201] sm:$0x10] %vm192, %v191
  %s203 = scalar_lea.vmem %s1, 683
  %204 = vst.msk [vmem:[%s203] sm:$0x20] %vm192, %v191
  %s205 = scalar_lea.vmem %s1, 714
  %206 = vst.msk [vmem:[%s205] sm:$0x40] %vm192, %v191
  %s207 = scalar_lea.vmem %s1, 745
  %208 = vst.msk [vmem:[%s207] sm:$0x80] %vm192, %v191
  %s209 = scalar_lea.vmem %s0, 88
  %v210 = vld [vmem:[%s209] sm:$0xff]
  %vm211 = vcmask 130048
  %s212 = scalar_lea.vmem %s1, 536
  %213 = vst.msk [vmem:[%s212] sm:$0x1] %vm211, %v210
  %s214 = scalar_lea.vmem %s1, 567
  %215 = vst.msk [vmem:[%s214] sm:$0x2] %vm211, %v210
  %s216 = scalar_lea.vmem %s1, 598
  %217 = vst.msk [vmem:[%s216] sm:$0x4] %vm211, %v210
  %s218 = scalar_lea.vmem %s1, 629
  %219 = vst.msk [vmem:[%s218] sm:$0x8] %vm211, %v210
  %s220 = scalar_lea.vmem %s1, 660
  %221 = vst.msk [vmem:[%s220] sm:$0x10] %vm211, %v210
  %s222 = scalar_lea.vmem %s1, 691
  %223 = vst.msk [vmem:[%s222] sm:$0x20] %vm211, %v210
  %s224 = scalar_lea.vmem %s1, 722
  %225 = vst.msk [vmem:[%s224] sm:$0x40] %vm211, %v210
  %s226 = scalar_lea.vmem %s1, 753
  %227 = vst.msk [vmem:[%s226] sm:$0x80] %vm211, %v210
  %s228 = scalar_lea.vmem %s0, 96
  %v229 = vld [vmem:[%s228] sm:$0xff]
  %vm230 = vcmask 130048
  %s231 = scalar_lea.vmem %s1, 768
  %232 = vst.msk [vmem:[%s231] sm:$0x1] %vm230, %v229
  %s233 = scalar_lea.vmem %s1, 799
  %234 = vst.msk [vmem:[%s233] sm:$0x2] %vm230, %v229
  %s235 = scalar_lea.vmem %s1, 830
  %236 = vst.msk [vmem:[%s235] sm:$0x4] %vm230, %v229
  %s237 = scalar_lea.vmem %s1, 861
  %238 = vst.msk [vmem:[%s237] sm:$0x8] %vm230, %v229
  %s239 = scalar_lea.vmem %s1, 892
  %240 = vst.msk [vmem:[%s239] sm:$0x10] %vm230, %v229
  %s241 = scalar_lea.vmem %s1, 923
  %242 = vst.msk [vmem:[%s241] sm:$0x20] %vm230, %v229
  %s243 = scalar_lea.vmem %s1, 954
  %244 = vst.msk [vmem:[%s243] sm:$0x40] %vm230, %v229
  %s245 = scalar_lea.vmem %s1, 985
  %246 = vst.msk [vmem:[%s245] sm:$0x80] %vm230, %v229
  %s247 = scalar_lea.vmem %s0, 104
  %v248 = vld [vmem:[%s247] sm:$0xff]
  %vm249 = vcmask 130048
  %s250 = scalar_lea.vmem %s1, 776
  %251 = vst.msk [vmem:[%s250] sm:$0x1] %vm249, %v248
  %s252 = scalar_lea.vmem %s1, 807
  %253 = vst.msk [vmem:[%s252] sm:$0x2] %vm249, %v248
  %s254 = scalar_lea.vmem %s1, 838
  %255 = vst.msk [vmem:[%s254] sm:$0x4] %vm249, %v248
  %s256 = scalar_lea.vmem %s1, 869
  %257 = vst.msk [vmem:[%s256] sm:$0x8] %vm249, %v248
  %s258 = scalar_lea.vmem %s1, 900
  %259 = vst.msk [vmem:[%s258] sm:$0x10] %vm249, %v248
  %s260 = scalar_lea.vmem %s1, 931
  %261 = vst.msk [vmem:[%s260] sm:$0x20] %vm249, %v248
  %s262 = scalar_lea.vmem %s1, 962
  %263 = vst.msk [vmem:[%s262] sm:$0x40] %vm249, %v248
  %s264 = scalar_lea.vmem %s1, 993
  %265 = vst.msk [vmem:[%s264] sm:$0x80] %vm249, %v248
  %s266 = scalar_lea.vmem %s0, 112
  %v267 = vld [vmem:[%s266] sm:$0xff]
  %vm268 = vcmask 130048
  %s269 = scalar_lea.vmem %s1, 784
  %270 = vst.msk [vmem:[%s269] sm:$0x1] %vm268, %v267
  %s271 = scalar_lea.vmem %s1, 815
  %272 = vst.msk [vmem:[%s271] sm:$0x2] %vm268, %v267
  %s273 = scalar_lea.vmem %s1, 846
  %274 = vst.msk [vmem:[%s273] sm:$0x4] %vm268, %v267
  %s275 = scalar_lea.vmem %s1, 877
  %276 = vst.msk [vmem:[%s275] sm:$0x8] %vm268, %v267
  %s277 = scalar_lea.vmem %s1, 908
  %278 = vst.msk [vmem:[%s277] sm:$0x10] %vm268, %v267
  %s279 = scalar_lea.vmem %s1, 939
  %280 = vst.msk [vmem:[%s279] sm:$0x20] %vm268, %v267
  %s281 = scalar_lea.vmem %s1, 970
  %282 = vst.msk [vmem:[%s281] sm:$0x40] %vm268, %v267
  %s283 = scalar_lea.vmem %s1, 1001
  %284 = vst.msk [vmem:[%s283] sm:$0x80] %vm268, %v267
  %s285 = scalar_lea.vmem %s0, 120
  %v286 = vld [vmem:[%s285] sm:$0xff]
  %vm287 = vcmask 130048
  %s288 = scalar_lea.vmem %s1, 792
  %289 = vst.msk [vmem:[%s288] sm:$0x1] %vm287, %v286
  %s290 = scalar_lea.vmem %s1, 823
  %291 = vst.msk [vmem:[%s290] sm:$0x2] %vm287, %v286
  %s292 = scalar_lea.vmem %s1, 854
  %293 = vst.msk [vmem:[%s292] sm:$0x4] %vm287, %v286
  %s294 = scalar_lea.vmem %s1, 885
  %295 = vst.msk [vmem:[%s294] sm:$0x8] %vm287, %v286
  %s296 = scalar_lea.vmem %s1, 916
  %297 = vst.msk [vmem:[%s296] sm:$0x10] %vm287, %v286
  %s298 = scalar_lea.vmem %s1, 947
  %299 = vst.msk [vmem:[%s298] sm:$0x20] %vm287, %v286
  %s300 = scalar_lea.vmem %s1, 978
  %301 = vst.msk [vmem:[%s300] sm:$0x40] %vm287, %v286
  %s302 = scalar_lea.vmem %s1, 1009
  %303 = vst.msk [vmem:[%s302] sm:$0x80] %vm287, %v286
  %v304 = vld [vmem:[%s0] ss:$8 sm:$0xf]
  %s305 = scalar_lea.vmem %s0, 4294967265
  %v306 = vld [vmem:[%s305] ss:$8 sm:$0xf0]
  %vm307 = vcmask 1047556
  %v308 = vsel %vm307, %v306, %v304
  %309 = vrot.lane.b32.xlu0 %v308, 112
  %v310 = vpop.permute.xlu0 %309
  %vm311 = vcmask 130048
  %s312 = scalar_lea.vmem %s1, 1
  %313 = vst.msk [vmem:[%s312] ss:$8 sm:$0xf] %vm311, %v310
  %s314 = scalar_lea.vmem %s1, 1
  %315 = vst.msk [vmem:[%s314] ss:$8 sm:$0xf0] %vm311, %v310
  %s316 = scalar_lea.vmem %s0, 2
  %v317 = vld [vmem:[%s316] ss:$8 sm:$0xf]
  %s318 = scalar_lea.vmem %s0, 4294967267
  %v319 = vld [vmem:[%s318] ss:$8 sm:$0xf0]
  %vm320 = vcmask 1047556
  %v321 = vsel %vm320, %v319, %v317
  %322 = vrot.lane.b32.xlu0 %v321, 112
  %v323 = vpop.permute.xlu0 %322
  %vm324 = vcmask 130048
  %s325 = scalar_lea.vmem %s1, 65
  %326 = vst.msk [vmem:[%s325] ss:$8 sm:$0xf] %vm324, %v323
  %s327 = scalar_lea.vmem %s1, 65
  %328 = vst.msk [vmem:[%s327] ss:$8 sm:$0xf0] %vm324, %v323
  %s329 = scalar_lea.vmem %s0, 4
  %v330 = vld [vmem:[%s329] ss:$8 sm:$0xf]
  %s331 = scalar_lea.vmem %s0, 4294967269
  %v332 = vld [vmem:[%s331] ss:$8 sm:$0xf0]
  %vm333 = vcmask 1047556
  %v334 = vsel %vm333, %v332, %v330
  %335 = vrot.lane.b32.xlu0 %v334, 112
  %v336 = vpop.permute.xlu0 %335
  %vm337 = vcmask 130048
  %s338 = scalar_lea.vmem %s1, 129
  %339 = vst.msk [vmem:[%s338] ss:$8 sm:$0xf] %vm337, %v336
  %s340 = scalar_lea.vmem %s1, 129
  %341 = vst.msk [vmem:[%s340] ss:$8 sm:$0xf0] %vm337, %v336
  %s342 = scalar_lea.vmem %s0, 6
  %v343 = vld [vmem:[%s342] ss:$8 sm:$0xf]
  %s344 = scalar_lea.vmem %s0, 4294967271
  %v345 = vld [vmem:[%s344] ss:$8 sm:$0xf0]
  %vm346 = vcmask 1047556
  %v347 = vsel %vm346, %v345, %v343
  %348 = vrot.lane.b32.xlu0 %v347, 112
  %v349 = vpop.permute.xlu0 %348
  %vm350 = vcmask 130048
  %s351 = scalar_lea.vmem %s1, 193
  %352 = vst.msk [vmem:[%s351] ss:$8 sm:$0xf] %vm350, %v349
  %s353 = scalar_lea.vmem %s1, 193
  %354 = vst.msk [vmem:[%s353] ss:$8 sm:$0xf0] %vm350, %v349
  %s355 = scalar_lea.vmem %s0, 32
  %v356 = vld [vmem:[%s355] ss:$8 sm:$0xf]
  %s357 = scalar_lea.vmem %s0, 1
  %v358 = vld [vmem:[%s357] ss:$8 sm:$0xf0]
  %vm359 = vcmask 1047556
  %v360 = vsel %vm359, %v358, %v356
  %361 = vrot.lane.b32.xlu0 %v360, 112
  %v362 = vpop.permute.xlu0 %361
  %vm363 = vcmask 130048
  %s364 = scalar_lea.vmem %s1, 257
  %365 = vst.msk [vmem:[%s364] ss:$8 sm:$0xf] %vm363, %v362
  %s366 = scalar_lea.vmem %s1, 257
  %367 = vst.msk [vmem:[%s366] ss:$8 sm:$0xf0] %vm363, %v362
  %s368 = scalar_lea.vmem %s0, 34
  %v369 = vld [vmem:[%s368] ss:$8 sm:$0xf]
  %s370 = scalar_lea.vmem %s0, 3
  %v371 = vld [vmem:[%s370] ss:$8 sm:$0xf0]
  %vm372 = vcmask 1047556
  %v373 = vsel %vm372, %v371, %v369
  %374 = vrot.lane.b32.xlu0 %v373, 112
  %v375 = vpop.permute.xlu0 %374
  %vm376 = vcmask 130048
  %s377 = scalar_lea.vmem %s1, 321
  %378 = vst.msk [vmem:[%s377] ss:$8 sm:$0xf] %vm376, %v375
  %s379 = scalar_lea.vmem %s1, 321
  %380 = vst.msk [vmem:[%s379] ss:$8 sm:$0xf0] %vm376, %v375
  %s381 = scalar_lea.vmem %s0, 36
  %v382 = vld [vmem:[%s381] ss:$8 sm:$0xf]
  %s383 = scalar_lea.vmem %s0, 5
  %v384 = vld [vmem:[%s383] ss:$8 sm:$0xf0]
  %vm385 = vcmask 1047556
  %v386 = vsel %vm385, %v384, %v382
  %387 = vrot.lane.b32.xlu0 %v386, 112
  %v388 = vpop.permute.xlu0 %387
  %vm389 = vcmask 130048
  %s390 = scalar_lea.vmem %s1, 385
  %391 = vst.msk [vmem:[%s390] ss:$8 sm:$0xf] %vm389, %v388
  %s392 = scalar_lea.vmem %s1, 385
  %393 = vst.msk [vmem:[%s392] ss:$8 sm:$0xf0] %vm389, %v388
  %s394 = scalar_lea.vmem %s0, 38
  %v395 = vld [vmem:[%s394] ss:$8 sm:$0xf]
  %s396 = scalar_lea.vmem %s0, 7
  %v397 = vld [vmem:[%s396] ss:$8 sm:$0xf0]
  %vm398 = vcmask 1047556
  %v399 = vsel %vm398, %v397, %v395
  %400 = vrot.lane.b32.xlu0 %v399, 112
  %v401 = vpop.permute.xlu0 %400
  %vm402 = vcmask 130048
  %s403 = scalar_lea.vmem %s1, 449
  %404 = vst.msk [vmem:[%s403] ss:$8 sm:$0xf] %vm402, %v401
  %s405 = scalar_lea.vmem %s1, 449
  %406 = vst.msk [vmem:[%s405] ss:$8 sm:$0xf0] %vm402, %v401
  %s407 = scalar_lea.vmem %s0, 64
  %v408 = vld [vmem:[%s407] ss:$8 sm:$0xf]
  %s409 = scalar_lea.vmem %s0, 33
  %v410 = vld [vmem:[%s409] ss:$8 sm:$0xf0]
  %vm411 = vcmask 1047556
  %v412 = vsel %vm411, %v410, %v408
  %413 = vrot.lane.b32.xlu0 %v412, 112
  %v414 = vpop.permute.xlu0 %413
  %vm415 = vcmask 130048
  %s416 = scalar_lea.vmem %s1, 513
  %417 = vst.msk [vmem:[%s416] ss:$8 sm:$0xf] %vm415, %v414
  %s418 = scalar_lea.vmem %s1, 513
  %419 = vst.msk [vmem:[%s418] ss:$8 sm:$0xf0] %vm415, %v414
  %s420 = scalar_lea.vmem %s0, 66
  %v421 = vld [vmem:[%s420] ss:$8 sm:$0xf]
  %s422 = scalar_lea.vmem %s0, 35
  %v423 = vld [vmem:[%s422] ss:$8 sm:$0xf0]
  %vm424 = vcmask 1047556
  %v425 = vsel %vm424, %v423, %v421
  %426 = vrot.lane.b32.xlu0 %v425, 112
  %v427 = vpop.permute.xlu0 %426
  %vm428 = vcmask 130048
  %s429 = scalar_lea.vmem %s1, 577
  %430 = vst.msk [vmem:[%s429] ss:$8 sm:$0xf] %vm428, %v427
  %s431 = scalar_lea.vmem %s1, 577
  %432 = vst.msk [vmem:[%s431] ss:$8 sm:$0xf0] %vm428, %v427
  %s433 = scalar_lea.vmem %s0, 68
  %v434 = vld [vmem:[%s433] ss:$8 sm:$0xf]
  %s435 = scalar_lea.vmem %s0, 37
  %v436 = vld [vmem:[%s435] ss:$8 sm:$0xf0]
  %vm437 = vcmask 1047556
  %v438 = vsel %vm437, %v436, %v434
  %439 = vrot.lane.b32.xlu0 %v438, 112
  %v440 = vpop.permute.xlu0 %439
  %vm441 = vcmask 130048
  %s442 = scalar_lea.vmem %s1, 641
  %443 = vst.msk [vmem:[%s442] ss:$8 sm:$0xf] %vm441, %v440
  %s444 = scalar_lea.vmem %s1, 641
  %445 = vst.msk [vmem:[%s444] ss:$8 sm:$0xf0] %vm441, %v440
  %s446 = scalar_lea.vmem %s0, 70
  %v447 = vld [vmem:[%s446] ss:$8 sm:$0xf]
  %s448 = scalar_lea.vmem %s0, 39
  %v449 = vld [vmem:[%s448] ss:$8 sm:$0xf0]
  %vm450 = vcmask 1047556
  %v451 = vsel %vm450, %v449, %v447
  %452 = vrot.lane.b32.xlu0 %v451, 112
  %v453 = vpop.permute.xlu0 %452
  %vm454 = vcmask 130048
  %s455 = scalar_lea.vmem %s1, 705
  %456 = vst.msk [vmem:[%s455] ss:$8 sm:$0xf] %vm454, %v453
  %s457 = scalar_lea.vmem %s1, 705
  %458 = vst.msk [vmem:[%s457] ss:$8 sm:$0xf0] %vm454, %v453
  %s459 = scalar_lea.vmem %s0, 96
  %v460 = vld [vmem:[%s459] ss:$8 sm:$0xf]
  %s461 = scalar_lea.vmem %s0, 65
  %v462 = vld [vmem:[%s461] ss:$8 sm:$0xf0]
  %vm463 = vcmask 1047556
  %v464 = vsel %vm463, %v462, %v460
  %465 = vrot.lane.b32.xlu0 %v464, 112
  %v466 = vpop.permute.xlu0 %465
  %vm467 = vcmask 130048
  %s468 = scalar_lea.vmem %s1, 769
  %469 = vst.msk [vmem:[%s468] ss:$8 sm:$0xf] %vm467, %v466
  %s470 = scalar_lea.vmem %s1, 769
  %471 = vst.msk [vmem:[%s470] ss:$8 sm:$0xf0] %vm467, %v466
  %s472 = scalar_lea.vmem %s0, 98
  %v473 = vld [vmem:[%s472] ss:$8 sm:$0xf]
  %s474 = scalar_lea.vmem %s0, 67
  %v475 = vld [vmem:[%s474] ss:$8 sm:$0xf0]
  %vm476 = vcmask 1047556
  %v477 = vsel %vm476, %v475, %v473
  %478 = vrot.lane.b32.xlu0 %v477, 112
  %v479 = vpop.permute.xlu0 %478
  %vm480 = vcmask 130048
  %s481 = scalar_lea.vmem %s1, 833
  %482 = vst.msk [vmem:[%s481] ss:$8 sm:$0xf] %vm480, %v479
  %s483 = scalar_lea.vmem %s1, 833
  %484 = vst.msk [vmem:[%s483] ss:$8 sm:$0xf0] %vm480, %v479
  %s485 = scalar_lea.vmem %s0, 100
  %v486 = vld [vmem:[%s485] ss:$8 sm:$0xf]
  %s487 = scalar_lea.vmem %s0, 69
  %v488 = vld [vmem:[%s487] ss:$8 sm:$0xf0]
  %vm489 = vcmask 1047556
  %v490 = vsel %vm489, %v488, %v486
  %491 = vrot.lane.b32.xlu0 %v490, 112
  %v492 = vpop.permute.xlu0 %491
  %vm493 = vcmask 130048
  %s494 = scalar_lea.vmem %s1, 897
  %495 = vst.msk [vmem:[%s494] ss:$8 sm:$0xf] %vm493, %v492
  %s496 = scalar_lea.vmem %s1, 897
  %497 = vst.msk [vmem:[%s496] ss:$8 sm:$0xf0] %vm493, %v492
  %s498 = scalar_lea.vmem %s0, 102
  %v499 = vld [vmem:[%s498] ss:$8 sm:$0xf]
  %s500 = scalar_lea.vmem %s0, 71
  %v501 = vld [vmem:[%s500] ss:$8 sm:$0xf0]
  %vm502 = vcmask 1047556
  %v503 = vsel %vm502, %v501, %v499
  %504 = vrot.lane.b32.xlu0 %v503, 112
  %v505 = vpop.permute.xlu0 %504
  %vm506 = vcmask 130048
  %s507 = scalar_lea.vmem %s1, 961
  %508 = vst.msk [vmem:[%s507] ss:$8 sm:$0xf] %vm506, %v505
  %s509 = scalar_lea.vmem %s1, 961
  %510 = vst.msk [vmem:[%s509] ss:$8 sm:$0xf0] %vm506, %v505
  %v511 = vld [vmem:[%s0] ss:$8 sm:$0xf]
  %s512 = scalar_lea.vmem %s0, 4294967265
  %v513 = vld [vmem:[%s512] ss:$8 sm:$0xf0]
  %vm514 = vcmask 1047556
  %v515 = vsel %vm514, %v513, %v511
  %516 = vrot.lane.b32.xlu0 %v515, 96
  %v517 = vpop.permute.xlu0 %516
  %vm518 = vcmask 130048
  %s519 = scalar_lea.vmem %s1, 2
  %520 = vst.msk [vmem:[%s519] ss:$8 sm:$0xf] %vm518, %v517
  %s521 = scalar_lea.vmem %s1, 2
  %522 = vst.msk [vmem:[%s521] ss:$8 sm:$0xf0] %vm518, %v517
  %s523 = scalar_lea.vmem %s0, 2
  %v524 = vld [vmem:[%s523] ss:$8 sm:$0xf]
  %s525 = scalar_lea.vmem %s0, 4294967267
  %v526 = vld [vmem:[%s525] ss:$8 sm:$0xf0]
  %vm527 = vcmask 1047556
  %v528 = vsel %vm527, %v526, %v524
  %529 = vrot.lane.b32.xlu0 %v528, 96
  %v530 = vpop.permute.xlu0 %529
  %vm531 = vcmask 130048
  %s532 = scalar_lea.vmem %s1, 66
  %533 = vst.msk [vmem:[%s532] ss:$8 sm:$0xf] %vm531, %v530
  %s534 = scalar_lea.vmem %s1, 66
  %535 = vst.msk [vmem:[%s534] ss:$8 sm:$0xf0] %vm531, %v530
  %s536 = scalar_lea.vmem %s0, 4
  %v537 = vld [vmem:[%s536] ss:$8 sm:$0xf]
  %s538 = scalar_lea.vmem %s0, 4294967269
  %v539 = vld [vmem:[%s538] ss:$8 sm:$0xf0]
  %vm540 = vcmask 1047556
  %v541 = vsel %vm540, %v539, %v537
  %542 = vrot.lane.b32.xlu0 %v541, 96
  %v543 = vpop.permute.xlu0 %542
  %vm544 = vcmask 130048
  %s545 = scalar_lea.vmem %s1, 130
  %546 = vst.msk [vmem:[%s545] ss:$8 sm:$0xf] %vm544, %v543
  %s547 = scalar_lea.vmem %s1, 130
  %548 = vst.msk [vmem:[%s547] ss:$8 sm:$0xf0] %vm544, %v543
  %s549 = scalar_lea.vmem %s0, 6
  %v550 = vld [vmem:[%s549] ss:$8 sm:$0xf]
  %s551 = scalar_lea.vmem %s0, 4294967271
  %v552 = vld [vmem:[%s551] ss:$8 sm:$0xf0]
  %vm553 = vcmask 1047556
  %v554 = vsel %vm553, %v552, %v550
  %555 = vrot.lane.b32.xlu0 %v554, 96
  %v556 = vpop.permute.xlu0 %555
  %vm557 = vcmask 130048
  %s558 = scalar_lea.vmem %s1, 194
  %559 = vst.msk [vmem:[%s558] ss:$8 sm:$0xf] %vm557, %v556
  %s560 = scalar_lea.vmem %s1, 194
  %561 = vst.msk [vmem:[%s560] ss:$8 sm:$0xf0] %vm557, %v556
  %s562 = scalar_lea.vmem %s0, 32
  %v563 = vld [vmem:[%s562] ss:$8 sm:$0xf]
  %s564 = scalar_lea.vmem %s0, 1
  %v565 = vld [vmem:[%s564] ss:$8 sm:$0xf0]
  %vm566 = vcmask 1047556
  %v567 = vsel %vm566, %v565, %v563
  %568 = vrot.lane.b32.xlu0 %v567, 96
  %v569 = vpop.permute.xlu0 %568
  %vm570 = vcmask 130048
  %s571 = scalar_lea.vmem %s1, 258
  %572 = vst.msk [vmem:[%s571] ss:$8 sm:$0xf] %vm570, %v569
  %s573 = scalar_lea.vmem %s1, 258
  %574 = vst.msk [vmem:[%s573] ss:$8 sm:$0xf0] %vm570, %v569
  %s575 = scalar_lea.vmem %s0, 34
  %v576 = vld [vmem:[%s575] ss:$8 sm:$0xf]
  %s577 = scalar_lea.vmem %s0, 3
  %v578 = vld [vmem:[%s577] ss:$8 sm:$0xf0]
  %vm579 = vcmask 1047556
  %v580 = vsel %vm579, %v578, %v576
  %581 = vrot.lane.b32.xlu0 %v580, 96
  %v582 = vpop.permute.xlu0 %581
  %vm583 = vcmask 130048
  %s584 = scalar_lea.vmem %s1, 322
  %585 = vst.msk [vmem:[%s584] ss:$8 sm:$0xf] %vm583, %v582
  %s586 = scalar_lea.vmem %s1, 322
  %587 = vst.msk [vmem:[%s586] ss:$8 sm:$0xf0] %vm583, %v582
  %s588 = scalar_lea.vmem %s0, 36
  %v589 = vld [vmem:[%s588] ss:$8 sm:$0xf]
  %s590 = scalar_lea.vmem %s0, 5
  %v591 = vld [vmem:[%s590] ss:$8 sm:$0xf0]
  %vm592 = vcmask 1047556
  %v593 = vsel %vm592, %v591, %v589
  %594 = vrot.lane.b32.xlu0 %v593, 96
  %v595 = vpop.permute.xlu0 %594
  %vm596 = vcmask 130048
  %s597 = scalar_lea.vmem %s1, 386
  %598 = vst.msk [vmem:[%s597] ss:$8 sm:$0xf] %vm596, %v595
  %s599 = scalar_lea.vmem %s1, 386
  %600 = vst.msk [vmem:[%s599] ss:$8 sm:$0xf0] %vm596, %v595
  %s601 = scalar_lea.vmem %s0, 38
  %v602 = vld [vmem:[%s601] ss:$8 sm:$0xf]
  %s603 = scalar_lea.vmem %s0, 7
  %v604 = vld [vmem:[%s603] ss:$8 sm:$0xf0]
  %vm605 = vcmask 1047556
  %v606 = vsel %vm605, %v604, %v602
  %607 = vrot.lane.b32.xlu0 %v606, 96
  %v608 = vpop.permute.xlu0 %607
  %vm609 = vcmask 130048
  %s610 = scalar_lea.vmem %s1, 450
  %611 = vst.msk [vmem:[%s610] ss:$8 sm:$0xf] %vm609, %v608
  %s612 = scalar_lea.vmem %s1, 450
  %613 = vst.msk [vmem:[%s612] ss:$8 sm:$0xf0] %vm609, %v608
  %s614 = scalar_lea.vmem %s0, 64
  %v615 = vld [vmem:[%s614] ss:$8 sm:$0xf]
  %s616 = scalar_lea.vmem %s0, 33
  %v617 = vld [vmem:[%s616] ss:$8 sm:$0xf0]
  %vm618 = vcmask 1047556
  %v619 = vsel %vm618, %v617, %v615
  %620 = vrot.lane.b32.xlu0 %v619, 96
  %v621 = vpop.permute.xlu0 %620
  %vm622 = vcmask 130048
  %s623 = scalar_lea.vmem %s1, 514
  %624 = vst.msk [vmem:[%s623] ss:$8 sm:$0xf] %vm622, %v621
  %s625 = scalar_lea.vmem %s1, 514
  %626 = vst.msk [vmem:[%s625] ss:$8 sm:$0xf0] %vm622, %v621
  %s627 = scalar_lea.vmem %s0, 66
  %v628 = vld [vmem:[%s627] ss:$8 sm:$0xf]
  %s629 = scalar_lea.vmem %s0, 35
  %v630 = vld [vmem:[%s629] ss:$8 sm:$0xf0]
  %vm631 = vcmask 1047556
  %v632 = vsel %vm631, %v630, %v628
  %633 = vrot.lane.b32.xlu0 %v632, 96
  %v634 = vpop.permute.xlu0 %633
  %vm635 = vcmask 130048
  %s636 = scalar_lea.vmem %s1, 578
  %637 = vst.msk [vmem:[%s636] ss:$8 sm:$0xf] %vm635, %v634
  %s638 = scalar_lea.vmem %s1, 578
  %639 = vst.msk [vmem:[%s638] ss:$8 sm:$0xf0] %vm635, %v634
  %s640 = scalar_lea.vmem %s0, 68
  %v641 = vld [vmem:[%s640] ss:$8 sm:$0xf]
  %s642 = scalar_lea.vmem %s0, 37
  %v643 = vld [vmem:[%s642] ss:$8 sm:$0xf0]
  %vm644 = vcmask 1047556
  %v645 = vsel %vm644, %v643, %v641
  %646 = vrot.lane.b32.xlu0 %v645, 96
  %v647 = vpop.permute.xlu0 %646
  %vm648 = vcmask 130048
  %s649 = scalar_lea.vmem %s1, 642
  %650 = vst.msk [vmem:[%s649] ss:$8 sm:$0xf] %vm648, %v647
  %s651 = scalar_lea.vmem %s1, 642
  %652 = vst.msk [vmem:[%s651] ss:$8 sm:$0xf0] %vm648, %v647
  %s653 = scalar_lea.vmem %s0, 70
  %v654 = vld [vmem:[%s653] ss:$8 sm:$0xf]
  %s655 = scalar_lea.vmem %s0, 39
  %v656 = vld [vmem:[%s655] ss:$8 sm:$0xf0]
  %vm657 = vcmask 1047556
  %v658 = vsel %vm657, %v656, %v654
  %659 = vrot.lane.b32.xlu0 %v658, 96
  %v660 = vpop.permute.xlu0 %659
  %vm661 = vcmask 130048
  %s662 = scalar_lea.vmem %s1, 706
  %663 = vst.msk [vmem:[%s662] ss:$8 sm:$0xf] %vm661, %v660
  %s664 = scalar_lea.vmem %s1, 706
  %665 = vst.msk [vmem:[%s664] ss:$8 sm:$0xf0] %vm661, %v660
  %s666 = scalar_lea.vmem %s0, 96
  %v667 = vld [vmem:[%s666] ss:$8 sm:$0xf]
  %s668 = scalar_lea.vmem %s0, 65
  %v669 = vld [vmem:[%s668] ss:$8 sm:$0xf0]
  %vm670 = vcmask 1047556
  %v671 = vsel %vm670, %v669, %v667
  %672 = vrot.lane.b32.xlu0 %v671, 96
  %v673 = vpop.permute.xlu0 %672
  %vm674 = vcmask 130048
  %s675 = scalar_lea.vmem %s1, 770
  %676 = vst.msk [vmem:[%s675] ss:$8 sm:$0xf] %vm674, %v673
  %s677 = scalar_lea.vmem %s1, 770
  %678 = vst.msk [vmem:[%s677] ss:$8 sm:$0xf0] %vm674, %v673
  %s679 = scalar_lea.vmem %s0, 98
  %v680 = vld [vmem:[%s679] ss:$8 sm:$0xf]
  %s681 = scalar_lea.vmem %s0, 67
  %v682 = vld [vmem:[%s681] ss:$8 sm:$0xf0]
  %vm683 = vcmask 1047556
  %v684 = vsel %vm683, %v682, %v680
  %685 = vrot.lane.b32.xlu0 %v684, 96
  %v686 = vpop.permute.xlu0 %685
  %vm687 = vcmask 130048
  %s688 = scalar_lea.vmem %s1, 834
  %689 = vst.msk [vmem:[%s688] ss:$8 sm:$0xf] %vm687, %v686
  %s690 = scalar_lea.vmem %s1, 834
  %691 = vst.msk [vmem:[%s690] ss:$8 sm:$0xf0] %vm687, %v686
  %s692 = scalar_lea.vmem %s0, 100
  %v693 = vld [vmem:[%s692] ss:$8 sm:$0xf]
  %s694 = scalar_lea.vmem %s0, 69
  %v695 = vld [vmem:[%s694] ss:$8 sm:$0xf0]
  %vm696 = vcmask 1047556
  %v697 = vsel %vm696, %v695, %v693
  %698 = vrot.lane.b32.xlu0 %v697, 96
  %v699 = vpop.permute.xlu0 %698
  %vm700 = vcmask 130048
  %s701 = scalar_lea.vmem %s1, 898
  %702 = vst.msk [vmem:[%s701] ss:$8 sm:$0xf] %vm700, %v699
  %s703 = scalar_lea.vmem %s1, 898
  %704 = vst.msk [vmem:[%s703] ss:$8 sm:$0xf0] %vm700, %v699
  %s705 = scalar_lea.vmem %s0, 102
  %v706 = vld [vmem:[%s705] ss:$8 sm:$0xf]
  %s707 = scalar_lea.vmem %s0, 71
  %v708 = vld [vmem:[%s707] ss:$8 sm:$0xf0]
  %vm709 = vcmask 1047556
  %v710 = vsel %vm709, %v708, %v706
  %711 = vrot.lane.b32.xlu0 %v710, 96
  %v712 = vpop.permute.xlu0 %711
  %vm713 = vcmask 130048
  %s714 = scalar_lea.vmem %s1, 962
  %715 = vst.msk [vmem:[%s714] ss:$8 sm:$0xf] %vm713, %v712
  %s716 = scalar_lea.vmem %s1, 962
  %717 = vst.msk [vmem:[%s716] ss:$8 sm:$0xf0] %vm713, %v712
  %v718 = vld [vmem:[%s0] ss:$8 sm:$0xf]
  %s719 = scalar_lea.vmem %s0, 4294967265
  %v720 = vld [vmem:[%s719] ss:$8 sm:$0xf0]
  %vm721 = vcmask 1047556
  %v722 = vsel %vm721, %v720, %v718
  %723 = vrot.lane.b32.xlu0 %v722, 80
  %v724 = vpop.permute.xlu0 %723
  %vm725 = vcmask 130048
  %s726 = scalar_lea.vmem %s1, 3
  %727 = vst.msk [vmem:[%s726] ss:$8 sm:$0xf] %vm725, %v724
  %s728 = scalar_lea.vmem %s1, 3
  %729 = vst.msk [vmem:[%s728] ss:$8 sm:$0xf0] %vm725, %v724
  %s730 = scalar_lea.vmem %s0, 2
  %v731 = vld [vmem:[%s730] ss:$8 sm:$0xf]
  %s732 = scalar_lea.vmem %s0, 4294967267
  %v733 = vld [vmem:[%s732] ss:$8 sm:$0xf0]
  %vm734 = vcmask 1047556
  %v735 = vsel %vm734, %v733, %v731
  %736 = vrot.lane.b32.xlu0 %v735, 80
  %v737 = vpop.permute.xlu0 %736
  %vm738 = vcmask 130048
  %s739 = scalar_lea.vmem %s1, 67
  %740 = vst.msk [vmem:[%s739] ss:$8 sm:$0xf] %vm738, %v737
  %s741 = scalar_lea.vmem %s1, 67
  %742 = vst.msk [vmem:[%s741] ss:$8 sm:$0xf0] %vm738, %v737
  %s743 = scalar_lea.vmem %s0, 4
  %v744 = vld [vmem:[%s743] ss:$8 sm:$0xf]
  %s745 = scalar_lea.vmem %s0, 4294967269
  %v746 = vld [vmem:[%s745] ss:$8 sm:$0xf0]
  %vm747 = vcmask 1047556
  %v748 = vsel %vm747, %v746, %v744
  %749 = vrot.lane.b32.xlu0 %v748, 80
  %v750 = vpop.permute.xlu0 %749
  %vm751 = vcmask 130048
  %s752 = scalar_lea.vmem %s1, 131
  %753 = vst.msk [vmem:[%s752] ss:$8 sm:$0xf] %vm751, %v750
  %s754 = scalar_lea.vmem %s1, 131
  %755 = vst.msk [vmem:[%s754] ss:$8 sm:$0xf0] %vm751, %v750
  %s756 = scalar_lea.vmem %s0, 6
  %v757 = vld [vmem:[%s756] ss:$8 sm:$0xf]
  %s758 = scalar_lea.vmem %s0, 4294967271
  %v759 = vld [vmem:[%s758] ss:$8 sm:$0xf0]
  %vm760 = vcmask 1047556
  %v761 = vsel %vm760, %v759, %v757
  %762 = vrot.lane.b32.xlu0 %v761, 80
  %v763 = vpop.permute.xlu0 %762
  %vm764 = vcmask 130048
  %s765 = scalar_lea.vmem %s1, 195
  %766 = vst.msk [vmem:[%s765] ss:$8 sm:$0xf] %vm764, %v763
  %s767 = scalar_lea.vmem %s1, 195
  %768 = vst.msk [vmem:[%s767] ss:$8 sm:$0xf0] %vm764, %v763
  %s769 = scalar_lea.vmem %s0, 32
  %v770 = vld [vmem:[%s769] ss:$8 sm:$0xf]
  %s771 = scalar_lea.vmem %s0, 1
  %v772 = vld [vmem:[%s771] ss:$8 sm:$0xf0]
  %vm773 = vcmask 1047556
  %v774 = vsel %vm773, %v772, %v770
  %775 = vrot.lane.b32.xlu0 %v774, 80
  %v776 = vpop.permute.xlu0 %775
  %vm777 = vcmask 130048
  %s778 = scalar_lea.vmem %s1, 259
  %779 = vst.msk [vmem:[%s778] ss:$8 sm:$0xf] %vm777, %v776
  %s780 = scalar_lea.vmem %s1, 259
  %781 = vst.msk [vmem:[%s780] ss:$8 sm:$0xf0] %vm777, %v776
  %s782 = scalar_lea.vmem %s0, 34
  %v783 = vld [vmem:[%s782] ss:$8 sm:$0xf]
  %s784 = scalar_lea.vmem %s0, 3
  %v785 = vld [vmem:[%s784] ss:$8 sm:$0xf0]
  %vm786 = vcmask 1047556
  %v787 = vsel %vm786, %v785, %v783
  %788 = vrot.lane.b32.xlu0 %v787, 80
  %v789 = vpop.permute.xlu0 %788
  %vm790 = vcmask 130048
  %s791 = scalar_lea.vmem %s1, 323
  %792 = vst.msk [vmem:[%s791] ss:$8 sm:$0xf] %vm790, %v789
  %s793 = scalar_lea.vmem %s1, 323
  %794 = vst.msk [vmem:[%s793] ss:$8 sm:$0xf0] %vm790, %v789
  %s795 = scalar_lea.vmem %s0, 36
  %v796 = vld [vmem:[%s795] ss:$8 sm:$0xf]
  %s797 = scalar_lea.vmem %s0, 5
  %v798 = vld [vmem:[%s797] ss:$8 sm:$0xf0]
  %vm799 = vcmask 1047556
  %v800 = vsel %vm799, %v798, %v796
  %801 = vrot.lane.b32.xlu0 %v800, 80
  %v802 = vpop.permute.xlu0 %801
  %vm803 = vcmask 130048
  %s804 = scalar_lea.vmem %s1, 387
  %805 = vst.msk [vmem:[%s804] ss:$8 sm:$0xf] %vm803, %v802
  %s806 = scalar_lea.vmem %s1, 387
  %807 = vst.msk [vmem:[%s806] ss:$8 sm:$0xf0] %vm803, %v802
  %s808 = scalar_lea.vmem %s0, 38
  %v809 = vld [vmem:[%s808] ss:$8 sm:$0xf]
  %s810 = scalar_lea.vmem %s0, 7
  %v811 = vld [vmem:[%s810] ss:$8 sm:$0xf0]
  %vm812 = vcmask 1047556
  %v813 = vsel %vm812, %v811, %v809
  %814 = vrot.lane.b32.xlu0 %v813, 80
  %v815 = vpop.permute.xlu0 %814
  %vm816 = vcmask 130048
  %s817 = scalar_lea.vmem %s1, 451
  %818 = vst.msk [vmem:[%s817] ss:$8 sm:$0xf] %vm816, %v815
  %s819 = scalar_lea.vmem %s1, 451
  %820 = vst.msk [vmem:[%s819] ss:$8 sm:$0xf0] %vm816, %v815
  %s821 = scalar_lea.vmem %s0, 64
  %v822 = vld [vmem:[%s821] ss:$8 sm:$0xf]
  %s823 = scalar_lea.vmem %s0, 33
  %v824 = vld [vmem:[%s823] ss:$8 sm:$0xf0]
  %vm825 = vcmask 1047556
  %v826 = vsel %vm825, %v824, %v822
  %827 = vrot.lane.b32.xlu0 %v826, 80
  %v828 = vpop.permute.xlu0 %827
  %vm829 = vcmask 130048
  %s830 = scalar_lea.vmem %s1, 515
  %831 = vst.msk [vmem:[%s830] ss:$8 sm:$0xf] %vm829, %v828
  %s832 = scalar_lea.vmem %s1, 515
  %833 = vst.msk [vmem:[%s832] ss:$8 sm:$0xf0] %vm829, %v828
  %s834 = scalar_lea.vmem %s0, 66
  %v835 = vld [vmem:[%s834] ss:$8 sm:$0xf]
  %s836 = scalar_lea.vmem %s0, 35
  %v837 = vld [vmem:[%s836] ss:$8 sm:$0xf0]
  %vm838 = vcmask 1047556
  %v839 = vsel %vm838, %v837, %v835
  %840 = vrot.lane.b32.xlu0 %v839, 80
  %v841 = vpop.permute.xlu0 %840
  %vm842 = vcmask 130048
  %s843 = scalar_lea.vmem %s1, 579
  %844 = vst.msk [vmem:[%s843] ss:$8 sm:$0xf] %vm842, %v841
  %s845 = scalar_lea.vmem %s1, 579
  %846 = vst.msk [vmem:[%s845] ss:$8 sm:$0xf0] %vm842, %v841
  %s847 = scalar_lea.vmem %s0, 68
  %v848 = vld [vmem:[%s847] ss:$8 sm:$0xf]
  %s849 = scalar_lea.vmem %s0, 37
  %v850 = vld [vmem:[%s849] ss:$8 sm:$0xf0]
  %vm851 = vcmask 1047556
  %v852 = vsel %vm851, %v850, %v848
  %853 = vrot.lane.b32.xlu0 %v852, 80
  %v854 = vpop.permute.xlu0 %853
  %vm855 = vcmask 130048
  %s856 = scalar_lea.vmem %s1, 643
  %857 = vst.msk [vmem:[%s856] ss:$8 sm:$0xf] %vm855, %v854
  %s858 = scalar_lea.vmem %s1, 643
  %859 = vst.msk [vmem:[%s858] ss:$8 sm:$0xf0] %vm855, %v854
  %s860 = scalar_lea.vmem %s0, 70
  %v861 = vld [vmem:[%s860] ss:$8 sm:$0xf]
  %s862 = scalar_lea.vmem %s0, 39
  %v863 = vld [vmem:[%s862] ss:$8 sm:$0xf0]
  %vm864 = vcmask 1047556
  %v865 = vsel %vm864, %v863, %v861
  %866 = vrot.lane.b32.xlu0 %v865, 80
  %v867 = vpop.permute.xlu0 %866
  %vm868 = vcmask 130048
  %s869 = scalar_lea.vmem %s1, 707
  %870 = vst.msk [vmem:[%s869] ss:$8 sm:$0xf] %vm868, %v867
  %s871 = scalar_lea.vmem %s1, 707
  %872 = vst.msk [vmem:[%s871] ss:$8 sm:$0xf0] %vm868, %v867
  %s873 = scalar_lea.vmem %s0, 96
  %v874 = vld [vmem:[%s873] ss:$8 sm:$0xf]
  %s875 = scalar_lea.vmem %s0, 65
  %v876 = vld [vmem:[%s875] ss:$8 sm:$0xf0]
  %vm877 = vcmask 1047556
  %v878 = vsel %vm877, %v876, %v874
  %879 = vrot.lane.b32.xlu0 %v878, 80
  %v880 = vpop.permute.xlu0 %879
  %vm881 = vcmask 130048
  %s882 = scalar_lea.vmem %s1, 771
  %883 = vst.msk [vmem:[%s882] ss:$8 sm:$0xf] %vm881, %v880
  %s884 = scalar_lea.vmem %s1, 771
  %885 = vst.msk [vmem:[%s884] ss:$8 sm:$0xf0] %vm881, %v880
  %s886 = scalar_lea.vmem %s0, 98
  %v887 = vld [vmem:[%s886] ss:$8 sm:$0xf]
  %s888 = scalar_lea.vmem %s0, 67
  %v889 = vld [vmem:[%s888] ss:$8 sm:$0xf0]
  %vm890 = vcmask 1047556
  %v891 = vsel %vm890, %v889, %v887
  %892 = vrot.lane.b32.xlu0 %v891, 80
  %v893 = vpop.permute.xlu0 %892
  %vm894 = vcmask 130048
  %s895 = scalar_lea.vmem %s1, 835
  %896 = vst.msk [vmem:[%s895] ss:$8 sm:$0xf] %vm894, %v893
  %s897 = scalar_lea.vmem %s1, 835
  %898 = vst.msk [vmem:[%s897] ss:$8 sm:$0xf0] %vm894, %v893
  %s899 = scalar_lea.vmem %s0, 100
  %v900 = vld [vmem:[%s899] ss:$8 sm:$0xf]
  %s901 = scalar_lea.vmem %s0, 69
  %v902 = vld [vmem:[%s901] ss:$8 sm:$0xf0]
  %vm903 = vcmask 1047556
  %v904 = vsel %vm903, %v902, %v900
  %905 = vrot.lane.b32.xlu0 %v904, 80
  %v906 = vpop.permute.xlu0 %905
  %vm907 = vcmask 130048
  %s908 = scalar_lea.vmem %s1, 899
  %909 = vst.msk [vmem:[%s908] ss:$8 sm:$0xf] %vm907, %v906
  %s910 = scalar_lea.vmem %s1, 899
  %911 = vst.msk [vmem:[%s910] ss:$8 sm:$0xf0] %vm907, %v906
  %s912 = scalar_lea.vmem %s0, 102
  %v913 = vld [vmem:[%s912] ss:$8 sm:$0xf]
  %s914 = scalar_lea.vmem %s0, 71
  %v915 = vld [vmem:[%s914] ss:$8 sm:$0xf0]
  %vm916 = vcmask 1047556
  %v917 = vsel %vm916, %v915, %v913
  %918 = vrot.lane.b32.xlu0 %v917, 80
  %v919 = vpop.permute.xlu0 %918
  %vm920 = vcmask 130048
  %s921 = scalar_lea.vmem %s1, 963
  %922 = vst.msk [vmem:[%s921] ss:$8 sm:$0xf] %vm920, %v919
  %s923 = scalar_lea.vmem %s1, 963
  %924 = vst.msk [vmem:[%s923] ss:$8 sm:$0xf0] %vm920, %v919
  %v925 = vld [vmem:[%s0] ss:$8 sm:$0xf]
  %s926 = scalar_lea.vmem %s0, 4294967265
  %v927 = vld [vmem:[%s926] ss:$8 sm:$0xf0]
  %vm928 = vcmask 1047556
  %v929 = vsel %vm928, %v927, %v925
  %930 = vrot.lane.b32.xlu0 %v929, 64
  %v931 = vpop.permute.xlu0 %930
  %vm932 = vcmask 130048
  %s933 = scalar_lea.vmem %s1, 4
  %934 = vst.msk [vmem:[%s933] ss:$8 sm:$0xf] %vm932, %v931
  %s935 = scalar_lea.vmem %s1, 4
  %936 = vst.msk [vmem:[%s935] ss:$8 sm:$0xf0] %vm932, %v931
  %s937 = scalar_lea.vmem %s0, 2
  %v938 = vld [vmem:[%s937] ss:$8 sm:$0xf]
  %s939 = scalar_lea.vmem %s0, 4294967267
  %v940 = vld [vmem:[%s939] ss:$8 sm:$0xf0]
  %vm941 = vcmask 1047556
  %v942 = vsel %vm941, %v940, %v938
  %943 = vrot.lane.b32.xlu0 %v942, 64
  %v944 = vpop.permute.xlu0 %943
  %vm945 = vcmask 130048
  %s946 = scalar_lea.vmem %s1, 68
  %947 = vst.msk [vmem:[%s946] ss:$8 sm:$0xf] %vm945, %v944
  %s948 = scalar_lea.vmem %s1, 68
  %949 = vst.msk [vmem:[%s948] ss:$8 sm:$0xf0] %vm945, %v944
  %s950 = scalar_lea.vmem %s0, 4
  %v951 = vld [vmem:[%s950] ss:$8 sm:$0xf]
  %s952 = scalar_lea.vmem %s0, 4294967269
  %v953 = vld [vmem:[%s952] ss:$8 sm:$0xf0]
  %vm954 = vcmask 1047556
  %v955 = vsel %vm954, %v953, %v951
  %956 = vrot.lane.b32.xlu0 %v955, 64
  %v957 = vpop.permute.xlu0 %956
  %vm958 = vcmask 130048
  %s959 = scalar_lea.vmem %s1, 132
  %960 = vst.msk [vmem:[%s959] ss:$8 sm:$0xf] %vm958, %v957
  %s961 = scalar_lea.vmem %s1, 132
  %962 = vst.msk [vmem:[%s961] ss:$8 sm:$0xf0] %vm958, %v957
  %s963 = scalar_lea.vmem %s0, 6
  %v964 = vld [vmem:[%s963] ss:$8 sm:$0xf]
  %s965 = scalar_lea.vmem %s0, 4294967271
  %v966 = vld [vmem:[%s965] ss:$8 sm:$0xf0]
  %vm967 = vcmask 1047556
  %v968 = vsel %vm967, %v966, %v964
  %969 = vrot.lane.b32.xlu0 %v968, 64
  %v970 = vpop.permute.xlu0 %969
  %vm971 = vcmask 130048
  %s972 = scalar_lea.vmem %s1, 196
  %973 = vst.msk [vmem:[%s972] ss:$8 sm:$0xf] %vm971, %v970
  %s974 = scalar_lea.vmem %s1, 196
  %975 = vst.msk [vmem:[%s974] ss:$8 sm:$0xf0] %vm971, %v970
  %s976 = scalar_lea.vmem %s0, 32
  %v977 = vld [vmem:[%s976] ss:$8 sm:$0xf]
  %s978 = scalar_lea.vmem %s0, 1
  %v979 = vld [vmem:[%s978] ss:$8 sm:$0xf0]
  %vm980 = vcmask 1047556
  %v981 = vsel %vm980, %v979, %v977
  %982 = vrot.lane.b32.xlu0 %v981, 64
  %v983 = vpop.permute.xlu0 %982
  %vm984 = vcmask 130048
  %s985 = scalar_lea.vmem %s1, 260
  %986 = vst.msk [vmem:[%s985] ss:$8 sm:$0xf] %vm984, %v983
  %s987 = scalar_lea.vmem %s1, 260
  %988 = vst.msk [vmem:[%s987] ss:$8 sm:$0xf0] %vm984, %v983
  %s989 = scalar_lea.vmem %s0, 34
  %v990 = vld [vmem:[%s989] ss:$8 sm:$0xf]
  %s991 = scalar_lea.vmem %s0, 3
  %v992 = vld [vmem:[%s991] ss:$8 sm:$0xf0]
  %vm993 = vcmask 1047556
  %v994 = vsel %vm993, %v992, %v990
  %995 = vrot.lane.b32.xlu0 %v994, 64
  %v996 = vpop.permute.xlu0 %995
  %vm997 = vcmask 130048
  %s998 = scalar_lea.vmem %s1, 324
  %999 = vst.msk [vmem:[%s998] ss:$8 sm:$0xf] %vm997, %v996
  %s1000 = scalar_lea.vmem %s1, 324
  %1001 = vst.msk [vmem:[%s1000] ss:$8 sm:$0xf0] %vm997, %v996
  %s1002 = scalar_lea.vmem %s0, 36
  %v1003 = vld [vmem:[%s1002] ss:$8 sm:$0xf]
  %s1004 = scalar_lea.vmem %s0, 5
  %v1005 = vld [vmem:[%s1004] ss:$8 sm:$0xf0]
  %vm1006 = vcmask 1047556
  %v1007 = vsel %vm1006, %v1005, %v1003
  %1008 = vrot.lane.b32.xlu0 %v1007, 64
  %v1009 = vpop.permute.xlu0 %1008
  %vm1010 = vcmask 130048
  %s1011 = scalar_lea.vmem %s1, 388
  %1012 = vst.msk [vmem:[%s1011] ss:$8 sm:$0xf] %vm1010, %v1009
  %s1013 = scalar_lea.vmem %s1, 388
  %1014 = vst.msk [vmem:[%s1013] ss:$8 sm:$0xf0] %vm1010, %v1009
  %s1015 = scalar_lea.vmem %s0, 38
  %v1016 = vld [vmem:[%s1015] ss:$8 sm:$0xf]
  %s1017 = scalar_lea.vmem %s0, 7
  %v1018 = vld [vmem:[%s1017] ss:$8 sm:$0xf0]
  %vm1019 = vcmask 1047556
  %v1020 = vsel %vm1019, %v1018, %v1016
  %1021 = vrot.lane.b32.xlu0 %v1020, 64
  %v1022 = vpop.permute.xlu0 %1021
  %vm1023 = vcmask 130048
  %s1024 = scalar_lea.vmem %s1, 452
  %1025 = vst.msk [vmem:[%s1024] ss:$8 sm:$0xf] %vm1023, %v1022
  %s1026 = scalar_lea.vmem %s1, 452
  %1027 = vst.msk [vmem:[%s1026] ss:$8 sm:$0xf0] %vm1023, %v1022
  %s1028 = scalar_lea.vmem %s0, 64
  %v1029 = vld [vmem:[%s1028] ss:$8 sm:$0xf]
  %s1030 = scalar_lea.vmem %s0, 33
  %v1031 = vld [vmem:[%s1030] ss:$8 sm:$0xf0]
  %vm1032 = vcmask 1047556
  %v1033 = vsel %vm1032, %v1031, %v1029
  %1034 = vrot.lane.b32.xlu0 %v1033, 64
  %v1035 = vpop.permute.xlu0 %1034
  %vm1036 = vcmask 130048
  %s1037 = scalar_lea.vmem %s1, 516
  %1038 = vst.msk [vmem:[%s1037] ss:$8 sm:$0xf] %vm1036, %v1035
  %s1039 = scalar_lea.vmem %s1, 516
  %1040 = vst.msk [vmem:[%s1039] ss:$8 sm:$0xf0] %vm1036, %v1035
  %s1041 = scalar_lea.vmem %s0, 66
  %v1042 = vld [vmem:[%s1041] ss:$8 sm:$0xf]
  %s1043 = scalar_lea.vmem %s0, 35
  %v1044 = vld [vmem:[%s1043] ss:$8 sm:$0xf0]
  %vm1045 = vcmask 1047556
  %v1046 = vsel %vm1045, %v1044, %v1042
  %1047 = vrot.lane.b32.xlu0 %v1046, 64
  %v1048 = vpop.permute.xlu0 %1047
  %vm1049 = vcmask 130048
  %s1050 = scalar_lea.vmem %s1, 580
  %1051 = vst.msk [vmem:[%s1050] ss:$8 sm:$0xf] %vm1049, %v1048
  %s1052 = scalar_lea.vmem %s1, 580
  %1053 = vst.msk [vmem:[%s1052] ss:$8 sm:$0xf0] %vm1049, %v1048
  %s1054 = scalar_lea.vmem %s0, 68
  %v1055 = vld [vmem:[%s1054] ss:$8 sm:$0xf]
  %s1056 = scalar_lea.vmem %s0, 37
  %v1057 = vld [vmem:[%s1056] ss:$8 sm:$0xf0]
  %vm1058 = vcmask 1047556
  %v1059 = vsel %vm1058, %v1057, %v1055
  %1060 = vrot.lane.b32.xlu0 %v1059, 64
  %v1061 = vpop.permute.xlu0 %1060
  %vm1062 = vcmask 130048
  %s1063 = scalar_lea.vmem %s1, 644
  %1064 = vst.msk [vmem:[%s1063] ss:$8 sm:$0xf] %vm1062, %v1061
  %s1065 = scalar_lea.vmem %s1, 644
  %1066 = vst.msk [vmem:[%s1065] ss:$8 sm:$0xf0] %vm1062, %v1061
  %s1067 = scalar_lea.vmem %s0, 70
  %v1068 = vld [vmem:[%s1067] ss:$8 sm:$0xf]
  %s1069 = scalar_lea.vmem %s0, 39
  %v1070 = vld [vmem:[%s1069] ss:$8 sm:$0xf0]
  %vm1071 = vcmask 1047556
  %v1072 = vsel %vm1071, %v1070, %v1068
  %1073 = vrot.lane.b32.xlu0 %v1072, 64
  %v1074 = vpop.permute.xlu0 %1073
  %vm1075 = vcmask 130048
  %s1076 = scalar_lea.vmem %s1, 708
  %1077 = vst.msk [vmem:[%s1076] ss:$8 sm:$0xf] %vm1075, %v1074
  %s1078 = scalar_lea.vmem %s1, 708
  %1079 = vst.msk [vmem:[%s1078] ss:$8 sm:$0xf0] %vm1075, %v1074
  %s1080 = scalar_lea.vmem %s0, 96
  %v1081 = vld [vmem:[%s1080] ss:$8 sm:$0xf]
  %s1082 = scalar_lea.vmem %s0, 65
  %v1083 = vld [vmem:[%s1082] ss:$8 sm:$0xf0]
  %vm1084 = vcmask 1047556
  %v1085 = vsel %vm1084, %v1083, %v1081
  %1086 = vrot.lane.b32.xlu0 %v1085, 64
  %v1087 = vpop.permute.xlu0 %1086
  %vm1088 = vcmask 130048
  %s1089 = scalar_lea.vmem %s1, 772
  %1090 = vst.msk [vmem:[%s1089] ss:$8 sm:$0xf] %vm1088, %v1087
  %s1091 = scalar_lea.vmem %s1, 772
  %1092 = vst.msk [vmem:[%s1091] ss:$8 sm:$0xf0] %vm1088, %v1087
  %s1093 = scalar_lea.vmem %s0, 98
  %v1094 = vld [vmem:[%s1093] ss:$8 sm:$0xf]
  %s1095 = scalar_lea.vmem %s0, 67
  %v1096 = vld [vmem:[%s1095] ss:$8 sm:$0xf0]
  %vm1097 = vcmask 1047556
  %v1098 = vsel %vm1097, %v1096, %v1094
  %1099 = vrot.lane.b32.xlu0 %v1098, 64
  %v1100 = vpop.permute.xlu0 %1099
  %vm1101 = vcmask 130048
  %s1102 = scalar_lea.vmem %s1, 836
  %1103 = vst.msk [vmem:[%s1102] ss:$8 sm:$0xf] %vm1101, %v1100
  %s1104 = scalar_lea.vmem %s1, 836
  %1105 = vst.msk [vmem:[%s1104] ss:$8 sm:$0xf0] %vm1101, %v1100
  %s1106 = scalar_lea.vmem %s0, 100
  %v1107 = vld [vmem:[%s1106] ss:$8 sm:$0xf]
  %s1108 = scalar_lea.vmem %s0, 69
  %v1109 = vld [vmem:[%s1108] ss:$8 sm:$0xf0]
  %vm1110 = vcmask 1047556
  %v1111 = vsel %vm1110, %v1109, %v1107
  %1112 = vrot.lane.b32.xlu0 %v1111, 64
  %v1113 = vpop.permute.xlu0 %1112
  %vm1114 = vcmask 130048
  %s1115 = scalar_lea.vmem %s1, 900
  %1116 = vst.msk [vmem:[%s1115] ss:$8 sm:$0xf] %vm1114, %v1113
  %s1117 = scalar_lea.vmem %s1, 900
  %1118 = vst.msk [vmem:[%s1117] ss:$8 sm:$0xf0] %vm1114, %v1113
  %s1119 = scalar_lea.vmem %s0, 102
  %v1120 = vld [vmem:[%s1119] ss:$8 sm:$0xf]
  %s1121 = scalar_lea.vmem %s0, 71
  %v1122 = vld [vmem:[%s1121] ss:$8 sm:$0xf0]
  %vm1123 = vcmask 1047556
  %v1124 = vsel %vm1123, %v1122, %v1120
  %1125 = vrot.lane.b32.xlu0 %v1124, 64
  %v1126 = vpop.permute.xlu0 %1125
  %vm1127 = vcmask 130048
  %s1128 = scalar_lea.vmem %s1, 964
  %1129 = vst.msk [vmem:[%s1128] ss:$8 sm:$0xf] %vm1127, %v1126
  %s1130 = scalar_lea.vmem %s1, 964
  %1131 = vst.msk [vmem:[%s1130] ss:$8 sm:$0xf0] %vm1127, %v1126
  %v1132 = vld [vmem:[%s0] ss:$8 sm:$0xf]
  %s1133 = scalar_lea.vmem %s0, 4294967265
  %v1134 = vld [vmem:[%s1133] ss:$8 sm:$0xf0]
  %vm1135 = vcmask 1047556
  %v1136 = vsel %vm1135, %v1134, %v1132
  %1137 = vrot.lane.b32.xlu0 %v1136, 48
  %v1138 = vpop.permute.xlu0 %1137
  %vm1139 = vcmask 130048
  %s1140 = scalar_lea.vmem %s1, 5
  %1141 = vst.msk [vmem:[%s1140] ss:$8 sm:$0xf] %vm1139, %v1138
  %s1142 = scalar_lea.vmem %s1, 5
  %1143 = vst.msk [vmem:[%s1142] ss:$8 sm:$0xf0] %vm1139, %v1138
  %s1144 = scalar_lea.vmem %s0, 2
  %v1145 = vld [vmem:[%s1144] ss:$8 sm:$0xf]
  %s1146 = scalar_lea.vmem %s0, 4294967267
  %v1147 = vld [vmem:[%s1146] ss:$8 sm:$0xf0]
  %vm1148 = vcmask 1047556
  %v1149 = vsel %vm1148, %v1147, %v1145
  %1150 = vrot.lane.b32.xlu0 %v1149, 48
  %v1151 = vpop.permute.xlu0 %1150
  %vm1152 = vcmask 130048
  %s1153 = scalar_lea.vmem %s1, 69
  %1154 = vst.msk [vmem:[%s1153] ss:$8 sm:$0xf] %vm1152, %v1151
  %s1155 = scalar_lea.vmem %s1, 69
  %1156 = vst.msk [vmem:[%s1155] ss:$8 sm:$0xf0] %vm1152, %v1151
  %s1157 = scalar_lea.vmem %s0, 4
  %v1158 = vld [vmem:[%s1157] ss:$8 sm:$0xf]
  %s1159 = scalar_lea.vmem %s0, 4294967269
  %v1160 = vld [vmem:[%s1159] ss:$8 sm:$0xf0]
  %vm1161 = vcmask 1047556
  %v1162 = vsel %vm1161, %v1160, %v1158
  %1163 = vrot.lane.b32.xlu0 %v1162, 48
  %v1164 = vpop.permute.xlu0 %1163
  %vm1165 = vcmask 130048
  %s1166 = scalar_lea.vmem %s1, 133
  %1167 = vst.msk [vmem:[%s1166] ss:$8 sm:$0xf] %vm1165, %v1164
  %s1168 = scalar_lea.vmem %s1, 133
  %1169 = vst.msk [vmem:[%s1168] ss:$8 sm:$0xf0] %vm1165, %v1164
  %s1170 = scalar_lea.vmem %s0, 6
  %v1171 = vld [vmem:[%s1170] ss:$8 sm:$0xf]
  %s1172 = scalar_lea.vmem %s0, 4294967271
  %v1173 = vld [vmem:[%s1172] ss:$8 sm:$0xf0]
  %vm1174 = vcmask 1047556
  %v1175 = vsel %vm1174, %v1173, %v1171
  %1176 = vrot.lane.b32.xlu0 %v1175, 48
  %v1177 = vpop.permute.xlu0 %1176
  %vm1178 = vcmask 130048
  %s1179 = scalar_lea.vmem %s1, 197
  %1180 = vst.msk [vmem:[%s1179] ss:$8 sm:$0xf] %vm1178, %v1177
  %s1181 = scalar_lea.vmem %s1, 197
  %1182 = vst.msk [vmem:[%s1181] ss:$8 sm:$0xf0] %vm1178, %v1177
  %s1183 = scalar_lea.vmem %s0, 32
  %v1184 = vld [vmem:[%s1183] ss:$8 sm:$0xf]
  %s1185 = scalar_lea.vmem %s0, 1
  %v1186 = vld [vmem:[%s1185] ss:$8 sm:$0xf0]
  %vm1187 = vcmask 1047556
  %v1188 = vsel %vm1187, %v1186, %v1184
  %1189 = vrot.lane.b32.xlu0 %v1188, 48
  %v1190 = vpop.permute.xlu0 %1189
  %vm1191 = vcmask 130048
  %s1192 = scalar_lea.vmem %s1, 261
  %1193 = vst.msk [vmem:[%s1192] ss:$8 sm:$0xf] %vm1191, %v1190
  %s1194 = scalar_lea.vmem %s1, 261
  %1195 = vst.msk [vmem:[%s1194] ss:$8 sm:$0xf0] %vm1191, %v1190
  %s1196 = scalar_lea.vmem %s0, 34
  %v1197 = vld [vmem:[%s1196] ss:$8 sm:$0xf]
  %s1198 = scalar_lea.vmem %s0, 3
  %v1199 = vld [vmem:[%s1198] ss:$8 sm:$0xf0]
  %vm1200 = vcmask 1047556
  %v1201 = vsel %vm1200, %v1199, %v1197
  %1202 = vrot.lane.b32.xlu0 %v1201, 48
  %v1203 = vpop.permute.xlu0 %1202
  %vm1204 = vcmask 130048
  %s1205 = scalar_lea.vmem %s1, 325
  %1206 = vst.msk [vmem:[%s1205] ss:$8 sm:$0xf] %vm1204, %v1203
  %s1207 = scalar_lea.vmem %s1, 325
  %1208 = vst.msk [vmem:[%s1207] ss:$8 sm:$0xf0] %vm1204, %v1203
  %s1209 = scalar_lea.vmem %s0, 36
  %v1210 = vld [vmem:[%s1209] ss:$8 sm:$0xf]
  %s1211 = scalar_lea.vmem %s0, 5
  %v1212 = vld [vmem:[%s1211] ss:$8 sm:$0xf0]
  %vm1213 = vcmask 1047556
  %v1214 = vsel %vm1213, %v1212, %v1210
  %1215 = vrot.lane.b32.xlu0 %v1214, 48
  %v1216 = vpop.permute.xlu0 %1215
  %vm1217 = vcmask 130048
  %s1218 = scalar_lea.vmem %s1, 389
  %1219 = vst.msk [vmem:[%s1218] ss:$8 sm:$0xf] %vm1217, %v1216
  %s1220 = scalar_lea.vmem %s1, 389
  %1221 = vst.msk [vmem:[%s1220] ss:$8 sm:$0xf0] %vm1217, %v1216
  %s1222 = scalar_lea.vmem %s0, 38
  %v1223 = vld [vmem:[%s1222] ss:$8 sm:$0xf]
  %s1224 = scalar_lea.vmem %s0, 7
  %v1225 = vld [vmem:[%s1224] ss:$8 sm:$0xf0]
  %vm1226 = vcmask 1047556
  %v1227 = vsel %vm1226, %v1225, %v1223
  %1228 = vrot.lane.b32.xlu0 %v1227, 48
  %v1229 = vpop.permute.xlu0 %1228
  %vm1230 = vcmask 130048
  %s1231 = scalar_lea.vmem %s1, 453
  %1232 = vst.msk [vmem:[%s1231] ss:$8 sm:$0xf] %vm1230, %v1229
  %s1233 = scalar_lea.vmem %s1, 453
  %1234 = vst.msk [vmem:[%s1233] ss:$8 sm:$0xf0] %vm1230, %v1229
  %s1235 = scalar_lea.vmem %s0, 64
  %v1236 = vld [vmem:[%s1235] ss:$8 sm:$0xf]
  %s1237 = scalar_lea.vmem %s0, 33
  %v1238 = vld [vmem:[%s1237] ss:$8 sm:$0xf0]
  %vm1239 = vcmask 1047556
  %v1240 = vsel %vm1239, %v1238, %v1236
  %1241 = vrot.lane.b32.xlu0 %v1240, 48
  %v1242 = vpop.permute.xlu0 %1241
  %vm1243 = vcmask 130048
  %s1244 = scalar_lea.vmem %s1, 517
  %1245 = vst.msk [vmem:[%s1244] ss:$8 sm:$0xf] %vm1243, %v1242
  %s1246 = scalar_lea.vmem %s1, 517
  %1247 = vst.msk [vmem:[%s1246] ss:$8 sm:$0xf0] %vm1243, %v1242
  %s1248 = scalar_lea.vmem %s0, 66
  %v1249 = vld [vmem:[%s1248] ss:$8 sm:$0xf]
  %s1250 = scalar_lea.vmem %s0, 35
  %v1251 = vld [vmem:[%s1250] ss:$8 sm:$0xf0]
  %vm1252 = vcmask 1047556
  %v1253 = vsel %vm1252, %v1251, %v1249
  %1254 = vrot.lane.b32.xlu0 %v1253, 48
  %v1255 = vpop.permute.xlu0 %1254
  %vm1256 = vcmask 130048
  %s1257 = scalar_lea.vmem %s1, 581
  %1258 = vst.msk [vmem:[%s1257] ss:$8 sm:$0xf] %vm1256, %v1255
  %s1259 = scalar_lea.vmem %s1, 581
  %1260 = vst.msk [vmem:[%s1259] ss:$8 sm:$0xf0] %vm1256, %v1255
  %s1261 = scalar_lea.vmem %s0, 68
  %v1262 = vld [vmem:[%s1261] ss:$8 sm:$0xf]
  %s1263 = scalar_lea.vmem %s0, 37
  %v1264 = vld [vmem:[%s1263] ss:$8 sm:$0xf0]
  %vm1265 = vcmask 1047556
  %v1266 = vsel %vm1265, %v1264, %v1262
  %1267 = vrot.lane.b32.xlu0 %v1266, 48
  %v1268 = vpop.permute.xlu0 %1267
  %vm1269 = vcmask 130048
  %s1270 = scalar_lea.vmem %s1, 645
  %1271 = vst.msk [vmem:[%s1270] ss:$8 sm:$0xf] %vm1269, %v1268
  %s1272 = scalar_lea.vmem %s1, 645
  %1273 = vst.msk [vmem:[%s1272] ss:$8 sm:$0xf0] %vm1269, %v1268
  %s1274 = scalar_lea.vmem %s0, 70
  %v1275 = vld [vmem:[%s1274] ss:$8 sm:$0xf]
  %s1276 = scalar_lea.vmem %s0, 39
  %v1277 = vld [vmem:[%s1276] ss:$8 sm:$0xf0]
  %vm1278 = vcmask 1047556
  %v1279 = vsel %vm1278, %v1277, %v1275
  %1280 = vrot.lane.b32.xlu0 %v1279, 48
  %v1281 = vpop.permute.xlu0 %1280
  %vm1282 = vcmask 130048
  %s1283 = scalar_lea.vmem %s1, 709
  %1284 = vst.msk [vmem:[%s1283] ss:$8 sm:$0xf] %vm1282, %v1281
  %s1285 = scalar_lea.vmem %s1, 709
  %1286 = vst.msk [vmem:[%s1285] ss:$8 sm:$0xf0] %vm1282, %v1281
  %s1287 = scalar_lea.vmem %s0, 96
  %v1288 = vld [vmem:[%s1287] ss:$8 sm:$0xf]
  %s1289 = scalar_lea.vmem %s0, 65
  %v1290 = vld [vmem:[%s1289] ss:$8 sm:$0xf0]
  %vm1291 = vcmask 1047556
  %v1292 = vsel %vm1291, %v1290, %v1288
  %1293 = vrot.lane.b32.xlu0 %v1292, 48
  %v1294 = vpop.permute.xlu0 %1293
  %vm1295 = vcmask 130048
  %s1296 = scalar_lea.vmem %s1, 773
  %1297 = vst.msk [vmem:[%s1296] ss:$8 sm:$0xf] %vm1295, %v1294
  %s1298 = scalar_lea.vmem %s1, 773
  %1299 = vst.msk [vmem:[%s1298] ss:$8 sm:$0xf0] %vm1295, %v1294
  %s1300 = scalar_lea.vmem %s0, 98
  %v1301 = vld [vmem:[%s1300] ss:$8 sm:$0xf]
  %s1302 = scalar_lea.vmem %s0, 67
  %v1303 = vld [vmem:[%s1302] ss:$8 sm:$0xf0]
  %vm1304 = vcmask 1047556
  %v1305 = vsel %vm1304, %v1303, %v1301
  %1306 = vrot.lane.b32.xlu0 %v1305, 48
  %v1307 = vpop.permute.xlu0 %1306
  %vm1308 = vcmask 130048
  %s1309 = scalar_lea.vmem %s1, 837
  %1310 = vst.msk [vmem:[%s1309] ss:$8 sm:$0xf] %vm1308, %v1307
  %s1311 = scalar_lea.vmem %s1, 837
  %1312 = vst.msk [vmem:[%s1311] ss:$8 sm:$0xf0] %vm1308, %v1307
  %s1313 = scalar_lea.vmem %s0, 100
  %v1314 = vld [vmem:[%s1313] ss:$8 sm:$0xf]
  %s1315 = scalar_lea.vmem %s0, 69
  %v1316 = vld [vmem:[%s1315] ss:$8 sm:$0xf0]
  %vm1317 = vcmask 1047556
  %v1318 = vsel %vm1317, %v1316, %v1314
  %1319 = vrot.lane.b32.xlu0 %v1318, 48
  %v1320 = vpop.permute.xlu0 %1319
  %vm1321 = vcmask 130048
  %s1322 = scalar_lea.vmem %s1, 901
  %1323 = vst.msk [vmem:[%s1322] ss:$8 sm:$0xf] %vm1321, %v1320
  %s1324 = scalar_lea.vmem %s1, 901
  %1325 = vst.msk [vmem:[%s1324] ss:$8 sm:$0xf0] %vm1321, %v1320
  %s1326 = scalar_lea.vmem %s0, 102
  %v1327 = vld [vmem:[%s1326] ss:$8 sm:$0xf]
  %s1328 = scalar_lea.vmem %s0, 71
  %v1329 = vld [vmem:[%s1328] ss:$8 sm:$0xf0]
  %vm1330 = vcmask 1047556
  %v1331 = vsel %vm1330, %v1329, %v1327
  %1332 = vrot.lane.b32.xlu0 %v1331, 48
  %v1333 = vpop.permute.xlu0 %1332
  %vm1334 = vcmask 130048
  %s1335 = scalar_lea.vmem %s1, 965
  %1336 = vst.msk [vmem:[%s1335] ss:$8 sm:$0xf] %vm1334, %v1333
  %s1337 = scalar_lea.vmem %s1, 965
  %1338 = vst.msk [vmem:[%s1337] ss:$8 sm:$0xf0] %vm1334, %v1333
  %v1339 = vld [vmem:[%s0] ss:$8 sm:$0xf]
  %s1340 = scalar_lea.vmem %s0, 4294967265
  %v1341 = vld [vmem:[%s1340] ss:$8 sm:$0xf0]
  %vm1342 = vcmask 1047556
  %v1343 = vsel %vm1342, %v1341, %v1339
  %1344 = vrot.lane.b32.xlu0 %v1343, 32
  %v1345 = vpop.permute.xlu0 %1344
  %vm1346 = vcmask 130048
  %s1347 = scalar_lea.vmem %s1, 6
  %1348 = vst.msk [vmem:[%s1347] ss:$8 sm:$0xf] %vm1346, %v1345
  %s1349 = scalar_lea.vmem %s1, 6
  %1350 = vst.msk [vmem:[%s1349] ss:$8 sm:$0xf0] %vm1346, %v1345
  %s1351 = scalar_lea.vmem %s0, 2
  %v1352 = vld [vmem:[%s1351] ss:$8 sm:$0xf]
  %s1353 = scalar_lea.vmem %s0, 4294967267
  %v1354 = vld [vmem:[%s1353] ss:$8 sm:$0xf0]
  %vm1355 = vcmask 1047556
  %v1356 = vsel %vm1355, %v1354, %v1352
  %1357 = vrot.lane.b32.xlu0 %v1356, 32
  %v1358 = vpop.permute.xlu0 %1357
  %vm1359 = vcmask 130048
  %s1360 = scalar_lea.vmem %s1, 70
  %1361 = vst.msk [vmem:[%s1360] ss:$8 sm:$0xf] %vm1359, %v1358
  %s1362 = scalar_lea.vmem %s1, 70
  %1363 = vst.msk [vmem:[%s1362] ss:$8 sm:$0xf0] %vm1359, %v1358
  %s1364 = scalar_lea.vmem %s0, 4
  %v1365 = vld [vmem:[%s1364] ss:$8 sm:$0xf]
  %s1366 = scalar_lea.vmem %s0, 4294967269
  %v1367 = vld [vmem:[%s1366] ss:$8 sm:$0xf0]
  %vm1368 = vcmask 1047556
  %v1369 = vsel %vm1368, %v1367, %v1365
  %1370 = vrot.lane.b32.xlu0 %v1369, 32
  %v1371 = vpop.permute.xlu0 %1370
  %vm1372 = vcmask 130048
  %s1373 = scalar_lea.vmem %s1, 134
  %1374 = vst.msk [vmem:[%s1373] ss:$8 sm:$0xf] %vm1372, %v1371
  %s1375 = scalar_lea.vmem %s1, 134
  %1376 = vst.msk [vmem:[%s1375] ss:$8 sm:$0xf0] %vm1372, %v1371
  %s1377 = scalar_lea.vmem %s0, 6
  %v1378 = vld [vmem:[%s1377] ss:$8 sm:$0xf]
  %s1379 = scalar_lea.vmem %s0, 4294967271
  %v1380 = vld [vmem:[%s1379] ss:$8 sm:$0xf0]
  %vm1381 = vcmask 1047556
  %v1382 = vsel %vm1381, %v1380, %v1378
  %1383 = vrot.lane.b32.xlu0 %v1382, 32
  %v1384 = vpop.permute.xlu0 %1383
  %vm1385 = vcmask 130048
  %s1386 = scalar_lea.vmem %s1, 198
  %1387 = vst.msk [vmem:[%s1386] ss:$8 sm:$0xf] %vm1385, %v1384
  %s1388 = scalar_lea.vmem %s1, 198
  %1389 = vst.msk [vmem:[%s1388] ss:$8 sm:$0xf0] %vm1385, %v1384
  %s1390 = scalar_lea.vmem %s0, 32
  %v1391 = vld [vmem:[%s1390] ss:$8 sm:$0xf]
  %s1392 = scalar_lea.vmem %s0, 1
  %v1393 = vld [vmem:[%s1392] ss:$8 sm:$0xf0]
  %vm1394 = vcmask 1047556
  %v1395 = vsel %vm1394, %v1393, %v1391
  %1396 = vrot.lane.b32.xlu0 %v1395, 32
  %v1397 = vpop.permute.xlu0 %1396
  %vm1398 = vcmask 130048
  %s1399 = scalar_lea.vmem %s1, 262
  %1400 = vst.msk [vmem:[%s1399] ss:$8 sm:$0xf] %vm1398, %v1397
  %s1401 = scalar_lea.vmem %s1, 262
  %1402 = vst.msk [vmem:[%s1401] ss:$8 sm:$0xf0] %vm1398, %v1397
  %s1403 = scalar_lea.vmem %s0, 34
  %v1404 = vld [vmem:[%s1403] ss:$8 sm:$0xf]
  %s1405 = scalar_lea.vmem %s0, 3
  %v1406 = vld [vmem:[%s1405] ss:$8 sm:$0xf0]
  %vm1407 = vcmask 1047556
  %v1408 = vsel %vm1407, %v1406, %v1404
  %1409 = vrot.lane.b32.xlu0 %v1408, 32
  %v1410 = vpop.permute.xlu0 %1409
  %vm1411 = vcmask 130048
  %s1412 = scalar_lea.vmem %s1, 326
  %1413 = vst.msk [vmem:[%s1412] ss:$8 sm:$0xf] %vm1411, %v1410
  %s1414 = scalar_lea.vmem %s1, 326
  %1415 = vst.msk [vmem:[%s1414] ss:$8 sm:$0xf0] %vm1411, %v1410
  %s1416 = scalar_lea.vmem %s0, 36
  %v1417 = vld [vmem:[%s1416] ss:$8 sm:$0xf]
  %s1418 = scalar_lea.vmem %s0, 5
  %v1419 = vld [vmem:[%s1418] ss:$8 sm:$0xf0]
  %vm1420 = vcmask 1047556
  %v1421 = vsel %vm1420, %v1419, %v1417
  %1422 = vrot.lane.b32.xlu0 %v1421, 32
  %v1423 = vpop.permute.xlu0 %1422
  %vm1424 = vcmask 130048
  %s1425 = scalar_lea.vmem %s1, 390
  %1426 = vst.msk [vmem:[%s1425] ss:$8 sm:$0xf] %vm1424, %v1423
  %s1427 = scalar_lea.vmem %s1, 390
  %1428 = vst.msk [vmem:[%s1427] ss:$8 sm:$0xf0] %vm1424, %v1423
  %s1429 = scalar_lea.vmem %s0, 38
  %v1430 = vld [vmem:[%s1429] ss:$8 sm:$0xf]
  %s1431 = scalar_lea.vmem %s0, 7
  %v1432 = vld [vmem:[%s1431] ss:$8 sm:$0xf0]
  %vm1433 = vcmask 1047556
  %v1434 = vsel %vm1433, %v1432, %v1430
  %1435 = vrot.lane.b32.xlu0 %v1434, 32
  %v1436 = vpop.permute.xlu0 %1435
  %vm1437 = vcmask 130048
  %s1438 = scalar_lea.vmem %s1, 454
  %1439 = vst.msk [vmem:[%s1438] ss:$8 sm:$0xf] %vm1437, %v1436
  %s1440 = scalar_lea.vmem %s1, 454
  %1441 = vst.msk [vmem:[%s1440] ss:$8 sm:$0xf0] %vm1437, %v1436
  %s1442 = scalar_lea.vmem %s0, 64
  %v1443 = vld [vmem:[%s1442] ss:$8 sm:$0xf]
  %s1444 = scalar_lea.vmem %s0, 33
  %v1445 = vld [vmem:[%s1444] ss:$8 sm:$0xf0]
  %vm1446 = vcmask 1047556
  %v1447 = vsel %vm1446, %v1445, %v1443
  %1448 = vrot.lane.b32.xlu0 %v1447, 32
  %v1449 = vpop.permute.xlu0 %1448
  %vm1450 = vcmask 130048
  %s1451 = scalar_lea.vmem %s1, 518
  %1452 = vst.msk [vmem:[%s1451] ss:$8 sm:$0xf] %vm1450, %v1449
  %s1453 = scalar_lea.vmem %s1, 518
  %1454 = vst.msk [vmem:[%s1453] ss:$8 sm:$0xf0] %vm1450, %v1449
  %s1455 = scalar_lea.vmem %s0, 66
  %v1456 = vld [vmem:[%s1455] ss:$8 sm:$0xf]
  %s1457 = scalar_lea.vmem %s0, 35
  %v1458 = vld [vmem:[%s1457] ss:$8 sm:$0xf0]
  %vm1459 = vcmask 1047556
  %v1460 = vsel %vm1459, %v1458, %v1456
  %1461 = vrot.lane.b32.xlu0 %v1460, 32
  %v1462 = vpop.permute.xlu0 %1461
  %vm1463 = vcmask 130048
  %s1464 = scalar_lea.vmem %s1, 582
  %1465 = vst.msk [vmem:[%s1464] ss:$8 sm:$0xf] %vm1463, %v1462
  %s1466 = scalar_lea.vmem %s1, 582
  %1467 = vst.msk [vmem:[%s1466] ss:$8 sm:$0xf0] %vm1463, %v1462
  %s1468 = scalar_lea.vmem %s0, 68
  %v1469 = vld [vmem:[%s1468] ss:$8 sm:$0xf]
  %s1470 = scalar_lea.vmem %s0, 37
  %v1471 = vld [vmem:[%s1470] ss:$8 sm:$0xf0]
  %vm1472 = vcmask 1047556
  %v1473 = vsel %vm1472, %v1471, %v1469
  %1474 = vrot.lane.b32.xlu0 %v1473, 32
  %v1475 = vpop.permute.xlu0 %1474
  %vm1476 = vcmask 130048
  %s1477 = scalar_lea.vmem %s1, 646
  %1478 = vst.msk [vmem:[%s1477] ss:$8 sm:$0xf] %vm1476, %v1475
  %s1479 = scalar_lea.vmem %s1, 646
  %1480 = vst.msk [vmem:[%s1479] ss:$8 sm:$0xf0] %vm1476, %v1475
  %s1481 = scalar_lea.vmem %s0, 70
  %v1482 = vld [vmem:[%s1481] ss:$8 sm:$0xf]
  %s1483 = scalar_lea.vmem %s0, 39
  %v1484 = vld [vmem:[%s1483] ss:$8 sm:$0xf0]
  %vm1485 = vcmask 1047556
  %v1486 = vsel %vm1485, %v1484, %v1482
  %1487 = vrot.lane.b32.xlu0 %v1486, 32
  %v1488 = vpop.permute.xlu0 %1487
  %vm1489 = vcmask 130048
  %s1490 = scalar_lea.vmem %s1, 710
  %1491 = vst.msk [vmem:[%s1490] ss:$8 sm:$0xf] %vm1489, %v1488
  %s1492 = scalar_lea.vmem %s1, 710
  %1493 = vst.msk [vmem:[%s1492] ss:$8 sm:$0xf0] %vm1489, %v1488
  %s1494 = scalar_lea.vmem %s0, 96
  %v1495 = vld [vmem:[%s1494] ss:$8 sm:$0xf]
  %s1496 = scalar_lea.vmem %s0, 65
  %v1497 = vld [vmem:[%s1496] ss:$8 sm:$0xf0]
  %vm1498 = vcmask 1047556
  %v1499 = vsel %vm1498, %v1497, %v1495
  %1500 = vrot.lane.b32.xlu0 %v1499, 32
  %v1501 = vpop.permute.xlu0 %1500
  %vm1502 = vcmask 130048
  %s1503 = scalar_lea.vmem %s1, 774
  %1504 = vst.msk [vmem:[%s1503] ss:$8 sm:$0xf] %vm1502, %v1501
  %s1505 = scalar_lea.vmem %s1, 774
  %1506 = vst.msk [vmem:[%s1505] ss:$8 sm:$0xf0] %vm1502, %v1501
  %s1507 = scalar_lea.vmem %s0, 98
  %v1508 = vld [vmem:[%s1507] ss:$8 sm:$0xf]
  %s1509 = scalar_lea.vmem %s0, 67
  %v1510 = vld [vmem:[%s1509] ss:$8 sm:$0xf0]
  %vm1511 = vcmask 1047556
  %v1512 = vsel %vm1511, %v1510, %v1508
  %1513 = vrot.lane.b32.xlu0 %v1512, 32
  %v1514 = vpop.permute.xlu0 %1513
  %vm1515 = vcmask 130048
  %s1516 = scalar_lea.vmem %s1, 838
  %1517 = vst.msk [vmem:[%s1516] ss:$8 sm:$0xf] %vm1515, %v1514
  %s1518 = scalar_lea.vmem %s1, 838
  %1519 = vst.msk [vmem:[%s1518] ss:$8 sm:$0xf0] %vm1515, %v1514
  %s1520 = scalar_lea.vmem %s0, 100
  %v1521 = vld [vmem:[%s1520] ss:$8 sm:$0xf]
  %s1522 = scalar_lea.vmem %s0, 69
  %v1523 = vld [vmem:[%s1522] ss:$8 sm:$0xf0]
  %vm1524 = vcmask 1047556
  %v1525 = vsel %vm1524, %v1523, %v1521
  %1526 = vrot.lane.b32.xlu0 %v1525, 32
  %v1527 = vpop.permute.xlu0 %1526
  %vm1528 = vcmask 130048
  %s1529 = scalar_lea.vmem %s1, 902
  %1530 = vst.msk [vmem:[%s1529] ss:$8 sm:$0xf] %vm1528, %v1527
  %s1531 = scalar_lea.vmem %s1, 902
  %1532 = vst.msk [vmem:[%s1531] ss:$8 sm:$0xf0] %vm1528, %v1527
  %s1533 = scalar_lea.vmem %s0, 102
  %v1534 = vld [vmem:[%s1533] ss:$8 sm:$0xf]
  %s1535 = scalar_lea.vmem %s0, 71
  %v1536 = vld [vmem:[%s1535] ss:$8 sm:$0xf0]
  %vm1537 = vcmask 1047556
  %v1538 = vsel %vm1537, %v1536, %v1534
  %1539 = vrot.lane.b32.xlu0 %v1538, 32
  %v1540 = vpop.permute.xlu0 %1539
  %vm1541 = vcmask 130048
  %s1542 = scalar_lea.vmem %s1, 966
  %1543 = vst.msk [vmem:[%s1542] ss:$8 sm:$0xf] %vm1541, %v1540
  %s1544 = scalar_lea.vmem %s1, 966
  %1545 = vst.msk [vmem:[%s1544] ss:$8 sm:$0xf0] %vm1541, %v1540
  %v1546 = vld [vmem:[%s0] ss:$8 sm:$0xf]
  %s1547 = scalar_lea.vmem %s0, 4294967265
  %v1548 = vld [vmem:[%s1547] ss:$8 sm:$0xf0]
  %vm1549 = vcmask 1047556
  %v1550 = vsel %vm1549, %v1548, %v1546
  %1551 = vrot.lane.b32.xlu0 %v1550, 16
  %v1552 = vpop.permute.xlu0 %1551
  %vm1553 = vcmask 130048
  %s1554 = scalar_lea.vmem %s1, 7
  %1555 = vst.msk [vmem:[%s1554] ss:$8 sm:$0xf] %vm1553, %v1552
  %s1556 = scalar_lea.vmem %s1, 7
  %1557 = vst.msk [vmem:[%s1556] ss:$8 sm:$0xf0] %vm1553, %v1552
  %s1558 = scalar_lea.vmem %s0, 2
  %v1559 = vld [vmem:[%s1558] ss:$8 sm:$0xf]
  %s1560 = scalar_lea.vmem %s0, 4294967267
  %v1561 = vld [vmem:[%s1560] ss:$8 sm:$0xf0]
  %vm1562 = vcmask 1047556
  %v1563 = vsel %vm1562, %v1561, %v1559
  %1564 = vrot.lane.b32.xlu0 %v1563, 16
  %v1565 = vpop.permute.xlu0 %1564
  %vm1566 = vcmask 130048
  %s1567 = scalar_lea.vmem %s1, 71
  %1568 = vst.msk [vmem:[%s1567] ss:$8 sm:$0xf] %vm1566, %v1565
  %s1569 = scalar_lea.vmem %s1, 71
  %1570 = vst.msk [vmem:[%s1569] ss:$8 sm:$0xf0] %vm1566, %v1565
  %s1571 = scalar_lea.vmem %s0, 4
  %v1572 = vld [vmem:[%s1571] ss:$8 sm:$0xf]
  %s1573 = scalar_lea.vmem %s0, 4294967269
  %v1574 = vld [vmem:[%s1573] ss:$8 sm:$0xf0]
  %vm1575 = vcmask 1047556
  %v1576 = vsel %vm1575, %v1574, %v1572
  %1577 = vrot.lane.b32.xlu0 %v1576, 16
  %v1578 = vpop.permute.xlu0 %1577
  %vm1579 = vcmask 130048
  %s1580 = scalar_lea.vmem %s1, 135
  %1581 = vst.msk [vmem:[%s1580] ss:$8 sm:$0xf] %vm1579, %v1578
  %s1582 = scalar_lea.vmem %s1, 135
  %1583 = vst.msk [vmem:[%s1582] ss:$8 sm:$0xf0] %vm1579, %v1578
  %s1584 = scalar_lea.vmem %s0, 6
  %v1585 = vld [vmem:[%s1584] ss:$8 sm:$0xf]
  %s1586 = scalar_lea.vmem %s0, 4294967271
  %v1587 = vld [vmem:[%s1586] ss:$8 sm:$0xf0]
  %vm1588 = vcmask 1047556
  %v1589 = vsel %vm1588, %v1587, %v1585
  %1590 = vrot.lane.b32.xlu0 %v1589, 16
  %v1591 = vpop.permute.xlu0 %1590
  %vm1592 = vcmask 130048
  %s1593 = scalar_lea.vmem %s1, 199
  %1594 = vst.msk [vmem:[%s1593] ss:$8 sm:$0xf] %vm1592, %v1591
  %s1595 = scalar_lea.vmem %s1, 199
  %1596 = vst.msk [vmem:[%s1595] ss:$8 sm:$0xf0] %vm1592, %v1591
  %s1597 = scalar_lea.vmem %s0, 32
  %v1598 = vld [vmem:[%s1597] ss:$8 sm:$0xf]
  %s1599 = scalar_lea.vmem %s0, 1
  %v1600 = vld [vmem:[%s1599] ss:$8 sm:$0xf0]
  %vm1601 = vcmask 1047556
  %v1602 = vsel %vm1601, %v1600, %v1598
  %1603 = vrot.lane.b32.xlu0 %v1602, 16
  %v1604 = vpop.permute.xlu0 %1603
  %vm1605 = vcmask 130048
  %s1606 = scalar_lea.vmem %s1, 263
  %1607 = vst.msk [vmem:[%s1606] ss:$8 sm:$0xf] %vm1605, %v1604
  %s1608 = scalar_lea.vmem %s1, 263
  %1609 = vst.msk [vmem:[%s1608] ss:$8 sm:$0xf0] %vm1605, %v1604
  %s1610 = scalar_lea.vmem %s0, 34
  %v1611 = vld [vmem:[%s1610] ss:$8 sm:$0xf]
  %s1612 = scalar_lea.vmem %s0, 3
  %v1613 = vld [vmem:[%s1612] ss:$8 sm:$0xf0]
  %vm1614 = vcmask 1047556
  %v1615 = vsel %vm1614, %v1613, %v1611
  %1616 = vrot.lane.b32.xlu0 %v1615, 16
  %v1617 = vpop.permute.xlu0 %1616
  %vm1618 = vcmask 130048
  %s1619 = scalar_lea.vmem %s1, 327
  %1620 = vst.msk [vmem:[%s1619] ss:$8 sm:$0xf] %vm1618, %v1617
  %s1621 = scalar_lea.vmem %s1, 327
  %1622 = vst.msk [vmem:[%s1621] ss:$8 sm:$0xf0] %vm1618, %v1617
  %s1623 = scalar_lea.vmem %s0, 36
  %v1624 = vld [vmem:[%s1623] ss:$8 sm:$0xf]
  %s1625 = scalar_lea.vmem %s0, 5
  %v1626 = vld [vmem:[%s1625] ss:$8 sm:$0xf0]
  %vm1627 = vcmask 1047556
  %v1628 = vsel %vm1627, %v1626, %v1624
  %1629 = vrot.lane.b32.xlu0 %v1628, 16
  %v1630 = vpop.permute.xlu0 %1629
  %vm1631 = vcmask 130048
  %s1632 = scalar_lea.vmem %s1, 391
  %1633 = vst.msk [vmem:[%s1632] ss:$8 sm:$0xf] %vm1631, %v1630
  %s1634 = scalar_lea.vmem %s1, 391
  %1635 = vst.msk [vmem:[%s1634] ss:$8 sm:$0xf0] %vm1631, %v1630
  %s1636 = scalar_lea.vmem %s0, 38
  %v1637 = vld [vmem:[%s1636] ss:$8 sm:$0xf]
  %s1638 = scalar_lea.vmem %s0, 7
  %v1639 = vld [vmem:[%s1638] ss:$8 sm:$0xf0]
  %vm1640 = vcmask 1047556
  %v1641 = vsel %vm1640, %v1639, %v1637
  %1642 = vrot.lane.b32.xlu0 %v1641, 16
  %v1643 = vpop.permute.xlu0 %1642
  %vm1644 = vcmask 130048
  %s1645 = scalar_lea.vmem %s1, 455
  %1646 = vst.msk [vmem:[%s1645] ss:$8 sm:$0xf] %vm1644, %v1643
  %s1647 = scalar_lea.vmem %s1, 455
  %1648 = vst.msk [vmem:[%s1647] ss:$8 sm:$0xf0] %vm1644, %v1643
  %s1649 = scalar_lea.vmem %s0, 64
  %v1650 = vld [vmem:[%s1649] ss:$8 sm:$0xf]
  %s1651 = scalar_lea.vmem %s0, 33
  %v1652 = vld [vmem:[%s1651] ss:$8 sm:$0xf0]
  %vm1653 = vcmask 1047556
  %v1654 = vsel %vm1653, %v1652, %v1650
  %1655 = vrot.lane.b32.xlu0 %v1654, 16
  %v1656 = vpop.permute.xlu0 %1655
  %vm1657 = vcmask 130048
  %s1658 = scalar_lea.vmem %s1, 519
  %1659 = vst.msk [vmem:[%s1658] ss:$8 sm:$0xf] %vm1657, %v1656
  %s1660 = scalar_lea.vmem %s1, 519
  %1661 = vst.msk [vmem:[%s1660] ss:$8 sm:$0xf0] %vm1657, %v1656
  %s1662 = scalar_lea.vmem %s0, 66
  %v1663 = vld [vmem:[%s1662] ss:$8 sm:$0xf]
  %s1664 = scalar_lea.vmem %s0, 35
  %v1665 = vld [vmem:[%s1664] ss:$8 sm:$0xf0]
  %vm1666 = vcmask 1047556
  %v1667 = vsel %vm1666, %v1665, %v1663
  %1668 = vrot.lane.b32.xlu0 %v1667, 16
  %v1669 = vpop.permute.xlu0 %1668
  %vm1670 = vcmask 130048
  %s1671 = scalar_lea.vmem %s1, 583
  %1672 = vst.msk [vmem:[%s1671] ss:$8 sm:$0xf] %vm1670, %v1669
  %s1673 = scalar_lea.vmem %s1, 583
  %1674 = vst.msk [vmem:[%s1673] ss:$8 sm:$0xf0] %vm1670, %v1669
  %s1675 = scalar_lea.vmem %s0, 68
  %v1676 = vld [vmem:[%s1675] ss:$8 sm:$0xf]
  %s1677 = scalar_lea.vmem %s0, 37
  %v1678 = vld [vmem:[%s1677] ss:$8 sm:$0xf0]
  %vm1679 = vcmask 1047556
  %v1680 = vsel %vm1679, %v1678, %v1676
  %1681 = vrot.lane.b32.xlu0 %v1680, 16
  %v1682 = vpop.permute.xlu0 %1681
  %vm1683 = vcmask 130048
  %s1684 = scalar_lea.vmem %s1, 647
  %1685 = vst.msk [vmem:[%s1684] ss:$8 sm:$0xf] %vm1683, %v1682
  %s1686 = scalar_lea.vmem %s1, 647
  %1687 = vst.msk [vmem:[%s1686] ss:$8 sm:$0xf0] %vm1683, %v1682
  %s1688 = scalar_lea.vmem %s0, 70
  %v1689 = vld [vmem:[%s1688] ss:$8 sm:$0xf]
  %s1690 = scalar_lea.vmem %s0, 39
  %v1691 = vld [vmem:[%s1690] ss:$8 sm:$0xf0]
  %vm1692 = vcmask 1047556
  %v1693 = vsel %vm1692, %v1691, %v1689
  %1694 = vrot.lane.b32.xlu0 %v1693, 16
  %v1695 = vpop.permute.xlu0 %1694
  %vm1696 = vcmask 130048
  %s1697 = scalar_lea.vmem %s1, 711
  %1698 = vst.msk [vmem:[%s1697] ss:$8 sm:$0xf] %vm1696, %v1695
  %s1699 = scalar_lea.vmem %s1, 711
  %1700 = vst.msk [vmem:[%s1699] ss:$8 sm:$0xf0] %vm1696, %v1695
  %s1701 = scalar_lea.vmem %s0, 96
  %v1702 = vld [vmem:[%s1701] ss:$8 sm:$0xf]
  %s1703 = scalar_lea.vmem %s0, 65
  %v1704 = vld [vmem:[%s1703] ss:$8 sm:$0xf0]
  %vm1705 = vcmask 1047556
  %v1706 = vsel %vm1705, %v1704, %v1702
  %1707 = vrot.lane.b32.xlu0 %v1706, 16
  %v1708 = vpop.permute.xlu0 %1707
  %vm1709 = vcmask 130048
  %s1710 = scalar_lea.vmem %s1, 775
  %1711 = vst.msk [vmem:[%s1710] ss:$8 sm:$0xf] %vm1709, %v1708
  %s1712 = scalar_lea.vmem %s1, 775
  %1713 = vst.msk [vmem:[%s1712] ss:$8 sm:$0xf0] %vm1709, %v1708
  %s1714 = scalar_lea.vmem %s0, 98
  %v1715 = vld [vmem:[%s1714] ss:$8 sm:$0xf]
  %s1716 = scalar_lea.vmem %s0, 67
  %v1717 = vld [vmem:[%s1716] ss:$8 sm:$0xf0]
  %vm1718 = vcmask 1047556
  %v1719 = vsel %vm1718, %v1717, %v1715
  %1720 = vrot.lane.b32.xlu0 %v1719, 16
  %v1721 = vpop.permute.xlu0 %1720
  %vm1722 = vcmask 130048
  %s1723 = scalar_lea.vmem %s1, 839
  %1724 = vst.msk [vmem:[%s1723] ss:$8 sm:$0xf] %vm1722, %v1721
  %s1725 = scalar_lea.vmem %s1, 839
  %1726 = vst.msk [vmem:[%s1725] ss:$8 sm:$0xf0] %vm1722, %v1721
  %s1727 = scalar_lea.vmem %s0, 100
  %v1728 = vld [vmem:[%s1727] ss:$8 sm:$0xf]
  %s1729 = scalar_lea.vmem %s0, 69
  %v1730 = vld [vmem:[%s1729] ss:$8 sm:$0xf0]
  %vm1731 = vcmask 1047556
  %v1732 = vsel %vm1731, %v1730, %v1728
  %1733 = vrot.lane.b32.xlu0 %v1732, 16
  %v1734 = vpop.permute.xlu0 %1733
  %vm1735 = vcmask 130048
  %s1736 = scalar_lea.vmem %s1, 903
  %1737 = vst.msk [vmem:[%s1736] ss:$8 sm:$0xf] %vm1735, %v1734
  %s1738 = scalar_lea.vmem %s1, 903
  %1739 = vst.msk [vmem:[%s1738] ss:$8 sm:$0xf0] %vm1735, %v1734
  %s1740 = scalar_lea.vmem %s0, 102
  %v1741 = vld [vmem:[%s1740] ss:$8 sm:$0xf]
  %s1742 = scalar_lea.vmem %s0, 71
  %v1743 = vld [vmem:[%s1742] ss:$8 sm:$0xf0]
  %vm1744 = vcmask 1047556
  %v1745 = vsel %vm1744, %v1743, %v1741
  %1746 = vrot.lane.b32.xlu0 %v1745, 16
  %v1747 = vpop.permute.xlu0 %1746
  %vm1748 = vcmask 130048
  %s1749 = scalar_lea.vmem %s1, 967
  %1750 = vst.msk [vmem:[%s1749] ss:$8 sm:$0xf] %vm1748, %v1747
  %s1751 = scalar_lea.vmem %s1, 967
  %1752 = vst.msk [vmem:[%s1751] ss:$8 sm:$0xf0] %vm1748, %v1747

// kernel: generator_forward.10
$region0: #{generator_forward.10}
  #allocation0 [shape = 'u32[]', space=smem, size = 0x4, offset = 0x4, fixed_abs, tag = 'smem constant byte address 0x4 - core index']
  #allocation1 [shape = 'u32[144,128]{1,0:T(1,128)}', space=vmem, size = 0x12000, scoped, tag = 'internal scratch']
  %s0 = inlined_call_operand.vmem [shape: f32[8,2048], index: 0, kind: input, shape index: {}]
  %s1 = inlined_call_operand.vmem [shape: f32[8,1], index: 1, kind: input, shape index: {}]
  %s2 = inlined_call_operand.vmem [shape: f32[8,1], index: 2, kind: input, shape index: {}]
  %s3 = inlined_call_operand.vmem [shape: bf16[27,8], index: 3, kind: input, shape index: {}]
  %s4 = inlined_call_operand.vmem [shape: f32[27,2048], index: 4, kind: output, shape index: {}]
  %s5 = sld [smem:[#allocation0]]
  $region26: #{generator_forward.10} parent=0
    _
  %s7 = ssub.s32 1, %s5
  %s8 = scalar_select 0, %s7, %s5
  // Predicated region
  $region2: #{generator_forward.10} parent=0 // pred_check
    _
  $region3: #{generator_forward.10} parent=0 // pred_check_branch
    %10 = sbr.rel (0) target = $region5
  $region4: #{generator_forward.10} parent=0 // pred_region
    _
  $region5: #{generator_forward.10} parent=0 // pred_fallthru
    _
  // Predicated region
  $region6: #{generator_forward.10} parent=0 // pred_check
    _
  $region7: #{generator_forward.10} parent=0 // pred_check_branch
    %12 = sbr.rel (0) target = $region9
  $region8: #{generator_forward.10} parent=0 // pred_region
    _
  $region9: #{generator_forward.10} parent=0 // pred_fallthru
    _
  // Predicated region
  $region10: #{generator_forward.10} parent=0 // pred_check
    _
  $region11: #{generator_forward.10} parent=0 // pred_check_branch
    %14 = sbr.rel (0) target = $region13
  $region12: #{generator_forward.10} parent=0 // pred_region
    _
  $region13: #{generator_forward.10} parent=0 // pred_fallthru
    _
  // Predicated region
  $region14: #{generator_forward.10} parent=0 // pred_check
    _
  $region15: #{generator_forward.10} parent=0 // pred_check_branch
    %16 = sbr.rel (0) target = $region17
  $region16: #{generator_forward.10} parent=0 // pred_region
    _
  $region17: #{generator_forward.10} parent=0 // pred_fallthru
    _
  %v18 = vld [vmem:[%s0] sm:$0xff]
  %v19 = vld [vmem:[%s0 + $0x8] sm:$0xff]
  %v20 = vld [vmem:[%s0 + $0x10] sm:$0xff]
  %v21 = vld [vmem:[%s0 + $0x18] sm:$0xff]
  %v22 = vld [vmem:[%s0 + $0x20] sm:$0xff]
  %v23 = vld [vmem:[%s0 + $0x28] sm:$0xff]
  %v24 = vld [vmem:[%s0 + $0x30] sm:$0xff]
  %v25 = vld [vmem:[%s0 + $0x38] sm:$0xff]
  %v26 = vld [vmem:[%s0 + $0x40] sm:$0xff]
  %v27 = vld [vmem:[%s0 + $0x48] sm:$0xff]
  %v28 = vld [vmem:[%s0 + $0x50] sm:$0xff]
  %v29 = vld [vmem:[%s0 + $0x58] sm:$0xff]
  %v30 = vld [vmem:[%s0 + $0x60] sm:$0xff]
  %v31 = vld [vmem:[%s0 + $0x68] sm:$0xff]
  %v32 = vld [vmem:[%s0 + $0x70] sm:$0xff]
  %v33 = vld [vmem:[%s0 + $0x78] sm:$0xff]
  %v34 = vadd.f32 %v18, %v19
  %v35 = vadd.f32 %v34, %v20
  %v36 = vadd.f32 %v35, %v21
  %v37 = vadd.f32 %v36, %v22
  %v38 = vadd.f32 %v37, %v23
  %v39 = vadd.f32 %v38, %v24
  %v40 = vadd.f32 %v39, %v25
  %v41 = vadd.f32 %v40, %v26
  %v42 = vadd.f32 %v41, %v27
  %v43 = vadd.f32 %v42, %v28
  %v44 = vadd.f32 %v43, %v29
  %v45 = vadd.f32 %v44, %v30
  %v46 = vadd.f32 %v45, %v31
  %v47 = vadd.f32 %v46, %v32
  %v48 = vadd.f32 %v47, %v33
  %49 = vadd.xlane.f32.xlu0 %v48
  %v50 = vpop.xlane.xlu0 %49
  %v51 = vmul.f32 %v50, 0.00048828125
  %v52 = vsub.f32 %v18, %v51
  %v53 = vsub.f32 %v19, %v51
  %v54 = vsub.f32 %v20, %v51
  %v55 = vsub.f32 %v21, %v51
  %v56 = vsub.f32 %v22, %v51
  %v57 = vsub.f32 %v23, %v51
  %v58 = vsub.f32 %v24, %v51
  %v59 = vsub.f32 %v25, %v51
  %v60 = vsub.f32 %v26, %v51
  %v61 = vsub.f32 %v27, %v51
  %v62 = vsub.f32 %v28, %v51
  %v63 = vsub.f32 %v29, %v51
  %v64 = vsub.f32 %v30, %v51
  %v65 = vsub.f32 %v31, %v51
  %v66 = vsub.f32 %v32, %v51
  %v67 = vsub.f32 %v33, %v51
  %v68 = vmul.f32 %v52, %v52
  %v69 = vmul.f32 %v53, %v53
  %v70 = vmul.f32 %v54, %v54
  %v71 = vmul.f32 %v55, %v55
  %v72 = vmul.f32 %v56, %v56
  %v73 = vmul.f32 %v57, %v57
  %v74 = vmul.f32 %v58, %v58
  %v75 = vmul.f32 %v59, %v59
  %v76 = vmul.f32 %v60, %v60
  %v77 = vmul.f32 %v61, %v61
  %v78 = vmul.f32 %v62, %v62
  %v79 = vmul.f32 %v63, %v63
  %v80 = vmul.f32 %v64, %v64
  %v81 = vmul.f32 %v65, %v65
  %v82 = vmul.f32 %v66, %v66
  %v83 = vmul.f32 %v67, %v67
  %v84 = vadd.f32 %v68, %v69
  %v85 = vadd.f32 %v84, %v70
  %v86 = vadd.f32 %v85, %v71
  %v87 = vadd.f32 %v86, %v72
  %v88 = vadd.f32 %v87, %v73
  %v89 = vadd.f32 %v88, %v74
  %v90 = vadd.f32 %v89, %v75
  %v91 = vadd.f32 %v90, %v76
  %v92 = vadd.f32 %v91, %v77
  %v93 = vadd.f32 %v92, %v78
  %v94 = vadd.f32 %v93, %v79
  %v95 = vadd.f32 %v94, %v80
  %v96 = vadd.f32 %v95, %v81
  %v97 = vadd.f32 %v96, %v82
  %v98 = vadd.f32 %v97, %v83
  %99 = vadd.xlane.f32.xlu0 %v98
  %v100 = vpop.xlane.xlu0 %99
  %v101 = vmul.f32 %v100, 0.00048828125
  %v102 = vld [vmem:[%s1] sm:$0xff]
  %v103 = vadd.f32 %v101, 1e-05
  %v104 = vrsqrt.pop %v103
  %v105 = vmul.f32 %v102, %v104
  %107 = vset.pattern.permute.xlu0 0
  %108 = vperm.xlu0 %107, %v105
  %v109 = vpop.permute.xlu0 %108
  %v111 = vmul.f32 %v52, %v109
  %v112 = vmul.f32 %v53, %v109
  %v113 = vmul.f32 %v54, %v109
  %v114 = vmul.f32 %v55, %v109
  %v115 = vmul.f32 %v56, %v109
  %v116 = vmul.f32 %v57, %v109
  %v117 = vmul.f32 %v58, %v109
  %v118 = vmul.f32 %v59, %v109
  %v119 = vmul.f32 %v60, %v109
  %v120 = vmul.f32 %v61, %v109
  %v121 = vmul.f32 %v62, %v109
  %v122 = vmul.f32 %v63, %v109
  %v123 = vmul.f32 %v64, %v109
  %v124 = vmul.f32 %v65, %v109
  %v125 = vmul.f32 %v66, %v109
  %v126 = vmul.f32 %v67, %v109
  %v127 = vld [vmem:[%s2] sm:$0xff]
  %129 = vset.pattern.permute.xlu0 0
  %130 = vperm.xlu0 %129, %v127
  %v131 = vpop.permute.xlu0 %130
  %v133 = vadd.f32 %v111, %v131
  %v134 = vadd.f32 %v112, %v131
  %v135 = vadd.f32 %v113, %v131
  %v136 = vadd.f32 %v114, %v131
  %v137 = vadd.f32 %v115, %v131
  %v138 = vadd.f32 %v116, %v131
  %v139 = vadd.f32 %v117, %v131
  %v140 = vadd.f32 %v118, %v131
  %v141 = vadd.f32 %v119, %v131
  %v142 = vadd.f32 %v120, %v131
  %v143 = vadd.f32 %v121, %v131
  %v144 = vadd.f32 %v122, %v131
  %v145 = vadd.f32 %v123, %v131
  %v146 = vadd.f32 %v124, %v131
  %v147 = vadd.f32 %v125, %v131
  %v148 = vadd.f32 %v126, %v131
  %v149 = vmax.f32 %v133, 0.0
  %v150 = vmax.f32 %v134, 0.0
  %v151 = vmax.f32 %v135, 0.0
  %v152 = vmax.f32 %v136, 0.0
  %v153 = vmax.f32 %v137, 0.0
  %v154 = vmax.f32 %v138, 0.0
  %v155 = vmax.f32 %v139, 0.0
  %v156 = vmax.f32 %v140, 0.0
  %v157 = vmax.f32 %v141, 0.0
  %v158 = vmax.f32 %v142, 0.0
  %v159 = vmax.f32 %v143, 0.0
  %v160 = vmax.f32 %v144, 0.0
  %v161 = vmax.f32 %v145, 0.0
  %v162 = vmax.f32 %v146, 0.0
  %v163 = vmax.f32 %v147, 0.0
  %v164 = vmax.f32 %v148, 0.0
  %v165 = vld [vmem:[%s3] sm:$0xf]
  %v166 = vld [vmem:[%s3 + $0x4] sm:$0xf]
  %v167 = vld [vmem:[%s3 + $0x8] sm:$0xf]
  %v168 = vld [vmem:[%s3 + $0xc] sm:$0x3]
  %v169 = vpack.c.bf16 %v149, %v149
  %v170 = vpack.c.bf16 %v150, %v150
  %v171 = vpack.c.bf16 %v151, %v151
  %v172 = vpack.c.bf16 %v152, %v152
  %v173 = vpack.c.bf16 %v153, %v153
  %v174 = vpack.c.bf16 %v154, %v154
  %v175 = vpack.c.bf16 %v155, %v155
  %v176 = vpack.c.bf16 %v156, %v156
  %v177 = vpack.c.bf16 %v157, %v157
  %v178 = vpack.c.bf16 %v158, %v158
  %v179 = vpack.c.bf16 %v159, %v159
  %v180 = vpack.c.bf16 %v160, %v160
  %v181 = vpack.c.bf16 %v161, %v161
  %v182 = vpack.c.bf16 %v162, %v162
  %v183 = vpack.c.bf16 %v163, %v163
  %v184 = vpack.c.bf16 %v164, %v164
  %v189 = vunpack.c.l.b16 %v165
  %v190 = vunpack.c.l.b16 %v166
  %v191 = vunpack.c.l.b16 %v167
  %v192 = vunpack.c.l.b16 %v168
  %v193 = vpack.c.b16 %v190, %v189
  %v194 = vpack.c.b16 %v192, %v191
  %vm195 = vcmask 64512
  %v197 = vsel %vm195, %v193, 0
  %v200 = vsel %vm195, %v194, 0
  %vm202 = vcmask 1043456
  %v204 = vsel %vm202, %v169, 0
  %v207 = vsel %vm202, %v170, 0
  %v210 = vsel %vm202, %v171, 0
  %v213 = vsel %vm202, %v172, 0
  %v216 = vsel %vm202, %v173, 0
  %v219 = vsel %vm202, %v174, 0
  %v222 = vsel %vm202, %v175, 0
  %v225 = vsel %vm202, %v176, 0
  %v228 = vsel %vm202, %v177, 0
  %v231 = vsel %vm202, %v178, 0
  %v234 = vsel %vm202, %v179, 0
  %v237 = vsel %vm202, %v180, 0
  %v240 = vsel %vm202, %v181, 0
  %v243 = vsel %vm202, %v182, 0
  %v246 = vsel %vm202, %v183, 0
  %v249 = vsel %vm202, %v184, 0
  %251 = vmatprep.subr.bf16.mxu0 %v207
  %252 = vmatpush1.bf16.msra.mxu0 %v204
  %253 = vmatprep.subr.bf16.mxu0 0
  %254 = vmatpush1.bf16.msra.mxu0 0
  %255 = vmatprep.subr.bf16.mxu0 0
  %256 = vmatpush1.bf16.msra.mxu0 0
  %257 = vmatprep.subr.bf16.mxu0 0
  %258 = vmatpush1.bf16.msra.mxu0 0
  %259 = vmatprep.subr.bf16.mxu0 0
  %260 = vmatpush1.bf16.msra.mxu0 0
  %261 = vmatprep.subr.bf16.mxu0 0
  %262 = vmatpush1.bf16.msra.mxu0 0
  %263 = vmatprep.subr.bf16.mxu0 0
  %264 = vmatpush1.bf16.msra.mxu0 0
  %265 = vmatprep.subr.bf16.mxu0 0
  %266 = vmatpush1.bf16.msra.mxu0 0
  %267 = vmatprep.subr.bf16.mxu0 0
  %268 = vmatpush1.bf16.msra.mxu0 0
  %269 = vmatprep.subr.bf16.mxu0 0
  %270 = vmatpush1.bf16.msra.mxu0 0
  %271 = vmatprep.subr.bf16.mxu0 0
  %272 = vmatpush1.bf16.msra.mxu0 0
  %273 = vmatprep.subr.bf16.mxu0 0
  %274 = vmatpush1.bf16.msra.mxu0 0
  %275 = vmatprep.subr.bf16.mxu0 0
  %276 = vmatpush1.bf16.msra.mxu0 0
  %277 = vmatprep.subr.bf16.mxu0 0
  %278 = vmatpush1.bf16.msra.mxu0 0
  %279 = vmatprep.subr.bf16.mxu0 0
  %280 = vmatpush1.bf16.msra.mxu0 0
  %281 = vmatprep.subr.bf16.mxu0 0
  %282 = vmatpush1.bf16.msra.mxu0 0
  %283 = vmatprep.mubr.bf16.mxu0 0
  %284 = vmatmul.mubr.bf16.gmra.mrb[0].mxu0 %v197
  %v285 = vpop.f32.mrb[0].mxu0
  %v286 = vadd.f32 0.0, %v285
  %v287 = vpop.f32.mrb[0].mxu0
  %v288 = vadd.f32 0.0, %v287
  %v289 = vpop.f32.mrb[0].mxu0
  %v290 = vadd.f32 0.0, %v289
  %v291 = vpop.f32.mrb[0].mxu0
  %v292 = vadd.f32 0.0, %v291
  %293 = vmatprep.mubr.bf16.mxu0 0
  %294 = vmatmul.mubr.bf16.gmra.mrb[0].mxu0 %v200
  %v295 = vpop.f32.mrb[0].mxu0
  %v296 = vadd.f32 0.0, %v295
  %v297 = vpop.f32.mrb[0].mxu0
  %v298 = vadd.f32 0.0, %v297
  %v299 = vpop.f32.mrb[0].mxu0
  %v300 = vadd.f32 0.0, %v299
  %v301 = vpop.f32.mrb[0].mxu0
  %v302 = vadd.f32 0.0, %v301
  %303 = vdwg.mxu0
  %304 = vmatprep.subr.bf16.mxu0 %v213
  %305 = vmatpush1.bf16.msra.mxu0 %v210
  %306 = vmatprep.subr.bf16.mxu0 0
  %307 = vmatpush1.bf16.msra.mxu0 0
  %308 = vmatprep.subr.bf16.mxu0 0
  %309 = vmatpush1.bf16.msra.mxu0 0
  %310 = vmatprep.subr.bf16.mxu0 0
  %311 = vmatpush1.bf16.msra.mxu0 0
  %312 = vmatprep.subr.bf16.mxu0 0
  %313 = vmatpush1.bf16.msra.mxu0 0
  %314 = vmatprep.subr.bf16.mxu0 0
  %315 = vmatpush1.bf16.msra.mxu0 0
  %316 = vmatprep.subr.bf16.mxu0 0
  %317 = vmatpush1.bf16.msra.mxu0 0
  %318 = vmatprep.subr.bf16.mxu0 0
  %319 = vmatpush1.bf16.msra.mxu0 0
  %320 = vmatprep.subr.bf16.mxu0 0
  %321 = vmatpush1.bf16.msra.mxu0 0
  %322 = vmatprep.subr.bf16.mxu0 0
  %323 = vmatpush1.bf16.msra.mxu0 0
  %324 = vmatprep.subr.bf16.mxu0 0
  %325 = vmatpush1.bf16.msra.mxu0 0
  %326 = vmatprep.subr.bf16.mxu0 0
  %327 = vmatpush1.bf16.msra.mxu0 0
  %328 = vmatprep.subr.bf16.mxu0 0
  %329 = vmatpush1.bf16.msra.mxu0 0
  %330 = vmatprep.subr.bf16.mxu0 0
  %331 = vmatpush1.bf16.msra.mxu0 0
  %332 = vmatprep.subr.bf16.mxu0 0
  %333 = vmatpush1.bf16.msra.mxu0 0
  %334 = vmatprep.subr.bf16.mxu0 0
  %335 = vmatpush1.bf16.msra.mxu0 0
  %336 = vmatprep.mubr.bf16.mxu0 0
  %337 = vmatmul.mubr.bf16.gmra.mrb[0].mxu0 %v197
  %v338 = vpop.f32.mrb[0].mxu0
  %v339 = vadd.f32 0.0, %v338
  %v340 = vpop.f32.mrb[0].mxu0
  %v341 = vadd.f32 0.0, %v340
  %v342 = vpop.f32.mrb[0].mxu0
  %v343 = vadd.f32 0.0, %v342
  %v344 = vpop.f32.mrb[0].mxu0
  %v345 = vadd.f32 0.0, %v344
  %346 = vmatprep.mubr.bf16.mxu0 0
  %347 = vmatmul.mubr.bf16.gmra.mrb[0].mxu0 %v200
  %v348 = vpop.f32.mrb[0].mxu0
  %v349 = vadd.f32 0.0, %v348
  %v350 = vpop.f32.mrb[0].mxu0
  %v351 = vadd.f32 0.0, %v350
  %v352 = vpop.f32.mrb[0].mxu0
  %v353 = vadd.f32 0.0, %v352
  %v354 = vpop.f32.mrb[0].mxu0
  %v355 = vadd.f32 0.0, %v354
  %356 = vdwg.mxu0
  %357 = vmatprep.subr.bf16.mxu0 %v219
  %358 = vmatpush1.bf16.msra.mxu0 %v216
  %359 = vmatprep.subr.bf16.mxu0 0
  %360 = vmatpush1.bf16.msra.mxu0 0
  %361 = vmatprep.subr.bf16.mxu0 0
  %362 = vmatpush1.bf16.msra.mxu0 0
  %363 = vmatprep.subr.bf16.mxu0 0
  %364 = vmatpush1.bf16.msra.mxu0 0
  %365 = vmatprep.subr.bf16.mxu0 0
  %366 = vmatpush1.bf16.msra.mxu0 0
  %367 = vmatprep.subr.bf16.mxu0 0
  %368 = vmatpush1.bf16.msra.mxu0 0
  %369 = vmatprep.subr.bf16.mxu0 0
  %370 = vmatpush1.bf16.msra.mxu0 0
  %371 = vmatprep.subr.bf16.mxu0 0
  %372 = vmatpush1.bf16.msra.mxu0 0
  %373 = vmatprep.subr.bf16.mxu0 0
  %374 = vmatpush1.bf16.msra.mxu0 0
  %375 = vmatprep.subr.bf16.mxu0 0
  %376 = vmatpush1.bf16.msra.mxu0 0
  %377 = vmatprep.subr.bf16.mxu0 0
  %378 = vmatpush1.bf16.msra.mxu0 0
  %379 = vmatprep.subr.bf16.mxu0 0
  %380 = vmatpush1.bf16.msra.mxu0 0
  %381 = vmatprep.subr.bf16.mxu0 0
  %382 = vmatpush1.bf16.msra.mxu0 0
  %383 = vmatprep.subr.bf16.mxu0 0
  %384 = vmatpush1.bf16.msra.mxu0 0
  %385 = vmatprep.subr.bf16.mxu0 0
  %386 = vmatpush1.bf16.msra.mxu0 0
  %387 = vmatprep.subr.bf16.mxu0 0
  %388 = vmatpush1.bf16.msra.mxu0 0
  %389 = vmatprep.mubr.bf16.mxu0 0
  %390 = vmatmul.mubr.bf16.gmra.mrb[0].mxu0 %v197
  %v391 = vpop.f32.mrb[0].mxu0
  %v392 = vadd.f32 0.0, %v391
  %v393 = vpop.f32.mrb[0].mxu0
  %v394 = vadd.f32 0.0, %v393
  %v395 = vpop.f32.mrb[0].mxu0
  %v396 = vadd.f32 0.0, %v395
  %v397 = vpop.f32.mrb[0].mxu0
  %v398 = vadd.f32 0.0, %v397
  %399 = vmatprep.mubr.bf16.mxu0 0
  %400 = vmatmul.mubr.bf16.gmra.mrb[0].mxu0 %v200
  %v401 = vpop.f32.mrb[0].mxu0
  %v402 = vadd.f32 0.0, %v401
  %v403 = vpop.f32.mrb[0].mxu0
  %v404 = vadd.f32 0.0, %v403
  %v405 = vpop.f32.mrb[0].mxu0
  %v406 = vadd.f32 0.0, %v405
  %v407 = vpop.f32.mrb[0].mxu0
  %v408 = vadd.f32 0.0, %v407
  %409 = vdwg.mxu0
  %410 = vmatprep.subr.bf16.mxu0 %v225
  %411 = vmatpush1.bf16.msra.mxu0 %v222
  %412 = vmatprep.subr.bf16.mxu0 0
  %413 = vmatpush1.bf16.msra.mxu0 0
  %414 = vmatprep.subr.bf16.mxu0 0
  %415 = vmatpush1.bf16.msra.mxu0 0
  %416 = vmatprep.subr.bf16.mxu0 0
  %417 = vmatpush1.bf16.msra.mxu0 0
  %418 = vmatprep.subr.bf16.mxu0 0
  %419 = vmatpush1.bf16.msra.mxu0 0
  %420 = vmatprep.subr.bf16.mxu0 0
  %421 = vmatpush1.bf16.msra.mxu0 0
  %422 = vmatprep.subr.bf16.mxu0 0
  %423 = vmatpush1.bf16.msra.mxu0 0
  %424 = vmatprep.subr.bf16.mxu0 0
  %425 = vmatpush1.bf16.msra.mxu0 0
  %426 = vmatprep.subr.bf16.mxu0 0
  %427 = vmatpush1.bf16.msra.mxu0 0
  %428 = vmatprep.subr.bf16.mxu0 0
  %429 = vmatpush1.bf16.msra.mxu0 0
  %430 = vmatprep.subr.bf16.mxu0 0
  %431 = vmatpush1.bf16.msra.mxu0 0
  %432 = vmatprep.subr.bf16.mxu0 0
  %433 = vmatpush1.bf16.msra.mxu0 0
  %434 = vmatprep.subr.bf16.mxu0 0
  %435 = vmatpush1.bf16.msra.mxu0 0
  %436 = vmatprep.subr.bf16.mxu0 0
  %437 = vmatpush1.bf16.msra.mxu0 0
  %438 = vmatprep.subr.bf16.mxu0 0
  %439 = vmatpush1.bf16.msra.mxu0 0
  %440 = vmatprep.subr.bf16.mxu0 0
  %441 = vmatpush1.bf16.msra.mxu0 0
  %442 = vmatprep.mubr.bf16.mxu0 0
  %443 = vmatmul.mubr.bf16.gmra.mrb[0].mxu0 %v197
  %v444 = vpop.f32.mrb[0].mxu0
  %v445 = vadd.f32 0.0, %v444
  %v446 = vpop.f32.mrb[0].mxu0
  %v447 = vadd.f32 0.0, %v446
  %v448 = vpop.f32.mrb[0].mxu0
  %v449 = vadd.f32 0.0, %v448
  %v450 = vpop.f32.mrb[0].mxu0
  %v451 = vadd.f32 0.0, %v450
  %452 = vmatprep.mubr.bf16.mxu0 0
  %453 = vmatmul.mubr.bf16.gmra.mrb[0].mxu0 %v200
  %v454 = vpop.f32.mrb[0].mxu0
  %v455 = vadd.f32 0.0, %v454
  %v456 = vpop.f32.mrb[0].mxu0
  %v457 = vadd.f32 0.0, %v456
  %v458 = vpop.f32.mrb[0].mxu0
  %v459 = vadd.f32 0.0, %v458
  %v460 = vpop.f32.mrb[0].mxu0
  %v461 = vadd.f32 0.0, %v460
  %462 = vdwg.mxu0
  %463 = vmatprep.subr.bf16.mxu0 %v231
  %464 = vmatpush1.bf16.msra.mxu0 %v228
  %465 = vmatprep.subr.bf16.mxu0 0
  %466 = vmatpush1.bf16.msra.mxu0 0
  %467 = vmatprep.subr.bf16.mxu0 0
  %468 = vmatpush1.bf16.msra.mxu0 0
  %469 = vmatprep.subr.bf16.mxu0 0
  %470 = vmatpush1.bf16.msra.mxu0 0
  %471 = vmatprep.subr.bf16.mxu0 0
  %472 = vmatpush1.bf16.msra.mxu0 0
  %473 = vmatprep.subr.bf16.mxu0 0
  %474 = vmatpush1.bf16.msra.mxu0 0
  %475 = vmatprep.subr.bf16.mxu0 0
  %476 = vmatpush1.bf16.msra.mxu0 0
  %477 = vmatprep.subr.bf16.mxu0 0
  %478 = vmatpush1.bf16.msra.mxu0 0
  %479 = vmatprep.subr.bf16.mxu0 0
  %480 = vmatpush1.bf16.msra.mxu0 0
  %481 = vmatprep.subr.bf16.mxu0 0
  %482 = vmatpush1.bf16.msra.mxu0 0
  %483 = vmatprep.subr.bf16.mxu0 0
  %484 = vmatpush1.bf16.msra.mxu0 0
  %485 = vmatprep.subr.bf16.mxu0 0
  %486 = vmatpush1.bf16.msra.mxu0 0
  %487 = vmatprep.subr.bf16.mxu0 0
  %488 = vmatpush1.bf16.msra.mxu0 0
  %489 = vmatprep.subr.bf16.mxu0 0
  %490 = vmatpush1.bf16.msra.mxu0 0
  %491 = vmatprep.subr.bf16.mxu0 0
  %492 = vmatpush1.bf16.msra.mxu0 0
  %493 = vmatprep.subr.bf16.mxu0 0
  %494 = vmatpush1.bf16.msra.mxu0 0
  %495 = vmatprep.mubr.bf16.mxu0 0
  %496 = vmatmul.mubr.bf16.gmra.mrb[0].mxu0 %v197
  %v497 = vpop.f32.mrb[0].mxu0
  %v498 = vadd.f32 0.0, %v497
  %v499 = vpop.f32.mrb[0].mxu0
  %v500 = vadd.f32 0.0, %v499
  %v501 = vpop.f32.mrb[0].mxu0
  %v502 = vadd.f32 0.0, %v501
  %v503 = vpop.f32.mrb[0].mxu0
  %v504 = vadd.f32 0.0, %v503
  %505 = vmatprep.mubr.bf16.mxu0 0
  %506 = vmatmul.mubr.bf16.gmra.mrb[0].mxu0 %v200
  %v507 = vpop.f32.mrb[0].mxu0
  %v508 = vadd.f32 0.0, %v507
  %v509 = vpop.f32.mrb[0].mxu0
  %v510 = vadd.f32 0.0, %v509
  %v511 = vpop.f32.mrb[0].mxu0
  %v512 = vadd.f32 0.0, %v511
  %v513 = vpop.f32.mrb[0].mxu0
  %v514 = vadd.f32 0.0, %v513
  %515 = vdwg.mxu0
  %516 = vmatprep.subr.bf16.mxu0 %v237
  %517 = vmatpush1.bf16.msra.mxu0 %v234
  %518 = vmatprep.subr.bf16.mxu0 0
  %519 = vmatpush1.bf16.msra.mxu0 0
  %520 = vmatprep.subr.bf16.mxu0 0
  %521 = vmatpush1.bf16.msra.mxu0 0
  %522 = vmatprep.subr.bf16.mxu0 0
  %523 = vmatpush1.bf16.msra.mxu0 0
  %524 = vmatprep.subr.bf16.mxu0 0
  %525 = vmatpush1.bf16.msra.mxu0 0
  %526 = vmatprep.subr.bf16.mxu0 0
  %527 = vmatpush1.bf16.msra.mxu0 0
  %528 = vmatprep.subr.bf16.mxu0 0
  %529 = vmatpush1.bf16.msra.mxu0 0
  %530 = vmatprep.subr.bf16.mxu0 0
  %531 = vmatpush1.bf16.msra.mxu0 0
  %532 = vmatprep.subr.bf16.mxu0 0
  %533 = vmatpush1.bf16.msra.mxu0 0
  %534 = vmatprep.subr.bf16.mxu0 0
  %535 = vmatpush1.bf16.msra.mxu0 0
  %536 = vmatprep.subr.bf16.mxu0 0
  %537 = vmatpush1.bf16.msra.mxu0 0
  %538 = vmatprep.subr.bf16.mxu0 0
  %539 = vmatpush1.bf16.msra.mxu0 0
  %540 = vmatprep.subr.bf16.mxu0 0
  %541 = vmatpush1.bf16.msra.mxu0 0
  %542 = vmatprep.subr.bf16.mxu0 0
  %543 = vmatpush1.bf16.msra.mxu0 0
  %544 = vmatprep.subr.bf16.mxu0 0
  %545 = vmatpush1.bf16.msra.mxu0 0
  %546 = vmatprep.subr.bf16.mxu0 0
  %547 = vmatpush1.bf16.msra.mxu0 0
  %548 = vmatprep.mubr.bf16.mxu0 0
  %549 = vmatmul.mubr.bf16.gmra.mrb[0].mxu0 %v197
  %v550 = vpop.f32.mrb[0].mxu0
  %v551 = vadd.f32 0.0, %v550
  %v552 = vpop.f32.mrb[0].mxu0
  %v553 = vadd.f32 0.0, %v552
  %v554 = vpop.f32.mrb[0].mxu0
  %v555 = vadd.f32 0.0, %v554
  %v556 = vpop.f32.mrb[0].mxu0
  %v557 = vadd.f32 0.0, %v556
  %558 = vmatprep.mubr.bf16.mxu0 0
  %559 = vmatmul.mubr.bf16.gmra.mrb[0].mxu0 %v200
  %v560 = vpop.f32.mrb[0].mxu0
  %v561 = vadd.f32 0.0, %v560
  %v562 = vpop.f32.mrb[0].mxu0
  %v563 = vadd.f32 0.0, %v562
  %v564 = vpop.f32.mrb[0].mxu0
  %v565 = vadd.f32 0.0, %v564
  %v566 = vpop.f32.mrb[0].mxu0
  %v567 = vadd.f32 0.0, %v566
  %568 = vdwg.mxu0
  %569 = vmatprep.subr.bf16.mxu0 %v243
  %570 = vmatpush1.bf16.msra.mxu0 %v240
  %571 = vmatprep.subr.bf16.mxu0 0
  %572 = vmatpush1.bf16.msra.mxu0 0
  %573 = vmatprep.subr.bf16.mxu0 0
  %574 = vmatpush1.bf16.msra.mxu0 0
  %575 = vmatprep.subr.bf16.mxu0 0
  %576 = vmatpush1.bf16.msra.mxu0 0
  %577 = vmatprep.subr.bf16.mxu0 0
  %578 = vmatpush1.bf16.msra.mxu0 0
  %579 = vmatprep.subr.bf16.mxu0 0
  %580 = vmatpush1.bf16.msra.mxu0 0
  %581 = vmatprep.subr.bf16.mxu0 0
  %582 = vmatpush1.bf16.msra.mxu0 0
  %583 = vmatprep.subr.bf16.mxu0 0
  %584 = vmatpush1.bf16.msra.mxu0 0
  %585 = vmatprep.subr.bf16.mxu0 0
  %586 = vmatpush1.bf16.msra.mxu0 0
  %587 = vmatprep.subr.bf16.mxu0 0
  %588 = vmatpush1.bf16.msra.mxu0 0
  %589 = vmatprep.subr.bf16.mxu0 0
  %590 = vmatpush1.bf16.msra.mxu0 0
  %591 = vmatprep.subr.bf16.mxu0 0
  %592 = vmatpush1.bf16.msra.mxu0 0
  %593 = vmatprep.subr.bf16.mxu0 0
  %594 = vmatpush1.bf16.msra.mxu0 0
  %595 = vmatprep.subr.bf16.mxu0 0
  %596 = vmatpush1.bf16.msra.mxu0 0
  %597 = vmatprep.subr.bf16.mxu0 0
  %598 = vmatpush1.bf16.msra.mxu0 0
  %599 = vmatprep.subr.bf16.mxu0 0
  %600 = vmatpush1.bf16.msra.mxu0 0
  %601 = vmatprep.mubr.bf16.mxu0 0
  %602 = vmatmul.mubr.bf16.gmra.mrb[0].mxu0 %v197
  %v603 = vpop.f32.mrb[0].mxu0
  %v604 = vadd.f32 0.0, %v603
  %v605 = vpop.f32.mrb[0].mxu0
  %v606 = vadd.f32 0.0, %v605
  %v607 = vpop.f32.mrb[0].mxu0
  %v608 = vadd.f32 0.0, %v607
  %v609 = vpop.f32.mrb[0].mxu0
  %v610 = vadd.f32 0.0, %v609
  %611 = vmatprep.mubr.bf16.mxu0 0
  %612 = vmatmul.mubr.bf16.gmra.mrb[0].mxu0 %v200
  %v613 = vpop.f32.mrb[0].mxu0
  %v614 = vadd.f32 0.0, %v613
  %v615 = vpop.f32.mrb[0].mxu0
  %v616 = vadd.f32 0.0, %v615
  %v617 = vpop.f32.mrb[0].mxu0
  %v618 = vadd.f32 0.0, %v617
  %v619 = vpop.f32.mrb[0].mxu0
  %v620 = vadd.f32 0.0, %v619
  %621 = vdwg.mxu0
  %622 = vmatprep.subr.bf16.mxu0 %v249
  %623 = vmatpush1.bf16.msra.mxu0 %v246
  %624 = vmatprep.subr.bf16.mxu0 0
  %625 = vmatpush1.bf16.msra.mxu0 0
  %626 = vmatprep.subr.bf16.mxu0 0
  %627 = vmatpush1.bf16.msra.mxu0 0
  %628 = vmatprep.subr.bf16.mxu0 0
  %629 = vmatpush1.bf16.msra.mxu0 0
  %630 = vmatprep.subr.bf16.mxu0 0
  %631 = vmatpush1.bf16.msra.mxu0 0
  %632 = vmatprep.subr.bf16.mxu0 0
  %633 = vmatpush1.bf16.msra.mxu0 0
  %634 = vmatprep.subr.bf16.mxu0 0
  %635 = vmatpush1.bf16.msra.mxu0 0
  %636 = vmatprep.subr.bf16.mxu0 0
  %637 = vmatpush1.bf16.msra.mxu0 0
  %638 = vmatprep.subr.bf16.mxu0 0
  %639 = vmatpush1.bf16.msra.mxu0 0
  %640 = vmatprep.subr.bf16.mxu0 0
  %641 = vmatpush1.bf16.msra.mxu0 0
  %642 = vmatprep.subr.bf16.mxu0 0
  %643 = vmatpush1.bf16.msra.mxu0 0
  %644 = vmatprep.subr.bf16.mxu0 0
  %645 = vmatpush1.bf16.msra.mxu0 0
  %646 = vmatprep.subr.bf16.mxu0 0
  %647 = vmatpush1.bf16.msra.mxu0 0
  %648 = vmatprep.subr.bf16.mxu0 0
  %649 = vmatpush1.bf16.msra.mxu0 0
  %650 = vmatprep.subr.bf16.mxu0 0
  %651 = vmatpush1.bf16.msra.mxu0 0
  %652 = vmatprep.subr.bf16.mxu0 0
  %653 = vmatpush1.bf16.msra.mxu0 0
  %654 = vmatprep.mubr.bf16.mxu0 0
  %655 = vmatmul.mubr.bf16.gmra.mrb[0].mxu0 %v197
  %v656 = vpop.f32.mrb[0].mxu0
  %v657 = vadd.f32 0.0, %v656
  %v658 = vpop.f32.mrb[0].mxu0
  %v659 = vadd.f32 0.0, %v658
  %v660 = vpop.f32.mrb[0].mxu0
  %v661 = vadd.f32 0.0, %v660
  %v662 = vpop.f32.mrb[0].mxu0
  %v663 = vadd.f32 0.0, %v662
  %664 = vmatprep.mubr.bf16.mxu0 0
  %665 = vmatmul.mubr.bf16.gmra.mrb[0].mxu0 %v200
  %v666 = vpop.f32.mrb[0].mxu0
  %v667 = vadd.f32 0.0, %v666
  %v668 = vpop.f32.mrb[0].mxu0
  %v669 = vadd.f32 0.0, %v668
  %v670 = vpop.f32.mrb[0].mxu0
  %v671 = vadd.f32 0.0, %v670
  %v672 = vpop.f32.mrb[0].mxu0
  %v673 = vadd.f32 0.0, %v672
  %674 = vdwg.mxu0
  %675 = vst [vmem:[%s4] sm:$0xff] %v286
  %676 = vst [vmem:[%s4 + $0x8] sm:$0xff] %v288
  %677 = vst [vmem:[%s4 + $0x10] sm:$0xff] %v339
  %678 = vst [vmem:[%s4 + $0x18] sm:$0xff] %v341
  %679 = vst [vmem:[%s4 + $0x20] sm:$0xff] %v392
  %680 = vst [vmem:[%s4 + $0x28] sm:$0xff] %v394
  %681 = vst [vmem:[%s4 + $0x30] sm:$0xff] %v445
  %682 = vst [vmem:[%s4 + $0x38] sm:$0xff] %v447
  %683 = vst [vmem:[%s4 + $0x40] sm:$0xff] %v498
  %684 = vst [vmem:[%s4 + $0x48] sm:$0xff] %v500
  %685 = vst [vmem:[%s4 + $0x50] sm:$0xff] %v551
  %686 = vst [vmem:[%s4 + $0x58] sm:$0xff] %v553
  %687 = vst [vmem:[%s4 + $0x60] sm:$0xff] %v604
  %688 = vst [vmem:[%s4 + $0x68] sm:$0xff] %v606
  %689 = vst [vmem:[%s4 + $0x70] sm:$0xff] %v657
  %690 = vst [vmem:[%s4 + $0x78] sm:$0xff] %v659
  %691 = vst [vmem:[%s4 + $0x80] sm:$0xff] %v290
  %692 = vst [vmem:[%s4 + $0x88] sm:$0xff] %v292
  %693 = vst [vmem:[%s4 + $0x90] sm:$0xff] %v343
  %694 = vst [vmem:[%s4 + $0x98] sm:$0xff] %v345
  %695 = vst [vmem:[%s4 + $0xa0] sm:$0xff] %v396
  %696 = vst [vmem:[%s4 + $0xa8] sm:$0xff] %v398
  %697 = vst [vmem:[%s4 + $0xb0] sm:$0xff] %v449
  %698 = vst [vmem:[%s4 + $0xb8] sm:$0xff] %v451
  %699 = vst [vmem:[%s4 + $0xc0] sm:$0xff] %v502
  %700 = vst [vmem:[%s4 + $0xc8] sm:$0xff] %v504
  %701 = vst [vmem:[%s4 + $0xd0] sm:$0xff] %v555
  %702 = vst [vmem:[%s4 + $0xd8] sm:$0xff] %v557
  %703 = vst [vmem:[%s4 + $0xe0] sm:$0xff] %v608
  %704 = vst [vmem:[%s4 + $0xe8] sm:$0xff] %v610
  %705 = vst [vmem:[%s4 + $0xf0] sm:$0xff] %v661
  %706 = vst [vmem:[%s4 + $0xf8] sm:$0xff] %v663
  %707 = vst [vmem:[%s4 + $0x100] sm:$0xff] %v296
  %708 = vst [vmem:[%s4 + $0x108] sm:$0xff] %v298
  %709 = vst [vmem:[%s4 + $0x110] sm:$0xff] %v349
  %710 = vst [vmem:[%s4 + $0x118] sm:$0xff] %v351
  %711 = vst [vmem:[%s4 + $0x120] sm:$0xff] %v402
  %712 = vst [vmem:[%s4 + $0x128] sm:$0xff] %v404
  %713 = vst [vmem:[%s4 + $0x130] sm:$0xff] %v455
  %714 = vst [vmem:[%s4 + $0x138] sm:$0xff] %v457
  %715 = vst [vmem:[%s4 + $0x140] sm:$0xff] %v508
  %716 = vst [vmem:[%s4 + $0x148] sm:$0xff] %v510
  %717 = vst [vmem:[%s4 + $0x150] sm:$0xff] %v561
  %718 = vst [vmem:[%s4 + $0x158] sm:$0xff] %v563
  %719 = vst [vmem:[%s4 + $0x160] sm:$0xff] %v614
  %720 = vst [vmem:[%s4 + $0x168] sm:$0xff] %v616
  %721 = vst [vmem:[%s4 + $0x170] sm:$0xff] %v667
  %722 = vst [vmem:[%s4 + $0x178] sm:$0xff] %v669
  %723 = vst [vmem:[%s4 + $0x180] sm:$0x7] %v300
  %724 = vst [vmem:[%s4 + $0x188] sm:$0x7] %v302
  %725 = vst [vmem:[%s4 + $0x190] sm:$0x7] %v353
  %726 = vst [vmem:[%s4 + $0x198] sm:$0x7] %v355
  %727 = vst [vmem:[%s4 + $0x1a0] sm:$0x7] %v406
  %728 = vst [vmem:[%s4 + $0x1a8] sm:$0x7] %v408
  %729 = vst [vmem:[%s4 + $0x1b0] sm:$0x7] %v459
  %730 = vst [vmem:[%s4 + $0x1b8] sm:$0x7] %v461
  %731 = vst [vmem:[%s4 + $0x1c0] sm:$0x7] %v512
  %732 = vst [vmem:[%s4 + $0x1c8] sm:$0x7] %v514
  %733 = vst [vmem:[%s4 + $0x1d0] sm:$0x7] %v565
  %734 = vst [vmem:[%s4 + $0x1d8] sm:$0x7] %v567
  %735 = vst [vmem:[%s4 + $0x1e0] sm:$0x7] %v618
  %736 = vst [vmem:[%s4 + $0x1e8] sm:$0x7] %v620
  %737 = vst [vmem:[%s4 + $0x1f0] sm:$0x7] %v671
  %738 = vst [vmem:[%s4 + $0x1f8] sm:$0x7] %v673
  // Predicated region
  $region18: #{generator_forward.10} parent=0 // pred_check
    _
  $region19: #{generator_forward.10} parent=0 // pred_check_branch
    %740 = sbr.rel (0) target = $region21
  $region20: #{generator_forward.10} parent=0 // pred_region
    _
  $region21: #{generator_forward.10} parent=0 // pred_fallthru
    _
  // Predicated region
  $region22: #{generator_forward.10} parent=0 // pred_check
    _
  $region23: #{generator_forward.10} parent=0 // pred_check_branch
    %742 = sbr.rel (0) target = $region25
  $region24: #{generator_forward.10} parent=0 // pred_region
    _
  $region25: #{generator_forward.10} parent=0 // pred_fallthru
    _

// kernel: squeeze.78
$region0: #{squeeze.78}
  %s0 = inlined_call_operand.vmem [shape: f32[9,2048], index: 0, kind: input, shape index: {}]
  %s1 = inlined_call_operand.vmem [shape: f32[3,3,2,32,32], index: 1, kind: output, shape index: {}]
  %v2 = vld [vmem:[%s0] sm:$0xff]
  %vm3 = vcmask 261120
  %4 = vst.msk [vmem:[%s1] sm:$0x1] %vm3, %v2
  %s5 = scalar_lea.vmem %s1, 63
  %6 = vst.msk [vmem:[%s5] sm:$0x2] %vm3, %v2
  %s7 = scalar_lea.vmem %s1, 126
  %8 = vst.msk [vmem:[%s7] sm:$0x4] %vm3, %v2
  %s9 = scalar_lea.vmem %s1, 189
  %10 = vst.msk [vmem:[%s9] sm:$0x8] %vm3, %v2
  %s11 = scalar_lea.vmem %s1, 252
  %12 = vst.msk [vmem:[%s11] sm:$0x10] %vm3, %v2
  %s13 = scalar_lea.vmem %s1, 315
  %14 = vst.msk [vmem:[%s13] sm:$0x20] %vm3, %v2
  %s15 = scalar_lea.vmem %s1, 378
  %16 = vst.msk [vmem:[%s15] sm:$0x40] %vm3, %v2
  %s17 = scalar_lea.vmem %s1, 441
  %18 = vst.msk [vmem:[%s17] sm:$0x80] %vm3, %v2
  %s19 = scalar_lea.vmem %s0, 8
  %v20 = vld [vmem:[%s19] sm:$0xff]
  %vm21 = vcmask 261120
  %s22 = scalar_lea.vmem %s1, 4
  %23 = vst.msk [vmem:[%s22] sm:$0x1] %vm21, %v20
  %s24 = scalar_lea.vmem %s1, 67
  %25 = vst.msk [vmem:[%s24] sm:$0x2] %vm21, %v20
  %s26 = scalar_lea.vmem %s1, 130
  %27 = vst.msk [vmem:[%s26] sm:$0x4] %vm21, %v20
  %s28 = scalar_lea.vmem %s1, 193
  %29 = vst.msk [vmem:[%s28] sm:$0x8] %vm21, %v20
  %s30 = scalar_lea.vmem %s1, 256
  %31 = vst.msk [vmem:[%s30] sm:$0x10] %vm21, %v20
  %s32 = scalar_lea.vmem %s1, 319
  %33 = vst.msk [vmem:[%s32] sm:$0x20] %vm21, %v20
  %s34 = scalar_lea.vmem %s1, 382
  %35 = vst.msk [vmem:[%s34] sm:$0x40] %vm21, %v20
  %s36 = scalar_lea.vmem %s1, 445
  %37 = vst.msk [vmem:[%s36] sm:$0x80] %vm21, %v20
  %s38 = scalar_lea.vmem %s0, 16
  %v39 = vld [vmem:[%s38] sm:$0xff]
  %vm40 = vcmask 261120
  %s41 = scalar_lea.vmem %s1, 8
  %42 = vst.msk [vmem:[%s41] sm:$0x1] %vm40, %v39
  %s43 = scalar_lea.vmem %s1, 71
  %44 = vst.msk [vmem:[%s43] sm:$0x2] %vm40, %v39
  %s45 = scalar_lea.vmem %s1, 134
  %46 = vst.msk [vmem:[%s45] sm:$0x4] %vm40, %v39
  %s47 = scalar_lea.vmem %s1, 197
  %48 = vst.msk [vmem:[%s47] sm:$0x8] %vm40, %v39
  %s49 = scalar_lea.vmem %s1, 260
  %50 = vst.msk [vmem:[%s49] sm:$0x10] %vm40, %v39
  %s51 = scalar_lea.vmem %s1, 323
  %52 = vst.msk [vmem:[%s51] sm:$0x20] %vm40, %v39
  %s53 = scalar_lea.vmem %s1, 386
  %54 = vst.msk [vmem:[%s53] sm:$0x40] %vm40, %v39
  %s55 = scalar_lea.vmem %s1, 449
  %56 = vst.msk [vmem:[%s55] sm:$0x80] %vm40, %v39
  %s57 = scalar_lea.vmem %s0, 24
  %v58 = vld [vmem:[%s57] sm:$0xff]
  %vm59 = vcmask 261120
  %s60 = scalar_lea.vmem %s1, 12
  %61 = vst.msk [vmem:[%s60] sm:$0x1] %vm59, %v58
  %s62 = scalar_lea.vmem %s1, 75
  %63 = vst.msk [vmem:[%s62] sm:$0x2] %vm59, %v58
  %s64 = scalar_lea.vmem %s1, 138
  %65 = vst.msk [vmem:[%s64] sm:$0x4] %vm59, %v58
  %s66 = scalar_lea.vmem %s1, 201
  %67 = vst.msk [vmem:[%s66] sm:$0x8] %vm59, %v58
  %s68 = scalar_lea.vmem %s1, 264
  %69 = vst.msk [vmem:[%s68] sm:$0x10] %vm59, %v58
  %s70 = scalar_lea.vmem %s1, 327
  %71 = vst.msk [vmem:[%s70] sm:$0x20] %vm59, %v58
  %s72 = scalar_lea.vmem %s1, 390
  %73 = vst.msk [vmem:[%s72] sm:$0x40] %vm59, %v58
  %s74 = scalar_lea.vmem %s1, 453
  %75 = vst.msk [vmem:[%s74] sm:$0x80] %vm59, %v58
  %s76 = scalar_lea.vmem %s0, 32
  %v77 = vld [vmem:[%s76] sm:$0xff]
  %vm78 = vcmask 261120
  %s79 = scalar_lea.vmem %s1, 16
  %80 = vst.msk [vmem:[%s79] sm:$0x1] %vm78, %v77
  %s81 = scalar_lea.vmem %s1, 79
  %82 = vst.msk [vmem:[%s81] sm:$0x2] %vm78, %v77
  %s83 = scalar_lea.vmem %s1, 142
  %84 = vst.msk [vmem:[%s83] sm:$0x4] %vm78, %v77
  %s85 = scalar_lea.vmem %s1, 205
  %86 = vst.msk [vmem:[%s85] sm:$0x8] %vm78, %v77
  %s87 = scalar_lea.vmem %s1, 268
  %88 = vst.msk [vmem:[%s87] sm:$0x10] %vm78, %v77
  %s89 = scalar_lea.vmem %s1, 331
  %90 = vst.msk [vmem:[%s89] sm:$0x20] %vm78, %v77
  %s91 = scalar_lea.vmem %s1, 394
  %92 = vst.msk [vmem:[%s91] sm:$0x40] %vm78, %v77
  %s93 = scalar_lea.vmem %s1, 457
  %94 = vst.msk [vmem:[%s93] sm:$0x80] %vm78, %v77
  %s95 = scalar_lea.vmem %s0, 40
  %v96 = vld [vmem:[%s95] sm:$0xff]
  %vm97 = vcmask 261120
  %s98 = scalar_lea.vmem %s1, 20
  %99 = vst.msk [vmem:[%s98] sm:$0x1] %vm97, %v96
  %s100 = scalar_lea.vmem %s1, 83
  %101 = vst.msk [vmem:[%s100] sm:$0x2] %vm97, %v96
  %s102 = scalar_lea.vmem %s1, 146
  %103 = vst.msk [vmem:[%s102] sm:$0x4] %vm97, %v96
  %s104 = scalar_lea.vmem %s1, 209
  %105 = vst.msk [vmem:[%s104] sm:$0x8] %vm97, %v96
  %s106 = scalar_lea.vmem %s1, 272
  %107 = vst.msk [vmem:[%s106] sm:$0x10] %vm97, %v96
  %s108 = scalar_lea.vmem %s1, 335
  %109 = vst.msk [vmem:[%s108] sm:$0x20] %vm97, %v96
  %s110 = scalar_lea.vmem %s1, 398
  %111 = vst.msk [vmem:[%s110] sm:$0x40] %vm97, %v96
  %s112 = scalar_lea.vmem %s1, 461
  %113 = vst.msk [vmem:[%s112] sm:$0x80] %vm97, %v96
  %s114 = scalar_lea.vmem %s0, 48
  %v115 = vld [vmem:[%s114] sm:$0xff]
  %vm116 = vcmask 261120
  %s117 = scalar_lea.vmem %s1, 24
  %118 = vst.msk [vmem:[%s117] sm:$0x1] %vm116, %v115
  %s119 = scalar_lea.vmem %s1, 87
  %120 = vst.msk [vmem:[%s119] sm:$0x2] %vm116, %v115
  %s121 = scalar_lea.vmem %s1, 150
  %122 = vst.msk [vmem:[%s121] sm:$0x4] %vm116, %v115
  %s123 = scalar_lea.vmem %s1, 213
  %124 = vst.msk [vmem:[%s123] sm:$0x8] %vm116, %v115
  %s125 = scalar_lea.vmem %s1, 276
  %126 = vst.msk [vmem:[%s125] sm:$0x10] %vm116, %v115
  %s127 = scalar_lea.vmem %s1, 339
  %128 = vst.msk [vmem:[%s127] sm:$0x20] %vm116, %v115
  %s129 = scalar_lea.vmem %s1, 402
  %130 = vst.msk [vmem:[%s129] sm:$0x40] %vm116, %v115
  %s131 = scalar_lea.vmem %s1, 465
  %132 = vst.msk [vmem:[%s131] sm:$0x80] %vm116, %v115
  %s133 = scalar_lea.vmem %s0, 56
  %v134 = vld [vmem:[%s133] sm:$0xff]
  %vm135 = vcmask 261120
  %s136 = scalar_lea.vmem %s1, 28
  %137 = vst.msk [vmem:[%s136] sm:$0x1] %vm135, %v134
  %s138 = scalar_lea.vmem %s1, 91
  %139 = vst.msk [vmem:[%s138] sm:$0x2] %vm135, %v134
  %s140 = scalar_lea.vmem %s1, 154
  %141 = vst.msk [vmem:[%s140] sm:$0x4] %vm135, %v134
  %s142 = scalar_lea.vmem %s1, 217
  %143 = vst.msk [vmem:[%s142] sm:$0x8] %vm135, %v134
  %s144 = scalar_lea.vmem %s1, 280
  %145 = vst.msk [vmem:[%s144] sm:$0x10] %vm135, %v134
  %s146 = scalar_lea.vmem %s1, 343
  %147 = vst.msk [vmem:[%s146] sm:$0x20] %vm135, %v134
  %s148 = scalar_lea.vmem %s1, 406
  %149 = vst.msk [vmem:[%s148] sm:$0x40] %vm135, %v134
  %s150 = scalar_lea.vmem %s1, 469
  %151 = vst.msk [vmem:[%s150] sm:$0x80] %vm135, %v134
  %s152 = scalar_lea.vmem %s0, 64
  %v153 = vld [vmem:[%s152] sm:$0xff]
  %vm154 = vcmask 261120
  %s155 = scalar_lea.vmem %s1, 32
  %156 = vst.msk [vmem:[%s155] sm:$0x1] %vm154, %v153
  %s157 = scalar_lea.vmem %s1, 95
  %158 = vst.msk [vmem:[%s157] sm:$0x2] %vm154, %v153
  %s159 = scalar_lea.vmem %s1, 158
  %160 = vst.msk [vmem:[%s159] sm:$0x4] %vm154, %v153
  %s161 = scalar_lea.vmem %s1, 221
  %162 = vst.msk [vmem:[%s161] sm:$0x8] %vm154, %v153
  %s163 = scalar_lea.vmem %s1, 284
  %164 = vst.msk [vmem:[%s163] sm:$0x10] %vm154, %v153
  %s165 = scalar_lea.vmem %s1, 347
  %166 = vst.msk [vmem:[%s165] sm:$0x20] %vm154, %v153
  %s167 = scalar_lea.vmem %s1, 410
  %168 = vst.msk [vmem:[%s167] sm:$0x40] %vm154, %v153
  %s169 = scalar_lea.vmem %s1, 473
  %170 = vst.msk [vmem:[%s169] sm:$0x80] %vm154, %v153
  %s171 = scalar_lea.vmem %s0, 72
  %v172 = vld [vmem:[%s171] sm:$0xff]
  %vm173 = vcmask 261120
  %s174 = scalar_lea.vmem %s1, 36
  %175 = vst.msk [vmem:[%s174] sm:$0x1] %vm173, %v172
  %s176 = scalar_lea.vmem %s1, 99
  %177 = vst.msk [vmem:[%s176] sm:$0x2] %vm173, %v172
  %s178 = scalar_lea.vmem %s1, 162
  %179 = vst.msk [vmem:[%s178] sm:$0x4] %vm173, %v172
  %s180 = scalar_lea.vmem %s1, 225
  %181 = vst.msk [vmem:[%s180] sm:$0x8] %vm173, %v172
  %s182 = scalar_lea.vmem %s1, 288
  %183 = vst.msk [vmem:[%s182] sm:$0x10] %vm173, %v172
  %s184 = scalar_lea.vmem %s1, 351
  %185 = vst.msk [vmem:[%s184] sm:$0x20] %vm173, %v172
  %s186 = scalar_lea.vmem %s1, 414
  %187 = vst.msk [vmem:[%s186] sm:$0x40] %vm173, %v172
  %s188 = scalar_lea.vmem %s1, 477
  %189 = vst.msk [vmem:[%s188] sm:$0x80] %vm173, %v172
  %s190 = scalar_lea.vmem %s0, 80
  %v191 = vld [vmem:[%s190] sm:$0xff]
  %vm192 = vcmask 261120
  %s193 = scalar_lea.vmem %s1, 40
  %194 = vst.msk [vmem:[%s193] sm:$0x1] %vm192, %v191
  %s195 = scalar_lea.vmem %s1, 103
  %196 = vst.msk [vmem:[%s195] sm:$0x2] %vm192, %v191
  %s197 = scalar_lea.vmem %s1, 166
  %198 = vst.msk [vmem:[%s197] sm:$0x4] %vm192, %v191
  %s199 = scalar_lea.vmem %s1, 229
  %200 = vst.msk [vmem:[%s199] sm:$0x8] %vm192, %v191
  %s201 = scalar_lea.vmem %s1, 292
  %202 = vst.msk [vmem:[%s201] sm:$0x10] %vm192, %v191
  %s203 = scalar_lea.vmem %s1, 355
  %204 = vst.msk [vmem:[%s203] sm:$0x20] %vm192, %v191
  %s205 = scalar_lea.vmem %s1, 418
  %206 = vst.msk [vmem:[%s205] sm:$0x40] %vm192, %v191
  %s207 = scalar_lea.vmem %s1, 481
  %208 = vst.msk [vmem:[%s207] sm:$0x80] %vm192, %v191
  %s209 = scalar_lea.vmem %s0, 88
  %v210 = vld [vmem:[%s209] sm:$0xff]
  %vm211 = vcmask 261120
  %s212 = scalar_lea.vmem %s1, 44
  %213 = vst.msk [vmem:[%s212] sm:$0x1] %vm211, %v210
  %s214 = scalar_lea.vmem %s1, 107
  %215 = vst.msk [vmem:[%s214] sm:$0x2] %vm211, %v210
  %s216 = scalar_lea.vmem %s1, 170
  %217 = vst.msk [vmem:[%s216] sm:$0x4] %vm211, %v210
  %s218 = scalar_lea.vmem %s1, 233
  %219 = vst.msk [vmem:[%s218] sm:$0x8] %vm211, %v210
  %s220 = scalar_lea.vmem %s1, 296
  %221 = vst.msk [vmem:[%s220] sm:$0x10] %vm211, %v210
  %s222 = scalar_lea.vmem %s1, 359
  %223 = vst.msk [vmem:[%s222] sm:$0x20] %vm211, %v210
  %s224 = scalar_lea.vmem %s1, 422
  %225 = vst.msk [vmem:[%s224] sm:$0x40] %vm211, %v210
  %s226 = scalar_lea.vmem %s1, 485
  %227 = vst.msk [vmem:[%s226] sm:$0x80] %vm211, %v210
  %s228 = scalar_lea.vmem %s0, 96
  %v229 = vld [vmem:[%s228] sm:$0xff]
  %vm230 = vcmask 261120
  %s231 = scalar_lea.vmem %s1, 48
  %232 = vst.msk [vmem:[%s231] sm:$0x1] %vm230, %v229
  %s233 = scalar_lea.vmem %s1, 111
  %234 = vst.msk [vmem:[%s233] sm:$0x2] %vm230, %v229
  %s235 = scalar_lea.vmem %s1, 174
  %236 = vst.msk [vmem:[%s235] sm:$0x4] %vm230, %v229
  %s237 = scalar_lea.vmem %s1, 237
  %238 = vst.msk [vmem:[%s237] sm:$0x8] %vm230, %v229
  %s239 = scalar_lea.vmem %s1, 300
  %240 = vst.msk [vmem:[%s239] sm:$0x10] %vm230, %v229
  %s241 = scalar_lea.vmem %s1, 363
  %242 = vst.msk [vmem:[%s241] sm:$0x20] %vm230, %v229
  %s243 = scalar_lea.vmem %s1, 426
  %244 = vst.msk [vmem:[%s243] sm:$0x40] %vm230, %v229
  %s245 = scalar_lea.vmem %s1, 489
  %246 = vst.msk [vmem:[%s245] sm:$0x80] %vm230, %v229
  %s247 = scalar_lea.vmem %s0, 104
  %v248 = vld [vmem:[%s247] sm:$0xff]
  %vm249 = vcmask 261120
  %s250 = scalar_lea.vmem %s1, 52
  %251 = vst.msk [vmem:[%s250] sm:$0x1] %vm249, %v248
  %s252 = scalar_lea.vmem %s1, 115
  %253 = vst.msk [vmem:[%s252] sm:$0x2] %vm249, %v248
  %s254 = scalar_lea.vmem %s1, 178
  %255 = vst.msk [vmem:[%s254] sm:$0x4] %vm249, %v248
  %s256 = scalar_lea.vmem %s1, 241
  %257 = vst.msk [vmem:[%s256] sm:$0x8] %vm249, %v248
  %s258 = scalar_lea.vmem %s1, 304
  %259 = vst.msk [vmem:[%s258] sm:$0x10] %vm249, %v248
  %s260 = scalar_lea.vmem %s1, 367
  %261 = vst.msk [vmem:[%s260] sm:$0x20] %vm249, %v248
  %s262 = scalar_lea.vmem %s1, 430
  %263 = vst.msk [vmem:[%s262] sm:$0x40] %vm249, %v248
  %s264 = scalar_lea.vmem %s1, 493
  %265 = vst.msk [vmem:[%s264] sm:$0x80] %vm249, %v248
  %s266 = scalar_lea.vmem %s0, 112
  %v267 = vld [vmem:[%s266] sm:$0xff]
  %vm268 = vcmask 261120
  %s269 = scalar_lea.vmem %s1, 56
  %270 = vst.msk [vmem:[%s269] sm:$0x1] %vm268, %v267
  %s271 = scalar_lea.vmem %s1, 119
  %272 = vst.msk [vmem:[%s271] sm:$0x2] %vm268, %v267
  %s273 = scalar_lea.vmem %s1, 182
  %274 = vst.msk [vmem:[%s273] sm:$0x4] %vm268, %v267
  %s275 = scalar_lea.vmem %s1, 245
  %276 = vst.msk [vmem:[%s275] sm:$0x8] %vm268, %v267
  %s277 = scalar_lea.vmem %s1, 308
  %278 = vst.msk [vmem:[%s277] sm:$0x10] %vm268, %v267
  %s279 = scalar_lea.vmem %s1, 371
  %280 = vst.msk [vmem:[%s279] sm:$0x20] %vm268, %v267
  %s281 = scalar_lea.vmem %s1, 434
  %282 = vst.msk [vmem:[%s281] sm:$0x40] %vm268, %v267
  %s283 = scalar_lea.vmem %s1, 497
  %284 = vst.msk [vmem:[%s283] sm:$0x80] %vm268, %v267
  %s285 = scalar_lea.vmem %s0, 120
  %v286 = vld [vmem:[%s285] sm:$0xff]
  %vm287 = vcmask 261120
  %s288 = scalar_lea.vmem %s1, 60
  %289 = vst.msk [vmem:[%s288] sm:$0x1] %vm287, %v286
  %s290 = scalar_lea.vmem %s1, 123
  %291 = vst.msk [vmem:[%s290] sm:$0x2] %vm287, %v286
  %s292 = scalar_lea.vmem %s1, 186
  %293 = vst.msk [vmem:[%s292] sm:$0x4] %vm287, %v286
  %s294 = scalar_lea.vmem %s1, 249
  %295 = vst.msk [vmem:[%s294] sm:$0x8] %vm287, %v286
  %s296 = scalar_lea.vmem %s1, 312
  %297 = vst.msk [vmem:[%s296] sm:$0x10] %vm287, %v286
  %s298 = scalar_lea.vmem %s1, 375
  %299 = vst.msk [vmem:[%s298] sm:$0x20] %vm287, %v286
  %s300 = scalar_lea.vmem %s1, 438
  %301 = vst.msk [vmem:[%s300] sm:$0x40] %vm287, %v286
  %s302 = scalar_lea.vmem %s1, 501
  %303 = vst.msk [vmem:[%s302] sm:$0x80] %vm287, %v286
  %s304 = scalar_lea.vmem %s0, 128
  %v305 = vld [vmem:[%s304] ss:$8 sm:$0xf]
  %s306 = scalar_lea.vmem %s0, 128
  %v307 = vld [vmem:[%s306] ss:$8 sm:$0xf0]
  %vm308 = vcmask 1047556
  %v309 = vsel %vm308, %v307, %v305
  %vm310 = vcmask 261120
  %s311 = scalar_lea.vmem %s1, 512
  %312 = vst.msk [vmem:[%s311] ss:$4 sm:$0xff] %vm310, %v309
  %s313 = scalar_lea.vmem %s0, 192
  %v314 = vld [vmem:[%s313] ss:$8 sm:$0xf]
  %s315 = scalar_lea.vmem %s0, 192
  %v316 = vld [vmem:[%s315] ss:$8 sm:$0xf0]
  %vm317 = vcmask 1047556
  %v318 = vsel %vm317, %v316, %v314
  %vm319 = vcmask 261120
  %s320 = scalar_lea.vmem %s1, 544
  %321 = vst.msk [vmem:[%s320] ss:$4 sm:$0xff] %vm319, %v318
  %v322 = vld [vmem:[%s0] ss:$8 sm:$0xf]
  %v323 = vld [vmem:[%s0] ss:$8 sm:$0xf0]
  %vm324 = vcmask 1047556
  %v325 = vsel %vm324, %v323, %v322
  %326 = vrot.lane.b32.xlu0 %v325, 96
  %v327 = vpop.permute.xlu0 %326
  %vm328 = vcmask 261120
  %s329 = scalar_lea.vmem %s1, 1
  %330 = vst.msk [vmem:[%s329] ss:$4 sm:$0xff] %vm328, %v327
  %s331 = scalar_lea.vmem %s0, 1
  %v332 = vld [vmem:[%s331] ss:$8 sm:$0xf]
  %s333 = scalar_lea.vmem %s0, 1
  %v334 = vld [vmem:[%s333] ss:$8 sm:$0xf0]
  %vm335 = vcmask 1047556
  %v336 = vsel %vm335, %v334, %v332
  %337 = vrot.lane.b32.xlu0 %v336, 96
  %v338 = vpop.permute.xlu0 %337
  %vm339 = vcmask 261120
  %s340 = scalar_lea.vmem %s1, 65
  %341 = vst.msk [vmem:[%s340] ss:$4 sm:$0xff] %vm339, %v338
  %s342 = scalar_lea.vmem %s0, 2
  %v343 = vld [vmem:[%s342] ss:$8 sm:$0xf]
  %s344 = scalar_lea.vmem %s0, 2
  %v345 = vld [vmem:[%s344] ss:$8 sm:$0xf0]
  %vm346 = vcmask 1047556
  %v347 = vsel %vm346, %v345, %v343
  %348 = vrot.lane.b32.xlu0 %v347, 96
  %v349 = vpop.permute.xlu0 %348
  %vm350 = vcmask 261120
  %s351 = scalar_lea.vmem %s1, 129
  %352 = vst.msk [vmem:[%s351] ss:$4 sm:$0xff] %vm350, %v349
  %s353 = scalar_lea.vmem %s0, 3
  %v354 = vld [vmem:[%s353] ss:$8 sm:$0xf]
  %s355 = scalar_lea.vmem %s0, 3
  %v356 = vld [vmem:[%s355] ss:$8 sm:$0xf0]
  %vm357 = vcmask 1047556
  %v358 = vsel %vm357, %v356, %v354
  %359 = vrot.lane.b32.xlu0 %v358, 96
  %v360 = vpop.permute.xlu0 %359
  %vm361 = vcmask 261120
  %s362 = scalar_lea.vmem %s1, 193
  %363 = vst.msk [vmem:[%s362] ss:$4 sm:$0xff] %vm361, %v360
  %s364 = scalar_lea.vmem %s0, 4
  %v365 = vld [vmem:[%s364] ss:$8 sm:$0xf]
  %s366 = scalar_lea.vmem %s0, 4
  %v367 = vld [vmem:[%s366] ss:$8 sm:$0xf0]
  %vm368 = vcmask 1047556
  %v369 = vsel %vm368, %v367, %v365
  %370 = vrot.lane.b32.xlu0 %v369, 96
  %v371 = vpop.permute.xlu0 %370
  %vm372 = vcmask 261120
  %s373 = scalar_lea.vmem %s1, 257
  %374 = vst.msk [vmem:[%s373] ss:$4 sm:$0xff] %vm372, %v371
  %s375 = scalar_lea.vmem %s0, 5
  %v376 = vld [vmem:[%s375] ss:$8 sm:$0xf]
  %s377 = scalar_lea.vmem %s0, 5
  %v378 = vld [vmem:[%s377] ss:$8 sm:$0xf0]
  %vm379 = vcmask 1047556
  %v380 = vsel %vm379, %v378, %v376
  %381 = vrot.lane.b32.xlu0 %v380, 96
  %v382 = vpop.permute.xlu0 %381
  %vm383 = vcmask 261120
  %s384 = scalar_lea.vmem %s1, 321
  %385 = vst.msk [vmem:[%s384] ss:$4 sm:$0xff] %vm383, %v382
  %s386 = scalar_lea.vmem %s0, 6
  %v387 = vld [vmem:[%s386] ss:$8 sm:$0xf]
  %s388 = scalar_lea.vmem %s0, 6
  %v389 = vld [vmem:[%s388] ss:$8 sm:$0xf0]
  %vm390 = vcmask 1047556
  %v391 = vsel %vm390, %v389, %v387
  %392 = vrot.lane.b32.xlu0 %v391, 96
  %v393 = vpop.permute.xlu0 %392
  %vm394 = vcmask 261120
  %s395 = scalar_lea.vmem %s1, 385
  %396 = vst.msk [vmem:[%s395] ss:$4 sm:$0xff] %vm394, %v393
  %s397 = scalar_lea.vmem %s0, 7
  %v398 = vld [vmem:[%s397] ss:$8 sm:$0xf]
  %s399 = scalar_lea.vmem %s0, 7
  %v400 = vld [vmem:[%s399] ss:$8 sm:$0xf0]
  %vm401 = vcmask 1047556
  %v402 = vsel %vm401, %v400, %v398
  %403 = vrot.lane.b32.xlu0 %v402, 96
  %v404 = vpop.permute.xlu0 %403
  %vm405 = vcmask 261120
  %s406 = scalar_lea.vmem %s1, 449
  %407 = vst.msk [vmem:[%s406] ss:$4 sm:$0xff] %vm405, %v404
  %s408 = scalar_lea.vmem %s0, 64
  %v409 = vld [vmem:[%s408] ss:$8 sm:$0xf]
  %s410 = scalar_lea.vmem %s0, 64
  %v411 = vld [vmem:[%s410] ss:$8 sm:$0xf0]
  %vm412 = vcmask 1047556
  %v413 = vsel %vm412, %v411, %v409
  %414 = vrot.lane.b32.xlu0 %v413, 96
  %v415 = vpop.permute.xlu0 %414
  %vm416 = vcmask 261120
  %s417 = scalar_lea.vmem %s1, 33
  %418 = vst.msk [vmem:[%s417] ss:$4 sm:$0xff] %vm416, %v415
  %s419 = scalar_lea.vmem %s0, 65
  %v420 = vld [vmem:[%s419] ss:$8 sm:$0xf]
  %s421 = scalar_lea.vmem %s0, 65
  %v422 = vld [vmem:[%s421] ss:$8 sm:$0xf0]
  %vm423 = vcmask 1047556
  %v424 = vsel %vm423, %v422, %v420
  %425 = vrot.lane.b32.xlu0 %v424, 96
  %v426 = vpop.permute.xlu0 %425
  %vm427 = vcmask 261120
  %s428 = scalar_lea.vmem %s1, 97
  %429 = vst.msk [vmem:[%s428] ss:$4 sm:$0xff] %vm427, %v426
  %s430 = scalar_lea.vmem %s0, 66
  %v431 = vld [vmem:[%s430] ss:$8 sm:$0xf]
  %s432 = scalar_lea.vmem %s0, 66
  %v433 = vld [vmem:[%s432] ss:$8 sm:$0xf0]
  %vm434 = vcmask 1047556
  %v435 = vsel %vm434, %v433, %v431
  %436 = vrot.lane.b32.xlu0 %v435, 96
  %v437 = vpop.permute.xlu0 %436
  %vm438 = vcmask 261120
  %s439 = scalar_lea.vmem %s1, 161
  %440 = vst.msk [vmem:[%s439] ss:$4 sm:$0xff] %vm438, %v437
  %s441 = scalar_lea.vmem %s0, 67
  %v442 = vld [vmem:[%s441] ss:$8 sm:$0xf]
  %s443 = scalar_lea.vmem %s0, 67
  %v444 = vld [vmem:[%s443] ss:$8 sm:$0xf0]
  %vm445 = vcmask 1047556
  %v446 = vsel %vm445, %v444, %v442
  %447 = vrot.lane.b32.xlu0 %v446, 96
  %v448 = vpop.permute.xlu0 %447
  %vm449 = vcmask 261120
  %s450 = scalar_lea.vmem %s1, 225
  %451 = vst.msk [vmem:[%s450] ss:$4 sm:$0xff] %vm449, %v448
  %s452 = scalar_lea.vmem %s0, 68
  %v453 = vld [vmem:[%s452] ss:$8 sm:$0xf]
  %s454 = scalar_lea.vmem %s0, 68
  %v455 = vld [vmem:[%s454] ss:$8 sm:$0xf0]
  %vm456 = vcmask 1047556
  %v457 = vsel %vm456, %v455, %v453
  %458 = vrot.lane.b32.xlu0 %v457, 96
  %v459 = vpop.permute.xlu0 %458
  %vm460 = vcmask 261120
  %s461 = scalar_lea.vmem %s1, 289
  %462 = vst.msk [vmem:[%s461] ss:$4 sm:$0xff] %vm460, %v459
  %s463 = scalar_lea.vmem %s0, 69
  %v464 = vld [vmem:[%s463] ss:$8 sm:$0xf]
  %s465 = scalar_lea.vmem %s0, 69
  %v466 = vld [vmem:[%s465] ss:$8 sm:$0xf0]
  %vm467 = vcmask 1047556
  %v468 = vsel %vm467, %v466, %v464
  %469 = vrot.lane.b32.xlu0 %v468, 96
  %v470 = vpop.permute.xlu0 %469
  %vm471 = vcmask 261120
  %s472 = scalar_lea.vmem %s1, 353
  %473 = vst.msk [vmem:[%s472] ss:$4 sm:$0xff] %vm471, %v470
  %s474 = scalar_lea.vmem %s0, 70
  %v475 = vld [vmem:[%s474] ss:$8 sm:$0xf]
  %s476 = scalar_lea.vmem %s0, 70
  %v477 = vld [vmem:[%s476] ss:$8 sm:$0xf0]
  %vm478 = vcmask 1047556
  %v479 = vsel %vm478, %v477, %v475
  %480 = vrot.lane.b32.xlu0 %v479, 96
  %v481 = vpop.permute.xlu0 %480
  %vm482 = vcmask 261120
  %s483 = scalar_lea.vmem %s1, 417
  %484 = vst.msk [vmem:[%s483] ss:$4 sm:$0xff] %vm482, %v481
  %s485 = scalar_lea.vmem %s0, 71
  %v486 = vld [vmem:[%s485] ss:$8 sm:$0xf]
  %s487 = scalar_lea.vmem %s0, 71
  %v488 = vld [vmem:[%s487] ss:$8 sm:$0xf0]
  %vm489 = vcmask 1047556
  %v490 = vsel %vm489, %v488, %v486
  %491 = vrot.lane.b32.xlu0 %v490, 96
  %v492 = vpop.permute.xlu0 %491
  %vm493 = vcmask 261120
  %s494 = scalar_lea.vmem %s1, 481
  %495 = vst.msk [vmem:[%s494] ss:$4 sm:$0xff] %vm493, %v492
  %s496 = scalar_lea.vmem %s0, 128
  %v497 = vld [vmem:[%s496] ss:$8 sm:$0xf]
  %s498 = scalar_lea.vmem %s0, 128
  %v499 = vld [vmem:[%s498] ss:$8 sm:$0xf0]
  %vm500 = vcmask 1047556
  %v501 = vsel %vm500, %v499, %v497
  %502 = vrot.lane.b32.xlu0 %v501, 96
  %v503 = vpop.permute.xlu0 %502
  %vm504 = vcmask 261120
  %s505 = scalar_lea.vmem %s1, 513
  %506 = vst.msk [vmem:[%s505] ss:$4 sm:$0xff] %vm504, %v503
  %s507 = scalar_lea.vmem %s0, 192
  %v508 = vld [vmem:[%s507] ss:$8 sm:$0xf]
  %s509 = scalar_lea.vmem %s0, 192
  %v510 = vld [vmem:[%s509] ss:$8 sm:$0xf0]
  %vm511 = vcmask 1047556
  %v512 = vsel %vm511, %v510, %v508
  %513 = vrot.lane.b32.xlu0 %v512, 96
  %v514 = vpop.permute.xlu0 %513
  %vm515 = vcmask 261120
  %s516 = scalar_lea.vmem %s1, 545
  %517 = vst.msk [vmem:[%s516] ss:$4 sm:$0xff] %vm515, %v514
  %v518 = vld [vmem:[%s0] ss:$8 sm:$0xf]
  %v519 = vld [vmem:[%s0] ss:$8 sm:$0xf0]
  %vm520 = vcmask 1047556
  %v521 = vsel %vm520, %v519, %v518
  %522 = vrot.lane.b32.xlu0 %v521, 64
  %v523 = vpop.permute.xlu0 %522
  %vm524 = vcmask 261120
  %s525 = scalar_lea.vmem %s1, 2
  %526 = vst.msk [vmem:[%s525] ss:$4 sm:$0xff] %vm524, %v523
  %s527 = scalar_lea.vmem %s0, 1
  %v528 = vld [vmem:[%s527] ss:$8 sm:$0xf]
  %s529 = scalar_lea.vmem %s0, 1
  %v530 = vld [vmem:[%s529] ss:$8 sm:$0xf0]
  %vm531 = vcmask 1047556
  %v532 = vsel %vm531, %v530, %v528
  %533 = vrot.lane.b32.xlu0 %v532, 64
  %v534 = vpop.permute.xlu0 %533
  %vm535 = vcmask 261120
  %s536 = scalar_lea.vmem %s1, 66
  %537 = vst.msk [vmem:[%s536] ss:$4 sm:$0xff] %vm535, %v534
  %s538 = scalar_lea.vmem %s0, 2
  %v539 = vld [vmem:[%s538] ss:$8 sm:$0xf]
  %s540 = scalar_lea.vmem %s0, 2
  %v541 = vld [vmem:[%s540] ss:$8 sm:$0xf0]
  %vm542 = vcmask 1047556
  %v543 = vsel %vm542, %v541, %v539
  %544 = vrot.lane.b32.xlu0 %v543, 64
  %v545 = vpop.permute.xlu0 %544
  %vm546 = vcmask 261120
  %s547 = scalar_lea.vmem %s1, 130
  %548 = vst.msk [vmem:[%s547] ss:$4 sm:$0xff] %vm546, %v545
  %s549 = scalar_lea.vmem %s0, 3
  %v550 = vld [vmem:[%s549] ss:$8 sm:$0xf]
  %s551 = scalar_lea.vmem %s0, 3
  %v552 = vld [vmem:[%s551] ss:$8 sm:$0xf0]
  %vm553 = vcmask 1047556
  %v554 = vsel %vm553, %v552, %v550
  %555 = vrot.lane.b32.xlu0 %v554, 64
  %v556 = vpop.permute.xlu0 %555
  %vm557 = vcmask 261120
  %s558 = scalar_lea.vmem %s1, 194
  %559 = vst.msk [vmem:[%s558] ss:$4 sm:$0xff] %vm557, %v556
  %s560 = scalar_lea.vmem %s0, 4
  %v561 = vld [vmem:[%s560] ss:$8 sm:$0xf]
  %s562 = scalar_lea.vmem %s0, 4
  %v563 = vld [vmem:[%s562] ss:$8 sm:$0xf0]
  %vm564 = vcmask 1047556
  %v565 = vsel %vm564, %v563, %v561
  %566 = vrot.lane.b32.xlu0 %v565, 64
  %v567 = vpop.permute.xlu0 %566
  %vm568 = vcmask 261120
  %s569 = scalar_lea.vmem %s1, 258
  %570 = vst.msk [vmem:[%s569] ss:$4 sm:$0xff] %vm568, %v567
  %s571 = scalar_lea.vmem %s0, 5
  %v572 = vld [vmem:[%s571] ss:$8 sm:$0xf]
  %s573 = scalar_lea.vmem %s0, 5
  %v574 = vld [vmem:[%s573] ss:$8 sm:$0xf0]
  %vm575 = vcmask 1047556
  %v576 = vsel %vm575, %v574, %v572
  %577 = vrot.lane.b32.xlu0 %v576, 64
  %v578 = vpop.permute.xlu0 %577
  %vm579 = vcmask 261120
  %s580 = scalar_lea.vmem %s1, 322
  %581 = vst.msk [vmem:[%s580] ss:$4 sm:$0xff] %vm579, %v578
  %s582 = scalar_lea.vmem %s0, 6
  %v583 = vld [vmem:[%s582] ss:$8 sm:$0xf]
  %s584 = scalar_lea.vmem %s0, 6
  %v585 = vld [vmem:[%s584] ss:$8 sm:$0xf0]
  %vm586 = vcmask 1047556
  %v587 = vsel %vm586, %v585, %v583
  %588 = vrot.lane.b32.xlu0 %v587, 64
  %v589 = vpop.permute.xlu0 %588
  %vm590 = vcmask 261120
  %s591 = scalar_lea.vmem %s1, 386
  %592 = vst.msk [vmem:[%s591] ss:$4 sm:$0xff] %vm590, %v589
  %s593 = scalar_lea.vmem %s0, 7
  %v594 = vld [vmem:[%s593] ss:$8 sm:$0xf]
  %s595 = scalar_lea.vmem %s0, 7
  %v596 = vld [vmem:[%s595] ss:$8 sm:$0xf0]
  %vm597 = vcmask 1047556
  %v598 = vsel %vm597, %v596, %v594
  %599 = vrot.lane.b32.xlu0 %v598, 64
  %v600 = vpop.permute.xlu0 %599
  %vm601 = vcmask 261120
  %s602 = scalar_lea.vmem %s1, 450
  %603 = vst.msk [vmem:[%s602] ss:$4 sm:$0xff] %vm601, %v600
  %s604 = scalar_lea.vmem %s0, 64
  %v605 = vld [vmem:[%s604] ss:$8 sm:$0xf]
  %s606 = scalar_lea.vmem %s0, 64
  %v607 = vld [vmem:[%s606] ss:$8 sm:$0xf0]
  %vm608 = vcmask 1047556
  %v609 = vsel %vm608, %v607, %v605
  %610 = vrot.lane.b32.xlu0 %v609, 64
  %v611 = vpop.permute.xlu0 %610
  %vm612 = vcmask 261120
  %s613 = scalar_lea.vmem %s1, 34
  %614 = vst.msk [vmem:[%s613] ss:$4 sm:$0xff] %vm612, %v611
  %s615 = scalar_lea.vmem %s0, 65
  %v616 = vld [vmem:[%s615] ss:$8 sm:$0xf]
  %s617 = scalar_lea.vmem %s0, 65
  %v618 = vld [vmem:[%s617] ss:$8 sm:$0xf0]
  %vm619 = vcmask 1047556
  %v620 = vsel %vm619, %v618, %v616
  %621 = vrot.lane.b32.xlu0 %v620, 64
  %v622 = vpop.permute.xlu0 %621
  %vm623 = vcmask 261120
  %s624 = scalar_lea.vmem %s1, 98
  %625 = vst.msk [vmem:[%s624] ss:$4 sm:$0xff] %vm623, %v622
  %s626 = scalar_lea.vmem %s0, 66
  %v627 = vld [vmem:[%s626] ss:$8 sm:$0xf]
  %s628 = scalar_lea.vmem %s0, 66
  %v629 = vld [vmem:[%s628] ss:$8 sm:$0xf0]
  %vm630 = vcmask 1047556
  %v631 = vsel %vm630, %v629, %v627
  %632 = vrot.lane.b32.xlu0 %v631, 64
  %v633 = vpop.permute.xlu0 %632
  %vm634 = vcmask 261120
  %s635 = scalar_lea.vmem %s1, 162
  %636 = vst.msk [vmem:[%s635] ss:$4 sm:$0xff] %vm634, %v633
  %s637 = scalar_lea.vmem %s0, 67
  %v638 = vld [vmem:[%s637] ss:$8 sm:$0xf]
  %s639 = scalar_lea.vmem %s0, 67
  %v640 = vld [vmem:[%s639] ss:$8 sm:$0xf0]
  %vm641 = vcmask 1047556
  %v642 = vsel %vm641, %v640, %v638
  %643 = vrot.lane.b32.xlu0 %v642, 64
  %v644 = vpop.permute.xlu0 %643
  %vm645 = vcmask 261120
  %s646 = scalar_lea.vmem %s1, 226
  %647 = vst.msk [vmem:[%s646] ss:$4 sm:$0xff] %vm645, %v644
  %s648 = scalar_lea.vmem %s0, 68
  %v649 = vld [vmem:[%s648] ss:$8 sm:$0xf]
  %s650 = scalar_lea.vmem %s0, 68
  %v651 = vld [vmem:[%s650] ss:$8 sm:$0xf0]
  %vm652 = vcmask 1047556
  %v653 = vsel %vm652, %v651, %v649
  %654 = vrot.lane.b32.xlu0 %v653, 64
  %v655 = vpop.permute.xlu0 %654
  %vm656 = vcmask 261120
  %s657 = scalar_lea.vmem %s1, 290
  %658 = vst.msk [vmem:[%s657] ss:$4 sm:$0xff] %vm656, %v655
  %s659 = scalar_lea.vmem %s0, 69
  %v660 = vld [vmem:[%s659] ss:$8 sm:$0xf]
  %s661 = scalar_lea.vmem %s0, 69
  %v662 = vld [vmem:[%s661] ss:$8 sm:$0xf0]
  %vm663 = vcmask 1047556
  %v664 = vsel %vm663, %v662, %v660
  %665 = vrot.lane.b32.xlu0 %v664, 64
  %v666 = vpop.permute.xlu0 %665
  %vm667 = vcmask 261120
  %s668 = scalar_lea.vmem %s1, 354
  %669 = vst.msk [vmem:[%s668] ss:$4 sm:$0xff] %vm667, %v666
  %s670 = scalar_lea.vmem %s0, 70
  %v671 = vld [vmem:[%s670] ss:$8 sm:$0xf]
  %s672 = scalar_lea.vmem %s0, 70
  %v673 = vld [vmem:[%s672] ss:$8 sm:$0xf0]
  %vm674 = vcmask 1047556
  %v675 = vsel %vm674, %v673, %v671
  %676 = vrot.lane.b32.xlu0 %v675, 64
  %v677 = vpop.permute.xlu0 %676
  %vm678 = vcmask 261120
  %s679 = scalar_lea.vmem %s1, 418
  %680 = vst.msk [vmem:[%s679] ss:$4 sm:$0xff] %vm678, %v677
  %s681 = scalar_lea.vmem %s0, 71
  %v682 = vld [vmem:[%s681] ss:$8 sm:$0xf]
  %s683 = scalar_lea.vmem %s0, 71
  %v684 = vld [vmem:[%s683] ss:$8 sm:$0xf0]
  %vm685 = vcmask 1047556
  %v686 = vsel %vm685, %v684, %v682
  %687 = vrot.lane.b32.xlu0 %v686, 64
  %v688 = vpop.permute.xlu0 %687
  %vm689 = vcmask 261120
  %s690 = scalar_lea.vmem %s1, 482
  %691 = vst.msk [vmem:[%s690] ss:$4 sm:$0xff] %vm689, %v688
  %s692 = scalar_lea.vmem %s0, 128
  %v693 = vld [vmem:[%s692] ss:$8 sm:$0xf]
  %s694 = scalar_lea.vmem %s0, 128
  %v695 = vld [vmem:[%s694] ss:$8 sm:$0xf0]
  %vm696 = vcmask 1047556
  %v697 = vsel %vm696, %v695, %v693
  %698 = vrot.lane.b32.xlu0 %v697, 64
  %v699 = vpop.permute.xlu0 %698
  %vm700 = vcmask 261120
  %s701 = scalar_lea.vmem %s1, 514
  %702 = vst.msk [vmem:[%s701] ss:$4 sm:$0xff] %vm700, %v699
  %s703 = scalar_lea.vmem %s0, 192
  %v704 = vld [vmem:[%s703] ss:$8 sm:$0xf]
  %s705 = scalar_lea.vmem %s0, 192
  %v706 = vld [vmem:[%s705] ss:$8 sm:$0xf0]
  %vm707 = vcmask 1047556
  %v708 = vsel %vm707, %v706, %v704
  %709 = vrot.lane.b32.xlu0 %v708, 64
  %v710 = vpop.permute.xlu0 %709
  %vm711 = vcmask 261120
  %s712 = scalar_lea.vmem %s1, 546
  %713 = vst.msk [vmem:[%s712] ss:$4 sm:$0xff] %vm711, %v710
  %v714 = vld [vmem:[%s0] ss:$8 sm:$0xf]
  %v715 = vld [vmem:[%s0] ss:$8 sm:$0xf0]
  %vm716 = vcmask 1047556
  %v717 = vsel %vm716, %v715, %v714
  %718 = vrot.lane.b32.xlu0 %v717, 32
  %v719 = vpop.permute.xlu0 %718
  %vm720 = vcmask 261120
  %s721 = scalar_lea.vmem %s1, 3
  %722 = vst.msk [vmem:[%s721] ss:$4 sm:$0xff] %vm720, %v719
  %s723 = scalar_lea.vmem %s0, 1
  %v724 = vld [vmem:[%s723] ss:$8 sm:$0xf]
  %s725 = scalar_lea.vmem %s0, 1
  %v726 = vld [vmem:[%s725] ss:$8 sm:$0xf0]
  %vm727 = vcmask 1047556
  %v728 = vsel %vm727, %v726, %v724
  %729 = vrot.lane.b32.xlu0 %v728, 32
  %v730 = vpop.permute.xlu0 %729
  %vm731 = vcmask 261120
  %s732 = scalar_lea.vmem %s1, 67
  %733 = vst.msk [vmem:[%s732] ss:$4 sm:$0xff] %vm731, %v730
  %s734 = scalar_lea.vmem %s0, 2
  %v735 = vld [vmem:[%s734] ss:$8 sm:$0xf]
  %s736 = scalar_lea.vmem %s0, 2
  %v737 = vld [vmem:[%s736] ss:$8 sm:$0xf0]
  %vm738 = vcmask 1047556
  %v739 = vsel %vm738, %v737, %v735
  %740 = vrot.lane.b32.xlu0 %v739, 32
  %v741 = vpop.permute.xlu0 %740
  %vm742 = vcmask 261120
  %s743 = scalar_lea.vmem %s1, 131
  %744 = vst.msk [vmem:[%s743] ss:$4 sm:$0xff] %vm742, %v741
  %s745 = scalar_lea.vmem %s0, 3
  %v746 = vld [vmem:[%s745] ss:$8 sm:$0xf]
  %s747 = scalar_lea.vmem %s0, 3
  %v748 = vld [vmem:[%s747] ss:$8 sm:$0xf0]
  %vm749 = vcmask 1047556
  %v750 = vsel %vm749, %v748, %v746
  %751 = vrot.lane.b32.xlu0 %v750, 32
  %v752 = vpop.permute.xlu0 %751
  %vm753 = vcmask 261120
  %s754 = scalar_lea.vmem %s1, 195
  %755 = vst.msk [vmem:[%s754] ss:$4 sm:$0xff] %vm753, %v752
  %s756 = scalar_lea.vmem %s0, 4
  %v757 = vld [vmem:[%s756] ss:$8 sm:$0xf]
  %s758 = scalar_lea.vmem %s0, 4
  %v759 = vld [vmem:[%s758] ss:$8 sm:$0xf0]
  %vm760 = vcmask 1047556
  %v761 = vsel %vm760, %v759, %v757
  %762 = vrot.lane.b32.xlu0 %v761, 32
  %v763 = vpop.permute.xlu0 %762
  %vm764 = vcmask 261120
  %s765 = scalar_lea.vmem %s1, 259
  %766 = vst.msk [vmem:[%s765] ss:$4 sm:$0xff] %vm764, %v763
  %s767 = scalar_lea.vmem %s0, 5
  %v768 = vld [vmem:[%s767] ss:$8 sm:$0xf]
  %s769 = scalar_lea.vmem %s0, 5
  %v770 = vld [vmem:[%s769] ss:$8 sm:$0xf0]
  %vm771 = vcmask 1047556
  %v772 = vsel %vm771, %v770, %v768
  %773 = vrot.lane.b32.xlu0 %v772, 32
  %v774 = vpop.permute.xlu0 %773
  %vm775 = vcmask 261120
  %s776 = scalar_lea.vmem %s1, 323
  %777 = vst.msk [vmem:[%s776] ss:$4 sm:$0xff] %vm775, %v774
  %s778 = scalar_lea.vmem %s0, 6
  %v779 = vld [vmem:[%s778] ss:$8 sm:$0xf]
  %s780 = scalar_lea.vmem %s0, 6
  %v781 = vld [vmem:[%s780] ss:$8 sm:$0xf0]
  %vm782 = vcmask 1047556
  %v783 = vsel %vm782, %v781, %v779
  %784 = vrot.lane.b32.xlu0 %v783, 32
  %v785 = vpop.permute.xlu0 %784
  %vm786 = vcmask 261120
  %s787 = scalar_lea.vmem %s1, 387
  %788 = vst.msk [vmem:[%s787] ss:$4 sm:$0xff] %vm786, %v785
  %s789 = scalar_lea.vmem %s0, 7
  %v790 = vld [vmem:[%s789] ss:$8 sm:$0xf]
  %s791 = scalar_lea.vmem %s0, 7
  %v792 = vld [vmem:[%s791] ss:$8 sm:$0xf0]
  %vm793 = vcmask 1047556
  %v794 = vsel %vm793, %v792, %v790
  %795 = vrot.lane.b32.xlu0 %v794, 32
  %v796 = vpop.permute.xlu0 %795
  %vm797 = vcmask 261120
  %s798 = scalar_lea.vmem %s1, 451
  %799 = vst.msk [vmem:[%s798] ss:$4 sm:$0xff] %vm797, %v796
  %s800 = scalar_lea.vmem %s0, 64
  %v801 = vld [vmem:[%s800] ss:$8 sm:$0xf]
  %s802 = scalar_lea.vmem %s0, 64
  %v803 = vld [vmem:[%s802] ss:$8 sm:$0xf0]
  %vm804 = vcmask 1047556
  %v805 = vsel %vm804, %v803, %v801
  %806 = vrot.lane.b32.xlu0 %v805, 32
  %v807 = vpop.permute.xlu0 %806
  %vm808 = vcmask 261120
  %s809 = scalar_lea.vmem %s1, 35
  %810 = vst.msk [vmem:[%s809] ss:$4 sm:$0xff] %vm808, %v807
  %s811 = scalar_lea.vmem %s0, 65
  %v812 = vld [vmem:[%s811] ss:$8 sm:$0xf]
  %s813 = scalar_lea.vmem %s0, 65
  %v814 = vld [vmem:[%s813] ss:$8 sm:$0xf0]
  %vm815 = vcmask 1047556
  %v816 = vsel %vm815, %v814, %v812
  %817 = vrot.lane.b32.xlu0 %v816, 32
  %v818 = vpop.permute.xlu0 %817
  %vm819 = vcmask 261120
  %s820 = scalar_lea.vmem %s1, 99
  %821 = vst.msk [vmem:[%s820] ss:$4 sm:$0xff] %vm819, %v818
  %s822 = scalar_lea.vmem %s0, 66
  %v823 = vld [vmem:[%s822] ss:$8 sm:$0xf]
  %s824 = scalar_lea.vmem %s0, 66
  %v825 = vld [vmem:[%s824] ss:$8 sm:$0xf0]
  %vm826 = vcmask 1047556
  %v827 = vsel %vm826, %v825, %v823
  %828 = vrot.lane.b32.xlu0 %v827, 32
  %v829 = vpop.permute.xlu0 %828
  %vm830 = vcmask 261120
  %s831 = scalar_lea.vmem %s1, 163
  %832 = vst.msk [vmem:[%s831] ss:$4 sm:$0xff] %vm830, %v829
  %s833 = scalar_lea.vmem %s0, 67
  %v834 = vld [vmem:[%s833] ss:$8 sm:$0xf]
  %s835 = scalar_lea.vmem %s0, 67
  %v836 = vld [vmem:[%s835] ss:$8 sm:$0xf0]
  %vm837 = vcmask 1047556
  %v838 = vsel %vm837, %v836, %v834
  %839 = vrot.lane.b32.xlu0 %v838, 32
  %v840 = vpop.permute.xlu0 %839
  %vm841 = vcmask 261120
  %s842 = scalar_lea.vmem %s1, 227
  %843 = vst.msk [vmem:[%s842] ss:$4 sm:$0xff] %vm841, %v840
  %s844 = scalar_lea.vmem %s0, 68
  %v845 = vld [vmem:[%s844] ss:$8 sm:$0xf]
  %s846 = scalar_lea.vmem %s0, 68
  %v847 = vld [vmem:[%s846] ss:$8 sm:$0xf0]
  %vm848 = vcmask 1047556
  %v849 = vsel %vm848, %v847, %v845
  %850 = vrot.lane.b32.xlu0 %v849, 32
  %v851 = vpop.permute.xlu0 %850
  %vm852 = vcmask 261120
  %s853 = scalar_lea.vmem %s1, 291
  %854 = vst.msk [vmem:[%s853] ss:$4 sm:$0xff] %vm852, %v851
  %s855 = scalar_lea.vmem %s0, 69
  %v856 = vld [vmem:[%s855] ss:$8 sm:$0xf]
  %s857 = scalar_lea.vmem %s0, 69
  %v858 = vld [vmem:[%s857] ss:$8 sm:$0xf0]
  %vm859 = vcmask 1047556
  %v860 = vsel %vm859, %v858, %v856
  %861 = vrot.lane.b32.xlu0 %v860, 32
  %v862 = vpop.permute.xlu0 %861
  %vm863 = vcmask 261120
  %s864 = scalar_lea.vmem %s1, 355
  %865 = vst.msk [vmem:[%s864] ss:$4 sm:$0xff] %vm863, %v862
  %s866 = scalar_lea.vmem %s0, 70
  %v867 = vld [vmem:[%s866] ss:$8 sm:$0xf]
  %s868 = scalar_lea.vmem %s0, 70
  %v869 = vld [vmem:[%s868] ss:$8 sm:$0xf0]
  %vm870 = vcmask 1047556
  %v871 = vsel %vm870, %v869, %v867
  %872 = vrot.lane.b32.xlu0 %v871, 32
  %v873 = vpop.permute.xlu0 %872
  %vm874 = vcmask 261120
  %s875 = scalar_lea.vmem %s1, 419
  %876 = vst.msk [vmem:[%s875] ss:$4 sm:$0xff] %vm874, %v873
  %s877 = scalar_lea.vmem %s0, 71
  %v878 = vld [vmem:[%s877] ss:$8 sm:$0xf]
  %s879 = scalar_lea.vmem %s0, 71
  %v880 = vld [vmem:[%s879] ss:$8 sm:$0xf0]
  %vm881 = vcmask 1047556
  %v882 = vsel %vm881, %v880, %v878
  %883 = vrot.lane.b32.xlu0 %v882, 32
  %v884 = vpop.permute.xlu0 %883
  %vm885 = vcmask 261120
  %s886 = scalar_lea.vmem %s1, 483
  %887 = vst.msk [vmem:[%s886] ss:$4 sm:$0xff] %vm885, %v884
  %s888 = scalar_lea.vmem %s0, 128
  %v889 = vld [vmem:[%s888] ss:$8 sm:$0xf]
  %s890 = scalar_lea.vmem %s0, 128
  %v891 = vld [vmem:[%s890] ss:$8 sm:$0xf0]
  %vm892 = vcmask 1047556
  %v893 = vsel %vm892, %v891, %v889
  %894 = vrot.lane.b32.xlu0 %v893, 32
  %v895 = vpop.permute.xlu0 %894
  %vm896 = vcmask 261120
  %s897 = scalar_lea.vmem %s1, 515
  %898 = vst.msk [vmem:[%s897] ss:$4 sm:$0xff] %vm896, %v895
  %s899 = scalar_lea.vmem %s0, 192
  %v900 = vld [vmem:[%s899] ss:$8 sm:$0xf]
  %s901 = scalar_lea.vmem %s0, 192
  %v902 = vld [vmem:[%s901] ss:$8 sm:$0xf0]
  %vm903 = vcmask 1047556
  %v904 = vsel %vm903, %v902, %v900
  %905 = vrot.lane.b32.xlu0 %v904, 32
  %v906 = vpop.permute.xlu0 %905
  %vm907 = vcmask 261120
  %s908 = scalar_lea.vmem %s1, 547
  %909 = vst.msk [vmem:[%s908] ss:$4 sm:$0xff] %vm907, %v906

// kernel: generator_forward.11
$region0: #{generator_forward.11}
  #allocation0 [shape = 'u32[]', space=smem, size = 0x4, offset = 0x4, fixed_abs, tag = 'smem constant byte address 0x4 - core index']
  #allocation1 [shape = 'u32[144,128]{1,0:T(1,128)}', space=vmem, size = 0x12000, scoped, tag = 'internal scratch']
  %s0 = inlined_call_operand.vmem [shape: f32[3,2048], index: 0, kind: input, shape index: {}]
  %s1 = inlined_call_operand.vmem [shape: f32[3,1], index: 1, kind: input, shape index: {}]
  %s2 = inlined_call_operand.vmem [shape: f32[3,2048], index: 2, kind: output, shape index: {}]
  %s3 = sld [smem:[#allocation0]]
  $region18: #{generator_forward.11} parent=0
    _
  %s5 = ssub.s32 1, %s3
  %s6 = scalar_select 0, %s5, %s3
  // Predicated region
  $region2: #{generator_forward.11} parent=0 // pred_check
    _
  $region3: #{generator_forward.11} parent=0 // pred_check_branch
    %8 = sbr.rel (0) target = $region5
  $region4: #{generator_forward.11} parent=0 // pred_region
    _
  $region5: #{generator_forward.11} parent=0 // pred_fallthru
    _
  // Predicated region
  $region6: #{generator_forward.11} parent=0 // pred_check
    _
  $region7: #{generator_forward.11} parent=0 // pred_check_branch
    %10 = sbr.rel (0) target = $region9
  $region8: #{generator_forward.11} parent=0 // pred_region
    _
  $region9: #{generator_forward.11} parent=0 // pred_fallthru
    _
  %v11 = vld [vmem:[%s0] sm:$0x77]
  %v12 = vld [vmem:[%s0 + $0x8] sm:$0x77]
  %v13 = vld [vmem:[%s0 + $0x10] sm:$0x77]
  %v14 = vld [vmem:[%s0 + $0x18] sm:$0x77]
  %v15 = vld [vmem:[%s0 + $0x20] sm:$0x77]
  %v16 = vld [vmem:[%s0 + $0x28] sm:$0x77]
  %v17 = vld [vmem:[%s0 + $0x30] sm:$0x77]
  %v18 = vld [vmem:[%s0 + $0x38] sm:$0x77]
  %v19 = vld [vmem:[%s1] sm:$0x7]
  %21 = vset.pattern.permute.xlu0 0
  %22 = vperm.xlu0 %21, %v19
  %v23 = vpop.permute.xlu0 %22
  %v25 = vunpack.c.l.s4 839922192
  %v26 = vunpack.c.0.s8 %v25
  %v27 = vlaneseq
  %v28 = vshrl.u32 %v27, 7
  %v29 = vsub.s32 %v26, %v28
  %v30 = vrot.slane %v23, %v29
  %v32 = vadd.f32 %v11, %v30
  %v33 = vadd.f32 %v12, %v30
  %v34 = vadd.f32 %v13, %v30
  %v35 = vadd.f32 %v14, %v30
  %v36 = vadd.f32 %v15, %v30
  %v37 = vadd.f32 %v16, %v30
  %v38 = vadd.f32 %v17, %v30
  %v39 = vadd.f32 %v18, %v30
  %v40 = vtanh.pop %v32
  %v41 = vtanh.pop %v33
  %v42 = vtanh.pop %v34
  %v43 = vtanh.pop %v35
  %v44 = vtanh.pop %v36
  %v45 = vtanh.pop %v37
  %v46 = vtanh.pop %v38
  %v47 = vtanh.pop %v39
  %48 = vst [vmem:[%s2] sm:$0x77] %v40
  %49 = vst [vmem:[%s2 + $0x8] sm:$0x77] %v41
  %50 = vst [vmem:[%s2 + $0x10] sm:$0x77] %v42
  %51 = vst [vmem:[%s2 + $0x18] sm:$0x77] %v43
  %52 = vst [vmem:[%s2 + $0x20] sm:$0x77] %v44
  %53 = vst [vmem:[%s2 + $0x28] sm:$0x77] %v45
  %54 = vst [vmem:[%s2 + $0x30] sm:$0x77] %v46
  %55 = vst [vmem:[%s2 + $0x38] sm:$0x77] %v47
  // Predicated region
  $region10: #{generator_forward.11} parent=0 // pred_check
    _
  $region11: #{generator_forward.11} parent=0 // pred_check_branch
    %57 = sbr.rel (0) target = $region13
  $region12: #{generator_forward.11} parent=0 // pred_region
    _
  $region13: #{generator_forward.11} parent=0 // pred_fallthru
    _
  // Predicated region
  $region14: #{generator_forward.11} parent=0 // pred_check
    _
  $region15: #{generator_forward.11} parent=0 // pred_check_branch
    %59 = sbr.rel (0) target = $region17
  $region16: #{generator_forward.11} parent=0 // pred_region
    _
  $region17: #{generator_forward.11} parent=0 // pred_fallthru
    _

</llo_original>
